<compile_context>
chip_gen: v7x
topology: tpu7x:2x2x1
jax: 0.10.0
libtpu: 0.0.40
codegen_flags: <defaults>
</compile_context>

<pallas_src>
import functools

import jax
import jax.numpy as jnp
import numpy as np
from jax import lax
from jax.experimental import pallas as pl
from jax.experimental.pallas import tpu as pltpu

EPS = 1e-5
LANE = 128


def _round_up(x, m):
    return (x + m - 1) // m * m


# ----------------------------- Pallas kernels --------------------------------
# One kernel per conv layer. Per grid step (= one image) it:
#   1. loads the zero-guarded flattened padded image (Lg, Cx) in f32,
#   2. applies folded BatchNorm (x*scale + shift), ReLU and the interior mask
#      (so the conv zero-padding stays zero) into a VMEM scratch,
#   3. accumulates the 3x3 conv as 9 statically shifted slab matmuls (MXU),
#   4. optionally adds the shortcut (fused 1x1 matmul or elementwise add),
#   5. writes the (L, Coutp) pre-activation output (f32, lane-dense).

def _make_conv_kernel(L, Wp, shortcut, conv_dtype):
    taps = [(dh, dw) for dh in range(3) for dw in range(3)]

    def kernel(x_ref, m_ref, sc_ref, sh_ref, w_ref, *rest):
        if shortcut == "proj":
            xs_ref, wsc_ref, o_ref, h_scr = rest
        elif shortcut == "ident":
            xs_ref, o_ref, h_scr = rest
        else:
            o_ref, h_scr = rest

        # Fused BN apply + ReLU + padding/guard mask (f32 on the VPU).
        x = x_ref[...]
        h = jnp.maximum(x * sc_ref[...] + sh_ref[...], 0.0) * m_ref[...]
        h_scr[...] = h

        # 3x3 conv = 9 shifted slab matmuls, f32 accumulation on the MXU.
        acc = jnp.zeros(o_ref.shape, jnp.float32)
        for t, (dh, dw) in enumerate(taps):
            off = dh * Wp + dw
            a = h_scr[pl.ds(off, L), :].astype(conv_dtype)
            acc = acc + jnp.dot(a, w_ref[t], preferred_element_type=jnp.float32)

        if shortcut == "proj":
            acc = acc + jnp.dot(xs_ref[...], wsc_ref[...],
                                preferred_element_type=jnp.float32)
        elif shortcut == "ident":
            acc = acc + xs_ref[...]  # identity shortcut: plain add, no matmul

        o_ref[...] = acc.astype(o_ref.dtype)

    return kernel


def _run_conv(xg, mask, scale, shift, w, xs, wsc, *, L, Wp, shortcut, conv_dtype):
    """xg: (N, Lg, Cx) guarded flat input; w: (9, K, Coutp)."""
    N, Lg, Cx = xg.shape
    Coutp = w.shape[-1]
    kernel = _make_conv_kernel(L, Wp, shortcut, conv_dtype)

    in_specs = [
        pl.BlockSpec((None, Lg, Cx), lambda i: (i, 0, 0)),  # image slab
        pl.BlockSpec((Lg, 1), lambda i: (0, 0)),            # interior mask
        pl.BlockSpec((1, Cx), lambda i: (0, 0)),            # BN scale (folded)
        pl.BlockSpec((1, Cx), lambda i: (0, 0)),            # BN shift (folded)
        pl.BlockSpec(w.shape, lambda i: (0, 0, 0)),         # conv weights
    ]
    args = [xg, mask, scale, shift, w]
    if shortcut is not None:
        in_specs.append(pl.BlockSpec((None, L, xs.shape[-1]),
                                     lambda i: (i, 0, 0)))
        args.append(xs)
    if shortcut == "proj":
        in_specs.append(pl.BlockSpec(wsc.shape, lambda i: (0, 0)))
        args.append(wsc)

    return pl.pallas_call(
        kernel,
        out_shape=jax.ShapeDtypeStruct((N, L, Coutp), jnp.float32),
        grid=(N,),
        in_specs=in_specs,
        out_specs=pl.BlockSpec((None, L, Coutp), lambda i: (i, 0, 0)),
        scratch_shapes=[pltpu.VMEM((Lg, Cx), jnp.float32)],
        compiler_params=pltpu.CompilerParams(
            dimension_semantics=("parallel",),
            vmem_limit_bytes=32 * 1024 * 1024,
        ),
    )(*args)


# ------------------------------ JAX-side glue --------------------------------

def _interior_mask(Hp, Wp, G):
    """(Hp*Wp + 2G, 1) f32: 1 on real pixels, 0 on conv padding & guard rows."""
    m = jnp.zeros((Hp, Wp), jnp.float32).at[1:-1, 1:-1].set(1.0)
    return jnp.pad(m.reshape(Hp * Wp), (G, G))[:, None]


def _guarded_flat(a_nhwc, G):
    """Zero-pad spatially by 1, flatten (H,W), add G zero guard rows per image."""
    N, H, W, C = a_nhwc.shape
    ap = jnp.pad(a_nhwc, ((0, 0), (1, 1), (1, 1), (0, 0)))
    ap = ap.reshape(N, (H + 2) * (W + 2), C)
    return jnp.pad(ap, ((0, 0), (G, G), (0, 0)))


def _pad_last(a, to):
    pad = to - a.shape[-1]
    if pad == 0:
        return a
    return jnp.pad(a, [(0, 0)] * (a.ndim - 1) + [(0, pad)])


def init_basic_block_params(key, inplanes, outplanes):
    """Deterministic parameter init. Conv weights in HWIO layout."""
    k1, k2, k3, k4, k5, k6, k7 = jax.random.split(key, 7)
    return {
        "gamma1": jax.random.normal(k1, (inplanes,), jnp.float32) * 0.1 + 1.0,
        "beta1": jax.random.normal(k2, (inplanes,), jnp.float32) * 0.1,
        "w1": jax.random.normal(k3, (3, 3, inplanes, outplanes), jnp.float32) * 0.1,
        "gamma2": jax.random.normal(k4, (outplanes,), jnp.float32) * 0.1 + 1.0,
        "beta2": jax.random.normal(k5, (outplanes,), jnp.float32) * 0.1,
        "w2": jax.random.normal(k6, (3, 3, outplanes, outplanes), jnp.float32) * 0.1,
        "wsc": jax.random.normal(k7, (1, 1, inplanes, outplanes), jnp.float32) * 0.1,
    }


@functools.partial(jax.jit, static_argnames=("stride", "conv_dtype"))
def basic_block_forward(x_nchw, params, stride, conv_dtype=jnp.bfloat16):
    """BasicBlock forward. x_nchw: (N, Cin, H, W) -> (N, Cout, Ho, Wo)."""
    N, Cin, H, W = x_nchw.shape
    Cout = params["w1"].shape[-1]
    Coutp = _round_up(Cout, LANE)  # lane-dense outputs
    x = jnp.transpose(x_nchw, (0, 2, 3, 1)).astype(jnp.float32)  # NHWC

    # ---- BN1 batch stats (tiny XLA reductions), folded into scale/shift ----
    mean1 = jnp.mean(x, axis=(0, 1, 2))
    var1 = jnp.mean((x - mean1) ** 2, axis=(0, 1, 2))  # biased, PyTorch training fwd
    scale1 = params["gamma1"] * lax.rsqrt(var1 + EPS)
    shift1 = params["beta1"] - mean1 * scale1

    # ---- conv1 geometry (stride-1 on padded geometry, subsample after) ----
    Hp1, Wp1 = H + 2, W + 2
    L1, G1 = Hp1 * Wp1, Wp1 + 1
    Ho = (H + 2 - 3) // stride + 1
    Wo = (W + 2 - 3) // stride + 1

    xg = _guarded_flat(x, G1)                                     # (N, L1g, Cin)
    mask1 = _interior_mask(Hp1, Wp1, G1)
    w1 = _pad_last(params["w1"].reshape(9, Cin, Cout), Coutp).astype(conv_dtype)

    # kernel 1: fused BN1-apply + ReLU + conv1
    z1full = _run_conv(xg, mask1, scale1[None, :], shift1[None, :], w1,
                       None, None, L=L1, Wp=Wp1, shortcut=None,
                       conv_dtype=conv_dtype)                     # (N, L1, Coutp)

    # strided conv1 output
    z1 = z1full.reshape(N, Hp1, Wp1, Coutp)[:, 1::stride, 1::stride, :]
    z1 = z1[:, :Ho, :Wo, :]                                       # (N, Ho, Wo, Coutp)

    # ---- BN2 batch stats over real channels, folded into scale/shift ----
    z1r = z1[..., :Cout]
    mean2 = jnp.mean(z1r, axis=(0, 1, 2))
    var2 = jnp.mean((z1r - mean2) ** 2, axis=(0, 1, 2))
    s2 = params["gamma2"] * lax.rsqrt(var2 + EPS)
    scale2 = _pad_last(s2[None, :], Coutp)           # zeros for padded channels
    shift2 = _pad_last((params["beta2"] - mean2 * s2)[None, :], Coutp)

    # ---- conv2 geometry ----
    Hp2, Wp2 = Ho + 2, Wo + 2
    L2, G2 = Hp2 * Wp2, Wp2 + 1
    z1g = _guarded_flat(z1, G2)                                   # (N, L2g, Coutp)
    mask2 = _interior_mask(Hp2, Wp2, G2)
    w2 = params["w2"].reshape(9, Cout, Cout)
    w2 = jnp.pad(w2, ((0, 0), (0, Coutp - Cout), (0, Coutp - Cout))).astype(conv_dtype)

    # ---- shortcut operand, aligned with the padded conv2 output geometry ----
    xs = x[:, ::stride, ::stride, :][:, :Ho, :Wo, :]              # (N, Ho, Wo, Cin)
    identity = (Cin == Cout) and (stride == 1)                    # static branch
    if identity:
        xs_flat = jnp.pad(_pad_last(xs, Coutp),
                          ((0, 0), (1, 1), (1, 1), (0, 0))).reshape(N, L2, Coutp)
        out_flat = _run_conv(z1g, mask2, scale2, shift2, w2, xs_flat, None,
                             L=L2, Wp=Wp2, shortcut="ident", conv_dtype=conv_dtype)
    else:
        xs_flat = jnp.pad(xs, ((0, 0), (1, 1), (1, 1), (0, 0))
                          ).reshape(N, L2, Cin).astype(conv_dtype)
        wsc = _pad_last(params["wsc"].reshape(Cin, Cout), Coutp).astype(conv_dtype)
        out_flat = _run_conv(z1g, mask2, scale2, shift2, w2, xs_flat, wsc,
                             L=L2, Wp=Wp2, shortcut="proj", conv_dtype=conv_dtype)

    out = out_flat.reshape(N, Hp2, Wp2, Coutp)[:, 1:Ho + 1, 1:Wo + 1, :Cout]
    return jnp.transpose(out, (0, 3, 1, 2))                       # back to NCHW


# ------------------------------ pure-JAX ref ---------------------------------

def ref_forward(x_nchw, params, stride):
    x = jnp.transpose(x_nchw, (0, 2, 3, 1))
    dn = ("NHWC", "HWIO", "NHWC")

    def bn(h, gamma, beta):
        mean = h.mean(axis=(0, 1, 2))
        var = ((h - mean) ** 2).mean(axis=(0, 1, 2))
        return (h - mean) * lax.rsqrt(var + EPS) * gamma + beta

    h = jax.nn.relu(bn(x, params["gamma1"], params["beta1"]))
    h = lax.conv_general_dilated(h, params["w1"], (stride, stride),
                                 ((1, 1), (1, 1)), dimension_numbers=dn)
    h = jax.nn.relu(bn(h, params["gamma2"], params["beta2"]))
    h = lax.conv_general_dilated(h, params["w2"], (1, 1),
                                 ((1, 1), (1, 1)), dimension_numbers=dn)
    Cin, Cout = x.shape[-1], params["w1"].shape[-1]
    if Cin != Cout or stride != 1:
        sc = lax.conv_general_dilated(x, params["wsc"], (stride, stride),
                                      ((0, 0), (0, 0)), dimension_numbers=dn)
    else:
        sc = x
    return jnp.transpose(h + sc, (0, 3, 1, 2))


# ---------------------------------- main --------------------------------------

if __name__ == "__main__":
    key = jax.random.PRNGKey(0)
    kx, kp, kp2 = jax.random.split(key, 3)

    # Config A: projection shortcut (Cin != Cout, stride 2).
    N, Cin, H, W, Cout, stride = 2, 4, 16, 16, 8, 2
    x = jax.random.normal(kx, (N, Cin, H, W), jnp.float32)
    params = init_basic_block_params(kp, Cin, Cout)
    ref = jax.block_until_ready(ref_forward(x, params, stride))

    out_f32 = jax.block_until_ready(
        basic_block_forward(x, params, stride, conv_dtype=jnp.float32))
    assert out_f32.shape == (N, Cout, H // stride, W // stride), out_f32.shape
    err = float(np.max(np.abs(np.asarray(out_f32) - np.asarray(ref))))
    assert np.allclose(np.asarray(out_f32), np.asarray(ref),
                       rtol=5e-4, atol=5e-4), err

    out_bf16 = jax.block_until_ready(
        basic_block_forward(x, params, stride, conv_dtype=jnp.bfloat16))
    err = float(np.max(np.abs(np.asarray(out_bf16) - np.asarray(ref))))
    assert np.allclose(np.asarray(out_bf16), np.asarray(ref),
                       rtol=1e-1, atol=1e-1), err

    # Config B: identity shortcut (Cin == Cout, stride 1) -> elementwise-add path.
    Cb = 8
    xb = jax.random.normal(kx, (N, Cb, H, W), jnp.float32)
    params_b = init_basic_block_params(kp2, Cb, Cb)
    ref_b = jax.block_until_ready(ref_forward(xb, params_b, 1))
    out_b = jax.block_until_ready(
        basic_block_forward(xb, params_b, 1, conv_dtype=jnp.float32))
    assert out_b.shape == (N, Cb, H, W), out_b.shape
    errb = float(np.max(np.abs(np.asarray(out_b) - np.asarray(ref_b))))
    assert np.allclose(np.asarray(out_b), np.asarray(ref_b),
                       rtol=5e-4, atol=5e-4), errb

    print("KERNEL_OK")
</pallas_src>

<mosaic_0001>
module attributes {stable_mosaic.version = 11 : i64} {
  func.func @kernel(%arg0: i32, %arg1: memref<1x362x4xf32, #tpu.memory_space<vmem>>, %arg2: memref<362x1xf32, #tpu.memory_space<vmem>>, %arg3: memref<1x4xf32, #tpu.memory_space<vmem>>, %arg4: memref<1x4xf32, #tpu.memory_space<vmem>>, %arg5: memref<9x4x128xf32, #tpu.memory_space<vmem>>, %arg6: memref<1x324x128xf32, #tpu.memory_space<vmem>>, %arg7: memref<362x4xf32, #tpu.memory_space<vmem>>) attributes {dimension_semantics = [#tpu.dimension_semantics<parallel>], iteration_bounds = array<i64: 2>, scalar_prefetch = 0 : i64, scratch_operands = 1 : i64, tpu.core_type = #tpu.core_type<tc>, window_params = [{transform_indices = @transform_0, window_bounds = array<i64: 1, 362, 4>}, {pipeline_mode = #tpu.pipeline_mode<synchronous>, transform_indices = @transform_1, window_bounds = array<i64: 362, 1>}, {pipeline_mode = #tpu.pipeline_mode<synchronous>, transform_indices = @transform_2, window_bounds = array<i64: 1, 4>}, {pipeline_mode = #tpu.pipeline_mode<synchronous>, transform_indices = @transform_3, window_bounds = array<i64: 1, 4>}, {pipeline_mode = #tpu.pipeline_mode<synchronous>, transform_indices = @transform_4, window_bounds = array<i64: 9, 4, 128>}, {transform_indices = @transform_5, window_bounds = array<i64: 1, 324, 128>}]} {
    %c0 = arith.constant 0 : index
    %c0_0 = arith.constant 0 : index
    %c0_1 = arith.constant 0 : index
    %0 = vector.load %arg1[%c0, %c0_0, %c0_1] : memref<1x362x4xf32, #tpu.memory_space<vmem>>, vector<1x362x4xf32>
    %1 = vector.shape_cast %0 : vector<1x362x4xf32> to vector<362x4xf32>
    %c0_2 = arith.constant 0 : index
    %c0_3 = arith.constant 0 : index
    %2 = vector.load %arg3[%c0_2, %c0_3] : memref<1x4xf32, #tpu.memory_space<vmem>>, vector<1x4xf32>
    %3 = vector.broadcast %2 : vector<1x4xf32> to vector<362x4xf32>
    %4 = arith.mulf %1, %3 : vector<362x4xf32>
    %c0_4 = arith.constant 0 : index
    %c0_5 = arith.constant 0 : index
    %5 = vector.load %arg4[%c0_4, %c0_5] : memref<1x4xf32, #tpu.memory_space<vmem>>, vector<1x4xf32>
    %6 = vector.broadcast %5 : vector<1x4xf32> to vector<362x4xf32>
    %7 = arith.addf %4, %6 : vector<362x4xf32>
    %cst = arith.constant 0.000000e+00 : f32
    %8 = vector.broadcast %cst : f32 to vector<362x4xf32>
    %9 = arith.maximumf %7, %8 : vector<362x4xf32>
    %c0_6 = arith.constant 0 : index
    %c0_7 = arith.constant 0 : index
    %10 = vector.load %arg2[%c0_6, %c0_7] : memref<362x1xf32, #tpu.memory_space<vmem>>, vector<362x1xf32>
    %11 = vector.broadcast %10 : vector<362x1xf32> to vector<362x4xf32>
    %12 = arith.mulf %9, %11 : vector<362x4xf32>
    %c0_8 = arith.constant 0 : index
    %c0_9 = arith.constant 0 : index
    %13 = vector.load %arg7[%c0_8, %c0_9] : memref<362x4xf32, #tpu.memory_space<vmem>>, vector<362x4xf32>
    tpu.vector_store %arg7[%c0_8, %c0_9], %12 {strides = array<i32>} : memref<362x4xf32, #tpu.memory_space<vmem>>, vector<362x4xf32>,
    %cst_10 = arith.constant 0.000000e+00 : f32
    %14 = vector.broadcast %cst_10 : f32 to vector<324x128xf32>
    %c0_11 = arith.constant 0 : index
    %c0_12 = arith.constant 0 : index
    %15 = vector.load %arg7[%c0_11, %c0_12] : memref<362x4xf32, #tpu.memory_space<vmem>>, vector<324x4xf32>
    %c0_13 = arith.constant 0 : index
    %c0_14 = arith.constant 0 : index
    %c0_15 = arith.constant 0 : index
    %16 = vector.load %arg5[%c0_13, %c0_14, %c0_15] : memref<9x4x128xf32, #tpu.memory_space<vmem>>, vector<1x4x128xf32>
    %17 = vector.shape_cast %16 : vector<1x4x128xf32> to vector<4x128xf32>
    %cst_16 = arith.constant dense<0.000000e+00> : vector<324x128xf32>
    %18 = tpu.matmul %15, %17, %cst_16 {dimension_numbers = #tpu.dot_dimension_numbers<[1], [0], [0], [1], [0, 0, 1, 1], [], []>} : vector<324x4xf32>, vector<4x128xf32>, vector<324x128xf32> -> vector<324x128xf32>
    %19 = arith.addf %14, %18 : vector<324x128xf32>
    %c1 = arith.constant 1 : index
    %c0_17 = arith.constant 0 : index
    %20 = vector.load %arg7[%c1, %c0_17] : memref<362x4xf32, #tpu.memory_space<vmem>>, vector<324x4xf32>
    %c1_18 = arith.constant 1 : index
    %c0_19 = arith.constant 0 : index
    %c0_20 = arith.constant 0 : index
    %21 = vector.load %arg5[%c1_18, %c0_19, %c0_20] : memref<9x4x128xf32, #tpu.memory_space<vmem>>, vector<1x4x128xf32>
    %22 = vector.shape_cast %21 : vector<1x4x128xf32> to vector<4x128xf32>
    %cst_21 = arith.constant dense<0.000000e+00> : vector<324x128xf32>
    %23 = tpu.matmul %20, %22, %cst_21 {dimension_numbers = #tpu.dot_dimension_numbers<[1], [0], [0], [1], [0, 0, 1, 1], [], []>} : vector<324x4xf32>, vector<4x128xf32>, vector<324x128xf32> -> vector<324x128xf32>
    %24 = arith.addf %19, %23 : vector<324x128xf32>
    %c2 = arith.constant 2 : index
    %c0_22 = arith.constant 0 : index
    %25 = vector.load %arg7[%c2, %c0_22] : memref<362x4xf32, #tpu.memory_space<vmem>>, vector<324x4xf32>
    %c2_23 = arith.constant 2 : index
    %c0_24 = arith.constant 0 : index
    %c0_25 = arith.constant 0 : index
    %26 = vector.load %arg5[%c2_23, %c0_24, %c0_25] : memref<9x4x128xf32, #tpu.memory_space<vmem>>, vector<1x4x128xf32>
    %27 = vector.shape_cast %26 : vector<1x4x128xf32> to vector<4x128xf32>
    %cst_26 = arith.constant dense<0.000000e+00> : vector<324x128xf32>
    %28 = tpu.matmul %25, %27, %cst_26 {dimension_numbers = #tpu.dot_dimension_numbers<[1], [0], [0], [1], [0, 0, 1, 1], [], []>} : vector<324x4xf32>, vector<4x128xf32>, vector<324x128xf32> -> vector<324x128xf32>
    %29 = arith.addf %24, %28 : vector<324x128xf32>
    %c18 = arith.constant 18 : index
    %c0_27 = arith.constant 0 : index
    %30 = vector.load %arg7[%c18, %c0_27] : memref<362x4xf32, #tpu.memory_space<vmem>>, vector<324x4xf32>
    %c3 = arith.constant 3 : index
    %c0_28 = arith.constant 0 : index
    %c0_29 = arith.constant 0 : index
    %31 = vector.load %arg5[%c3, %c0_28, %c0_29] : memref<9x4x128xf32, #tpu.memory_space<vmem>>, vector<1x4x128xf32>
    %32 = vector.shape_cast %31 : vector<1x4x128xf32> to vector<4x128xf32>
    %cst_30 = arith.constant dense<0.000000e+00> : vector<324x128xf32>
    %33 = tpu.matmul %30, %32, %cst_30 {dimension_numbers = #tpu.dot_dimension_numbers<[1], [0], [0], [1], [0, 0, 1, 1], [], []>} : vector<324x4xf32>, vector<4x128xf32>, vector<324x128xf32> -> vector<324x128xf32>
    %34 = arith.addf %29, %33 : vector<324x128xf32>
    %c19 = arith.constant 19 : index
    %c0_31 = arith.constant 0 : index
    %35 = vector.load %arg7[%c19, %c0_31] : memref<362x4xf32, #tpu.memory_space<vmem>>, vector<324x4xf32>
    %c4 = arith.constant 4 : index
    %c0_32 = arith.constant 0 : index
    %c0_33 = arith.constant 0 : index
    %36 = vector.load %arg5[%c4, %c0_32, %c0_33] : memref<9x4x128xf32, #tpu.memory_space<vmem>>, vector<1x4x128xf32>
    %37 = vector.shape_cast %36 : vector<1x4x128xf32> to vector<4x128xf32>
    %cst_34 = arith.constant dense<0.000000e+00> : vector<324x128xf32>
    %38 = tpu.matmul %35, %37, %cst_34 {dimension_numbers = #tpu.dot_dimension_numbers<[1], [0], [0], [1], [0, 0, 1, 1], [], []>} : vector<324x4xf32>, vector<4x128xf32>, vector<324x128xf32> -> vector<324x128xf32>
    %39 = arith.addf %34, %38 : vector<324x128xf32>
    %c20 = arith.constant 20 : index
    %c0_35 = arith.constant 0 : index
    %40 = vector.load %arg7[%c20, %c0_35] : memref<362x4xf32, #tpu.memory_space<vmem>>, vector<324x4xf32>
    %c5 = arith.constant 5 : index
    %c0_36 = arith.constant 0 : index
    %c0_37 = arith.constant 0 : index
    %41 = vector.load %arg5[%c5, %c0_36, %c0_37] : memref<9x4x128xf32, #tpu.memory_space<vmem>>, vector<1x4x128xf32>
    %42 = vector.shape_cast %41 : vector<1x4x128xf32> to vector<4x128xf32>
    %cst_38 = arith.constant dense<0.000000e+00> : vector<324x128xf32>
    %43 = tpu.matmul %40, %42, %cst_38 {dimension_numbers = #tpu.dot_dimension_numbers<[1], [0], [0], [1], [0, 0, 1, 1], [], []>} : vector<324x4xf32>, vector<4x128xf32>, vector<324x128xf32> -> vector<324x128xf32>
    %44 = arith.addf %39, %43 : vector<324x128xf32>
    %c36 = arith.constant 36 : index
    %c0_39 = arith.constant 0 : index
    %45 = vector.load %arg7[%c36, %c0_39] : memref<362x4xf32, #tpu.memory_space<vmem>>, vector<324x4xf32>
    %c6 = arith.constant 6 : index
    %c0_40 = arith.constant 0 : index
    %c0_41 = arith.constant 0 : index
    %46 = vector.load %arg5[%c6, %c0_40, %c0_41] : memref<9x4x128xf32, #tpu.memory_space<vmem>>, vector<1x4x128xf32>
    %47 = vector.shape_cast %46 : vector<1x4x128xf32> to vector<4x128xf32>
    %cst_42 = arith.constant dense<0.000000e+00> : vector<324x128xf32>
    %48 = tpu.matmul %45, %47, %cst_42 {dimension_numbers = #tpu.dot_dimension_numbers<[1], [0], [0], [1], [0, 0, 1, 1], [], []>} : vector<324x4xf32>, vector<4x128xf32>, vector<324x128xf32> -> vector<324x128xf32>
    %49 = arith.addf %44, %48 : vector<324x128xf32>
    %c37 = arith.constant 37 : index
    %c0_43 = arith.constant 0 : index
    %50 = vector.load %arg7[%c37, %c0_43] : memref<362x4xf32, #tpu.memory_space<vmem>>, vector<324x4xf32>
    %c7 = arith.constant 7 : index
    %c0_44 = arith.constant 0 : index
    %c0_45 = arith.constant 0 : index
    %51 = vector.load %arg5[%c7, %c0_44, %c0_45] : memref<9x4x128xf32, #tpu.memory_space<vmem>>, vector<1x4x128xf32>
    %52 = vector.shape_cast %51 : vector<1x4x128xf32> to vector<4x128xf32>
    %cst_46 = arith.constant dense<0.000000e+00> : vector<324x128xf32>
    %53 = tpu.matmul %50, %52, %cst_46 {dimension_numbers = #tpu.dot_dimension_numbers<[1], [0], [0], [1], [0, 0, 1, 1], [], []>} : vector<324x4xf32>, vector<4x128xf32>, vector<324x128xf32> -> vector<324x128xf32>
    %54 = arith.addf %49, %53 : vector<324x128xf32>
    %c38 = arith.constant 38 : index
    %c0_47 = arith.constant 0 : index
    %55 = vector.load %arg7[%c38, %c0_47] : memref<362x4xf32, #tpu.memory_space<vmem>>, vector<324x4xf32>
    %c8 = arith.constant 8 : index
    %c0_48 = arith.constant 0 : index
    %c0_49 = arith.constant 0 : index
    %56 = vector.load %arg5[%c8, %c0_48, %c0_49] : memref<9x4x128xf32, #tpu.memory_space<vmem>>, vector<1x4x128xf32>
    %57 = vector.shape_cast %56 : vector<1x4x128xf32> to vector<4x128xf32>
    %cst_50 = arith.constant dense<0.000000e+00> : vector<324x128xf32>
    %58 = tpu.matmul %55, %57, %cst_50 {dimension_numbers = #tpu.dot_dimension_numbers<[1], [0], [0], [1], [0, 0, 1, 1], [], []>} : vector<324x4xf32>, vector<4x128xf32>, vector<324x128xf32> -> vector<324x128xf32>
    %59 = arith.addf %54, %58 : vector<324x128xf32>
    %c0_51 = arith.constant 0 : index
    %c0_52 = arith.constant 0 : index
    %c0_53 = arith.constant 0 : index
    %60 = vector.load %arg6[%c0_51, %c0_52, %c0_53] : memref<1x324x128xf32, #tpu.memory_space<vmem>>, vector<1x324x128xf32>
    %61 = vector.shape_cast %60 : vector<1x324x128xf32> to vector<324x128xf32>
    %62 = vector.shape_cast %59 : vector<324x128xf32> to vector<1x324x128xf32>
    tpu.vector_store %arg6[%c0_51, %c0_52, %c0_53], %62 {strides = array<i32>} : memref<1x324x128xf32, #tpu.memory_space<vmem>>, vector<1x324x128xf32>,
    return
  }
  func.func @transform_0(%arg0: i32) -> (i32, i32, i32) {
    %c0_i32 = arith.constant 0 : i32
    %c0_i32_0 = arith.constant 0 : i32
    %c0_i32_1 = arith.constant 0 : i32
    return %arg0, %c0_i32, %c0_i32_0 : i32, i32, i32
  }
  func.func @transform_1(%arg0: i32) -> (i32, i32) {
    %c0_i32 = arith.constant 0 : i32
    %c0_i32_0 = arith.constant 0 : i32
    %c0_i32_1 = arith.constant 0 : i32
    return %c0_i32, %c0_i32_0 : i32, i32
  }
  func.func @transform_2(%arg0: i32) -> (i32, i32) {
    %c0_i32 = arith.constant 0 : i32
    %c0_i32_0 = arith.constant 0 : i32
    %c0_i32_1 = arith.constant 0 : i32
    return %c0_i32, %c0_i32_0 : i32, i32
  }
  func.func @transform_3(%arg0: i32) -> (i32, i32) {
    %c0_i32 = arith.constant 0 : i32
    %c0_i32_0 = arith.constant 0 : i32
    %c0_i32_1 = arith.constant 0 : i32
    return %c0_i32, %c0_i32_0 : i32, i32
  }
  func.func @transform_4(%arg0: i32) -> (i32, i32, i32) {
    %c0_i32 = arith.constant 0 : i32
    %c0_i32_0 = arith.constant 0 : i32
    %c0_i32_1 = arith.constant 0 : i32
    %c0_i32_2 = arith.constant 0 : i32
    return %c0_i32, %c0_i32_0, %c0_i32_1 : i32, i32, i32
  }
  func.func @transform_5(%arg0: i32) -> (i32, i32, i32) {
    %c0_i32 = arith.constant 0 : i32
    %c0_i32_0 = arith.constant 0 : i32
    %c0_i32_1 = arith.constant 0 : i32
    return %arg0, %c0_i32, %c0_i32_0 : i32, i32, i32
  }
}

module attributes {stable_mosaic.version = 11 : i64} {
  func.func @kernel(%arg0: i32, %arg1: memref<1x122x128xf32, #tpu.memory_space<vmem>>, %arg2: memref<122x1xf32, #tpu.memory_space<vmem>>, %arg3: memref<1x128xf32, #tpu.memory_space<vmem>>, %arg4: memref<1x128xf32, #tpu.memory_space<vmem>>, %arg5: memref<9x128x128xf32, #tpu.memory_space<vmem>>, %arg6: memref<1x100x4xf32, #tpu.memory_space<vmem>>, %arg7: memref<4x128xf32, #tpu.memory_space<vmem>>, %arg8: memref<1x100x128xf32, #tpu.memory_space<vmem>>, %arg9: memref<122x128xf32, #tpu.memory_space<vmem>>) attributes {dimension_semantics = [#tpu.dimension_semantics<parallel>], iteration_bounds = array<i64: 2>, scalar_prefetch = 0 : i64, scratch_operands = 1 : i64, tpu.core_type = #tpu.core_type<tc>, window_params = [{transform_indices = @transform_0, window_bounds = array<i64: 1, 122, 128>}, {pipeline_mode = #tpu.pipeline_mode<synchronous>, transform_indices = @transform_1, window_bounds = array<i64: 122, 1>}, {pipeline_mode = #tpu.pipeline_mode<synchronous>, transform_indices = @transform_2, window_bounds = array<i64: 1, 128>}, {pipeline_mode = #tpu.pipeline_mode<synchronous>, transform_indices = @transform_3, window_bounds = array<i64: 1, 128>}, {pipeline_mode = #tpu.pipeline_mode<synchronous>, transform_indices = @transform_4, window_bounds = array<i64: 9, 128, 128>}, {transform_indices = @transform_5, window_bounds = array<i64: 1, 100, 4>}, {pipeline_mode = #tpu.pipeline_mode<synchronous>, transform_indices = @transform_6, window_bounds = array<i64: 4, 128>}, {transform_indices = @transform_7, window_bounds = array<i64: 1, 100, 128>}]} {
    %c0 = arith.constant 0 : index
    %c0_0 = arith.constant 0 : index
    %c0_1 = arith.constant 0 : index
    %0 = vector.load %arg1[%c0, %c0_0, %c0_1] : memref<1x122x128xf32, #tpu.memory_space<vmem>>, vector<1x122x128xf32>
    %1 = vector.shape_cast %0 : vector<1x122x128xf32> to vector<122x128xf32>
    %c0_2 = arith.constant 0 : index
    %c0_3 = arith.constant 0 : index
    %2 = vector.load %arg3[%c0_2, %c0_3] : memref<1x128xf32, #tpu.memory_space<vmem>>, vector<1x128xf32>
    %3 = vector.broadcast %2 : vector<1x128xf32> to vector<122x128xf32>
    %4 = arith.mulf %1, %3 : vector<122x128xf32>
    %c0_4 = arith.constant 0 : index
    %c0_5 = arith.constant 0 : index
    %5 = vector.load %arg4[%c0_4, %c0_5] : memref<1x128xf32, #tpu.memory_space<vmem>>, vector<1x128xf32>
    %6 = vector.broadcast %5 : vector<1x128xf32> to vector<122x128xf32>
    %7 = arith.addf %4, %6 : vector<122x128xf32>
    %cst = arith.constant 0.000000e+00 : f32
    %8 = vector.broadcast %cst : f32 to vector<122x128xf32>
    %9 = arith.maximumf %7, %8 : vector<122x128xf32>
    %c0_6 = arith.constant 0 : index
    %c0_7 = arith.constant 0 : index
    %10 = vector.load %arg2[%c0_6, %c0_7] : memref<122x1xf32, #tpu.memory_space<vmem>>, vector<122x1xf32>
    %11 = vector.broadcast %10 : vector<122x1xf32> to vector<122x128xf32>
    %12 = arith.mulf %9, %11 : vector<122x128xf32>
    %c0_8 = arith.constant 0 : index
    %c0_9 = arith.constant 0 : index
    %13 = vector.load %arg9[%c0_8, %c0_9] : memref<122x128xf32, #tpu.memory_space<vmem>>, vector<122x128xf32>
    tpu.vector_store %arg9[%c0_8, %c0_9], %12 {strides = array<i32>} : memref<122x128xf32, #tpu.memory_space<vmem>>, vector<122x128xf32>,
    %cst_10 = arith.constant 0.000000e+00 : f32
    %14 = vector.broadcast %cst_10 : f32 to vector<100x128xf32>
    %c0_11 = arith.constant 0 : index
    %c0_12 = arith.constant 0 : index
    %15 = vector.load %arg9[%c0_11, %c0_12] : memref<122x128xf32, #tpu.memory_space<vmem>>, vector<100x128xf32>
    %c0_13 = arith.constant 0 : index
    %c0_14 = arith.constant 0 : index
    %c0_15 = arith.constant 0 : index
    %16 = vector.load %arg5[%c0_13, %c0_14, %c0_15] : memref<9x128x128xf32, #tpu.memory_space<vmem>>, vector<1x128x128xf32>
    %17 = vector.shape_cast %16 : vector<1x128x128xf32> to vector<128x128xf32>
    %cst_16 = arith.constant dense<0.000000e+00> : vector<100x128xf32>
    %18 = tpu.matmul %15, %17, %cst_16 {dimension_numbers = #tpu.dot_dimension_numbers<[1], [0], [0], [1], [0, 0, 1, 1], [], []>} : vector<100x128xf32>, vector<128x128xf32>, vector<100x128xf32> -> vector<100x128xf32>
    %19 = arith.addf %14, %18 : vector<100x128xf32>
    %c1 = arith.constant 1 : index
    %c0_17 = arith.constant 0 : index
    %20 = vector.load %arg9[%c1, %c0_17] : memref<122x128xf32, #tpu.memory_space<vmem>>, vector<100x128xf32>
    %c1_18 = arith.constant 1 : index
    %c0_19 = arith.constant 0 : index
    %c0_20 = arith.constant 0 : index
    %21 = vector.load %arg5[%c1_18, %c0_19, %c0_20] : memref<9x128x128xf32, #tpu.memory_space<vmem>>, vector<1x128x128xf32>
    %22 = vector.shape_cast %21 : vector<1x128x128xf32> to vector<128x128xf32>
    %cst_21 = arith.constant dense<0.000000e+00> : vector<100x128xf32>
    %23 = tpu.matmul %20, %22, %cst_21 {dimension_numbers = #tpu.dot_dimension_numbers<[1], [0], [0], [1], [0, 0, 1, 1], [], []>} : vector<100x128xf32>, vector<128x128xf32>, vector<100x128xf32> -> vector<100x128xf32>
    %24 = arith.addf %19, %23 : vector<100x128xf32>
    %c2 = arith.constant 2 : index
    %c0_22 = arith.constant 0 : index
    %25 = vector.load %arg9[%c2, %c0_22] : memref<122x128xf32, #tpu.memory_space<vmem>>, vector<100x128xf32>
    %c2_23 = arith.constant 2 : index
    %c0_24 = arith.constant 0 : index
    %c0_25 = arith.constant 0 : index
    %26 = vector.load %arg5[%c2_23, %c0_24, %c0_25] : memref<9x128x128xf32, #tpu.memory_space<vmem>>, vector<1x128x128xf32>
    %27 = vector.shape_cast %26 : vector<1x128x128xf32> to vector<128x128xf32>
    %cst_26 = arith.constant dense<0.000000e+00> : vector<100x128xf32>
    %28 = tpu.matmul %25, %27, %cst_26 {dimension_numbers = #tpu.dot_dimension_numbers<[1], [0], [0], [1], [0, 0, 1, 1], [], []>} : vector<100x128xf32>, vector<128x128xf32>, vector<100x128xf32> -> vector<100x128xf32>
    %29 = arith.addf %24, %28 : vector<100x128xf32>
    %c10 = arith.constant 10 : index
    %c0_27 = arith.constant 0 : index
    %30 = vector.load %arg9[%c10, %c0_27] : memref<122x128xf32, #tpu.memory_space<vmem>>, vector<100x128xf32>
    %c3 = arith.constant 3 : index
    %c0_28 = arith.constant 0 : index
    %c0_29 = arith.constant 0 : index
    %31 = vector.load %arg5[%c3, %c0_28, %c0_29] : memref<9x128x128xf32, #tpu.memory_space<vmem>>, vector<1x128x128xf32>
    %32 = vector.shape_cast %31 : vector<1x128x128xf32> to vector<128x128xf32>
    %cst_30 = arith.constant dense<0.000000e+00> : vector<100x128xf32>
    %33 = tpu.matmul %30, %32, %cst_30 {dimension_numbers = #tpu.dot_dimension_numbers<[1], [0], [0], [1], [0, 0, 1, 1], [], []>} : vector<100x128xf32>, vector<128x128xf32>, vector<100x128xf32> -> vector<100x128xf32>
    %34 = arith.addf %29, %33 : vector<100x128xf32>
    %c11 = arith.constant 11 : index
    %c0_31 = arith.constant 0 : index
    %35 = vector.load %arg9[%c11, %c0_31] : memref<122x128xf32, #tpu.memory_space<vmem>>, vector<100x128xf32>
    %c4 = arith.constant 4 : index
    %c0_32 = arith.constant 0 : index
    %c0_33 = arith.constant 0 : index
    %36 = vector.load %arg5[%c4, %c0_32, %c0_33] : memref<9x128x128xf32, #tpu.memory_space<vmem>>, vector<1x128x128xf32>
    %37 = vector.shape_cast %36 : vector<1x128x128xf32> to vector<128x128xf32>
    %cst_34 = arith.constant dense<0.000000e+00> : vector<100x128xf32>
    %38 = tpu.matmul %35, %37, %cst_34 {dimension_numbers = #tpu.dot_dimension_numbers<[1], [0], [0], [1], [0, 0, 1, 1], [], []>} : vector<100x128xf32>, vector<128x128xf32>, vector<100x128xf32> -> vector<100x128xf32>
    %39 = arith.addf %34, %38 : vector<100x128xf32>
    %c12 = arith.constant 12 : index
    %c0_35 = arith.constant 0 : index
    %40 = vector.load %arg9[%c12, %c0_35] : memref<122x128xf32, #tpu.memory_space<vmem>>, vector<100x128xf32>
    %c5 = arith.constant 5 : index
    %c0_36 = arith.constant 0 : index
    %c0_37 = arith.constant 0 : index
    %41 = vector.load %arg5[%c5, %c0_36, %c0_37] : memref<9x128x128xf32, #tpu.memory_space<vmem>>, vector<1x128x128xf32>
    %42 = vector.shape_cast %41 : vector<1x128x128xf32> to vector<128x128xf32>
    %cst_38 = arith.constant dense<0.000000e+00> : vector<100x128xf32>
    %43 = tpu.matmul %40, %42, %cst_38 {dimension_numbers = #tpu.dot_dimension_numbers<[1], [0], [0], [1], [0, 0, 1, 1], [], []>} : vector<100x128xf32>, vector<128x128xf32>, vector<100x128xf32> -> vector<100x128xf32>
    %44 = arith.addf %39, %43 : vector<100x128xf32>
    %c20 = arith.constant 20 : index
    %c0_39 = arith.constant 0 : index
    %45 = vector.load %arg9[%c20, %c0_39] : memref<122x128xf32, #tpu.memory_space<vmem>>, vector<100x128xf32>
    %c6 = arith.constant 6 : index
    %c0_40 = arith.constant 0 : index
    %c0_41 = arith.constant 0 : index
    %46 = vector.load %arg5[%c6, %c0_40, %c0_41] : memref<9x128x128xf32, #tpu.memory_space<vmem>>, vector<1x128x128xf32>
    %47 = vector.shape_cast %46 : vector<1x128x128xf32> to vector<128x128xf32>
    %cst_42 = arith.constant dense<0.000000e+00> : vector<100x128xf32>
    %48 = tpu.matmul %45, %47, %cst_42 {dimension_numbers = #tpu.dot_dimension_numbers<[1], [0], [0], [1], [0, 0, 1, 1], [], []>} : vector<100x128xf32>, vector<128x128xf32>, vector<100x128xf32> -> vector<100x128xf32>
    %49 = arith.addf %44, %48 : vector<100x128xf32>
    %c21 = arith.constant 21 : index
    %c0_43 = arith.constant 0 : index
    %50 = vector.load %arg9[%c21, %c0_43] : memref<122x128xf32, #tpu.memory_space<vmem>>, vector<100x128xf32>
    %c7 = arith.constant 7 : index
    %c0_44 = arith.constant 0 : index
    %c0_45 = arith.constant 0 : index
    %51 = vector.load %arg5[%c7, %c0_44, %c0_45] : memref<9x128x128xf32, #tpu.memory_space<vmem>>, vector<1x128x128xf32>
    %52 = vector.shape_cast %51 : vector<1x128x128xf32> to vector<128x128xf32>
    %cst_46 = arith.constant dense<0.000000e+00> : vector<100x128xf32>
    %53 = tpu.matmul %50, %52, %cst_46 {dimension_numbers = #tpu.dot_dimension_numbers<[1], [0], [0], [1], [0, 0, 1, 1], [], []>} : vector<100x128xf32>, vector<128x128xf32>, vector<100x128xf32> -> vector<100x128xf32>
    %54 = arith.addf %49, %53 : vector<100x128xf32>
    %c22 = arith.constant 22 : index
    %c0_47 = arith.constant 0 : index
    %55 = vector.load %arg9[%c22, %c0_47] : memref<122x128xf32, #tpu.memory_space<vmem>>, vector<100x128xf32>
    %c8 = arith.constant 8 : index
    %c0_48 = arith.constant 0 : index
    %c0_49 = arith.constant 0 : index
    %56 = vector.load %arg5[%c8, %c0_48, %c0_49] : memref<9x128x128xf32, #tpu.memory_space<vmem>>, vector<1x128x128xf32>
    %57 = vector.shape_cast %56 : vector<1x128x128xf32> to vector<128x128xf32>
    %cst_50 = arith.constant dense<0.000000e+00> : vector<100x128xf32>
    %58 = tpu.matmul %55, %57, %cst_50 {dimension_numbers = #tpu.dot_dimension_numbers<[1], [0], [0], [1], [0, 0, 1, 1], [], []>} : vector<100x128xf32>, vector<128x128xf32>, vector<100x128xf32> -> vector<100x128xf32>
    %59 = arith.addf %54, %58 : vector<100x128xf32>
    %c0_51 = arith.constant 0 : index
    %c0_52 = arith.constant 0 : index
    %c0_53 = arith.constant 0 : index
    %60 = vector.load %arg6[%c0_51, %c0_52, %c0_53] : memref<1x100x4xf32, #tpu.memory_space<vmem>>, vector<1x100x4xf32>
    %61 = vector.shape_cast %60 : vector<1x100x4xf32> to vector<100x4xf32>
    %c0_54 = arith.constant 0 : index
    %c0_55 = arith.constant 0 : index
    %62 = vector.load %arg7[%c0_54, %c0_55] : memref<4x128xf32, #tpu.memory_space<vmem>>, vector<4x128xf32>
    %cst_56 = arith.constant dense<0.000000e+00> : vector<100x128xf32>
    %63 = tpu.matmul %61, %62, %cst_56 {dimension_numbers = #tpu.dot_dimension_numbers<[1], [0], [0], [1], [0, 0, 1, 1], [], []>} : vector<100x4xf32>, vector<4x128xf32>, vector<100x128xf32> -> vector<100x128xf32>
    %64 = arith.addf %59, %63 : vector<100x128xf32>
    %c0_57 = arith.constant 0 : index
    %c0_58 = arith.constant 0 : index
    %c0_59 = arith.constant 0 : index
    %65 = vector.load %arg8[%c0_57, %c0_58, %c0_59] : memref<1x100x128xf32, #tpu.memory_space<vmem>>, vector<1x100x128xf32>
    %66 = vector.shape_cast %65 : vector<1x100x128xf32> to vector<100x128xf32>
    %67 = vector.shape_cast %64 : vector<100x128xf32> to vector<1x100x128xf32>
    tpu.vector_store %arg8[%c0_57, %c0_58, %c0_59], %67 {strides = array<i32>} : memref<1x100x128xf32, #tpu.memory_space<vmem>>, vector<1x100x128xf32>,
    return
  }
  func.func @transform_0(%arg0: i32) -> (i32, i32, i32) {
    %c0_i32 = arith.constant 0 : i32
    %c0_i32_0 = arith.constant 0 : i32
    %c0_i32_1 = arith.constant 0 : i32
    return %arg0, %c0_i32, %c0_i32_0 : i32, i32, i32
  }
  func.func @transform_1(%arg0: i32) -> (i32, i32) {
    %c0_i32 = arith.constant 0 : i32
    %c0_i32_0 = arith.constant 0 : i32
    %c0_i32_1 = arith.constant 0 : i32
    return %c0_i32, %c0_i32_0 : i32, i32
  }
  func.func @transform_2(%arg0: i32) -> (i32, i32) {
    %c0_i32 = arith.constant 0 : i32
    %c0_i32_0 = arith.constant 0 : i32
    %c0_i32_1 = arith.constant 0 : i32
    return %c0_i32, %c0_i32_0 : i32, i32
  }
  func.func @transform_3(%arg0: i32) -> (i32, i32) {
    %c0_i32 = arith.constant 0 : i32
    %c0_i32_0 = arith.constant 0 : i32
    %c0_i32_1 = arith.constant 0 : i32
    return %c0_i32, %c0_i32_0 : i32, i32
  }
  func.func @transform_4(%arg0: i32) -> (i32, i32, i32) {
    %c0_i32 = arith.constant 0 : i32
    %c0_i32_0 = arith.constant 0 : i32
    %c0_i32_1 = arith.constant 0 : i32
    %c0_i32_2 = arith.constant 0 : i32
    return %c0_i32, %c0_i32_0, %c0_i32_1 : i32, i32, i32
  }
  func.func @transform_5(%arg0: i32) -> (i32, i32, i32) {
    %c0_i32 = arith.constant 0 : i32
    %c0_i32_0 = arith.constant 0 : i32
    %c0_i32_1 = arith.constant 0 : i32
    return %arg0, %c0_i32, %c0_i32_0 : i32, i32, i32
  }
  func.func @transform_6(%arg0: i32) -> (i32, i32) {
    %c0_i32 = arith.constant 0 : i32
    %c0_i32_0 = arith.constant 0 : i32
    %c0_i32_1 = arith.constant 0 : i32
    return %c0_i32, %c0_i32_0 : i32, i32
  }
  func.func @transform_7(%arg0: i32) -> (i32, i32, i32) {
    %c0_i32 = arith.constant 0 : i32
    %c0_i32_0 = arith.constant 0 : i32
    %c0_i32_1 = arith.constant 0 : i32
    return %arg0, %c0_i32, %c0_i32_0 : i32, i32, i32
  }
}

</mosaic_0001>

<llo_original>
// kernel: basic_block_forward.3
$region0: #{basic_block_forward.3}
  #allocation0 [shape = 'u32[]', space=smem, size = 0x4, offset = 0x4, fixed_abs, tag = 'smem constant byte address 0x4 - core index']
  #allocation1 [shape = 'u32[144,128]{1,0:T(1,128)}', space=vmem, size = 0x12000, scoped, tag = 'internal scratch']
  #allocation2 [shape = 'f32[122,128]{1,0:T(8,128)}', space=vmem, size = 0x10000, scoped, tag = 'scratch operand']
  %s0 = inlined_call_operand.vmem [shape: f32[2,122,128], index: 0, kind: input, shape index: {}]
  %s1 = inlined_call_operand.vmem [shape: f32[122,1], index: 1, kind: input, shape index: {}]
  %s2 = inlined_call_operand.vmem [shape: f32[1,128], index: 2, kind: input, shape index: {}]
  %s3 = inlined_call_operand.vmem [shape: f32[1,128], index: 3, kind: input, shape index: {}]
  %s4 = inlined_call_operand.vmem [shape: f32[9,128,128], index: 4, kind: input, shape index: {}]
  %s5 = inlined_call_operand.vmem [shape: f32[2,100,4], index: 5, kind: input, shape index: {}]
  %s6 = inlined_call_operand.vmem [shape: f32[4,128], index: 6, kind: input, shape index: {}]
  %s7 = inlined_call_operand.vmem [shape: f32[2,100,128], index: 7, kind: output, shape index: {}]
  %s8 = sld [smem:[#allocation0]]
  $region61: #{basic_block_forward.3} parent=0
    _
  %s10 = ssub.s32 1, %s8
  %s11 = scalar_select 0, %s10, %s8
  loop: start=0, step=1, limit=4
  $region2: #{basic_block_forward.3} parent=0 // loop_pre_header
    _
  $region3: #{basic_block_forward.3} parent=0 // loop_header
    %s13 = sphi 0, %s17
    %p14 = scmp.ge.s32.totalorder %s13, 4
    %s23 = sphi 0, %s25
    %s26 = sphi 0, %s23
    %s27 = sphi 0, %s26
    %s43 = sphi 0, %s27
    %s47 = sphi 0, %s47
    %s49 = sphi 0, %s47
    %s50 = sphi 0, %s49
    %s64 = sphi 0, %s50
    %s68 = sphi 0, %s68
    %s70 = sphi 0, %s68
    %s71 = sphi 0, %s70
    %s85 = sphi 0, %s71
    %s89 = sphi 0, %s89
    %s91 = sphi 0, %s89
    %s92 = sphi 0, %s91
    %s106 = sphi 0, %s92
    %s110 = sphi 0, %s110
    %s112 = sphi 0, %s110
    %s113 = sphi 0, %s112
    %s127 = sphi 0, %s113
    %s133 = sphi 0, %s135
    %s136 = sphi 0, %s133
    %s137 = sphi 0, %s136
    %s153 = sphi 0, %s137
    %s157 = sphi 0, %s157
    %s159 = sphi 0, %s157
    %s160 = sphi 0, %s159
    %s174 = sphi 0, %s160
    %s180 = sphi 0, %s182
    %s183 = sphi 0, %s180
    %s184 = sphi 0, %s183
    %s200 = sphi 0, %s184
  $region4: #{basic_block_forward.3} parent=0 // loop_header_branch
    %16 = sbr.rel (%p14) target = $region8
  $region5: #{basic_block_forward.3} parent=0 // loop_body
    %s18 = ssub.s32 %s13, 1
    %s19 = ssub.s32 %s13, 2
    %s20 = sadd.s32 %s13, 1
    %s21 = ssub.s32 %s13, %s20
    %p22 = scmp.eq.s32.totalorder %s21, 0
    %s24 = sadd.s32 %s23, 1
    %s25 = scalar_select %p22, %s23, %s24
    %p28 = pneg %p22
    %p29 = scmp.eq.s32.totalorder %s13, 1
    %p30 = por %p28, %p29
    %p31 = scmp.ne.s32.totalorder %s23, %s26
    %p32 = scmp.eq.s32.totalorder %s13, 0
    %p33 = por %p31, %p32
    %p34 = scmp.ne.s32.totalorder %s23, %s26
    %p35 = scmp.eq.s32.totalorder %s18, 1
    %p36 = por %p34, %p35
    %p37 = scmp.ne.s32.totalorder %s26, %s27
    %p38 = scmp.eq.s32.totalorder %s18, 0
    %p39 = por %p37, %p38
    %p40 = scmp.ne.s32.totalorder %s26, %s27
    %p41 = scmp.eq.s32.totalorder %s19, 1
    %p42 = por %p40, %p41
    %p44 = scmp.ne.s32.totalorder %s27, %s43
    %p45 = scmp.eq.s32.totalorder %s19, 0
    %p46 = por %p44, %p45
    %s48 = sadd.s32 %s47, 1
    %p51 = scmp.eq.s32.totalorder %s13, 1
    %p52 = scmp.ne.s32.totalorder %s47, %s49
    %p53 = scmp.eq.s32.totalorder %s13, 0
    %p54 = por %p52, %p53
    %p55 = scmp.ne.s32.totalorder %s47, %s49
    %p56 = scmp.eq.s32.totalorder %s18, 1
    %p57 = por %p55, %p56
    %p58 = scmp.ne.s32.totalorder %s49, %s50
    %p59 = scmp.eq.s32.totalorder %s18, 0
    %p60 = por %p58, %p59
    %p61 = scmp.ne.s32.totalorder %s49, %s50
    %p62 = scmp.eq.s32.totalorder %s19, 1
    %p63 = por %p61, %p62
    %p65 = scmp.ne.s32.totalorder %s50, %s64
    %p66 = scmp.eq.s32.totalorder %s19, 0
    %p67 = por %p65, %p66
    %s69 = sadd.s32 %s68, 1
    %p72 = scmp.eq.s32.totalorder %s13, 1
    %p73 = scmp.ne.s32.totalorder %s68, %s70
    %p74 = scmp.eq.s32.totalorder %s13, 0
    %p75 = por %p73, %p74
    %p76 = scmp.ne.s32.totalorder %s68, %s70
    %p77 = scmp.eq.s32.totalorder %s18, 1
    %p78 = por %p76, %p77
    %p79 = scmp.ne.s32.totalorder %s70, %s71
    %p80 = scmp.eq.s32.totalorder %s18, 0
    %p81 = por %p79, %p80
    %p82 = scmp.ne.s32.totalorder %s70, %s71
    %p83 = scmp.eq.s32.totalorder %s19, 1
    %p84 = por %p82, %p83
    %p86 = scmp.ne.s32.totalorder %s71, %s85
    %p87 = scmp.eq.s32.totalorder %s19, 0
    %p88 = por %p86, %p87
    %s90 = sadd.s32 %s89, 1
    %p93 = scmp.eq.s32.totalorder %s13, 1
    %p94 = scmp.ne.s32.totalorder %s89, %s91
    %p95 = scmp.eq.s32.totalorder %s13, 0
    %p96 = por %p94, %p95
    %p97 = scmp.ne.s32.totalorder %s89, %s91
    %p98 = scmp.eq.s32.totalorder %s18, 1
    %p99 = por %p97, %p98
    %p100 = scmp.ne.s32.totalorder %s91, %s92
    %p101 = scmp.eq.s32.totalorder %s18, 0
    %p102 = por %p100, %p101
    %p103 = scmp.ne.s32.totalorder %s91, %s92
    %p104 = scmp.eq.s32.totalorder %s19, 1
    %p105 = por %p103, %p104
    %p107 = scmp.ne.s32.totalorder %s92, %s106
    %p108 = scmp.eq.s32.totalorder %s19, 0
    %p109 = por %p107, %p108
    %s111 = sadd.s32 %s110, 1
    %p114 = scmp.eq.s32.totalorder %s13, 1
    %p115 = scmp.ne.s32.totalorder %s110, %s112
    %p116 = scmp.eq.s32.totalorder %s13, 0
    %p117 = por %p115, %p116
    %p118 = scmp.ne.s32.totalorder %s110, %s112
    %p119 = scmp.eq.s32.totalorder %s18, 1
    %p120 = por %p118, %p119
    %p121 = scmp.ne.s32.totalorder %s112, %s113
    %p122 = scmp.eq.s32.totalorder %s18, 0
    %p123 = por %p121, %p122
    %p124 = scmp.ne.s32.totalorder %s112, %s113
    %p125 = scmp.eq.s32.totalorder %s19, 1
    %p126 = por %p124, %p125
    %p128 = scmp.ne.s32.totalorder %s113, %s127
    %p129 = scmp.eq.s32.totalorder %s19, 0
    %p130 = por %p128, %p129
    %s131 = ssub.s32 %s13, %s20
    %p132 = scmp.eq.s32.totalorder %s131, 0
    %s134 = sadd.s32 %s133, 1
    %s135 = scalar_select %p132, %s133, %s134
    %p138 = pneg %p132
    %p139 = scmp.eq.s32.totalorder %s13, 1
    %p140 = por %p138, %p139
    %p141 = scmp.ne.s32.totalorder %s133, %s136
    %p142 = scmp.eq.s32.totalorder %s13, 0
    %p143 = por %p141, %p142
    %p144 = scmp.ne.s32.totalorder %s133, %s136
    %p145 = scmp.eq.s32.totalorder %s18, 1
    %p146 = por %p144, %p145
    %p147 = scmp.ne.s32.totalorder %s136, %s137
    %p148 = scmp.eq.s32.totalorder %s18, 0
    %p149 = por %p147, %p148
    %p150 = scmp.ne.s32.totalorder %s136, %s137
    %p151 = scmp.eq.s32.totalorder %s19, 1
    %p152 = por %p150, %p151
    %p154 = scmp.ne.s32.totalorder %s137, %s153
    %p155 = scmp.eq.s32.totalorder %s19, 0
    %p156 = por %p154, %p155
    %s158 = sadd.s32 %s157, 1
    %p161 = scmp.eq.s32.totalorder %s13, 1
    %p162 = scmp.ne.s32.totalorder %s157, %s159
    %p163 = scmp.eq.s32.totalorder %s13, 0
    %p164 = por %p162, %p163
    %p165 = scmp.ne.s32.totalorder %s157, %s159
    %p166 = scmp.eq.s32.totalorder %s18, 1
    %p167 = por %p165, %p166
    %p168 = scmp.ne.s32.totalorder %s159, %s160
    %p169 = scmp.eq.s32.totalorder %s18, 0
    %p170 = por %p168, %p169
    %p171 = scmp.ne.s32.totalorder %s159, %s160
    %p172 = scmp.eq.s32.totalorder %s19, 1
    %p173 = por %p171, %p172
    %p175 = scmp.ne.s32.totalorder %s160, %s174
    %p176 = scmp.eq.s32.totalorder %s19, 0
    %p177 = por %p175, %p176
    %s178 = ssub.s32 %s13, %s20
    %p179 = scmp.eq.s32.totalorder %s178, 0
    %s181 = sadd.s32 %s180, 1
    %s182 = scalar_select %p179, %s180, %s181
    %p185 = pneg %p179
    %p186 = scmp.eq.s32.totalorder %s13, 1
    %p187 = por %p185, %p186
    %p188 = scmp.ne.s32.totalorder %s180, %s183
    %p189 = scmp.eq.s32.totalorder %s13, 0
    %p190 = por %p188, %p189
    %p191 = scmp.ne.s32.totalorder %s180, %s183
    %p192 = scmp.eq.s32.totalorder %s18, 1
    %p193 = por %p191, %p192
    %p194 = scmp.ne.s32.totalorder %s183, %s184
    %p195 = scmp.eq.s32.totalorder %s18, 0
    %p196 = por %p194, %p195
    %p197 = scmp.ne.s32.totalorder %s183, %s184
    %p198 = scmp.eq.s32.totalorder %s19, 1
    %p199 = por %p197, %p198
    %p201 = scmp.ne.s32.totalorder %s184, %s200
    %p202 = scmp.eq.s32.totalorder %s19, 0
    %p203 = por %p201, %p202
    %p204 = scmp.le.s32.totalorder 1, %s13
    %p205 = scmp.lt.s32.totalorder %s13, 3
    %p206 = pnand %p204, %p205
    %p207 = pneg %p206
    // Predicated region
    $region9: #{basic_block_forward.3} parent=5 // pred_check
      _
    $region10: #{basic_block_forward.3} parent=5 // pred_check_branch
      %209 = sbr.rel (%p206) target = $region12
    $region11: #{basic_block_forward.3} parent=5 // pred_region
      %s210 = ssub.s32 %s13, 1
      // Predicated region
      $region13: #{basic_block_forward.3} parent=11 // pred_check
        %p211 = pneg %p60
      $region14: #{basic_block_forward.3} parent=11 // pred_check_branch
        %213 = sbr.rel (%p211) target = $region16
      $region15: #{basic_block_forward.3} parent=11 // pred_region
        _
      $region16: #{basic_block_forward.3} parent=11 // pred_fallthru
        _
      // Predicated region
      $region17: #{basic_block_forward.3} parent=11 // pred_check
        %p214 = pneg %p81
      $region18: #{basic_block_forward.3} parent=11 // pred_check_branch
        %216 = sbr.rel (%p214) target = $region20
      $region19: #{basic_block_forward.3} parent=11 // pred_region
        _
      $region20: #{basic_block_forward.3} parent=11 // pred_fallthru
        _
      // Predicated region
      $region21: #{basic_block_forward.3} parent=11 // pred_check
        %p217 = pneg %p102
      $region22: #{basic_block_forward.3} parent=11 // pred_check_branch
        %219 = sbr.rel (%p217) target = $region24
      $region23: #{basic_block_forward.3} parent=11 // pred_region
        _
      $region24: #{basic_block_forward.3} parent=11 // pred_fallthru
        _
      // Predicated region
      $region25: #{basic_block_forward.3} parent=11 // pred_check
        %p220 = pneg %p123
      $region26: #{basic_block_forward.3} parent=11 // pred_check_branch
        %222 = sbr.rel (%p220) target = $region28
      $region27: #{basic_block_forward.3} parent=11 // pred_region
        _
      $region28: #{basic_block_forward.3} parent=11 // pred_fallthru
        _
      // Predicated region
      $region29: #{basic_block_forward.3} parent=11 // pred_check
        %p223 = pneg %p170
      $region30: #{basic_block_forward.3} parent=11 // pred_check_branch
        %225 = sbr.rel (%p223) target = $region32
      $region31: #{basic_block_forward.3} parent=11 // pred_region
        _
      $region32: #{basic_block_forward.3} parent=11 // pred_fallthru
        _
    $region12: #{basic_block_forward.3} parent=5 // pred_fallthru
      _
    %p226 = scmp.lt.s32.totalorder %s13, 2
    // Predicated region
    $region33: #{basic_block_forward.3} parent=5 // pred_check
      %p227 = pneg %p226
    $region34: #{basic_block_forward.3} parent=5 // pred_check_branch
      %229 = sbr.rel (%p227) target = $region36
    $region35: #{basic_block_forward.3} parent=5 // pred_region
      // Predicated region
      $region37: #{basic_block_forward.3} parent=35 // pred_check
        %p230 = pneg %p33
      $region38: #{basic_block_forward.3} parent=35 // pred_check_branch
        %232 = sbr.rel (%p230) target = $region40
      $region39: #{basic_block_forward.3} parent=35 // pred_region
        %p233 = scmp.lt.s32.totalorder %s13, 1
        %s234 = scalar_select %p233, %s13, 1
        %s235 = smul.addr %s234, 16
        %s236 = smul.addr %s235, 8
        %s237 = scalar_lea.vmem %s0, %s236
      $region40: #{basic_block_forward.3} parent=35 // pred_fallthru
        _
      // Predicated region
      $region41: #{basic_block_forward.3} parent=35 // pred_check
        %p238 = pneg %p143
      $region42: #{basic_block_forward.3} parent=35 // pred_check_branch
        %240 = sbr.rel (%p238) target = $region44
      $region43: #{basic_block_forward.3} parent=35 // pred_region
        %p241 = scmp.lt.s32.totalorder %s13, 1
        %s242 = scalar_select %p241, %s13, 1
        %s243 = smul.addr %s242, 13
        %s244 = smul.addr %s243, 8
        %s245 = scalar_lea.vmem %s5, %s244
      $region44: #{basic_block_forward.3} parent=35 // pred_fallthru
        _
    $region36: #{basic_block_forward.3} parent=5 // pred_fallthru
      _
    %p246 = scmp.le.s32.totalorder 1, %s13
    %p247 = scmp.lt.s32.totalorder %s13, 3
    %p248 = pnand %p246, %p247
    %p249 = pneg %p248
    // Predicated region
    $region45: #{basic_block_forward.3} parent=5 // pred_check
      _
    $region46: #{basic_block_forward.3} parent=5 // pred_check_branch
      %251 = sbr.rel (%p248) target = $region48
    $region47: #{basic_block_forward.3} parent=5 // pred_region
      %s252 = ssub.s32 %s13, 1
      %p253 = scmp.lt.s32.totalorder %s18, 1
      %s254 = scalar_select %p253, %s18, 1
      %s255 = smul.addr %s254, 16
      %s256 = smul.addr %s255, 8
      %s257 = scalar_lea.vmem %s0, %s256
      %p258 = pneg %p39
      %p259 = pneg %p36
      %p260 = pneg %p60
      %p261 = pneg %p57
      %p262 = pneg %p81
      %p263 = pneg %p78
      %p264 = pneg %p102
      %p265 = pneg %p99
      %p266 = pneg %p123
      %p267 = pneg %p120
      %p268 = scmp.lt.s32.totalorder %s18, 1
      %s269 = scalar_select %p268, %s18, 1
      %s270 = smul.addr %s269, 13
      %s271 = smul.addr %s270, 8
      %s272 = scalar_lea.vmem %s5, %s271
      %p273 = pneg %p149
      %p274 = pneg %p146
      %p275 = pneg %p170
      %p276 = pneg %p167
      %p277 = pneg %p196
      %p278 = pneg %p193
      %p279 = scmp.lt.s32.totalorder %s18, 1
      %s280 = scalar_select %p279, %s18, 1
      %s281 = smul.addr %s280, 13
      %s282 = smul.addr %s281, 8
      %s283 = scalar_lea.vmem %s7, %s282
      %p284 = scmp.lt.s32.totalorder %s18, 1
      %s285 = scalar_select %p284, %s18, 1
      %s286 = smul.addr %s285, 16
      %s287 = smul.addr %s286, 8
      %s288 = scalar_lea.vmem %s0, %s287
      %p289 = scmp.lt.s32.totalorder %s18, 1
      %s290 = scalar_select %p289, %s18, 1
      %s291 = smul.addr %s290, 13
      %s292 = smul.addr %s291, 8
      %s293 = scalar_lea.vmem %s5, %s292
      %p294 = scmp.lt.s32.totalorder %s18, 1
      %s295 = scalar_select %p294, %s18, 1
      %s296 = smul.addr %s295, 13
      %s297 = smul.addr %s296, 8
      %s298 = scalar_lea.vmem %s7, %s297
      %v299 = vld [vmem:[%s288] sm:$0xff]
      %v300 = vld [vmem:[%s288 + $0x8] sm:$0xff]
      %v301 = vld [vmem:[%s288 + $0x10] sm:$0xff]
      %v302 = vld [vmem:[%s288 + $0x18] sm:$0xff]
      %v303 = vld [vmem:[%s288 + $0x20] sm:$0xff]
      %v304 = vld [vmem:[%s288 + $0x28] sm:$0xff]
      %v305 = vld [vmem:[%s288 + $0x30] sm:$0xff]
      %v306 = vld [vmem:[%s288 + $0x38] sm:$0xff]
      %v307 = vld [vmem:[%s288 + $0x40] sm:$0xff]
      %v308 = vld [vmem:[%s288 + $0x48] sm:$0xff]
      %v309 = vld [vmem:[%s288 + $0x50] sm:$0xff]
      %v310 = vld [vmem:[%s288 + $0x58] sm:$0xff]
      %v311 = vld [vmem:[%s288 + $0x60] sm:$0xff]
      %v312 = vld [vmem:[%s288 + $0x68] sm:$0xff]
      %v313 = vld [vmem:[%s288 + $0x70] sm:$0xff]
      %v314 = vld [vmem:[%s288 + $0x78] sm:$0x3]
      %v315 = vld [vmem:[%s2] sm:$0x1]
      %v317 = vlaneseq
      %v318 = vshrl.u32 %v317, 7
      %v319 = vsub.s32 0, %v318
      %v320 = vrot.slane %v315, %v319
      %v322 = vmul.f32 %v299, %v320
      %v323 = vmul.f32 %v300, %v320
      %v324 = vmul.f32 %v301, %v320
      %v325 = vmul.f32 %v302, %v320
      %v326 = vmul.f32 %v303, %v320
      %v327 = vmul.f32 %v304, %v320
      %v328 = vmul.f32 %v305, %v320
      %v329 = vmul.f32 %v306, %v320
      %v330 = vmul.f32 %v307, %v320
      %v331 = vmul.f32 %v308, %v320
      %v332 = vmul.f32 %v309, %v320
      %v333 = vmul.f32 %v310, %v320
      %v334 = vmul.f32 %v311, %v320
      %v335 = vmul.f32 %v312, %v320
      %v336 = vmul.f32 %v313, %v320
      %v337 = vmul.f32 %v314, %v320
      %v338 = vld [vmem:[%s3] sm:$0x1]
      %v340 = vlaneseq
      %v341 = vshrl.u32 %v340, 7
      %v342 = vsub.s32 0, %v341
      %v343 = vrot.slane %v338, %v342
      %v345 = vadd.f32 %v322, %v343
      %v346 = vadd.f32 %v323, %v343
      %v347 = vadd.f32 %v324, %v343
      %v348 = vadd.f32 %v325, %v343
      %v349 = vadd.f32 %v326, %v343
      %v350 = vadd.f32 %v327, %v343
      %v351 = vadd.f32 %v328, %v343
      %v352 = vadd.f32 %v329, %v343
      %v353 = vadd.f32 %v330, %v343
      %v354 = vadd.f32 %v331, %v343
      %v355 = vadd.f32 %v332, %v343
      %v356 = vadd.f32 %v333, %v343
      %v357 = vadd.f32 %v334, %v343
      %v358 = vadd.f32 %v335, %v343
      %v359 = vadd.f32 %v336, %v343
      %v360 = vadd.f32 %v337, %v343
      %v361 = vmax.f32 %v345, 0.0
      %v362 = vmax.f32 %v346, 0.0
      %v363 = vmax.f32 %v347, 0.0
      %v364 = vmax.f32 %v348, 0.0
      %v365 = vmax.f32 %v349, 0.0
      %v366 = vmax.f32 %v350, 0.0
      %v367 = vmax.f32 %v351, 0.0
      %v368 = vmax.f32 %v352, 0.0
      %v369 = vmax.f32 %v353, 0.0
      %v370 = vmax.f32 %v354, 0.0
      %v371 = vmax.f32 %v355, 0.0
      %v372 = vmax.f32 %v356, 0.0
      %v373 = vmax.f32 %v357, 0.0
      %v374 = vmax.f32 %v358, 0.0
      %v375 = vmax.f32 %v359, 0.0
      %v376 = vmax.f32 %v360, 0.0
      %v377 = vld [vmem:[%s1] sm:$0xff]
      %v378 = vld [vmem:[%s1 + $0x8] sm:$0xff]
      %v379 = vld [vmem:[%s1 + $0x10] sm:$0xff]
      %v380 = vld [vmem:[%s1 + $0x18] sm:$0xff]
      %v381 = vld [vmem:[%s1 + $0x20] sm:$0xff]
      %v382 = vld [vmem:[%s1 + $0x28] sm:$0xff]
      %v383 = vld [vmem:[%s1 + $0x30] sm:$0xff]
      %v384 = vld [vmem:[%s1 + $0x38] sm:$0xff]
      %v385 = vld [vmem:[%s1 + $0x40] sm:$0xff]
      %v386 = vld [vmem:[%s1 + $0x48] sm:$0xff]
      %v387 = vld [vmem:[%s1 + $0x50] sm:$0xff]
      %v388 = vld [vmem:[%s1 + $0x58] sm:$0xff]
      %v389 = vld [vmem:[%s1 + $0x60] sm:$0xff]
      %v390 = vld [vmem:[%s1 + $0x68] sm:$0xff]
      %v391 = vld [vmem:[%s1 + $0x70] sm:$0xff]
      %v392 = vld [vmem:[%s1 + $0x78] sm:$0x3]
      %394 = vset.pattern.permute.xlu0 0
      %395 = vperm.xlu0 %394, %v377
      %v396 = vpop.permute.xlu0 %395
      %399 = vset.pattern.permute.xlu0 0
      %400 = vperm.xlu0 %399, %v378
      %v401 = vpop.permute.xlu0 %400
      %404 = vset.pattern.permute.xlu0 0
      %405 = vperm.xlu0 %404, %v379
      %v406 = vpop.permute.xlu0 %405
      %409 = vset.pattern.permute.xlu0 0
      %410 = vperm.xlu0 %409, %v380
      %v411 = vpop.permute.xlu0 %410
      %414 = vset.pattern.permute.xlu0 0
      %415 = vperm.xlu0 %414, %v381
      %v416 = vpop.permute.xlu0 %415
      %419 = vset.pattern.permute.xlu0 0
      %420 = vperm.xlu0 %419, %v382
      %v421 = vpop.permute.xlu0 %420
      %424 = vset.pattern.permute.xlu0 0
      %425 = vperm.xlu0 %424, %v383
      %v426 = vpop.permute.xlu0 %425
      %429 = vset.pattern.permute.xlu0 0
      %430 = vperm.xlu0 %429, %v384
      %v431 = vpop.permute.xlu0 %430
      %434 = vset.pattern.permute.xlu0 0
      %435 = vperm.xlu0 %434, %v385
      %v436 = vpop.permute.xlu0 %435
      %439 = vset.pattern.permute.xlu0 0
      %440 = vperm.xlu0 %439, %v386
      %v441 = vpop.permute.xlu0 %440
      %444 = vset.pattern.permute.xlu0 0
      %445 = vperm.xlu0 %444, %v387
      %v446 = vpop.permute.xlu0 %445
      %449 = vset.pattern.permute.xlu0 0
      %450 = vperm.xlu0 %449, %v388
      %v451 = vpop.permute.xlu0 %450
      %454 = vset.pattern.permute.xlu0 0
      %455 = vperm.xlu0 %454, %v389
      %v456 = vpop.permute.xlu0 %455
      %459 = vset.pattern.permute.xlu0 0
      %460 = vperm.xlu0 %459, %v390
      %v461 = vpop.permute.xlu0 %460
      %464 = vset.pattern.permute.xlu0 0
      %465 = vperm.xlu0 %464, %v391
      %v466 = vpop.permute.xlu0 %465
      %469 = vset.pattern.permute.xlu0 0
      %470 = vperm.xlu0 %469, %v392
      %v471 = vpop.permute.xlu0 %470
      %v473 = vmul.f32 %v361, %v396
      %v474 = vmul.f32 %v362, %v401
      %v475 = vmul.f32 %v363, %v406
      %v476 = vmul.f32 %v364, %v411
      %v477 = vmul.f32 %v365, %v416
      %v478 = vmul.f32 %v366, %v421
      %v479 = vmul.f32 %v367, %v426
      %v480 = vmul.f32 %v368, %v431
      %v481 = vmul.f32 %v369, %v436
      %v482 = vmul.f32 %v370, %v441
      %v483 = vmul.f32 %v371, %v446
      %v484 = vmul.f32 %v372, %v451
      %v485 = vmul.f32 %v373, %v456
      %v486 = vmul.f32 %v374, %v461
      %v487 = vmul.f32 %v375, %v466
      %v488 = vmul.f32 %v376, %v471
      %489 = vst [vmem:[#allocation2] sm:$0xff] %v473
      %490 = vst [vmem:[#allocation2 + $0x8] sm:$0xff] %v474
      %491 = vst [vmem:[#allocation2 + $0x10] sm:$0xff] %v475
      %492 = vst [vmem:[#allocation2 + $0x18] sm:$0xff] %v476
      %493 = vst [vmem:[#allocation2 + $0x20] sm:$0xff] %v477
      %494 = vst [vmem:[#allocation2 + $0x28] sm:$0xff] %v478
      %495 = vst [vmem:[#allocation2 + $0x30] sm:$0xff] %v479
      %496 = vst [vmem:[#allocation2 + $0x38] sm:$0xff] %v480
      %497 = vst [vmem:[#allocation2 + $0x40] sm:$0xff] %v481
      %498 = vst [vmem:[#allocation2 + $0x48] sm:$0xff] %v482
      %499 = vst [vmem:[#allocation2 + $0x50] sm:$0xff] %v483
      %500 = vst [vmem:[#allocation2 + $0x58] sm:$0xff] %v484
      %501 = vst [vmem:[#allocation2 + $0x60] sm:$0xff] %v485
      %502 = vst [vmem:[#allocation2 + $0x68] sm:$0xff] %v486
      %503 = vst [vmem:[#allocation2 + $0x70] sm:$0xff] %v487
      %504 = vst [vmem:[#allocation2 + $0x78] sm:$0x3] %v488
      %v505 = vld [vmem:[#allocation2] sm:$0xff]
      %v506 = vld [vmem:[#allocation2 + $0x8] sm:$0xff]
      %v507 = vld [vmem:[#allocation2 + $0x10] sm:$0xff]
      %v508 = vld [vmem:[#allocation2 + $0x18] sm:$0xff]
      %v509 = vld [vmem:[#allocation2 + $0x20] sm:$0xff]
      %v510 = vld [vmem:[#allocation2 + $0x28] sm:$0xff]
      %v511 = vld [vmem:[#allocation2 + $0x30] sm:$0xff]
      %v512 = vld [vmem:[#allocation2 + $0x38] sm:$0xff]
      %v513 = vld [vmem:[#allocation2 + $0x40] sm:$0xff]
      %v514 = vld [vmem:[#allocation2 + $0x48] sm:$0xff]
      %v515 = vld [vmem:[#allocation2 + $0x50] sm:$0xff]
      %v516 = vld [vmem:[#allocation2 + $0x58] sm:$0xff]
      %v517 = vld [vmem:[#allocation2 + $0x60] sm:$0xf]
      %v518 = vld [vmem:[%s4] sm:$0xff]
      %v519 = vld [vmem:[%s4 + $0x8] sm:$0xff]
      %v520 = vld [vmem:[%s4 + $0x10] sm:$0xff]
      %v521 = vld [vmem:[%s4 + $0x18] sm:$0xff]
      %v522 = vld [vmem:[%s4 + $0x20] sm:$0xff]
      %v523 = vld [vmem:[%s4 + $0x28] sm:$0xff]
      %v524 = vld [vmem:[%s4 + $0x30] sm:$0xff]
      %v525 = vld [vmem:[%s4 + $0x38] sm:$0xff]
      %v526 = vld [vmem:[%s4 + $0x40] sm:$0xff]
      %v527 = vld [vmem:[%s4 + $0x48] sm:$0xff]
      %v528 = vld [vmem:[%s4 + $0x50] sm:$0xff]
      %v529 = vld [vmem:[%s4 + $0x58] sm:$0xff]
      %v530 = vld [vmem:[%s4 + $0x60] sm:$0xff]
      %v531 = vld [vmem:[%s4 + $0x68] sm:$0xff]
      %v532 = vld [vmem:[%s4 + $0x70] sm:$0xff]
      %v533 = vld [vmem:[%s4 + $0x78] sm:$0xff]
      %v534 = vld [vmem:[#allocation2 + $0x1] sm:$0xff]
      %v535 = vld [vmem:[#allocation2 + $0x9] sm:$0xff]
      %v536 = vld [vmem:[#allocation2 + $0x11] sm:$0xff]
      %v537 = vld [vmem:[#allocation2 + $0x19] sm:$0xff]
      %v538 = vld [vmem:[#allocation2 + $0x21] sm:$0xff]
      %v539 = vld [vmem:[#allocation2 + $0x29] sm:$0xff]
      %v540 = vld [vmem:[#allocation2 + $0x31] sm:$0xff]
      %v541 = vld [vmem:[#allocation2 + $0x39] sm:$0xff]
      %v542 = vld [vmem:[#allocation2 + $0x41] sm:$0xff]
      %v543 = vld [vmem:[#allocation2 + $0x49] sm:$0xff]
      %v544 = vld [vmem:[#allocation2 + $0x51] sm:$0xff]
      %v545 = vld [vmem:[#allocation2 + $0x59] sm:$0xff]
      %v546 = vld [vmem:[#allocation2 + $0x61] sm:$0xf]
      %s547 = scalar_lea.vmem %s4, 128
      %v548 = vld [vmem:[%s547] sm:$0xff]
      %v549 = vld [vmem:[%s547 + $0x8] sm:$0xff]
      %v550 = vld [vmem:[%s547 + $0x10] sm:$0xff]
      %v551 = vld [vmem:[%s547 + $0x18] sm:$0xff]
      %v552 = vld [vmem:[%s547 + $0x20] sm:$0xff]
      %v553 = vld [vmem:[%s547 + $0x28] sm:$0xff]
      %v554 = vld [vmem:[%s547 + $0x30] sm:$0xff]
      %v555 = vld [vmem:[%s547 + $0x38] sm:$0xff]
      %v556 = vld [vmem:[%s547 + $0x40] sm:$0xff]
      %v557 = vld [vmem:[%s547 + $0x48] sm:$0xff]
      %v558 = vld [vmem:[%s547 + $0x50] sm:$0xff]
      %v559 = vld [vmem:[%s547 + $0x58] sm:$0xff]
      %v560 = vld [vmem:[%s547 + $0x60] sm:$0xff]
      %v561 = vld [vmem:[%s547 + $0x68] sm:$0xff]
      %v562 = vld [vmem:[%s547 + $0x70] sm:$0xff]
      %v563 = vld [vmem:[%s547 + $0x78] sm:$0xff]
      %564 = vmatprep.subr.mxu0 0.0
      %565 = vmatpush1.msra.mxu0 %v548
      %566 = vmatprep.subr.mxu0 0.0
      %567 = vmatpush1.msra.mxu0 %v549
      %568 = vmatprep.subr.mxu0 0.0
      %569 = vmatpush1.msra.mxu0 %v550
      %570 = vmatprep.subr.mxu0 0.0
      %571 = vmatpush1.msra.mxu0 %v551
      %572 = vmatprep.subr.mxu0 0.0
      %573 = vmatpush1.msra.mxu0 %v552
      %574 = vmatprep.subr.mxu0 0.0
      %575 = vmatpush1.msra.mxu0 %v553
      %576 = vmatprep.subr.mxu0 0.0
      %577 = vmatpush1.msra.mxu0 %v554
      %578 = vmatprep.subr.mxu0 0.0
      %579 = vmatpush1.msra.mxu0 %v555
      %580 = vmatprep.subr.mxu0 0.0
      %581 = vmatpush1.msra.mxu0 %v556
      %582 = vmatprep.subr.mxu0 0.0
      %583 = vmatpush1.msra.mxu0 %v557
      %584 = vmatprep.subr.mxu0 0.0
      %585 = vmatpush1.msra.mxu0 %v558
      %586 = vmatprep.subr.mxu0 0.0
      %587 = vmatpush1.msra.mxu0 %v559
      %588 = vmatprep.subr.mxu0 0.0
      %589 = vmatpush1.msra.mxu0 %v560
      %590 = vmatprep.subr.mxu0 0.0
      %591 = vmatpush1.msra.mxu0 %v561
      %592 = vmatprep.subr.mxu0 0.0
      %593 = vmatpush1.msra.mxu0 %v562
      %594 = vmatprep.subr.mxu0 0.0
      %595 = vmatpush1.msra.mxu0 %v563
      %596 = vmatprep.subr.mxu0 0.0
      %597 = vmatpush1.msra.mxu0 0.0
      %598 = vmatprep.subr.mxu0 0.0
      %599 = vmatpush1.msra.mxu0 0.0
      %600 = vmatprep.subr.mxu0 0.0
      %601 = vmatpush1.msra.mxu0 0.0
      %602 = vmatprep.subr.mxu0 0.0
      %603 = vmatpush1.msra.mxu0 0.0
      %604 = vmatprep.subr.mxu0 0.0
      %605 = vmatpush1.msra.mxu0 0.0
      %606 = vmatprep.subr.mxu0 0.0
      %607 = vmatpush1.msra.mxu0 0.0
      %608 = vmatprep.subr.mxu0 0.0
      %609 = vmatpush1.msra.mxu0 0.0
      %610 = vmatprep.subr.mxu0 0.0
      %611 = vmatpush1.msra.mxu0 0.0
      %612 = vmatprep.subr.mxu0 0.0
      %613 = vmatpush1.msra.mxu0 0.0
      %614 = vmatprep.subr.mxu0 0.0
      %615 = vmatpush1.msra.mxu0 0.0
      %616 = vmatprep.subr.mxu0 0.0
      %617 = vmatpush1.msra.mxu0 0.0
      %618 = vmatprep.subr.mxu0 0.0
      %619 = vmatpush1.msra.mxu0 0.0
      %620 = vmatprep.subr.mxu0 0.0
      %621 = vmatpush1.msra.mxu0 0.0
      %622 = vmatprep.subr.mxu0 0.0
      %623 = vmatpush1.msra.mxu0 0.0
      %624 = vmatprep.subr.mxu0 0.0
      %625 = vmatpush1.msra.mxu0 0.0
      %626 = vmatprep.subr.mxu0 0.0
      %627 = vmatpush1.msra.mxu0 0.0
      %628 = vmatprep.mubr.f32.mxu0 0.0
      %629 = vmatmul.mubr.f32.gmra.mrb[0].mxu0 %v534
      %v630 = vpop.f32.mrb[0].mxu0
      %v631 = vadd.f32 0.0, %v630
      %v632 = vpop.f32.mrb[0].mxu0
      %633 = vmatprep.mubr.f32.mxu0 0.0
      %634 = vmatmul.mubr.f32.gmra.mrb[0].mxu0 %v535
      %v635 = vpop.f32.mrb[0].mxu0
      %v636 = vadd.f32 0.0, %v635
      %v637 = vpop.f32.mrb[0].mxu0
      %638 = vmatprep.mubr.f32.mxu0 0.0
      %639 = vmatmul.mubr.f32.gmra.mrb[0].mxu0 %v536
      %v640 = vpop.f32.mrb[0].mxu0
      %v641 = vadd.f32 0.0, %v640
      %v642 = vpop.f32.mrb[0].mxu0
      %643 = vmatprep.mubr.f32.mxu0 0.0
      %644 = vmatmul.mubr.f32.gmra.mrb[0].mxu0 %v537
      %v645 = vpop.f32.mrb[0].mxu0
      %v646 = vadd.f32 0.0, %v645
      %v647 = vpop.f32.mrb[0].mxu0
      %648 = vmatprep.mubr.f32.mxu0 0.0
      %649 = vmatmul.mubr.f32.gmra.mrb[0].mxu0 %v538
      %v650 = vpop.f32.mrb[0].mxu0
      %v651 = vadd.f32 0.0, %v650
      %v652 = vpop.f32.mrb[0].mxu0
      %653 = vmatprep.mubr.f32.mxu0 0.0
      %654 = vmatmul.mubr.f32.gmra.mrb[0].mxu0 %v539
      %v655 = vpop.f32.mrb[0].mxu0
      %v656 = vadd.f32 0.0, %v655
      %v657 = vpop.f32.mrb[0].mxu0
      %658 = vmatprep.mubr.f32.mxu0 0.0
      %659 = vmatmul.mubr.f32.gmra.mrb[0].mxu0 %v540
      %v660 = vpop.f32.mrb[0].mxu0
      %v661 = vadd.f32 0.0, %v660
      %v662 = vpop.f32.mrb[0].mxu0
      %663 = vmatprep.mubr.f32.mxu0 0.0
      %664 = vmatmul.mubr.f32.gmra.mrb[0].mxu0 %v541
      %v665 = vpop.f32.mrb[0].mxu0
      %v666 = vadd.f32 0.0, %v665
      %v667 = vpop.f32.mrb[0].mxu0
      %668 = vmatprep.mubr.f32.mxu0 0.0
      %669 = vmatmul.mubr.f32.gmra.mrb[0].mxu0 %v542
      %v670 = vpop.f32.mrb[0].mxu0
      %v671 = vadd.f32 0.0, %v670
      %v672 = vpop.f32.mrb[0].mxu0
      %673 = vmatprep.mubr.f32.mxu0 0.0
      %674 = vmatmul.mubr.f32.gmra.mrb[0].mxu0 %v543
      %v675 = vpop.f32.mrb[0].mxu0
      %v676 = vadd.f32 0.0, %v675
      %v677 = vpop.f32.mrb[0].mxu0
      %678 = vmatprep.mubr.f32.mxu0 0.0
      %679 = vmatmul.mubr.f32.gmra.mrb[0].mxu0 %v544
      %v680 = vpop.f32.mrb[0].mxu0
      %v681 = vadd.f32 0.0, %v680
      %v682 = vpop.f32.mrb[0].mxu0
      %683 = vmatprep.mubr.f32.mxu0 0.0
      %684 = vmatmul.mubr.f32.gmra.mrb[0].mxu0 %v545
      %v685 = vpop.f32.mrb[0].mxu0
      %v686 = vadd.f32 0.0, %v685
      %v687 = vpop.f32.mrb[0].mxu0
      %688 = vmatprep.mubr.f32.mxu0 0.0
      %689 = vmatmul.mubr.f32.gmra.mrb[0].mxu0 %v546
      %v690 = vpop.f32.mrb[0].mxu0
      %v691 = vadd.f32 0.0, %v690
      %v692 = vpop.f32.mrb[0].mxu0
      %693 = vdwg.mxu0
      %694 = vmatprep.subr.mxu0 0.0
      %695 = vmatpush1.msra.mxu0 %v518
      %696 = vmatprep.subr.mxu0 0.0
      %697 = vmatpush1.msra.mxu0 %v519
      %698 = vmatprep.subr.mxu0 0.0
      %699 = vmatpush1.msra.mxu0 %v520
      %700 = vmatprep.subr.mxu0 0.0
      %701 = vmatpush1.msra.mxu0 %v521
      %702 = vmatprep.subr.mxu0 0.0
      %703 = vmatpush1.msra.mxu0 %v522
      %704 = vmatprep.subr.mxu0 0.0
      %705 = vmatpush1.msra.mxu0 %v523
      %706 = vmatprep.subr.mxu0 0.0
      %707 = vmatpush1.msra.mxu0 %v524
      %708 = vmatprep.subr.mxu0 0.0
      %709 = vmatpush1.msra.mxu0 %v525
      %710 = vmatprep.subr.mxu0 0.0
      %711 = vmatpush1.msra.mxu0 %v526
      %712 = vmatprep.subr.mxu0 0.0
      %713 = vmatpush1.msra.mxu0 %v527
      %714 = vmatprep.subr.mxu0 0.0
      %715 = vmatpush1.msra.mxu0 %v528
      %716 = vmatprep.subr.mxu0 0.0
      %717 = vmatpush1.msra.mxu0 %v529
      %718 = vmatprep.subr.mxu0 0.0
      %719 = vmatpush1.msra.mxu0 %v530
      %720 = vmatprep.subr.mxu0 0.0
      %721 = vmatpush1.msra.mxu0 %v531
      %722 = vmatprep.subr.mxu0 0.0
      %723 = vmatpush1.msra.mxu0 %v532
      %724 = vmatprep.subr.mxu0 0.0
      %725 = vmatpush1.msra.mxu0 %v533
      %726 = vmatprep.subr.mxu0 0.0
      %727 = vmatpush1.msra.mxu0 0.0
      %728 = vmatprep.subr.mxu0 0.0
      %729 = vmatpush1.msra.mxu0 0.0
      %730 = vmatprep.subr.mxu0 0.0
      %731 = vmatpush1.msra.mxu0 0.0
      %732 = vmatprep.subr.mxu0 0.0
      %733 = vmatpush1.msra.mxu0 0.0
      %734 = vmatprep.subr.mxu0 0.0
      %735 = vmatpush1.msra.mxu0 0.0
      %736 = vmatprep.subr.mxu0 0.0
      %737 = vmatpush1.msra.mxu0 0.0
      %738 = vmatprep.subr.mxu0 0.0
      %739 = vmatpush1.msra.mxu0 0.0
      %740 = vmatprep.subr.mxu0 0.0
      %741 = vmatpush1.msra.mxu0 0.0
      %742 = vmatprep.subr.mxu0 0.0
      %743 = vmatpush1.msra.mxu0 0.0
      %744 = vmatprep.subr.mxu0 0.0
      %745 = vmatpush1.msra.mxu0 0.0
      %746 = vmatprep.subr.mxu0 0.0
      %747 = vmatpush1.msra.mxu0 0.0
      %748 = vmatprep.subr.mxu0 0.0
      %749 = vmatpush1.msra.mxu0 0.0
      %750 = vmatprep.subr.mxu0 0.0
      %751 = vmatpush1.msra.mxu0 0.0
      %752 = vmatprep.subr.mxu0 0.0
      %753 = vmatpush1.msra.mxu0 0.0
      %754 = vmatprep.subr.mxu0 0.0
      %755 = vmatpush1.msra.mxu0 0.0
      %756 = vmatprep.subr.mxu0 0.0
      %757 = vmatpush1.msra.mxu0 0.0
      %758 = vmatprep.mubr.f32.mxu0 0.0
      %759 = vmatmul.mubr.f32.gmra.mrb[0].mxu0 %v505
      %v760 = vpop.f32.mrb[0].mxu0
      %v761 = vadd.f32 %v631, %v760
      %v762 = vpop.f32.mrb[0].mxu0
      %763 = vmatprep.mubr.f32.mxu0 0.0
      %764 = vmatmul.mubr.f32.gmra.mrb[0].mxu0 %v506
      %v765 = vpop.f32.mrb[0].mxu0
      %v766 = vadd.f32 %v636, %v765
      %v767 = vpop.f32.mrb[0].mxu0
      %768 = vmatprep.mubr.f32.mxu0 0.0
      %769 = vmatmul.mubr.f32.gmra.mrb[0].mxu0 %v507
      %v770 = vpop.f32.mrb[0].mxu0
      %v771 = vadd.f32 %v641, %v770
      %v772 = vpop.f32.mrb[0].mxu0
      %773 = vmatprep.mubr.f32.mxu0 0.0
      %774 = vmatmul.mubr.f32.gmra.mrb[0].mxu0 %v508
      %v775 = vpop.f32.mrb[0].mxu0
      %v776 = vadd.f32 %v646, %v775
      %v777 = vpop.f32.mrb[0].mxu0
      %778 = vmatprep.mubr.f32.mxu0 0.0
      %779 = vmatmul.mubr.f32.gmra.mrb[0].mxu0 %v509
      %v780 = vpop.f32.mrb[0].mxu0
      %v781 = vadd.f32 %v651, %v780
      %v782 = vpop.f32.mrb[0].mxu0
      %783 = vmatprep.mubr.f32.mxu0 0.0
      %784 = vmatmul.mubr.f32.gmra.mrb[0].mxu0 %v510
      %v785 = vpop.f32.mrb[0].mxu0
      %v786 = vadd.f32 %v656, %v785
      %v787 = vpop.f32.mrb[0].mxu0
      %788 = vmatprep.mubr.f32.mxu0 0.0
      %789 = vmatmul.mubr.f32.gmra.mrb[0].mxu0 %v511
      %v790 = vpop.f32.mrb[0].mxu0
      %v791 = vadd.f32 %v661, %v790
      %v792 = vpop.f32.mrb[0].mxu0
      %793 = vmatprep.mubr.f32.mxu0 0.0
      %794 = vmatmul.mubr.f32.gmra.mrb[0].mxu0 %v512
      %v795 = vpop.f32.mrb[0].mxu0
      %v796 = vadd.f32 %v666, %v795
      %v797 = vpop.f32.mrb[0].mxu0
      %798 = vmatprep.mubr.f32.mxu0 0.0
      %799 = vmatmul.mubr.f32.gmra.mrb[0].mxu0 %v513
      %v800 = vpop.f32.mrb[0].mxu0
      %v801 = vadd.f32 %v671, %v800
      %v802 = vpop.f32.mrb[0].mxu0
      %803 = vmatprep.mubr.f32.mxu0 0.0
      %804 = vmatmul.mubr.f32.gmra.mrb[0].mxu0 %v514
      %v805 = vpop.f32.mrb[0].mxu0
      %v806 = vadd.f32 %v676, %v805
      %v807 = vpop.f32.mrb[0].mxu0
      %808 = vmatprep.mubr.f32.mxu0 0.0
      %809 = vmatmul.mubr.f32.gmra.mrb[0].mxu0 %v515
      %v810 = vpop.f32.mrb[0].mxu0
      %v811 = vadd.f32 %v681, %v810
      %v812 = vpop.f32.mrb[0].mxu0
      %813 = vmatprep.mubr.f32.mxu0 0.0
      %814 = vmatmul.mubr.f32.gmra.mrb[0].mxu0 %v516
      %v815 = vpop.f32.mrb[0].mxu0
      %v816 = vadd.f32 %v686, %v815
      %v817 = vpop.f32.mrb[0].mxu0
      %818 = vmatprep.mubr.f32.mxu0 0.0
      %819 = vmatmul.mubr.f32.gmra.mrb[0].mxu0 %v517
      %v820 = vpop.f32.mrb[0].mxu0
      %v821 = vadd.f32 %v691, %v820
      %v822 = vpop.f32.mrb[0].mxu0
      %823 = vdwg.mxu0
      %v824 = vld [vmem:[#allocation2 + $0x2] sm:$0xff]
      %v825 = vld [vmem:[#allocation2 + $0xa] sm:$0xff]
      %v826 = vld [vmem:[#allocation2 + $0x12] sm:$0xff]
      %v827 = vld [vmem:[#allocation2 + $0x1a] sm:$0xff]
      %v828 = vld [vmem:[#allocation2 + $0x22] sm:$0xff]
      %v829 = vld [vmem:[#allocation2 + $0x2a] sm:$0xff]
      %v830 = vld [vmem:[#allocation2 + $0x32] sm:$0xff]
      %v831 = vld [vmem:[#allocation2 + $0x3a] sm:$0xff]
      %v832 = vld [vmem:[#allocation2 + $0x42] sm:$0xff]
      %v833 = vld [vmem:[#allocation2 + $0x4a] sm:$0xff]
      %v834 = vld [vmem:[#allocation2 + $0x52] sm:$0xff]
      %v835 = vld [vmem:[#allocation2 + $0x5a] sm:$0xff]
      %v836 = vld [vmem:[#allocation2 + $0x62] sm:$0xf]
      %s837 = scalar_lea.vmem %s4, 256
      %v838 = vld [vmem:[%s837] sm:$0xff]
      %v839 = vld [vmem:[%s837 + $0x8] sm:$0xff]
      %v840 = vld [vmem:[%s837 + $0x10] sm:$0xff]
      %v841 = vld [vmem:[%s837 + $0x18] sm:$0xff]
      %v842 = vld [vmem:[%s837 + $0x20] sm:$0xff]
      %v843 = vld [vmem:[%s837 + $0x28] sm:$0xff]
      %v844 = vld [vmem:[%s837 + $0x30] sm:$0xff]
      %v845 = vld [vmem:[%s837 + $0x38] sm:$0xff]
      %v846 = vld [vmem:[%s837 + $0x40] sm:$0xff]
      %v847 = vld [vmem:[%s837 + $0x48] sm:$0xff]
      %v848 = vld [vmem:[%s837 + $0x50] sm:$0xff]
      %v849 = vld [vmem:[%s837 + $0x58] sm:$0xff]
      %v850 = vld [vmem:[%s837 + $0x60] sm:$0xff]
      %v851 = vld [vmem:[%s837 + $0x68] sm:$0xff]
      %v852 = vld [vmem:[%s837 + $0x70] sm:$0xff]
      %v853 = vld [vmem:[%s837 + $0x78] sm:$0xff]
      %854 = vmatprep.subr.mxu0 0.0
      %855 = vmatpush1.msra.mxu0 %v838
      %856 = vmatprep.subr.mxu0 0.0
      %857 = vmatpush1.msra.mxu0 %v839
      %858 = vmatprep.subr.mxu0 0.0
      %859 = vmatpush1.msra.mxu0 %v840
      %860 = vmatprep.subr.mxu0 0.0
      %861 = vmatpush1.msra.mxu0 %v841
      %862 = vmatprep.subr.mxu0 0.0
      %863 = vmatpush1.msra.mxu0 %v842
      %864 = vmatprep.subr.mxu0 0.0
      %865 = vmatpush1.msra.mxu0 %v843
      %866 = vmatprep.subr.mxu0 0.0
      %867 = vmatpush1.msra.mxu0 %v844
      %868 = vmatprep.subr.mxu0 0.0
      %869 = vmatpush1.msra.mxu0 %v845
      %870 = vmatprep.subr.mxu0 0.0
      %871 = vmatpush1.msra.mxu0 %v846
      %872 = vmatprep.subr.mxu0 0.0
      %873 = vmatpush1.msra.mxu0 %v847
      %874 = vmatprep.subr.mxu0 0.0
      %875 = vmatpush1.msra.mxu0 %v848
      %876 = vmatprep.subr.mxu0 0.0
      %877 = vmatpush1.msra.mxu0 %v849
      %878 = vmatprep.subr.mxu0 0.0
      %879 = vmatpush1.msra.mxu0 %v850
      %880 = vmatprep.subr.mxu0 0.0
      %881 = vmatpush1.msra.mxu0 %v851
      %882 = vmatprep.subr.mxu0 0.0
      %883 = vmatpush1.msra.mxu0 %v852
      %884 = vmatprep.subr.mxu0 0.0
      %885 = vmatpush1.msra.mxu0 %v853
      %886 = vmatprep.subr.mxu0 0.0
      %887 = vmatpush1.msra.mxu0 0.0
      %888 = vmatprep.subr.mxu0 0.0
      %889 = vmatpush1.msra.mxu0 0.0
      %890 = vmatprep.subr.mxu0 0.0
      %891 = vmatpush1.msra.mxu0 0.0
      %892 = vmatprep.subr.mxu0 0.0
      %893 = vmatpush1.msra.mxu0 0.0
      %894 = vmatprep.subr.mxu0 0.0
      %895 = vmatpush1.msra.mxu0 0.0
      %896 = vmatprep.subr.mxu0 0.0
      %897 = vmatpush1.msra.mxu0 0.0
      %898 = vmatprep.subr.mxu0 0.0
      %899 = vmatpush1.msra.mxu0 0.0
      %900 = vmatprep.subr.mxu0 0.0
      %901 = vmatpush1.msra.mxu0 0.0
      %902 = vmatprep.subr.mxu0 0.0
      %903 = vmatpush1.msra.mxu0 0.0
      %904 = vmatprep.subr.mxu0 0.0
      %905 = vmatpush1.msra.mxu0 0.0
      %906 = vmatprep.subr.mxu0 0.0
      %907 = vmatpush1.msra.mxu0 0.0
      %908 = vmatprep.subr.mxu0 0.0
      %909 = vmatpush1.msra.mxu0 0.0
      %910 = vmatprep.subr.mxu0 0.0
      %911 = vmatpush1.msra.mxu0 0.0
      %912 = vmatprep.subr.mxu0 0.0
      %913 = vmatpush1.msra.mxu0 0.0
      %914 = vmatprep.subr.mxu0 0.0
      %915 = vmatpush1.msra.mxu0 0.0
      %916 = vmatprep.subr.mxu0 0.0
      %917 = vmatpush1.msra.mxu0 0.0
      %918 = vmatprep.mubr.f32.mxu0 0.0
      %919 = vmatmul.mubr.f32.gmra.mrb[0].mxu0 %v824
      %v920 = vpop.f32.mrb[0].mxu0
      %v921 = vadd.f32 0.0, %v920
      %v922 = vpop.f32.mrb[0].mxu0
      %923 = vmatprep.mubr.f32.mxu0 0.0
      %924 = vmatmul.mubr.f32.gmra.mrb[0].mxu0 %v825
      %v925 = vpop.f32.mrb[0].mxu0
      %v926 = vadd.f32 0.0, %v925
      %v927 = vpop.f32.mrb[0].mxu0
      %928 = vmatprep.mubr.f32.mxu0 0.0
      %929 = vmatmul.mubr.f32.gmra.mrb[0].mxu0 %v826
      %v930 = vpop.f32.mrb[0].mxu0
      %v931 = vadd.f32 0.0, %v930
      %v932 = vpop.f32.mrb[0].mxu0
      %933 = vmatprep.mubr.f32.mxu0 0.0
      %934 = vmatmul.mubr.f32.gmra.mrb[0].mxu0 %v827
      %v935 = vpop.f32.mrb[0].mxu0
      %v936 = vadd.f32 0.0, %v935
      %v937 = vpop.f32.mrb[0].mxu0
      %938 = vmatprep.mubr.f32.mxu0 0.0
      %939 = vmatmul.mubr.f32.gmra.mrb[0].mxu0 %v828
      %v940 = vpop.f32.mrb[0].mxu0
      %v941 = vadd.f32 0.0, %v940
      %v942 = vpop.f32.mrb[0].mxu0
      %943 = vmatprep.mubr.f32.mxu0 0.0
      %944 = vmatmul.mubr.f32.gmra.mrb[0].mxu0 %v829
      %v945 = vpop.f32.mrb[0].mxu0
      %v946 = vadd.f32 0.0, %v945
      %v947 = vpop.f32.mrb[0].mxu0
      %948 = vmatprep.mubr.f32.mxu0 0.0
      %949 = vmatmul.mubr.f32.gmra.mrb[0].mxu0 %v830
      %v950 = vpop.f32.mrb[0].mxu0
      %v951 = vadd.f32 0.0, %v950
      %v952 = vpop.f32.mrb[0].mxu0
      %953 = vmatprep.mubr.f32.mxu0 0.0
      %954 = vmatmul.mubr.f32.gmra.mrb[0].mxu0 %v831
      %v955 = vpop.f32.mrb[0].mxu0
      %v956 = vadd.f32 0.0, %v955
      %v957 = vpop.f32.mrb[0].mxu0
      %958 = vmatprep.mubr.f32.mxu0 0.0
      %959 = vmatmul.mubr.f32.gmra.mrb[0].mxu0 %v832
      %v960 = vpop.f32.mrb[0].mxu0
      %v961 = vadd.f32 0.0, %v960
      %v962 = vpop.f32.mrb[0].mxu0
      %963 = vmatprep.mubr.f32.mxu0 0.0
      %964 = vmatmul.mubr.f32.gmra.mrb[0].mxu0 %v833
      %v965 = vpop.f32.mrb[0].mxu0
      %v966 = vadd.f32 0.0, %v965
      %v967 = vpop.f32.mrb[0].mxu0
      %968 = vmatprep.mubr.f32.mxu0 0.0
      %969 = vmatmul.mubr.f32.gmra.mrb[0].mxu0 %v834
      %v970 = vpop.f32.mrb[0].mxu0
      %v971 = vadd.f32 0.0, %v970
      %v972 = vpop.f32.mrb[0].mxu0
      %973 = vmatprep.mubr.f32.mxu0 0.0
      %974 = vmatmul.mubr.f32.gmra.mrb[0].mxu0 %v835
      %v975 = vpop.f32.mrb[0].mxu0
      %v976 = vadd.f32 0.0, %v975
      %v977 = vpop.f32.mrb[0].mxu0
      %978 = vmatprep.mubr.f32.mxu0 0.0
      %979 = vmatmul.mubr.f32.gmra.mrb[0].mxu0 %v836
      %v980 = vpop.f32.mrb[0].mxu0
      %v981 = vadd.f32 0.0, %v980
      %v982 = vpop.f32.mrb[0].mxu0
      %983 = vdwg.mxu0
      %v984 = vadd.f32 %v761, %v921
      %v985 = vadd.f32 %v766, %v926
      %v986 = vadd.f32 %v771, %v931
      %v987 = vadd.f32 %v776, %v936
      %v988 = vadd.f32 %v781, %v941
      %v989 = vadd.f32 %v786, %v946
      %v990 = vadd.f32 %v791, %v951
      %v991 = vadd.f32 %v796, %v956
      %v992 = vadd.f32 %v801, %v961
      %v993 = vadd.f32 %v806, %v966
      %v994 = vadd.f32 %v811, %v971
      %v995 = vadd.f32 %v816, %v976
      %v996 = vadd.f32 %v821, %v981
      %v997 = vld [vmem:[#allocation2 + $0xa] sm:$0xff]
      %v998 = vld [vmem:[#allocation2 + $0x12] sm:$0xff]
      %v999 = vld [vmem:[#allocation2 + $0x1a] sm:$0xff]
      %v1000 = vld [vmem:[#allocation2 + $0x22] sm:$0xff]
      %v1001 = vld [vmem:[#allocation2 + $0x2a] sm:$0xff]
      %v1002 = vld [vmem:[#allocation2 + $0x32] sm:$0xff]
      %v1003 = vld [vmem:[#allocation2 + $0x3a] sm:$0xff]
      %v1004 = vld [vmem:[#allocation2 + $0x42] sm:$0xff]
      %v1005 = vld [vmem:[#allocation2 + $0x4a] sm:$0xff]
      %v1006 = vld [vmem:[#allocation2 + $0x52] sm:$0xff]
      %v1007 = vld [vmem:[#allocation2 + $0x5a] sm:$0xff]
      %v1008 = vld [vmem:[#allocation2 + $0x62] sm:$0xff]
      %v1009 = vld [vmem:[#allocation2 + $0x6a] sm:$0xf]
      %s1010 = scalar_lea.vmem %s4, 384
      %v1011 = vld [vmem:[%s1010] sm:$0xff]
      %v1012 = vld [vmem:[%s1010 + $0x8] sm:$0xff]
      %v1013 = vld [vmem:[%s1010 + $0x10] sm:$0xff]
      %v1014 = vld [vmem:[%s1010 + $0x18] sm:$0xff]
      %v1015 = vld [vmem:[%s1010 + $0x20] sm:$0xff]
      %v1016 = vld [vmem:[%s1010 + $0x28] sm:$0xff]
      %v1017 = vld [vmem:[%s1010 + $0x30] sm:$0xff]
      %v1018 = vld [vmem:[%s1010 + $0x38] sm:$0xff]
      %v1019 = vld [vmem:[%s1010 + $0x40] sm:$0xff]
      %v1020 = vld [vmem:[%s1010 + $0x48] sm:$0xff]
      %v1021 = vld [vmem:[%s1010 + $0x50] sm:$0xff]
      %v1022 = vld [vmem:[%s1010 + $0x58] sm:$0xff]
      %v1023 = vld [vmem:[%s1010 + $0x60] sm:$0xff]
      %v1024 = vld [vmem:[%s1010 + $0x68] sm:$0xff]
      %v1025 = vld [vmem:[%s1010 + $0x70] sm:$0xff]
      %v1026 = vld [vmem:[%s1010 + $0x78] sm:$0xff]
      %1027 = vmatprep.subr.mxu0 0.0
      %1028 = vmatpush1.msra.mxu0 %v1011
      %1029 = vmatprep.subr.mxu0 0.0
      %1030 = vmatpush1.msra.mxu0 %v1012
      %1031 = vmatprep.subr.mxu0 0.0
      %1032 = vmatpush1.msra.mxu0 %v1013
      %1033 = vmatprep.subr.mxu0 0.0
      %1034 = vmatpush1.msra.mxu0 %v1014
      %1035 = vmatprep.subr.mxu0 0.0
      %1036 = vmatpush1.msra.mxu0 %v1015
      %1037 = vmatprep.subr.mxu0 0.0
      %1038 = vmatpush1.msra.mxu0 %v1016
      %1039 = vmatprep.subr.mxu0 0.0
      %1040 = vmatpush1.msra.mxu0 %v1017
      %1041 = vmatprep.subr.mxu0 0.0
      %1042 = vmatpush1.msra.mxu0 %v1018
      %1043 = vmatprep.subr.mxu0 0.0
      %1044 = vmatpush1.msra.mxu0 %v1019
      %1045 = vmatprep.subr.mxu0 0.0
      %1046 = vmatpush1.msra.mxu0 %v1020
      %1047 = vmatprep.subr.mxu0 0.0
      %1048 = vmatpush1.msra.mxu0 %v1021
      %1049 = vmatprep.subr.mxu0 0.0
      %1050 = vmatpush1.msra.mxu0 %v1022
      %1051 = vmatprep.subr.mxu0 0.0
      %1052 = vmatpush1.msra.mxu0 %v1023
      %1053 = vmatprep.subr.mxu0 0.0
      %1054 = vmatpush1.msra.mxu0 %v1024
      %1055 = vmatprep.subr.mxu0 0.0
      %1056 = vmatpush1.msra.mxu0 %v1025
      %1057 = vmatprep.subr.mxu0 0.0
      %1058 = vmatpush1.msra.mxu0 %v1026
      %1059 = vmatprep.subr.mxu0 0.0
      %1060 = vmatpush1.msra.mxu0 0.0
      %1061 = vmatprep.subr.mxu0 0.0
      %1062 = vmatpush1.msra.mxu0 0.0
      %1063 = vmatprep.subr.mxu0 0.0
      %1064 = vmatpush1.msra.mxu0 0.0
      %1065 = vmatprep.subr.mxu0 0.0
      %1066 = vmatpush1.msra.mxu0 0.0
      %1067 = vmatprep.subr.mxu0 0.0
      %1068 = vmatpush1.msra.mxu0 0.0
      %1069 = vmatprep.subr.mxu0 0.0
      %1070 = vmatpush1.msra.mxu0 0.0
      %1071 = vmatprep.subr.mxu0 0.0
      %1072 = vmatpush1.msra.mxu0 0.0
      %1073 = vmatprep.subr.mxu0 0.0
      %1074 = vmatpush1.msra.mxu0 0.0
      %1075 = vmatprep.subr.mxu0 0.0
      %1076 = vmatpush1.msra.mxu0 0.0
      %1077 = vmatprep.subr.mxu0 0.0
      %1078 = vmatpush1.msra.mxu0 0.0
      %1079 = vmatprep.subr.mxu0 0.0
      %1080 = vmatpush1.msra.mxu0 0.0
      %1081 = vmatprep.subr.mxu0 0.0
      %1082 = vmatpush1.msra.mxu0 0.0
      %1083 = vmatprep.subr.mxu0 0.0
      %1084 = vmatpush1.msra.mxu0 0.0
      %1085 = vmatprep.subr.mxu0 0.0
      %1086 = vmatpush1.msra.mxu0 0.0
      %1087 = vmatprep.subr.mxu0 0.0
      %1088 = vmatpush1.msra.mxu0 0.0
      %1089 = vmatprep.subr.mxu0 0.0
      %1090 = vmatpush1.msra.mxu0 0.0
      %1091 = vmatprep.mubr.f32.mxu0 0.0
      %1092 = vmatmul.mubr.f32.gmra.mrb[0].mxu0 %v997
      %v1093 = vpop.f32.mrb[0].mxu0
      %v1094 = vadd.f32 0.0, %v1093
      %v1095 = vpop.f32.mrb[0].mxu0
      %1096 = vmatprep.mubr.f32.mxu0 0.0
      %1097 = vmatmul.mubr.f32.gmra.mrb[0].mxu0 %v998
      %v1098 = vpop.f32.mrb[0].mxu0
      %v1099 = vadd.f32 0.0, %v1098
      %v1100 = vpop.f32.mrb[0].mxu0
      %1101 = vmatprep.mubr.f32.mxu0 0.0
      %1102 = vmatmul.mubr.f32.gmra.mrb[0].mxu0 %v999
      %v1103 = vpop.f32.mrb[0].mxu0
      %v1104 = vadd.f32 0.0, %v1103
      %v1105 = vpop.f32.mrb[0].mxu0
      %1106 = vmatprep.mubr.f32.mxu0 0.0
      %1107 = vmatmul.mubr.f32.gmra.mrb[0].mxu0 %v1000
      %v1108 = vpop.f32.mrb[0].mxu0
      %v1109 = vadd.f32 0.0, %v1108
      %v1110 = vpop.f32.mrb[0].mxu0
      %1111 = vmatprep.mubr.f32.mxu0 0.0
      %1112 = vmatmul.mubr.f32.gmra.mrb[0].mxu0 %v1001
      %v1113 = vpop.f32.mrb[0].mxu0
      %v1114 = vadd.f32 0.0, %v1113
      %v1115 = vpop.f32.mrb[0].mxu0
      %1116 = vmatprep.mubr.f32.mxu0 0.0
      %1117 = vmatmul.mubr.f32.gmra.mrb[0].mxu0 %v1002
      %v1118 = vpop.f32.mrb[0].mxu0
      %v1119 = vadd.f32 0.0, %v1118
      %v1120 = vpop.f32.mrb[0].mxu0
      %1121 = vmatprep.mubr.f32.mxu0 0.0
      %1122 = vmatmul.mubr.f32.gmra.mrb[0].mxu0 %v1003
      %v1123 = vpop.f32.mrb[0].mxu0
      %v1124 = vadd.f32 0.0, %v1123
      %v1125 = vpop.f32.mrb[0].mxu0
      %1126 = vmatprep.mubr.f32.mxu0 0.0
      %1127 = vmatmul.mubr.f32.gmra.mrb[0].mxu0 %v1004
      %v1128 = vpop.f32.mrb[0].mxu0
      %v1129 = vadd.f32 0.0, %v1128
      %v1130 = vpop.f32.mrb[0].mxu0
      %1131 = vmatprep.mubr.f32.mxu0 0.0
      %1132 = vmatmul.mubr.f32.gmra.mrb[0].mxu0 %v1005
      %v1133 = vpop.f32.mrb[0].mxu0
      %v1134 = vadd.f32 0.0, %v1133
      %v1135 = vpop.f32.mrb[0].mxu0
      %1136 = vmatprep.mubr.f32.mxu0 0.0
      %1137 = vmatmul.mubr.f32.gmra.mrb[0].mxu0 %v1006
      %v1138 = vpop.f32.mrb[0].mxu0
      %v1139 = vadd.f32 0.0, %v1138
      %v1140 = vpop.f32.mrb[0].mxu0
      %1141 = vmatprep.mubr.f32.mxu0 0.0
      %1142 = vmatmul.mubr.f32.gmra.mrb[0].mxu0 %v1007
      %v1143 = vpop.f32.mrb[0].mxu0
      %v1144 = vadd.f32 0.0, %v1143
      %v1145 = vpop.f32.mrb[0].mxu0
      %1146 = vmatprep.mubr.f32.mxu0 0.0
      %1147 = vmatmul.mubr.f32.gmra.mrb[0].mxu0 %v1008
      %v1148 = vpop.f32.mrb[0].mxu0
      %v1149 = vadd.f32 0.0, %v1148
      %v1150 = vpop.f32.mrb[0].mxu0
      %1151 = vmatprep.mubr.f32.mxu0 0.0
      %1152 = vmatmul.mubr.f32.gmra.mrb[0].mxu0 %v1009
      %v1153 = vpop.f32.mrb[0].mxu0
      %v1154 = vadd.f32 0.0, %v1153
      %v1155 = vpop.f32.mrb[0].mxu0
      %1156 = vdwg.mxu0
      %v1157 = vadd.f32 %v984, %v1094
      %v1158 = vadd.f32 %v985, %v1099
      %v1159 = vadd.f32 %v986, %v1104
      %v1160 = vadd.f32 %v987, %v1109
      %v1161 = vadd.f32 %v988, %v1114
      %v1162 = vadd.f32 %v989, %v1119
      %v1163 = vadd.f32 %v990, %v1124
      %v1164 = vadd.f32 %v991, %v1129
      %v1165 = vadd.f32 %v992, %v1134
      %v1166 = vadd.f32 %v993, %v1139
      %v1167 = vadd.f32 %v994, %v1144
      %v1168 = vadd.f32 %v995, %v1149
      %v1169 = vadd.f32 %v996, %v1154
      %v1170 = vld [vmem:[#allocation2 + $0xb] sm:$0xff]
      %v1171 = vld [vmem:[#allocation2 + $0x13] sm:$0xff]
      %v1172 = vld [vmem:[#allocation2 + $0x1b] sm:$0xff]
      %v1173 = vld [vmem:[#allocation2 + $0x23] sm:$0xff]
      %v1174 = vld [vmem:[#allocation2 + $0x2b] sm:$0xff]
      %v1175 = vld [vmem:[#allocation2 + $0x33] sm:$0xff]
      %v1176 = vld [vmem:[#allocation2 + $0x3b] sm:$0xff]
      %v1177 = vld [vmem:[#allocation2 + $0x43] sm:$0xff]
      %v1178 = vld [vmem:[#allocation2 + $0x4b] sm:$0xff]
      %v1179 = vld [vmem:[#allocation2 + $0x53] sm:$0xff]
      %v1180 = vld [vmem:[#allocation2 + $0x5b] sm:$0xff]
      %v1181 = vld [vmem:[#allocation2 + $0x63] sm:$0xff]
      %v1182 = vld [vmem:[#allocation2 + $0x6b] sm:$0xf]
      %s1183 = scalar_lea.vmem %s4, 512
      %v1184 = vld [vmem:[%s1183] sm:$0xff]
      %v1185 = vld [vmem:[%s1183 + $0x8] sm:$0xff]
      %v1186 = vld [vmem:[%s1183 + $0x10] sm:$0xff]
      %v1187 = vld [vmem:[%s1183 + $0x18] sm:$0xff]
      %v1188 = vld [vmem:[%s1183 + $0x20] sm:$0xff]
      %v1189 = vld [vmem:[%s1183 + $0x28] sm:$0xff]
      %v1190 = vld [vmem:[%s1183 + $0x30] sm:$0xff]
      %v1191 = vld [vmem:[%s1183 + $0x38] sm:$0xff]
      %v1192 = vld [vmem:[%s1183 + $0x40] sm:$0xff]
      %v1193 = vld [vmem:[%s1183 + $0x48] sm:$0xff]
      %v1194 = vld [vmem:[%s1183 + $0x50] sm:$0xff]
      %v1195 = vld [vmem:[%s1183 + $0x58] sm:$0xff]
      %v1196 = vld [vmem:[%s1183 + $0x60] sm:$0xff]
      %v1197 = vld [vmem:[%s1183 + $0x68] sm:$0xff]
      %v1198 = vld [vmem:[%s1183 + $0x70] sm:$0xff]
      %v1199 = vld [vmem:[%s1183 + $0x78] sm:$0xff]
      %1200 = vmatprep.subr.mxu0 0.0
      %1201 = vmatpush1.msra.mxu0 %v1184
      %1202 = vmatprep.subr.mxu0 0.0
      %1203 = vmatpush1.msra.mxu0 %v1185
      %1204 = vmatprep.subr.mxu0 0.0
      %1205 = vmatpush1.msra.mxu0 %v1186
      %1206 = vmatprep.subr.mxu0 0.0
      %1207 = vmatpush1.msra.mxu0 %v1187
      %1208 = vmatprep.subr.mxu0 0.0
      %1209 = vmatpush1.msra.mxu0 %v1188
      %1210 = vmatprep.subr.mxu0 0.0
      %1211 = vmatpush1.msra.mxu0 %v1189
      %1212 = vmatprep.subr.mxu0 0.0
      %1213 = vmatpush1.msra.mxu0 %v1190
      %1214 = vmatprep.subr.mxu0 0.0
      %1215 = vmatpush1.msra.mxu0 %v1191
      %1216 = vmatprep.subr.mxu0 0.0
      %1217 = vmatpush1.msra.mxu0 %v1192
      %1218 = vmatprep.subr.mxu0 0.0
      %1219 = vmatpush1.msra.mxu0 %v1193
      %1220 = vmatprep.subr.mxu0 0.0
      %1221 = vmatpush1.msra.mxu0 %v1194
      %1222 = vmatprep.subr.mxu0 0.0
      %1223 = vmatpush1.msra.mxu0 %v1195
      %1224 = vmatprep.subr.mxu0 0.0
      %1225 = vmatpush1.msra.mxu0 %v1196
      %1226 = vmatprep.subr.mxu0 0.0
      %1227 = vmatpush1.msra.mxu0 %v1197
      %1228 = vmatprep.subr.mxu0 0.0
      %1229 = vmatpush1.msra.mxu0 %v1198
      %1230 = vmatprep.subr.mxu0 0.0
      %1231 = vmatpush1.msra.mxu0 %v1199
      %1232 = vmatprep.subr.mxu0 0.0
      %1233 = vmatpush1.msra.mxu0 0.0
      %1234 = vmatprep.subr.mxu0 0.0
      %1235 = vmatpush1.msra.mxu0 0.0
      %1236 = vmatprep.subr.mxu0 0.0
      %1237 = vmatpush1.msra.mxu0 0.0
      %1238 = vmatprep.subr.mxu0 0.0
      %1239 = vmatpush1.msra.mxu0 0.0
      %1240 = vmatprep.subr.mxu0 0.0
      %1241 = vmatpush1.msra.mxu0 0.0
      %1242 = vmatprep.subr.mxu0 0.0
      %1243 = vmatpush1.msra.mxu0 0.0
      %1244 = vmatprep.subr.mxu0 0.0
      %1245 = vmatpush1.msra.mxu0 0.0
      %1246 = vmatprep.subr.mxu0 0.0
      %1247 = vmatpush1.msra.mxu0 0.0
      %1248 = vmatprep.subr.mxu0 0.0
      %1249 = vmatpush1.msra.mxu0 0.0
      %1250 = vmatprep.subr.mxu0 0.0
      %1251 = vmatpush1.msra.mxu0 0.0
      %1252 = vmatprep.subr.mxu0 0.0
      %1253 = vmatpush1.msra.mxu0 0.0
      %1254 = vmatprep.subr.mxu0 0.0
      %1255 = vmatpush1.msra.mxu0 0.0
      %1256 = vmatprep.subr.mxu0 0.0
      %1257 = vmatpush1.msra.mxu0 0.0
      %1258 = vmatprep.subr.mxu0 0.0
      %1259 = vmatpush1.msra.mxu0 0.0
      %1260 = vmatprep.subr.mxu0 0.0
      %1261 = vmatpush1.msra.mxu0 0.0
      %1262 = vmatprep.subr.mxu0 0.0
      %1263 = vmatpush1.msra.mxu0 0.0
      %1264 = vmatprep.mubr.f32.mxu0 0.0
      %1265 = vmatmul.mubr.f32.gmra.mrb[0].mxu0 %v1170
      %v1266 = vpop.f32.mrb[0].mxu0
      %v1267 = vadd.f32 0.0, %v1266
      %v1268 = vpop.f32.mrb[0].mxu0
      %1269 = vmatprep.mubr.f32.mxu0 0.0
      %1270 = vmatmul.mubr.f32.gmra.mrb[0].mxu0 %v1171
      %v1271 = vpop.f32.mrb[0].mxu0
      %v1272 = vadd.f32 0.0, %v1271
      %v1273 = vpop.f32.mrb[0].mxu0
      %1274 = vmatprep.mubr.f32.mxu0 0.0
      %1275 = vmatmul.mubr.f32.gmra.mrb[0].mxu0 %v1172
      %v1276 = vpop.f32.mrb[0].mxu0
      %v1277 = vadd.f32 0.0, %v1276
      %v1278 = vpop.f32.mrb[0].mxu0
      %1279 = vmatprep.mubr.f32.mxu0 0.0
      %1280 = vmatmul.mubr.f32.gmra.mrb[0].mxu0 %v1173
      %v1281 = vpop.f32.mrb[0].mxu0
      %v1282 = vadd.f32 0.0, %v1281
      %v1283 = vpop.f32.mrb[0].mxu0
      %1284 = vmatprep.mubr.f32.mxu0 0.0
      %1285 = vmatmul.mubr.f32.gmra.mrb[0].mxu0 %v1174
      %v1286 = vpop.f32.mrb[0].mxu0
      %v1287 = vadd.f32 0.0, %v1286
      %v1288 = vpop.f32.mrb[0].mxu0
      %1289 = vmatprep.mubr.f32.mxu0 0.0
      %1290 = vmatmul.mubr.f32.gmra.mrb[0].mxu0 %v1175
      %v1291 = vpop.f32.mrb[0].mxu0
      %v1292 = vadd.f32 0.0, %v1291
      %v1293 = vpop.f32.mrb[0].mxu0
      %1294 = vmatprep.mubr.f32.mxu0 0.0
      %1295 = vmatmul.mubr.f32.gmra.mrb[0].mxu0 %v1176
      %v1296 = vpop.f32.mrb[0].mxu0
      %v1297 = vadd.f32 0.0, %v1296
      %v1298 = vpop.f32.mrb[0].mxu0
      %1299 = vmatprep.mubr.f32.mxu0 0.0
      %1300 = vmatmul.mubr.f32.gmra.mrb[0].mxu0 %v1177
      %v1301 = vpop.f32.mrb[0].mxu0
      %v1302 = vadd.f32 0.0, %v1301
      %v1303 = vpop.f32.mrb[0].mxu0
      %1304 = vmatprep.mubr.f32.mxu0 0.0
      %1305 = vmatmul.mubr.f32.gmra.mrb[0].mxu0 %v1178
      %v1306 = vpop.f32.mrb[0].mxu0
      %v1307 = vadd.f32 0.0, %v1306
      %v1308 = vpop.f32.mrb[0].mxu0
      %1309 = vmatprep.mubr.f32.mxu0 0.0
      %1310 = vmatmul.mubr.f32.gmra.mrb[0].mxu0 %v1179
      %v1311 = vpop.f32.mrb[0].mxu0
      %v1312 = vadd.f32 0.0, %v1311
      %v1313 = vpop.f32.mrb[0].mxu0
      %1314 = vmatprep.mubr.f32.mxu0 0.0
      %1315 = vmatmul.mubr.f32.gmra.mrb[0].mxu0 %v1180
      %v1316 = vpop.f32.mrb[0].mxu0
      %v1317 = vadd.f32 0.0, %v1316
      %v1318 = vpop.f32.mrb[0].mxu0
      %1319 = vmatprep.mubr.f32.mxu0 0.0
      %1320 = vmatmul.mubr.f32.gmra.mrb[0].mxu0 %v1181
      %v1321 = vpop.f32.mrb[0].mxu0
      %v1322 = vadd.f32 0.0, %v1321
      %v1323 = vpop.f32.mrb[0].mxu0
      %1324 = vmatprep.mubr.f32.mxu0 0.0
      %1325 = vmatmul.mubr.f32.gmra.mrb[0].mxu0 %v1182
      %v1326 = vpop.f32.mrb[0].mxu0
      %v1327 = vadd.f32 0.0, %v1326
      %v1328 = vpop.f32.mrb[0].mxu0
      %1329 = vdwg.mxu0
      %v1330 = vadd.f32 %v1157, %v1267
      %v1331 = vadd.f32 %v1158, %v1272
      %v1332 = vadd.f32 %v1159, %v1277
      %v1333 = vadd.f32 %v1160, %v1282
      %v1334 = vadd.f32 %v1161, %v1287
      %v1335 = vadd.f32 %v1162, %v1292
      %v1336 = vadd.f32 %v1163, %v1297
      %v1337 = vadd.f32 %v1164, %v1302
      %v1338 = vadd.f32 %v1165, %v1307
      %v1339 = vadd.f32 %v1166, %v1312
      %v1340 = vadd.f32 %v1167, %v1317
      %v1341 = vadd.f32 %v1168, %v1322
      %v1342 = vadd.f32 %v1169, %v1327
      %v1343 = vld [vmem:[#allocation2 + $0xc] sm:$0xff]
      %v1344 = vld [vmem:[#allocation2 + $0x14] sm:$0xff]
      %v1345 = vld [vmem:[#allocation2 + $0x1c] sm:$0xff]
      %v1346 = vld [vmem:[#allocation2 + $0x24] sm:$0xff]
      %v1347 = vld [vmem:[#allocation2 + $0x2c] sm:$0xff]
      %v1348 = vld [vmem:[#allocation2 + $0x34] sm:$0xff]
      %v1349 = vld [vmem:[#allocation2 + $0x3c] sm:$0xff]
      %v1350 = vld [vmem:[#allocation2 + $0x44] sm:$0xff]
      %v1351 = vld [vmem:[#allocation2 + $0x4c] sm:$0xff]
      %v1352 = vld [vmem:[#allocation2 + $0x54] sm:$0xff]
      %v1353 = vld [vmem:[#allocation2 + $0x5c] sm:$0xff]
      %v1354 = vld [vmem:[#allocation2 + $0x64] sm:$0xff]
      %v1355 = vld [vmem:[#allocation2 + $0x6c] sm:$0xf]
      %s1356 = scalar_lea.vmem %s4, 640
      %v1357 = vld [vmem:[%s1356] sm:$0xff]
      %v1358 = vld [vmem:[%s1356 + $0x8] sm:$0xff]
      %v1359 = vld [vmem:[%s1356 + $0x10] sm:$0xff]
      %v1360 = vld [vmem:[%s1356 + $0x18] sm:$0xff]
      %v1361 = vld [vmem:[%s1356 + $0x20] sm:$0xff]
      %v1362 = vld [vmem:[%s1356 + $0x28] sm:$0xff]
      %v1363 = vld [vmem:[%s1356 + $0x30] sm:$0xff]
      %v1364 = vld [vmem:[%s1356 + $0x38] sm:$0xff]
      %v1365 = vld [vmem:[%s1356 + $0x40] sm:$0xff]
      %v1366 = vld [vmem:[%s1356 + $0x48] sm:$0xff]
      %v1367 = vld [vmem:[%s1356 + $0x50] sm:$0xff]
      %v1368 = vld [vmem:[%s1356 + $0x58] sm:$0xff]
      %v1369 = vld [vmem:[%s1356 + $0x60] sm:$0xff]
      %v1370 = vld [vmem:[%s1356 + $0x68] sm:$0xff]
      %v1371 = vld [vmem:[%s1356 + $0x70] sm:$0xff]
      %v1372 = vld [vmem:[%s1356 + $0x78] sm:$0xff]
      %1373 = vmatprep.subr.mxu0 0.0
      %1374 = vmatpush1.msra.mxu0 %v1357
      %1375 = vmatprep.subr.mxu0 0.0
      %1376 = vmatpush1.msra.mxu0 %v1358
      %1377 = vmatprep.subr.mxu0 0.0
      %1378 = vmatpush1.msra.mxu0 %v1359
      %1379 = vmatprep.subr.mxu0 0.0
      %1380 = vmatpush1.msra.mxu0 %v1360
      %1381 = vmatprep.subr.mxu0 0.0
      %1382 = vmatpush1.msra.mxu0 %v1361
      %1383 = vmatprep.subr.mxu0 0.0
      %1384 = vmatpush1.msra.mxu0 %v1362
      %1385 = vmatprep.subr.mxu0 0.0
      %1386 = vmatpush1.msra.mxu0 %v1363
      %1387 = vmatprep.subr.mxu0 0.0
      %1388 = vmatpush1.msra.mxu0 %v1364
      %1389 = vmatprep.subr.mxu0 0.0
      %1390 = vmatpush1.msra.mxu0 %v1365
      %1391 = vmatprep.subr.mxu0 0.0
      %1392 = vmatpush1.msra.mxu0 %v1366
      %1393 = vmatprep.subr.mxu0 0.0
      %1394 = vmatpush1.msra.mxu0 %v1367
      %1395 = vmatprep.subr.mxu0 0.0
      %1396 = vmatpush1.msra.mxu0 %v1368
      %1397 = vmatprep.subr.mxu0 0.0
      %1398 = vmatpush1.msra.mxu0 %v1369
      %1399 = vmatprep.subr.mxu0 0.0
      %1400 = vmatpush1.msra.mxu0 %v1370
      %1401 = vmatprep.subr.mxu0 0.0
      %1402 = vmatpush1.msra.mxu0 %v1371
      %1403 = vmatprep.subr.mxu0 0.0
      %1404 = vmatpush1.msra.mxu0 %v1372
      %1405 = vmatprep.subr.mxu0 0.0
      %1406 = vmatpush1.msra.mxu0 0.0
      %1407 = vmatprep.subr.mxu0 0.0
      %1408 = vmatpush1.msra.mxu0 0.0
      %1409 = vmatprep.subr.mxu0 0.0
      %1410 = vmatpush1.msra.mxu0 0.0
      %1411 = vmatprep.subr.mxu0 0.0
      %1412 = vmatpush1.msra.mxu0 0.0
      %1413 = vmatprep.subr.mxu0 0.0
      %1414 = vmatpush1.msra.mxu0 0.0
      %1415 = vmatprep.subr.mxu0 0.0
      %1416 = vmatpush1.msra.mxu0 0.0
      %1417 = vmatprep.subr.mxu0 0.0
      %1418 = vmatpush1.msra.mxu0 0.0
      %1419 = vmatprep.subr.mxu0 0.0
      %1420 = vmatpush1.msra.mxu0 0.0
      %1421 = vmatprep.subr.mxu0 0.0
      %1422 = vmatpush1.msra.mxu0 0.0
      %1423 = vmatprep.subr.mxu0 0.0
      %1424 = vmatpush1.msra.mxu0 0.0
      %1425 = vmatprep.subr.mxu0 0.0
      %1426 = vmatpush1.msra.mxu0 0.0
      %1427 = vmatprep.subr.mxu0 0.0
      %1428 = vmatpush1.msra.mxu0 0.0
      %1429 = vmatprep.subr.mxu0 0.0
      %1430 = vmatpush1.msra.mxu0 0.0
      %1431 = vmatprep.subr.mxu0 0.0
      %1432 = vmatpush1.msra.mxu0 0.0
      %1433 = vmatprep.subr.mxu0 0.0
      %1434 = vmatpush1.msra.mxu0 0.0
      %1435 = vmatprep.subr.mxu0 0.0
      %1436 = vmatpush1.msra.mxu0 0.0
      %1437 = vmatprep.mubr.f32.mxu0 0.0
      %1438 = vmatmul.mubr.f32.gmra.mrb[0].mxu0 %v1343
      %v1439 = vpop.f32.mrb[0].mxu0
      %v1440 = vadd.f32 0.0, %v1439
      %v1441 = vpop.f32.mrb[0].mxu0
      %1442 = vmatprep.mubr.f32.mxu0 0.0
      %1443 = vmatmul.mubr.f32.gmra.mrb[0].mxu0 %v1344
      %v1444 = vpop.f32.mrb[0].mxu0
      %v1445 = vadd.f32 0.0, %v1444
      %v1446 = vpop.f32.mrb[0].mxu0
      %1447 = vmatprep.mubr.f32.mxu0 0.0
      %1448 = vmatmul.mubr.f32.gmra.mrb[0].mxu0 %v1345
      %v1449 = vpop.f32.mrb[0].mxu0
      %v1450 = vadd.f32 0.0, %v1449
      %v1451 = vpop.f32.mrb[0].mxu0
      %1452 = vmatprep.mubr.f32.mxu0 0.0
      %1453 = vmatmul.mubr.f32.gmra.mrb[0].mxu0 %v1346
      %v1454 = vpop.f32.mrb[0].mxu0
      %v1455 = vadd.f32 0.0, %v1454
      %v1456 = vpop.f32.mrb[0].mxu0
      %1457 = vmatprep.mubr.f32.mxu0 0.0
      %1458 = vmatmul.mubr.f32.gmra.mrb[0].mxu0 %v1347
      %v1459 = vpop.f32.mrb[0].mxu0
      %v1460 = vadd.f32 0.0, %v1459
      %v1461 = vpop.f32.mrb[0].mxu0
      %1462 = vmatprep.mubr.f32.mxu0 0.0
      %1463 = vmatmul.mubr.f32.gmra.mrb[0].mxu0 %v1348
      %v1464 = vpop.f32.mrb[0].mxu0
      %v1465 = vadd.f32 0.0, %v1464
      %v1466 = vpop.f32.mrb[0].mxu0
      %1467 = vmatprep.mubr.f32.mxu0 0.0
      %1468 = vmatmul.mubr.f32.gmra.mrb[0].mxu0 %v1349
      %v1469 = vpop.f32.mrb[0].mxu0
      %v1470 = vadd.f32 0.0, %v1469
      %v1471 = vpop.f32.mrb[0].mxu0
      %1472 = vmatprep.mubr.f32.mxu0 0.0
      %1473 = vmatmul.mubr.f32.gmra.mrb[0].mxu0 %v1350
      %v1474 = vpop.f32.mrb[0].mxu0
      %v1475 = vadd.f32 0.0, %v1474
      %v1476 = vpop.f32.mrb[0].mxu0
      %1477 = vmatprep.mubr.f32.mxu0 0.0
      %1478 = vmatmul.mubr.f32.gmra.mrb[0].mxu0 %v1351
      %v1479 = vpop.f32.mrb[0].mxu0
      %v1480 = vadd.f32 0.0, %v1479
      %v1481 = vpop.f32.mrb[0].mxu0
      %1482 = vmatprep.mubr.f32.mxu0 0.0
      %1483 = vmatmul.mubr.f32.gmra.mrb[0].mxu0 %v1352
      %v1484 = vpop.f32.mrb[0].mxu0
      %v1485 = vadd.f32 0.0, %v1484
      %v1486 = vpop.f32.mrb[0].mxu0
      %1487 = vmatprep.mubr.f32.mxu0 0.0
      %1488 = vmatmul.mubr.f32.gmra.mrb[0].mxu0 %v1353
      %v1489 = vpop.f32.mrb[0].mxu0
      %v1490 = vadd.f32 0.0, %v1489
      %v1491 = vpop.f32.mrb[0].mxu0
      %1492 = vmatprep.mubr.f32.mxu0 0.0
      %1493 = vmatmul.mubr.f32.gmra.mrb[0].mxu0 %v1354
      %v1494 = vpop.f32.mrb[0].mxu0
      %v1495 = vadd.f32 0.0, %v1494
      %v1496 = vpop.f32.mrb[0].mxu0
      %1497 = vmatprep.mubr.f32.mxu0 0.0
      %1498 = vmatmul.mubr.f32.gmra.mrb[0].mxu0 %v1355
      %v1499 = vpop.f32.mrb[0].mxu0
      %v1500 = vadd.f32 0.0, %v1499
      %v1501 = vpop.f32.mrb[0].mxu0
      %1502 = vdwg.mxu0
      %v1503 = vadd.f32 %v1330, %v1440
      %v1504 = vadd.f32 %v1331, %v1445
      %v1505 = vadd.f32 %v1332, %v1450
      %v1506 = vadd.f32 %v1333, %v1455
      %v1507 = vadd.f32 %v1334, %v1460
      %v1508 = vadd.f32 %v1335, %v1465
      %v1509 = vadd.f32 %v1336, %v1470
      %v1510 = vadd.f32 %v1337, %v1475
      %v1511 = vadd.f32 %v1338, %v1480
      %v1512 = vadd.f32 %v1339, %v1485
      %v1513 = vadd.f32 %v1340, %v1490
      %v1514 = vadd.f32 %v1341, %v1495
      %v1515 = vadd.f32 %v1342, %v1500
      %v1516 = vld [vmem:[#allocation2 + $0x14] sm:$0xff]
      %v1517 = vld [vmem:[#allocation2 + $0x1c] sm:$0xff]
      %v1518 = vld [vmem:[#allocation2 + $0x24] sm:$0xff]
      %v1519 = vld [vmem:[#allocation2 + $0x2c] sm:$0xff]
      %v1520 = vld [vmem:[#allocation2 + $0x34] sm:$0xff]
      %v1521 = vld [vmem:[#allocation2 + $0x3c] sm:$0xff]
      %v1522 = vld [vmem:[#allocation2 + $0x44] sm:$0xff]
      %v1523 = vld [vmem:[#allocation2 + $0x4c] sm:$0xff]
      %v1524 = vld [vmem:[#allocation2 + $0x54] sm:$0xff]
      %v1525 = vld [vmem:[#allocation2 + $0x5c] sm:$0xff]
      %v1526 = vld [vmem:[#allocation2 + $0x64] sm:$0xff]
      %v1527 = vld [vmem:[#allocation2 + $0x6c] sm:$0xff]
      %v1528 = vld [vmem:[#allocation2 + $0x74] sm:$0xf]
      %s1529 = scalar_lea.vmem %s4, 768
      %v1530 = vld [vmem:[%s1529] sm:$0xff]
      %v1531 = vld [vmem:[%s1529 + $0x8] sm:$0xff]
      %v1532 = vld [vmem:[%s1529 + $0x10] sm:$0xff]
      %v1533 = vld [vmem:[%s1529 + $0x18] sm:$0xff]
      %v1534 = vld [vmem:[%s1529 + $0x20] sm:$0xff]
      %v1535 = vld [vmem:[%s1529 + $0x28] sm:$0xff]
      %v1536 = vld [vmem:[%s1529 + $0x30] sm:$0xff]
      %v1537 = vld [vmem:[%s1529 + $0x38] sm:$0xff]
      %v1538 = vld [vmem:[%s1529 + $0x40] sm:$0xff]
      %v1539 = vld [vmem:[%s1529 + $0x48] sm:$0xff]
      %v1540 = vld [vmem:[%s1529 + $0x50] sm:$0xff]
      %v1541 = vld [vmem:[%s1529 + $0x58] sm:$0xff]
      %v1542 = vld [vmem:[%s1529 + $0x60] sm:$0xff]
      %v1543 = vld [vmem:[%s1529 + $0x68] sm:$0xff]
      %v1544 = vld [vmem:[%s1529 + $0x70] sm:$0xff]
      %v1545 = vld [vmem:[%s1529 + $0x78] sm:$0xff]
      %1546 = vmatprep.subr.mxu0 0.0
      %1547 = vmatpush1.msra.mxu0 %v1530
      %1548 = vmatprep.subr.mxu0 0.0
      %1549 = vmatpush1.msra.mxu0 %v1531
      %1550 = vmatprep.subr.mxu0 0.0
      %1551 = vmatpush1.msra.mxu0 %v1532
      %1552 = vmatprep.subr.mxu0 0.0
      %1553 = vmatpush1.msra.mxu0 %v1533
      %1554 = vmatprep.subr.mxu0 0.0
      %1555 = vmatpush1.msra.mxu0 %v1534
      %1556 = vmatprep.subr.mxu0 0.0
      %1557 = vmatpush1.msra.mxu0 %v1535
      %1558 = vmatprep.subr.mxu0 0.0
      %1559 = vmatpush1.msra.mxu0 %v1536
      %1560 = vmatprep.subr.mxu0 0.0
      %1561 = vmatpush1.msra.mxu0 %v1537
      %1562 = vmatprep.subr.mxu0 0.0
      %1563 = vmatpush1.msra.mxu0 %v1538
      %1564 = vmatprep.subr.mxu0 0.0
      %1565 = vmatpush1.msra.mxu0 %v1539
      %1566 = vmatprep.subr.mxu0 0.0
      %1567 = vmatpush1.msra.mxu0 %v1540
      %1568 = vmatprep.subr.mxu0 0.0
      %1569 = vmatpush1.msra.mxu0 %v1541
      %1570 = vmatprep.subr.mxu0 0.0
      %1571 = vmatpush1.msra.mxu0 %v1542
      %1572 = vmatprep.subr.mxu0 0.0
      %1573 = vmatpush1.msra.mxu0 %v1543
      %1574 = vmatprep.subr.mxu0 0.0
      %1575 = vmatpush1.msra.mxu0 %v1544
      %1576 = vmatprep.subr.mxu0 0.0
      %1577 = vmatpush1.msra.mxu0 %v1545
      %1578 = vmatprep.subr.mxu0 0.0
      %1579 = vmatpush1.msra.mxu0 0.0
      %1580 = vmatprep.subr.mxu0 0.0
      %1581 = vmatpush1.msra.mxu0 0.0
      %1582 = vmatprep.subr.mxu0 0.0
      %1583 = vmatpush1.msra.mxu0 0.0
      %1584 = vmatprep.subr.mxu0 0.0
      %1585 = vmatpush1.msra.mxu0 0.0
      %1586 = vmatprep.subr.mxu0 0.0
      %1587 = vmatpush1.msra.mxu0 0.0
      %1588 = vmatprep.subr.mxu0 0.0
      %1589 = vmatpush1.msra.mxu0 0.0
      %1590 = vmatprep.subr.mxu0 0.0
      %1591 = vmatpush1.msra.mxu0 0.0
      %1592 = vmatprep.subr.mxu0 0.0
      %1593 = vmatpush1.msra.mxu0 0.0
      %1594 = vmatprep.subr.mxu0 0.0
      %1595 = vmatpush1.msra.mxu0 0.0
      %1596 = vmatprep.subr.mxu0 0.0
      %1597 = vmatpush1.msra.mxu0 0.0
      %1598 = vmatprep.subr.mxu0 0.0
      %1599 = vmatpush1.msra.mxu0 0.0
      %1600 = vmatprep.subr.mxu0 0.0
      %1601 = vmatpush1.msra.mxu0 0.0
      %1602 = vmatprep.subr.mxu0 0.0
      %1603 = vmatpush1.msra.mxu0 0.0
      %1604 = vmatprep.subr.mxu0 0.0
      %1605 = vmatpush1.msra.mxu0 0.0
      %1606 = vmatprep.subr.mxu0 0.0
      %1607 = vmatpush1.msra.mxu0 0.0
      %1608 = vmatprep.subr.mxu0 0.0
      %1609 = vmatpush1.msra.mxu0 0.0
      %1610 = vmatprep.mubr.f32.mxu0 0.0
      %1611 = vmatmul.mubr.f32.gmra.mrb[0].mxu0 %v1516
      %v1612 = vpop.f32.mrb[0].mxu0
      %v1613 = vadd.f32 0.0, %v1612
      %v1614 = vpop.f32.mrb[0].mxu0
      %1615 = vmatprep.mubr.f32.mxu0 0.0
      %1616 = vmatmul.mubr.f32.gmra.mrb[0].mxu0 %v1517
      %v1617 = vpop.f32.mrb[0].mxu0
      %v1618 = vadd.f32 0.0, %v1617
      %v1619 = vpop.f32.mrb[0].mxu0
      %1620 = vmatprep.mubr.f32.mxu0 0.0
      %1621 = vmatmul.mubr.f32.gmra.mrb[0].mxu0 %v1518
      %v1622 = vpop.f32.mrb[0].mxu0
      %v1623 = vadd.f32 0.0, %v1622
      %v1624 = vpop.f32.mrb[0].mxu0
      %1625 = vmatprep.mubr.f32.mxu0 0.0
      %1626 = vmatmul.mubr.f32.gmra.mrb[0].mxu0 %v1519
      %v1627 = vpop.f32.mrb[0].mxu0
      %v1628 = vadd.f32 0.0, %v1627
      %v1629 = vpop.f32.mrb[0].mxu0
      %1630 = vmatprep.mubr.f32.mxu0 0.0
      %1631 = vmatmul.mubr.f32.gmra.mrb[0].mxu0 %v1520
      %v1632 = vpop.f32.mrb[0].mxu0
      %v1633 = vadd.f32 0.0, %v1632
      %v1634 = vpop.f32.mrb[0].mxu0
      %1635 = vmatprep.mubr.f32.mxu0 0.0
      %1636 = vmatmul.mubr.f32.gmra.mrb[0].mxu0 %v1521
      %v1637 = vpop.f32.mrb[0].mxu0
      %v1638 = vadd.f32 0.0, %v1637
      %v1639 = vpop.f32.mrb[0].mxu0
      %1640 = vmatprep.mubr.f32.mxu0 0.0
      %1641 = vmatmul.mubr.f32.gmra.mrb[0].mxu0 %v1522
      %v1642 = vpop.f32.mrb[0].mxu0
      %v1643 = vadd.f32 0.0, %v1642
      %v1644 = vpop.f32.mrb[0].mxu0
      %1645 = vmatprep.mubr.f32.mxu0 0.0
      %1646 = vmatmul.mubr.f32.gmra.mrb[0].mxu0 %v1523
      %v1647 = vpop.f32.mrb[0].mxu0
      %v1648 = vadd.f32 0.0, %v1647
      %v1649 = vpop.f32.mrb[0].mxu0
      %1650 = vmatprep.mubr.f32.mxu0 0.0
      %1651 = vmatmul.mubr.f32.gmra.mrb[0].mxu0 %v1524
      %v1652 = vpop.f32.mrb[0].mxu0
      %v1653 = vadd.f32 0.0, %v1652
      %v1654 = vpop.f32.mrb[0].mxu0
      %1655 = vmatprep.mubr.f32.mxu0 0.0
      %1656 = vmatmul.mubr.f32.gmra.mrb[0].mxu0 %v1525
      %v1657 = vpop.f32.mrb[0].mxu0
      %v1658 = vadd.f32 0.0, %v1657
      %v1659 = vpop.f32.mrb[0].mxu0
      %1660 = vmatprep.mubr.f32.mxu0 0.0
      %1661 = vmatmul.mubr.f32.gmra.mrb[0].mxu0 %v1526
      %v1662 = vpop.f32.mrb[0].mxu0
      %v1663 = vadd.f32 0.0, %v1662
      %v1664 = vpop.f32.mrb[0].mxu0
      %1665 = vmatprep.mubr.f32.mxu0 0.0
      %1666 = vmatmul.mubr.f32.gmra.mrb[0].mxu0 %v1527
      %v1667 = vpop.f32.mrb[0].mxu0
      %v1668 = vadd.f32 0.0, %v1667
      %v1669 = vpop.f32.mrb[0].mxu0
      %1670 = vmatprep.mubr.f32.mxu0 0.0
      %1671 = vmatmul.mubr.f32.gmra.mrb[0].mxu0 %v1528
      %v1672 = vpop.f32.mrb[0].mxu0
      %v1673 = vadd.f32 0.0, %v1672
      %v1674 = vpop.f32.mrb[0].mxu0
      %1675 = vdwg.mxu0
      %v1676 = vadd.f32 %v1503, %v1613
      %v1677 = vadd.f32 %v1504, %v1618
      %v1678 = vadd.f32 %v1505, %v1623
      %v1679 = vadd.f32 %v1506, %v1628
      %v1680 = vadd.f32 %v1507, %v1633
      %v1681 = vadd.f32 %v1508, %v1638
      %v1682 = vadd.f32 %v1509, %v1643
      %v1683 = vadd.f32 %v1510, %v1648
      %v1684 = vadd.f32 %v1511, %v1653
      %v1685 = vadd.f32 %v1512, %v1658
      %v1686 = vadd.f32 %v1513, %v1663
      %v1687 = vadd.f32 %v1514, %v1668
      %v1688 = vadd.f32 %v1515, %v1673
      %v1689 = vld [vmem:[#allocation2 + $0x15] sm:$0xff]
      %v1690 = vld [vmem:[#allocation2 + $0x1d] sm:$0xff]
      %v1691 = vld [vmem:[#allocation2 + $0x25] sm:$0xff]
      %v1692 = vld [vmem:[#allocation2 + $0x2d] sm:$0xff]
      %v1693 = vld [vmem:[#allocation2 + $0x35] sm:$0xff]
      %v1694 = vld [vmem:[#allocation2 + $0x3d] sm:$0xff]
      %v1695 = vld [vmem:[#allocation2 + $0x45] sm:$0xff]
      %v1696 = vld [vmem:[#allocation2 + $0x4d] sm:$0xff]
      %v1697 = vld [vmem:[#allocation2 + $0x55] sm:$0xff]
      %v1698 = vld [vmem:[#allocation2 + $0x5d] sm:$0xff]
      %v1699 = vld [vmem:[#allocation2 + $0x65] sm:$0xff]
      %v1700 = vld [vmem:[#allocation2 + $0x6d] sm:$0xff]
      %v1701 = vld [vmem:[#allocation2 + $0x75] sm:$0xf]
      %s1702 = scalar_lea.vmem %s4, 896
      %v1703 = vld [vmem:[%s1702] sm:$0xff]
      %v1704 = vld [vmem:[%s1702 + $0x8] sm:$0xff]
      %v1705 = vld [vmem:[%s1702 + $0x10] sm:$0xff]
      %v1706 = vld [vmem:[%s1702 + $0x18] sm:$0xff]
      %v1707 = vld [vmem:[%s1702 + $0x20] sm:$0xff]
      %v1708 = vld [vmem:[%s1702 + $0x28] sm:$0xff]
      %v1709 = vld [vmem:[%s1702 + $0x30] sm:$0xff]
      %v1710 = vld [vmem:[%s1702 + $0x38] sm:$0xff]
      %v1711 = vld [vmem:[%s1702 + $0x40] sm:$0xff]
      %v1712 = vld [vmem:[%s1702 + $0x48] sm:$0xff]
      %v1713 = vld [vmem:[%s1702 + $0x50] sm:$0xff]
      %v1714 = vld [vmem:[%s1702 + $0x58] sm:$0xff]
      %v1715 = vld [vmem:[%s1702 + $0x60] sm:$0xff]
      %v1716 = vld [vmem:[%s1702 + $0x68] sm:$0xff]
      %v1717 = vld [vmem:[%s1702 + $0x70] sm:$0xff]
      %v1718 = vld [vmem:[%s1702 + $0x78] sm:$0xff]
      %1719 = vmatprep.subr.mxu0 0.0
      %1720 = vmatpush1.msra.mxu0 %v1703
      %1721 = vmatprep.subr.mxu0 0.0
      %1722 = vmatpush1.msra.mxu0 %v1704
      %1723 = vmatprep.subr.mxu0 0.0
      %1724 = vmatpush1.msra.mxu0 %v1705
      %1725 = vmatprep.subr.mxu0 0.0
      %1726 = vmatpush1.msra.mxu0 %v1706
      %1727 = vmatprep.subr.mxu0 0.0
      %1728 = vmatpush1.msra.mxu0 %v1707
      %1729 = vmatprep.subr.mxu0 0.0
      %1730 = vmatpush1.msra.mxu0 %v1708
      %1731 = vmatprep.subr.mxu0 0.0
      %1732 = vmatpush1.msra.mxu0 %v1709
      %1733 = vmatprep.subr.mxu0 0.0
      %1734 = vmatpush1.msra.mxu0 %v1710
      %1735 = vmatprep.subr.mxu0 0.0
      %1736 = vmatpush1.msra.mxu0 %v1711
      %1737 = vmatprep.subr.mxu0 0.0
      %1738 = vmatpush1.msra.mxu0 %v1712
      %1739 = vmatprep.subr.mxu0 0.0
      %1740 = vmatpush1.msra.mxu0 %v1713
      %1741 = vmatprep.subr.mxu0 0.0
      %1742 = vmatpush1.msra.mxu0 %v1714
      %1743 = vmatprep.subr.mxu0 0.0
      %1744 = vmatpush1.msra.mxu0 %v1715
      %1745 = vmatprep.subr.mxu0 0.0
      %1746 = vmatpush1.msra.mxu0 %v1716
      %1747 = vmatprep.subr.mxu0 0.0
      %1748 = vmatpush1.msra.mxu0 %v1717
      %1749 = vmatprep.subr.mxu0 0.0
      %1750 = vmatpush1.msra.mxu0 %v1718
      %1751 = vmatprep.subr.mxu0 0.0
      %1752 = vmatpush1.msra.mxu0 0.0
      %1753 = vmatprep.subr.mxu0 0.0
      %1754 = vmatpush1.msra.mxu0 0.0
      %1755 = vmatprep.subr.mxu0 0.0
      %1756 = vmatpush1.msra.mxu0 0.0
      %1757 = vmatprep.subr.mxu0 0.0
      %1758 = vmatpush1.msra.mxu0 0.0
      %1759 = vmatprep.subr.mxu0 0.0
      %1760 = vmatpush1.msra.mxu0 0.0
      %1761 = vmatprep.subr.mxu0 0.0
      %1762 = vmatpush1.msra.mxu0 0.0
      %1763 = vmatprep.subr.mxu0 0.0
      %1764 = vmatpush1.msra.mxu0 0.0
      %1765 = vmatprep.subr.mxu0 0.0
      %1766 = vmatpush1.msra.mxu0 0.0
      %1767 = vmatprep.subr.mxu0 0.0
      %1768 = vmatpush1.msra.mxu0 0.0
      %1769 = vmatprep.subr.mxu0 0.0
      %1770 = vmatpush1.msra.mxu0 0.0
      %1771 = vmatprep.subr.mxu0 0.0
      %1772 = vmatpush1.msra.mxu0 0.0
      %1773 = vmatprep.subr.mxu0 0.0
      %1774 = vmatpush1.msra.mxu0 0.0
      %1775 = vmatprep.subr.mxu0 0.0
      %1776 = vmatpush1.msra.mxu0 0.0
      %1777 = vmatprep.subr.mxu0 0.0
      %1778 = vmatpush1.msra.mxu0 0.0
      %1779 = vmatprep.subr.mxu0 0.0
      %1780 = vmatpush1.msra.mxu0 0.0
      %1781 = vmatprep.subr.mxu0 0.0
      %1782 = vmatpush1.msra.mxu0 0.0
      %1783 = vmatprep.mubr.f32.mxu0 0.0
      %1784 = vmatmul.mubr.f32.gmra.mrb[0].mxu0 %v1689
      %v1785 = vpop.f32.mrb[0].mxu0
      %v1786 = vadd.f32 0.0, %v1785
      %v1787 = vpop.f32.mrb[0].mxu0
      %1788 = vmatprep.mubr.f32.mxu0 0.0
      %1789 = vmatmul.mubr.f32.gmra.mrb[0].mxu0 %v1690
      %v1790 = vpop.f32.mrb[0].mxu0
      %v1791 = vadd.f32 0.0, %v1790
      %v1792 = vpop.f32.mrb[0].mxu0
      %1793 = vmatprep.mubr.f32.mxu0 0.0
      %1794 = vmatmul.mubr.f32.gmra.mrb[0].mxu0 %v1691
      %v1795 = vpop.f32.mrb[0].mxu0
      %v1796 = vadd.f32 0.0, %v1795
      %v1797 = vpop.f32.mrb[0].mxu0
      %1798 = vmatprep.mubr.f32.mxu0 0.0
      %1799 = vmatmul.mubr.f32.gmra.mrb[0].mxu0 %v1692
      %v1800 = vpop.f32.mrb[0].mxu0
      %v1801 = vadd.f32 0.0, %v1800
      %v1802 = vpop.f32.mrb[0].mxu0
      %1803 = vmatprep.mubr.f32.mxu0 0.0
      %1804 = vmatmul.mubr.f32.gmra.mrb[0].mxu0 %v1693
      %v1805 = vpop.f32.mrb[0].mxu0
      %v1806 = vadd.f32 0.0, %v1805
      %v1807 = vpop.f32.mrb[0].mxu0
      %1808 = vmatprep.mubr.f32.mxu0 0.0
      %1809 = vmatmul.mubr.f32.gmra.mrb[0].mxu0 %v1694
      %v1810 = vpop.f32.mrb[0].mxu0
      %v1811 = vadd.f32 0.0, %v1810
      %v1812 = vpop.f32.mrb[0].mxu0
      %1813 = vmatprep.mubr.f32.mxu0 0.0
      %1814 = vmatmul.mubr.f32.gmra.mrb[0].mxu0 %v1695
      %v1815 = vpop.f32.mrb[0].mxu0
      %v1816 = vadd.f32 0.0, %v1815
      %v1817 = vpop.f32.mrb[0].mxu0
      %1818 = vmatprep.mubr.f32.mxu0 0.0
      %1819 = vmatmul.mubr.f32.gmra.mrb[0].mxu0 %v1696
      %v1820 = vpop.f32.mrb[0].mxu0
      %v1821 = vadd.f32 0.0, %v1820
      %v1822 = vpop.f32.mrb[0].mxu0
      %1823 = vmatprep.mubr.f32.mxu0 0.0
      %1824 = vmatmul.mubr.f32.gmra.mrb[0].mxu0 %v1697
      %v1825 = vpop.f32.mrb[0].mxu0
      %v1826 = vadd.f32 0.0, %v1825
      %v1827 = vpop.f32.mrb[0].mxu0
      %1828 = vmatprep.mubr.f32.mxu0 0.0
      %1829 = vmatmul.mubr.f32.gmra.mrb[0].mxu0 %v1698
      %v1830 = vpop.f32.mrb[0].mxu0
      %v1831 = vadd.f32 0.0, %v1830
      %v1832 = vpop.f32.mrb[0].mxu0
      %1833 = vmatprep.mubr.f32.mxu0 0.0
      %1834 = vmatmul.mubr.f32.gmra.mrb[0].mxu0 %v1699
      %v1835 = vpop.f32.mrb[0].mxu0
      %v1836 = vadd.f32 0.0, %v1835
      %v1837 = vpop.f32.mrb[0].mxu0
      %1838 = vmatprep.mubr.f32.mxu0 0.0
      %1839 = vmatmul.mubr.f32.gmra.mrb[0].mxu0 %v1700
      %v1840 = vpop.f32.mrb[0].mxu0
      %v1841 = vadd.f32 0.0, %v1840
      %v1842 = vpop.f32.mrb[0].mxu0
      %1843 = vmatprep.mubr.f32.mxu0 0.0
      %1844 = vmatmul.mubr.f32.gmra.mrb[0].mxu0 %v1701
      %v1845 = vpop.f32.mrb[0].mxu0
      %v1846 = vadd.f32 0.0, %v1845
      %v1847 = vpop.f32.mrb[0].mxu0
      %1848 = vdwg.mxu0
      %v1849 = vadd.f32 %v1676, %v1786
      %v1850 = vadd.f32 %v1677, %v1791
      %v1851 = vadd.f32 %v1678, %v1796
      %v1852 = vadd.f32 %v1679, %v1801
      %v1853 = vadd.f32 %v1680, %v1806
      %v1854 = vadd.f32 %v1681, %v1811
      %v1855 = vadd.f32 %v1682, %v1816
      %v1856 = vadd.f32 %v1683, %v1821
      %v1857 = vadd.f32 %v1684, %v1826
      %v1858 = vadd.f32 %v1685, %v1831
      %v1859 = vadd.f32 %v1686, %v1836
      %v1860 = vadd.f32 %v1687, %v1841
      %v1861 = vadd.f32 %v1688, %v1846
      %v1862 = vld [vmem:[#allocation2 + $0x16] sm:$0xff]
      %v1863 = vld [vmem:[#allocation2 + $0x1e] sm:$0xff]
      %v1864 = vld [vmem:[#allocation2 + $0x26] sm:$0xff]
      %v1865 = vld [vmem:[#allocation2 + $0x2e] sm:$0xff]
      %v1866 = vld [vmem:[#allocation2 + $0x36] sm:$0xff]
      %v1867 = vld [vmem:[#allocation2 + $0x3e] sm:$0xff]
      %v1868 = vld [vmem:[#allocation2 + $0x46] sm:$0xff]
      %v1869 = vld [vmem:[#allocation2 + $0x4e] sm:$0xff]
      %v1870 = vld [vmem:[#allocation2 + $0x56] sm:$0xff]
      %v1871 = vld [vmem:[#allocation2 + $0x5e] sm:$0xff]
      %v1872 = vld [vmem:[#allocation2 + $0x66] sm:$0xff]
      %v1873 = vld [vmem:[#allocation2 + $0x6e] sm:$0xff]
      %v1874 = vld [vmem:[#allocation2 + $0x76] sm:$0xf]
      %s1875 = scalar_lea.vmem %s4, 1024
      %v1876 = vld [vmem:[%s1875] sm:$0xff]
      %v1877 = vld [vmem:[%s1875 + $0x8] sm:$0xff]
      %v1878 = vld [vmem:[%s1875 + $0x10] sm:$0xff]
      %v1879 = vld [vmem:[%s1875 + $0x18] sm:$0xff]
      %v1880 = vld [vmem:[%s1875 + $0x20] sm:$0xff]
      %v1881 = vld [vmem:[%s1875 + $0x28] sm:$0xff]
      %v1882 = vld [vmem:[%s1875 + $0x30] sm:$0xff]
      %v1883 = vld [vmem:[%s1875 + $0x38] sm:$0xff]
      %v1884 = vld [vmem:[%s1875 + $0x40] sm:$0xff]
      %v1885 = vld [vmem:[%s1875 + $0x48] sm:$0xff]
      %v1886 = vld [vmem:[%s1875 + $0x50] sm:$0xff]
      %v1887 = vld [vmem:[%s1875 + $0x58] sm:$0xff]
      %v1888 = vld [vmem:[%s1875 + $0x60] sm:$0xff]
      %v1889 = vld [vmem:[%s1875 + $0x68] sm:$0xff]
      %v1890 = vld [vmem:[%s1875 + $0x70] sm:$0xff]
      %v1891 = vld [vmem:[%s1875 + $0x78] sm:$0xff]
      %1892 = vmatprep.subr.mxu0 0.0
      %1893 = vmatpush1.msra.mxu0 %v1876
      %1894 = vmatprep.subr.mxu0 0.0
      %1895 = vmatpush1.msra.mxu0 %v1877
      %1896 = vmatprep.subr.mxu0 0.0
      %1897 = vmatpush1.msra.mxu0 %v1878
      %1898 = vmatprep.subr.mxu0 0.0
      %1899 = vmatpush1.msra.mxu0 %v1879
      %1900 = vmatprep.subr.mxu0 0.0
      %1901 = vmatpush1.msra.mxu0 %v1880
      %1902 = vmatprep.subr.mxu0 0.0
      %1903 = vmatpush1.msra.mxu0 %v1881
      %1904 = vmatprep.subr.mxu0 0.0
      %1905 = vmatpush1.msra.mxu0 %v1882
      %1906 = vmatprep.subr.mxu0 0.0
      %1907 = vmatpush1.msra.mxu0 %v1883
      %1908 = vmatprep.subr.mxu0 0.0
      %1909 = vmatpush1.msra.mxu0 %v1884
      %1910 = vmatprep.subr.mxu0 0.0
      %1911 = vmatpush1.msra.mxu0 %v1885
      %1912 = vmatprep.subr.mxu0 0.0
      %1913 = vmatpush1.msra.mxu0 %v1886
      %1914 = vmatprep.subr.mxu0 0.0
      %1915 = vmatpush1.msra.mxu0 %v1887
      %1916 = vmatprep.subr.mxu0 0.0
      %1917 = vmatpush1.msra.mxu0 %v1888
      %1918 = vmatprep.subr.mxu0 0.0
      %1919 = vmatpush1.msra.mxu0 %v1889
      %1920 = vmatprep.subr.mxu0 0.0
      %1921 = vmatpush1.msra.mxu0 %v1890
      %1922 = vmatprep.subr.mxu0 0.0
      %1923 = vmatpush1.msra.mxu0 %v1891
      %1924 = vmatprep.subr.mxu0 0.0
      %1925 = vmatpush1.msra.mxu0 0.0
      %1926 = vmatprep.subr.mxu0 0.0
      %1927 = vmatpush1.msra.mxu0 0.0
      %1928 = vmatprep.subr.mxu0 0.0
      %1929 = vmatpush1.msra.mxu0 0.0
      %1930 = vmatprep.subr.mxu0 0.0
      %1931 = vmatpush1.msra.mxu0 0.0
      %1932 = vmatprep.subr.mxu0 0.0
      %1933 = vmatpush1.msra.mxu0 0.0
      %1934 = vmatprep.subr.mxu0 0.0
      %1935 = vmatpush1.msra.mxu0 0.0
      %1936 = vmatprep.subr.mxu0 0.0
      %1937 = vmatpush1.msra.mxu0 0.0
      %1938 = vmatprep.subr.mxu0 0.0
      %1939 = vmatpush1.msra.mxu0 0.0
      %1940 = vmatprep.subr.mxu0 0.0
      %1941 = vmatpush1.msra.mxu0 0.0
      %1942 = vmatprep.subr.mxu0 0.0
      %1943 = vmatpush1.msra.mxu0 0.0
      %1944 = vmatprep.subr.mxu0 0.0
      %1945 = vmatpush1.msra.mxu0 0.0
      %1946 = vmatprep.subr.mxu0 0.0
      %1947 = vmatpush1.msra.mxu0 0.0
      %1948 = vmatprep.subr.mxu0 0.0
      %1949 = vmatpush1.msra.mxu0 0.0
      %1950 = vmatprep.subr.mxu0 0.0
      %1951 = vmatpush1.msra.mxu0 0.0
      %1952 = vmatprep.subr.mxu0 0.0
      %1953 = vmatpush1.msra.mxu0 0.0
      %1954 = vmatprep.subr.mxu0 0.0
      %1955 = vmatpush1.msra.mxu0 0.0
      %1956 = vmatprep.mubr.f32.mxu0 0.0
      %1957 = vmatmul.mubr.f32.gmra.mrb[0].mxu0 %v1862
      %v1958 = vpop.f32.mrb[0].mxu0
      %v1959 = vadd.f32 0.0, %v1958
      %v1960 = vpop.f32.mrb[0].mxu0
      %1961 = vmatprep.mubr.f32.mxu0 0.0
      %1962 = vmatmul.mubr.f32.gmra.mrb[0].mxu0 %v1863
      %v1963 = vpop.f32.mrb[0].mxu0
      %v1964 = vadd.f32 0.0, %v1963
      %v1965 = vpop.f32.mrb[0].mxu0
      %1966 = vmatprep.mubr.f32.mxu0 0.0
      %1967 = vmatmul.mubr.f32.gmra.mrb[0].mxu0 %v1864
      %v1968 = vpop.f32.mrb[0].mxu0
      %v1969 = vadd.f32 0.0, %v1968
      %v1970 = vpop.f32.mrb[0].mxu0
      %1971 = vmatprep.mubr.f32.mxu0 0.0
      %1972 = vmatmul.mubr.f32.gmra.mrb[0].mxu0 %v1865
      %v1973 = vpop.f32.mrb[0].mxu0
      %v1974 = vadd.f32 0.0, %v1973
      %v1975 = vpop.f32.mrb[0].mxu0
      %1976 = vmatprep.mubr.f32.mxu0 0.0
      %1977 = vmatmul.mubr.f32.gmra.mrb[0].mxu0 %v1866
      %v1978 = vpop.f32.mrb[0].mxu0
      %v1979 = vadd.f32 0.0, %v1978
      %v1980 = vpop.f32.mrb[0].mxu0
      %1981 = vmatprep.mubr.f32.mxu0 0.0
      %1982 = vmatmul.mubr.f32.gmra.mrb[0].mxu0 %v1867
      %v1983 = vpop.f32.mrb[0].mxu0
      %v1984 = vadd.f32 0.0, %v1983
      %v1985 = vpop.f32.mrb[0].mxu0
      %1986 = vmatprep.mubr.f32.mxu0 0.0
      %1987 = vmatmul.mubr.f32.gmra.mrb[0].mxu0 %v1868
      %v1988 = vpop.f32.mrb[0].mxu0
      %v1989 = vadd.f32 0.0, %v1988
      %v1990 = vpop.f32.mrb[0].mxu0
      %1991 = vmatprep.mubr.f32.mxu0 0.0
      %1992 = vmatmul.mubr.f32.gmra.mrb[0].mxu0 %v1869
      %v1993 = vpop.f32.mrb[0].mxu0
      %v1994 = vadd.f32 0.0, %v1993
      %v1995 = vpop.f32.mrb[0].mxu0
      %1996 = vmatprep.mubr.f32.mxu0 0.0
      %1997 = vmatmul.mubr.f32.gmra.mrb[0].mxu0 %v1870
      %v1998 = vpop.f32.mrb[0].mxu0
      %v1999 = vadd.f32 0.0, %v1998
      %v2000 = vpop.f32.mrb[0].mxu0
      %2001 = vmatprep.mubr.f32.mxu0 0.0
      %2002 = vmatmul.mubr.f32.gmra.mrb[0].mxu0 %v1871
      %v2003 = vpop.f32.mrb[0].mxu0
      %v2004 = vadd.f32 0.0, %v2003
      %v2005 = vpop.f32.mrb[0].mxu0
      %2006 = vmatprep.mubr.f32.mxu0 0.0
      %2007 = vmatmul.mubr.f32.gmra.mrb[0].mxu0 %v1872
      %v2008 = vpop.f32.mrb[0].mxu0
      %v2009 = vadd.f32 0.0, %v2008
      %v2010 = vpop.f32.mrb[0].mxu0
      %2011 = vmatprep.mubr.f32.mxu0 0.0
      %2012 = vmatmul.mubr.f32.gmra.mrb[0].mxu0 %v1873
      %v2013 = vpop.f32.mrb[0].mxu0
      %v2014 = vadd.f32 0.0, %v2013
      %v2015 = vpop.f32.mrb[0].mxu0
      %2016 = vmatprep.mubr.f32.mxu0 0.0
      %2017 = vmatmul.mubr.f32.gmra.mrb[0].mxu0 %v1874
      %v2018 = vpop.f32.mrb[0].mxu0
      %v2019 = vadd.f32 0.0, %v2018
      %v2020 = vpop.f32.mrb[0].mxu0
      %2021 = vdwg.mxu0
      %v2022 = vadd.f32 %v1849, %v1959
      %v2023 = vadd.f32 %v1850, %v1964
      %v2024 = vadd.f32 %v1851, %v1969
      %v2025 = vadd.f32 %v1852, %v1974
      %v2026 = vadd.f32 %v1853, %v1979
      %v2027 = vadd.f32 %v1854, %v1984
      %v2028 = vadd.f32 %v1855, %v1989
      %v2029 = vadd.f32 %v1856, %v1994
      %v2030 = vadd.f32 %v1857, %v1999
      %v2031 = vadd.f32 %v1858, %v2004
      %v2032 = vadd.f32 %v1859, %v2009
      %v2033 = vadd.f32 %v1860, %v2014
      %v2034 = vadd.f32 %v1861, %v2019
      %v2035 = vld [vmem:[%s293] sm:$0xff]
      %v2036 = vld [vmem:[%s293 + $0x8] sm:$0xff]
      %v2037 = vld [vmem:[%s293 + $0x10] sm:$0xff]
      %v2038 = vld [vmem:[%s293 + $0x18] sm:$0xff]
      %v2039 = vld [vmem:[%s293 + $0x20] sm:$0xff]
      %v2040 = vld [vmem:[%s293 + $0x28] sm:$0xff]
      %v2041 = vld [vmem:[%s293 + $0x30] sm:$0xff]
      %v2042 = vld [vmem:[%s293 + $0x38] sm:$0xff]
      %v2043 = vld [vmem:[%s293 + $0x40] sm:$0xff]
      %v2044 = vld [vmem:[%s293 + $0x48] sm:$0xff]
      %v2045 = vld [vmem:[%s293 + $0x50] sm:$0xff]
      %v2046 = vld [vmem:[%s293 + $0x58] sm:$0xff]
      %v2047 = vld [vmem:[%s293 + $0x60] sm:$0xf]
      %v2048 = vld [vmem:[%s6] sm:$0xf]
      %vm2049 = vcmask 31744
      %v2051 = vsel %vm2049, %v2035, 0
      %v2054 = vsel %vm2049, %v2036, 0
      %v2057 = vsel %vm2049, %v2037, 0
      %v2060 = vsel %vm2049, %v2038, 0
      %v2063 = vsel %vm2049, %v2039, 0
      %v2066 = vsel %vm2049, %v2040, 0
      %v2069 = vsel %vm2049, %v2041, 0
      %v2072 = vsel %vm2049, %v2042, 0
      %v2075 = vsel %vm2049, %v2043, 0
      %v2078 = vsel %vm2049, %v2044, 0
      %v2081 = vsel %vm2049, %v2045, 0
      %v2084 = vsel %vm2049, %v2046, 0
      %v2087 = vsel %vm2049, %v2047, 0
      %vm2089 = vcmask 1043456
      %v2091 = vsel %vm2089, %v2048, 0
      %2093 = vmatprep.subr.mxu0 0.0
      %2094 = vmatpush1.msra.mxu0 %v2091
      %2095 = vmatprep.subr.mxu0 0.0
      %2096 = vmatpush1.msra.mxu0 0.0
      %2097 = vmatprep.subr.mxu0 0.0
      %2098 = vmatpush1.msra.mxu0 0.0
      %2099 = vmatprep.subr.mxu0 0.0
      %2100 = vmatpush1.msra.mxu0 0.0
      %2101 = vmatprep.subr.mxu0 0.0
      %2102 = vmatpush1.msra.mxu0 0.0
      %2103 = vmatprep.subr.mxu0 0.0
      %2104 = vmatpush1.msra.mxu0 0.0
      %2105 = vmatprep.subr.mxu0 0.0
      %2106 = vmatpush1.msra.mxu0 0.0
      %2107 = vmatprep.subr.mxu0 0.0
      %2108 = vmatpush1.msra.mxu0 0.0
      %2109 = vmatprep.subr.mxu0 0.0
      %2110 = vmatpush1.msra.mxu0 0.0
      %2111 = vmatprep.subr.mxu0 0.0
      %2112 = vmatpush1.msra.mxu0 0.0
      %2113 = vmatprep.subr.mxu0 0.0
      %2114 = vmatpush1.msra.mxu0 0.0
      %2115 = vmatprep.subr.mxu0 0.0
      %2116 = vmatpush1.msra.mxu0 0.0
      %2117 = vmatprep.subr.mxu0 0.0
      %2118 = vmatpush1.msra.mxu0 0.0
      %2119 = vmatprep.subr.mxu0 0.0
      %2120 = vmatpush1.msra.mxu0 0.0
      %2121 = vmatprep.subr.mxu0 0.0
      %2122 = vmatpush1.msra.mxu0 0.0
      %2123 = vmatprep.subr.mxu0 0.0
      %2124 = vmatpush1.msra.mxu0 0.0
      %2125 = vmatprep.subr.mxu0 0.0
      %2126 = vmatpush1.msra.mxu0 0.0
      %2127 = vmatprep.subr.mxu0 0.0
      %2128 = vmatpush1.msra.mxu0 0.0
      %2129 = vmatprep.subr.mxu0 0.0
      %2130 = vmatpush1.msra.mxu0 0.0
      %2131 = vmatprep.subr.mxu0 0.0
      %2132 = vmatpush1.msra.mxu0 0.0
      %2133 = vmatprep.subr.mxu0 0.0
      %2134 = vmatpush1.msra.mxu0 0.0
      %2135 = vmatprep.subr.mxu0 0.0
      %2136 = vmatpush1.msra.mxu0 0.0
      %2137 = vmatprep.subr.mxu0 0.0
      %2138 = vmatpush1.msra.mxu0 0.0
      %2139 = vmatprep.subr.mxu0 0.0
      %2140 = vmatpush1.msra.mxu0 0.0
      %2141 = vmatprep.subr.mxu0 0.0
      %2142 = vmatpush1.msra.mxu0 0.0
      %2143 = vmatprep.subr.mxu0 0.0
      %2144 = vmatpush1.msra.mxu0 0.0
      %2145 = vmatprep.subr.mxu0 0.0
      %2146 = vmatpush1.msra.mxu0 0.0
      %2147 = vmatprep.subr.mxu0 0.0
      %2148 = vmatpush1.msra.mxu0 0.0
      %2149 = vmatprep.subr.mxu0 0.0
      %2150 = vmatpush1.msra.mxu0 0.0
      %2151 = vmatprep.subr.mxu0 0.0
      %2152 = vmatpush1.msra.mxu0 0.0
      %2153 = vmatprep.subr.mxu0 0.0
      %2154 = vmatpush1.msra.mxu0 0.0
      %2155 = vmatprep.subr.mxu0 0.0
      %2156 = vmatpush1.msra.mxu0 0.0
      %2157 = vmatprep.mubr.f32.mxu0 0.0
      %2158 = vmatmul.mubr.f32.gmra.mrb[0].mxu0 %v2051
      %v2159 = vpop.f32.mrb[0].mxu0
      %v2160 = vadd.f32 0.0, %v2159
      %v2161 = vpop.f32.mrb[0].mxu0
      %2162 = vmatprep.mubr.f32.mxu0 0.0
      %2163 = vmatmul.mubr.f32.gmra.mrb[0].mxu0 %v2054
      %v2164 = vpop.f32.mrb[0].mxu0
      %v2165 = vadd.f32 0.0, %v2164
      %v2166 = vpop.f32.mrb[0].mxu0
      %2167 = vmatprep.mubr.f32.mxu0 0.0
      %2168 = vmatmul.mubr.f32.gmra.mrb[0].mxu0 %v2057
      %v2169 = vpop.f32.mrb[0].mxu0
      %v2170 = vadd.f32 0.0, %v2169
      %v2171 = vpop.f32.mrb[0].mxu0
      %2172 = vmatprep.mubr.f32.mxu0 0.0
      %2173 = vmatmul.mubr.f32.gmra.mrb[0].mxu0 %v2060
      %v2174 = vpop.f32.mrb[0].mxu0
      %v2175 = vadd.f32 0.0, %v2174
      %v2176 = vpop.f32.mrb[0].mxu0
      %2177 = vmatprep.mubr.f32.mxu0 0.0
      %2178 = vmatmul.mubr.f32.gmra.mrb[0].mxu0 %v2063
      %v2179 = vpop.f32.mrb[0].mxu0
      %v2180 = vadd.f32 0.0, %v2179
      %v2181 = vpop.f32.mrb[0].mxu0
      %2182 = vmatprep.mubr.f32.mxu0 0.0
      %2183 = vmatmul.mubr.f32.gmra.mrb[0].mxu0 %v2066
      %v2184 = vpop.f32.mrb[0].mxu0
      %v2185 = vadd.f32 0.0, %v2184
      %v2186 = vpop.f32.mrb[0].mxu0
      %2187 = vmatprep.mubr.f32.mxu0 0.0
      %2188 = vmatmul.mubr.f32.gmra.mrb[0].mxu0 %v2069
      %v2189 = vpop.f32.mrb[0].mxu0
      %v2190 = vadd.f32 0.0, %v2189
      %v2191 = vpop.f32.mrb[0].mxu0
      %2192 = vmatprep.mubr.f32.mxu0 0.0
      %2193 = vmatmul.mubr.f32.gmra.mrb[0].mxu0 %v2072
      %v2194 = vpop.f32.mrb[0].mxu0
      %v2195 = vadd.f32 0.0, %v2194
      %v2196 = vpop.f32.mrb[0].mxu0
      %2197 = vmatprep.mubr.f32.mxu0 0.0
      %2198 = vmatmul.mubr.f32.gmra.mrb[0].mxu0 %v2075
      %v2199 = vpop.f32.mrb[0].mxu0
      %v2200 = vadd.f32 0.0, %v2199
      %v2201 = vpop.f32.mrb[0].mxu0
      %2202 = vmatprep.mubr.f32.mxu0 0.0
      %2203 = vmatmul.mubr.f32.gmra.mrb[0].mxu0 %v2078
      %v2204 = vpop.f32.mrb[0].mxu0
      %v2205 = vadd.f32 0.0, %v2204
      %v2206 = vpop.f32.mrb[0].mxu0
      %2207 = vmatprep.mubr.f32.mxu0 0.0
      %2208 = vmatmul.mubr.f32.gmra.mrb[0].mxu0 %v2081
      %v2209 = vpop.f32.mrb[0].mxu0
      %v2210 = vadd.f32 0.0, %v2209
      %v2211 = vpop.f32.mrb[0].mxu0
      %2212 = vmatprep.mubr.f32.mxu0 0.0
      %2213 = vmatmul.mubr.f32.gmra.mrb[0].mxu0 %v2084
      %v2214 = vpop.f32.mrb[0].mxu0
      %v2215 = vadd.f32 0.0, %v2214
      %v2216 = vpop.f32.mrb[0].mxu0
      %2217 = vmatprep.mubr.f32.mxu0 0.0
      %2218 = vmatmul.mubr.f32.gmra.mrb[0].mxu0 %v2087
      %v2219 = vpop.f32.mrb[0].mxu0
      %v2220 = vadd.f32 0.0, %v2219
      %v2221 = vpop.f32.mrb[0].mxu0
      %2222 = vdwg.mxu0
      %v2223 = vadd.f32 %v2022, %v2160
      %v2224 = vadd.f32 %v2023, %v2165
      %v2225 = vadd.f32 %v2024, %v2170
      %v2226 = vadd.f32 %v2025, %v2175
      %v2227 = vadd.f32 %v2026, %v2180
      %v2228 = vadd.f32 %v2027, %v2185
      %v2229 = vadd.f32 %v2028, %v2190
      %v2230 = vadd.f32 %v2029, %v2195
      %v2231 = vadd.f32 %v2030, %v2200
      %v2232 = vadd.f32 %v2031, %v2205
      %v2233 = vadd.f32 %v2032, %v2210
      %v2234 = vadd.f32 %v2033, %v2215
      %v2235 = vadd.f32 %v2034, %v2220
      %2236 = vst [vmem:[%s298] sm:$0xff] %v2223
      %2237 = vst [vmem:[%s298 + $0x8] sm:$0xff] %v2224
      %2238 = vst [vmem:[%s298 + $0x10] sm:$0xff] %v2225
      %2239 = vst [vmem:[%s298 + $0x18] sm:$0xff] %v2226
      %2240 = vst [vmem:[%s298 + $0x20] sm:$0xff] %v2227
      %2241 = vst [vmem:[%s298 + $0x28] sm:$0xff] %v2228
      %2242 = vst [vmem:[%s298 + $0x30] sm:$0xff] %v2229
      %2243 = vst [vmem:[%s298 + $0x38] sm:$0xff] %v2230
      %2244 = vst [vmem:[%s298 + $0x40] sm:$0xff] %v2231
      %2245 = vst [vmem:[%s298 + $0x48] sm:$0xff] %v2232
      %2246 = vst [vmem:[%s298 + $0x50] sm:$0xff] %v2233
      %2247 = vst [vmem:[%s298 + $0x58] sm:$0xff] %v2234
      %2248 = vst [vmem:[%s298 + $0x60] sm:$0xf] %v2235
      %p2249 = scmp.lt.s32.totalorder %s18, 1
      %s2250 = scalar_select %p2249, %s18, 1
      %s2251 = smul.addr %s2250, 13
      %s2252 = smul.addr %s2251, 8
      %s2253 = scalar_lea.vmem %s7, %s2252
      // Predicated region
      $region49: #{basic_block_forward.3} parent=47 // pred_check
        %p2254 = pneg %p193
      $region50: #{basic_block_forward.3} parent=47 // pred_check_branch
        %2256 = sbr.rel (%p2254) target = $region52
      $region51: #{basic_block_forward.3} parent=47 // pred_region
        _
      $region52: #{basic_block_forward.3} parent=47 // pred_fallthru
        _
    $region48: #{basic_block_forward.3} parent=5 // pred_fallthru
      _
    %p2257 = scmp.le.s32.totalorder 2, %s13
    // Predicated region
    $region53: #{basic_block_forward.3} parent=5 // pred_check
      %p2258 = pneg %p2257
    $region54: #{basic_block_forward.3} parent=5 // pred_check_branch
      %2260 = sbr.rel (%p2258) target = $region56
    $region55: #{basic_block_forward.3} parent=5 // pred_region
      %s2261 = ssub.s32 %s13, 2
      // Predicated region
      $region57: #{basic_block_forward.3} parent=55 // pred_check
        %p2262 = pneg %p199
      $region58: #{basic_block_forward.3} parent=55 // pred_check_branch
        %2264 = sbr.rel (%p2262) target = $region60
      $region59: #{basic_block_forward.3} parent=55 // pred_region
        %p2265 = scmp.lt.s32.totalorder %s19, 1
        %s2266 = scalar_select %p2265, %s19, 1
        %s2267 = smul.addr %s2266, 13
        %s2268 = smul.addr %s2267, 8
        %s2269 = scalar_lea.vmem %s7, %s2268
      $region60: #{basic_block_forward.3} parent=55 // pred_fallthru
        _
    $region56: #{basic_block_forward.3} parent=5 // pred_fallthru
      _
  $region6: #{basic_block_forward.3} parent=0 // loop_footer
    %s17 = sadd.s32 1, %s13
  $region7: #{basic_block_forward.3} parent=0 // loop_footer_branch
    %12 = sbr.rel target = $region3
  $region8: #{basic_block_forward.3} parent=0 // loop_exit
    _

// kernel: basic_block_forward.2
$region0: #{basic_block_forward.2}
  #allocation0 [shape = 'u32[]', space=smem, size = 0x4, offset = 0x4, fixed_abs, tag = 'smem constant byte address 0x4 - core index']
  #allocation1 [shape = 'u32[144,128]{1,0:T(1,128)}', space=vmem, size = 0x12000, scoped, tag = 'internal scratch']
  #allocation2 [shape = 'f32[362,4]{1,0:T(8,128)}', space=vmem, size = 0x2e000, scoped, tag = 'scratch operand']
  %s0 = inlined_call_operand.vmem [shape: f32[2,362,4], index: 0, kind: input, shape index: {}]
  %s1 = inlined_call_operand.vmem [shape: f32[362,1], index: 1, kind: input, shape index: {}]
  %s2 = inlined_call_operand.vmem [shape: f32[1,4], index: 2, kind: input, shape index: {}]
  %s3 = inlined_call_operand.vmem [shape: f32[1,4], index: 3, kind: input, shape index: {}]
  %s4 = inlined_call_operand.vmem [shape: f32[9,4,128], index: 4, kind: input, shape index: {}]
  %s5 = inlined_call_operand.vmem [shape: f32[2,324,128], index: 5, kind: output, shape index: {}]
  %s6 = sld [smem:[#allocation0]]
  $region53: #{basic_block_forward.2} parent=0
    _
  %s8 = ssub.s32 1, %s6
  %s9 = scalar_select 0, %s8, %s6
  loop: start=0, step=1, limit=4
  $region2: #{basic_block_forward.2} parent=0 // loop_pre_header
    _
  $region3: #{basic_block_forward.2} parent=0 // loop_header
    %s11 = sphi 0, %s15
    %p12 = scmp.ge.s32.totalorder %s11, 4
    %s21 = sphi 0, %s23
    %s24 = sphi 0, %s21
    %s25 = sphi 0, %s24
    %s41 = sphi 0, %s25
    %s45 = sphi 0, %s45
    %s47 = sphi 0, %s45
    %s48 = sphi 0, %s47
    %s62 = sphi 0, %s48
    %s66 = sphi 0, %s66
    %s68 = sphi 0, %s66
    %s69 = sphi 0, %s68
    %s83 = sphi 0, %s69
    %s87 = sphi 0, %s87
    %s89 = sphi 0, %s87
    %s90 = sphi 0, %s89
    %s104 = sphi 0, %s90
    %s108 = sphi 0, %s108
    %s110 = sphi 0, %s108
    %s111 = sphi 0, %s110
    %s125 = sphi 0, %s111
    %s131 = sphi 0, %s133
    %s134 = sphi 0, %s131
    %s135 = sphi 0, %s134
    %s151 = sphi 0, %s135
  $region4: #{basic_block_forward.2} parent=0 // loop_header_branch
    %14 = sbr.rel (%p12) target = $region8
  $region5: #{basic_block_forward.2} parent=0 // loop_body
    %s16 = ssub.s32 %s11, 1
    %s17 = ssub.s32 %s11, 2
    %s18 = sadd.s32 %s11, 1
    %s19 = ssub.s32 %s11, %s18
    %p20 = scmp.eq.s32.totalorder %s19, 0
    %s22 = sadd.s32 %s21, 1
    %s23 = scalar_select %p20, %s21, %s22
    %p26 = pneg %p20
    %p27 = scmp.eq.s32.totalorder %s11, 1
    %p28 = por %p26, %p27
    %p29 = scmp.ne.s32.totalorder %s21, %s24
    %p30 = scmp.eq.s32.totalorder %s11, 0
    %p31 = por %p29, %p30
    %p32 = scmp.ne.s32.totalorder %s21, %s24
    %p33 = scmp.eq.s32.totalorder %s16, 1
    %p34 = por %p32, %p33
    %p35 = scmp.ne.s32.totalorder %s24, %s25
    %p36 = scmp.eq.s32.totalorder %s16, 0
    %p37 = por %p35, %p36
    %p38 = scmp.ne.s32.totalorder %s24, %s25
    %p39 = scmp.eq.s32.totalorder %s17, 1
    %p40 = por %p38, %p39
    %p42 = scmp.ne.s32.totalorder %s25, %s41
    %p43 = scmp.eq.s32.totalorder %s17, 0
    %p44 = por %p42, %p43
    %s46 = sadd.s32 %s45, 1
    %p49 = scmp.eq.s32.totalorder %s11, 1
    %p50 = scmp.ne.s32.totalorder %s45, %s47
    %p51 = scmp.eq.s32.totalorder %s11, 0
    %p52 = por %p50, %p51
    %p53 = scmp.ne.s32.totalorder %s45, %s47
    %p54 = scmp.eq.s32.totalorder %s16, 1
    %p55 = por %p53, %p54
    %p56 = scmp.ne.s32.totalorder %s47, %s48
    %p57 = scmp.eq.s32.totalorder %s16, 0
    %p58 = por %p56, %p57
    %p59 = scmp.ne.s32.totalorder %s47, %s48
    %p60 = scmp.eq.s32.totalorder %s17, 1
    %p61 = por %p59, %p60
    %p63 = scmp.ne.s32.totalorder %s48, %s62
    %p64 = scmp.eq.s32.totalorder %s17, 0
    %p65 = por %p63, %p64
    %s67 = sadd.s32 %s66, 1
    %p70 = scmp.eq.s32.totalorder %s11, 1
    %p71 = scmp.ne.s32.totalorder %s66, %s68
    %p72 = scmp.eq.s32.totalorder %s11, 0
    %p73 = por %p71, %p72
    %p74 = scmp.ne.s32.totalorder %s66, %s68
    %p75 = scmp.eq.s32.totalorder %s16, 1
    %p76 = por %p74, %p75
    %p77 = scmp.ne.s32.totalorder %s68, %s69
    %p78 = scmp.eq.s32.totalorder %s16, 0
    %p79 = por %p77, %p78
    %p80 = scmp.ne.s32.totalorder %s68, %s69
    %p81 = scmp.eq.s32.totalorder %s17, 1
    %p82 = por %p80, %p81
    %p84 = scmp.ne.s32.totalorder %s69, %s83
    %p85 = scmp.eq.s32.totalorder %s17, 0
    %p86 = por %p84, %p85
    %s88 = sadd.s32 %s87, 1
    %p91 = scmp.eq.s32.totalorder %s11, 1
    %p92 = scmp.ne.s32.totalorder %s87, %s89
    %p93 = scmp.eq.s32.totalorder %s11, 0
    %p94 = por %p92, %p93
    %p95 = scmp.ne.s32.totalorder %s87, %s89
    %p96 = scmp.eq.s32.totalorder %s16, 1
    %p97 = por %p95, %p96
    %p98 = scmp.ne.s32.totalorder %s89, %s90
    %p99 = scmp.eq.s32.totalorder %s16, 0
    %p100 = por %p98, %p99
    %p101 = scmp.ne.s32.totalorder %s89, %s90
    %p102 = scmp.eq.s32.totalorder %s17, 1
    %p103 = por %p101, %p102
    %p105 = scmp.ne.s32.totalorder %s90, %s104
    %p106 = scmp.eq.s32.totalorder %s17, 0
    %p107 = por %p105, %p106
    %s109 = sadd.s32 %s108, 1
    %p112 = scmp.eq.s32.totalorder %s11, 1
    %p113 = scmp.ne.s32.totalorder %s108, %s110
    %p114 = scmp.eq.s32.totalorder %s11, 0
    %p115 = por %p113, %p114
    %p116 = scmp.ne.s32.totalorder %s108, %s110
    %p117 = scmp.eq.s32.totalorder %s16, 1
    %p118 = por %p116, %p117
    %p119 = scmp.ne.s32.totalorder %s110, %s111
    %p120 = scmp.eq.s32.totalorder %s16, 0
    %p121 = por %p119, %p120
    %p122 = scmp.ne.s32.totalorder %s110, %s111
    %p123 = scmp.eq.s32.totalorder %s17, 1
    %p124 = por %p122, %p123
    %p126 = scmp.ne.s32.totalorder %s111, %s125
    %p127 = scmp.eq.s32.totalorder %s17, 0
    %p128 = por %p126, %p127
    %s129 = ssub.s32 %s11, %s18
    %p130 = scmp.eq.s32.totalorder %s129, 0
    %s132 = sadd.s32 %s131, 1
    %s133 = scalar_select %p130, %s131, %s132
    %p136 = pneg %p130
    %p137 = scmp.eq.s32.totalorder %s11, 1
    %p138 = por %p136, %p137
    %p139 = scmp.ne.s32.totalorder %s131, %s134
    %p140 = scmp.eq.s32.totalorder %s11, 0
    %p141 = por %p139, %p140
    %p142 = scmp.ne.s32.totalorder %s131, %s134
    %p143 = scmp.eq.s32.totalorder %s16, 1
    %p144 = por %p142, %p143
    %p145 = scmp.ne.s32.totalorder %s134, %s135
    %p146 = scmp.eq.s32.totalorder %s16, 0
    %p147 = por %p145, %p146
    %p148 = scmp.ne.s32.totalorder %s134, %s135
    %p149 = scmp.eq.s32.totalorder %s17, 1
    %p150 = por %p148, %p149
    %p152 = scmp.ne.s32.totalorder %s135, %s151
    %p153 = scmp.eq.s32.totalorder %s17, 0
    %p154 = por %p152, %p153
    %p155 = scmp.le.s32.totalorder 1, %s11
    %p156 = scmp.lt.s32.totalorder %s11, 3
    %p157 = pnand %p155, %p156
    %p158 = pneg %p157
    // Predicated region
    $region9: #{basic_block_forward.2} parent=5 // pred_check
      _
    $region10: #{basic_block_forward.2} parent=5 // pred_check_branch
      %160 = sbr.rel (%p157) target = $region12
    $region11: #{basic_block_forward.2} parent=5 // pred_region
      %s161 = ssub.s32 %s11, 1
      // Predicated region
      $region13: #{basic_block_forward.2} parent=11 // pred_check
        %p162 = pneg %p58
      $region14: #{basic_block_forward.2} parent=11 // pred_check_branch
        %164 = sbr.rel (%p162) target = $region16
      $region15: #{basic_block_forward.2} parent=11 // pred_region
        _
      $region16: #{basic_block_forward.2} parent=11 // pred_fallthru
        _
      // Predicated region
      $region17: #{basic_block_forward.2} parent=11 // pred_check
        %p165 = pneg %p79
      $region18: #{basic_block_forward.2} parent=11 // pred_check_branch
        %167 = sbr.rel (%p165) target = $region20
      $region19: #{basic_block_forward.2} parent=11 // pred_region
        _
      $region20: #{basic_block_forward.2} parent=11 // pred_fallthru
        _
      // Predicated region
      $region21: #{basic_block_forward.2} parent=11 // pred_check
        %p168 = pneg %p100
      $region22: #{basic_block_forward.2} parent=11 // pred_check_branch
        %170 = sbr.rel (%p168) target = $region24
      $region23: #{basic_block_forward.2} parent=11 // pred_region
        _
      $region24: #{basic_block_forward.2} parent=11 // pred_fallthru
        _
      // Predicated region
      $region25: #{basic_block_forward.2} parent=11 // pred_check
        %p171 = pneg %p121
      $region26: #{basic_block_forward.2} parent=11 // pred_check_branch
        %173 = sbr.rel (%p171) target = $region28
      $region27: #{basic_block_forward.2} parent=11 // pred_region
        _
      $region28: #{basic_block_forward.2} parent=11 // pred_fallthru
        _
    $region12: #{basic_block_forward.2} parent=5 // pred_fallthru
      _
    %p174 = scmp.lt.s32.totalorder %s11, 2
    // Predicated region
    $region29: #{basic_block_forward.2} parent=5 // pred_check
      %p175 = pneg %p174
    $region30: #{basic_block_forward.2} parent=5 // pred_check_branch
      %177 = sbr.rel (%p175) target = $region32
    $region31: #{basic_block_forward.2} parent=5 // pred_region
      // Predicated region
      $region33: #{basic_block_forward.2} parent=31 // pred_check
        %p178 = pneg %p31
      $region34: #{basic_block_forward.2} parent=31 // pred_check_branch
        %180 = sbr.rel (%p178) target = $region36
      $region35: #{basic_block_forward.2} parent=31 // pred_region
        %p181 = scmp.lt.s32.totalorder %s11, 1
        %s182 = scalar_select %p181, %s11, 1
        %s183 = smul.addr %s182, 46
        %s184 = smul.addr %s183, 8
        %s185 = scalar_lea.vmem %s0, %s184
      $region36: #{basic_block_forward.2} parent=31 // pred_fallthru
        _
    $region32: #{basic_block_forward.2} parent=5 // pred_fallthru
      _
    %p186 = scmp.le.s32.totalorder 1, %s11
    %p187 = scmp.lt.s32.totalorder %s11, 3
    %p188 = pnand %p186, %p187
    %p189 = pneg %p188
    // Predicated region
    $region37: #{basic_block_forward.2} parent=5 // pred_check
      _
    $region38: #{basic_block_forward.2} parent=5 // pred_check_branch
      %191 = sbr.rel (%p188) target = $region40
    $region39: #{basic_block_forward.2} parent=5 // pred_region
      %s192 = ssub.s32 %s11, 1
      %p193 = scmp.lt.s32.totalorder %s16, 1
      %s194 = scalar_select %p193, %s16, 1
      %s195 = smul.addr %s194, 46
      %s196 = smul.addr %s195, 8
      %s197 = scalar_lea.vmem %s0, %s196
      %p198 = pneg %p37
      %p199 = pneg %p34
      %p200 = pneg %p58
      %p201 = pneg %p55
      %p202 = pneg %p79
      %p203 = pneg %p76
      %p204 = pneg %p100
      %p205 = pneg %p97
      %p206 = pneg %p121
      %p207 = pneg %p118
      %p208 = pneg %p147
      %p209 = pneg %p144
      %p210 = scmp.lt.s32.totalorder %s16, 1
      %s211 = scalar_select %p210, %s16, 1
      %s212 = smul.addr %s211, 41
      %s213 = smul.addr %s212, 8
      %s214 = scalar_lea.vmem %s5, %s213
      %p215 = scmp.lt.s32.totalorder %s16, 1
      %s216 = scalar_select %p215, %s16, 1
      %s217 = smul.addr %s216, 46
      %s218 = smul.addr %s217, 8
      %s219 = scalar_lea.vmem %s0, %s218
      %p220 = scmp.lt.s32.totalorder %s16, 1
      %s221 = scalar_select %p220, %s16, 1
      %s222 = smul.addr %s221, 41
      %s223 = smul.addr %s222, 8
      %s224 = scalar_lea.vmem %s5, %s223
      %v225 = vld [vmem:[%s219] sm:$0xff]
      %v226 = vld [vmem:[%s219 + $0x8] sm:$0xff]
      %v227 = vld [vmem:[%s219 + $0x10] sm:$0xff]
      %v228 = vld [vmem:[%s219 + $0x18] sm:$0xff]
      %v229 = vld [vmem:[%s219 + $0x20] sm:$0xff]
      %v230 = vld [vmem:[%s219 + $0x28] sm:$0xff]
      %v231 = vld [vmem:[%s219 + $0x30] sm:$0xff]
      %v232 = vld [vmem:[%s219 + $0x38] sm:$0xff]
      %v233 = vld [vmem:[%s219 + $0x40] sm:$0xff]
      %v234 = vld [vmem:[%s219 + $0x48] sm:$0xff]
      %v235 = vld [vmem:[%s219 + $0x50] sm:$0xff]
      %v236 = vld [vmem:[%s219 + $0x58] sm:$0xff]
      %v237 = vld [vmem:[%s219 + $0x60] sm:$0xff]
      %v238 = vld [vmem:[%s219 + $0x68] sm:$0xff]
      %v239 = vld [vmem:[%s219 + $0x70] sm:$0xff]
      %v240 = vld [vmem:[%s219 + $0x78] sm:$0xff]
      %v241 = vld [vmem:[%s219 + $0x80] sm:$0xff]
      %v242 = vld [vmem:[%s219 + $0x88] sm:$0xff]
      %v243 = vld [vmem:[%s219 + $0x90] sm:$0xff]
      %v244 = vld [vmem:[%s219 + $0x98] sm:$0xff]
      %v245 = vld [vmem:[%s219 + $0xa0] sm:$0xff]
      %v246 = vld [vmem:[%s219 + $0xa8] sm:$0xff]
      %v247 = vld [vmem:[%s219 + $0xb0] sm:$0xff]
      %v248 = vld [vmem:[%s219 + $0xb8] sm:$0xff]
      %v249 = vld [vmem:[%s219 + $0xc0] sm:$0xff]
      %v250 = vld [vmem:[%s219 + $0xc8] sm:$0xff]
      %v251 = vld [vmem:[%s219 + $0xd0] sm:$0xff]
      %v252 = vld [vmem:[%s219 + $0xd8] sm:$0xff]
      %v253 = vld [vmem:[%s219 + $0xe0] sm:$0xff]
      %v254 = vld [vmem:[%s219 + $0xe8] sm:$0xff]
      %v255 = vld [vmem:[%s219 + $0xf0] sm:$0xff]
      %v256 = vld [vmem:[%s219 + $0xf8] sm:$0xff]
      %v257 = vld [vmem:[%s219 + $0x100] sm:$0xff]
      %v258 = vld [vmem:[%s219 + $0x108] sm:$0xff]
      %v259 = vld [vmem:[%s219 + $0x110] sm:$0xff]
      %v260 = vld [vmem:[%s219 + $0x118] sm:$0xff]
      %v261 = vld [vmem:[%s219 + $0x120] sm:$0xff]
      %v262 = vld [vmem:[%s219 + $0x128] sm:$0xff]
      %v263 = vld [vmem:[%s219 + $0x130] sm:$0xff]
      %v264 = vld [vmem:[%s219 + $0x138] sm:$0xff]
      %v265 = vld [vmem:[%s219 + $0x140] sm:$0xff]
      %v266 = vld [vmem:[%s219 + $0x148] sm:$0xff]
      %v267 = vld [vmem:[%s219 + $0x150] sm:$0xff]
      %v268 = vld [vmem:[%s219 + $0x158] sm:$0xff]
      %v269 = vld [vmem:[%s219 + $0x160] sm:$0xff]
      %v270 = vld [vmem:[%s219 + $0x168] sm:$0x3]
      %v271 = vld [vmem:[%s2] sm:$0x1]
      %v273 = vlaneseq
      %v274 = vshrl.u32 %v273, 7
      %v275 = vsub.s32 0, %v274
      %v276 = vrot.slane %v271, %v275
      %v278 = vmul.f32 %v225, %v276
      %v279 = vmul.f32 %v226, %v276
      %v280 = vmul.f32 %v227, %v276
      %v281 = vmul.f32 %v228, %v276
      %v282 = vmul.f32 %v229, %v276
      %v283 = vmul.f32 %v230, %v276
      %v284 = vmul.f32 %v231, %v276
      %v285 = vmul.f32 %v232, %v276
      %v286 = vmul.f32 %v233, %v276
      %v287 = vmul.f32 %v234, %v276
      %v288 = vmul.f32 %v235, %v276
      %v289 = vmul.f32 %v236, %v276
      %v290 = vmul.f32 %v237, %v276
      %v291 = vmul.f32 %v238, %v276
      %v292 = vmul.f32 %v239, %v276
      %v293 = vmul.f32 %v240, %v276
      %v294 = vmul.f32 %v241, %v276
      %v295 = vmul.f32 %v242, %v276
      %v296 = vmul.f32 %v243, %v276
      %v297 = vmul.f32 %v244, %v276
      %v298 = vmul.f32 %v245, %v276
      %v299 = vmul.f32 %v246, %v276
      %v300 = vmul.f32 %v247, %v276
      %v301 = vmul.f32 %v248, %v276
      %v302 = vmul.f32 %v249, %v276
      %v303 = vmul.f32 %v250, %v276
      %v304 = vmul.f32 %v251, %v276
      %v305 = vmul.f32 %v252, %v276
      %v306 = vmul.f32 %v253, %v276
      %v307 = vmul.f32 %v254, %v276
      %v308 = vmul.f32 %v255, %v276
      %v309 = vmul.f32 %v256, %v276
      %v310 = vmul.f32 %v257, %v276
      %v311 = vmul.f32 %v258, %v276
      %v312 = vmul.f32 %v259, %v276
      %v313 = vmul.f32 %v260, %v276
      %v314 = vmul.f32 %v261, %v276
      %v315 = vmul.f32 %v262, %v276
      %v316 = vmul.f32 %v263, %v276
      %v317 = vmul.f32 %v264, %v276
      %v318 = vmul.f32 %v265, %v276
      %v319 = vmul.f32 %v266, %v276
      %v320 = vmul.f32 %v267, %v276
      %v321 = vmul.f32 %v268, %v276
      %v322 = vmul.f32 %v269, %v276
      %v323 = vmul.f32 %v270, %v276
      %v324 = vld [vmem:[%s3] sm:$0x1]
      %v326 = vlaneseq
      %v327 = vshrl.u32 %v326, 7
      %v328 = vsub.s32 0, %v327
      %v329 = vrot.slane %v324, %v328
      %v331 = vadd.f32 %v278, %v329
      %v332 = vadd.f32 %v279, %v329
      %v333 = vadd.f32 %v280, %v329
      %v334 = vadd.f32 %v281, %v329
      %v335 = vadd.f32 %v282, %v329
      %v336 = vadd.f32 %v283, %v329
      %v337 = vadd.f32 %v284, %v329
      %v338 = vadd.f32 %v285, %v329
      %v339 = vadd.f32 %v286, %v329
      %v340 = vadd.f32 %v287, %v329
      %v341 = vadd.f32 %v288, %v329
      %v342 = vadd.f32 %v289, %v329
      %v343 = vadd.f32 %v290, %v329
      %v344 = vadd.f32 %v291, %v329
      %v345 = vadd.f32 %v292, %v329
      %v346 = vadd.f32 %v293, %v329
      %v347 = vadd.f32 %v294, %v329
      %v348 = vadd.f32 %v295, %v329
      %v349 = vadd.f32 %v296, %v329
      %v350 = vadd.f32 %v297, %v329
      %v351 = vadd.f32 %v298, %v329
      %v352 = vadd.f32 %v299, %v329
      %v353 = vadd.f32 %v300, %v329
      %v354 = vadd.f32 %v301, %v329
      %v355 = vadd.f32 %v302, %v329
      %v356 = vadd.f32 %v303, %v329
      %v357 = vadd.f32 %v304, %v329
      %v358 = vadd.f32 %v305, %v329
      %v359 = vadd.f32 %v306, %v329
      %v360 = vadd.f32 %v307, %v329
      %v361 = vadd.f32 %v308, %v329
      %v362 = vadd.f32 %v309, %v329
      %v363 = vadd.f32 %v310, %v329
      %v364 = vadd.f32 %v311, %v329
      %v365 = vadd.f32 %v312, %v329
      %v366 = vadd.f32 %v313, %v329
      %v367 = vadd.f32 %v314, %v329
      %v368 = vadd.f32 %v315, %v329
      %v369 = vadd.f32 %v316, %v329
      %v370 = vadd.f32 %v317, %v329
      %v371 = vadd.f32 %v318, %v329
      %v372 = vadd.f32 %v319, %v329
      %v373 = vadd.f32 %v320, %v329
      %v374 = vadd.f32 %v321, %v329
      %v375 = vadd.f32 %v322, %v329
      %v376 = vadd.f32 %v323, %v329
      %v377 = vmax.f32 %v331, 0.0
      %v378 = vmax.f32 %v332, 0.0
      %v379 = vmax.f32 %v333, 0.0
      %v380 = vmax.f32 %v334, 0.0
      %v381 = vmax.f32 %v335, 0.0
      %v382 = vmax.f32 %v336, 0.0
      %v383 = vmax.f32 %v337, 0.0
      %v384 = vmax.f32 %v338, 0.0
      %v385 = vmax.f32 %v339, 0.0
      %v386 = vmax.f32 %v340, 0.0
      %v387 = vmax.f32 %v341, 0.0
      %v388 = vmax.f32 %v342, 0.0
      %v389 = vmax.f32 %v343, 0.0
      %v390 = vmax.f32 %v344, 0.0
      %v391 = vmax.f32 %v345, 0.0
      %v392 = vmax.f32 %v346, 0.0
      %v393 = vmax.f32 %v347, 0.0
      %v394 = vmax.f32 %v348, 0.0
      %v395 = vmax.f32 %v349, 0.0
      %v396 = vmax.f32 %v350, 0.0
      %v397 = vmax.f32 %v351, 0.0
      %v398 = vmax.f32 %v352, 0.0
      %v399 = vmax.f32 %v353, 0.0
      %v400 = vmax.f32 %v354, 0.0
      %v401 = vmax.f32 %v355, 0.0
      %v402 = vmax.f32 %v356, 0.0
      %v403 = vmax.f32 %v357, 0.0
      %v404 = vmax.f32 %v358, 0.0
      %v405 = vmax.f32 %v359, 0.0
      %v406 = vmax.f32 %v360, 0.0
      %v407 = vmax.f32 %v361, 0.0
      %v408 = vmax.f32 %v362, 0.0
      %v409 = vmax.f32 %v363, 0.0
      %v410 = vmax.f32 %v364, 0.0
      %v411 = vmax.f32 %v365, 0.0
      %v412 = vmax.f32 %v366, 0.0
      %v413 = vmax.f32 %v367, 0.0
      %v414 = vmax.f32 %v368, 0.0
      %v415 = vmax.f32 %v369, 0.0
      %v416 = vmax.f32 %v370, 0.0
      %v417 = vmax.f32 %v371, 0.0
      %v418 = vmax.f32 %v372, 0.0
      %v419 = vmax.f32 %v373, 0.0
      %v420 = vmax.f32 %v374, 0.0
      %v421 = vmax.f32 %v375, 0.0
      %v422 = vmax.f32 %v376, 0.0
      %v423 = vld [vmem:[%s1] sm:$0xff]
      %v424 = vld [vmem:[%s1 + $0x8] sm:$0xff]
      %v425 = vld [vmem:[%s1 + $0x10] sm:$0xff]
      %v426 = vld [vmem:[%s1 + $0x18] sm:$0xff]
      %v427 = vld [vmem:[%s1 + $0x20] sm:$0xff]
      %v428 = vld [vmem:[%s1 + $0x28] sm:$0xff]
      %v429 = vld [vmem:[%s1 + $0x30] sm:$0xff]
      %v430 = vld [vmem:[%s1 + $0x38] sm:$0xff]
      %v431 = vld [vmem:[%s1 + $0x40] sm:$0xff]
      %v432 = vld [vmem:[%s1 + $0x48] sm:$0xff]
      %v433 = vld [vmem:[%s1 + $0x50] sm:$0xff]
      %v434 = vld [vmem:[%s1 + $0x58] sm:$0xff]
      %v435 = vld [vmem:[%s1 + $0x60] sm:$0xff]
      %v436 = vld [vmem:[%s1 + $0x68] sm:$0xff]
      %v437 = vld [vmem:[%s1 + $0x70] sm:$0xff]
      %v438 = vld [vmem:[%s1 + $0x78] sm:$0xff]
      %v439 = vld [vmem:[%s1 + $0x80] sm:$0xff]
      %v440 = vld [vmem:[%s1 + $0x88] sm:$0xff]
      %v441 = vld [vmem:[%s1 + $0x90] sm:$0xff]
      %v442 = vld [vmem:[%s1 + $0x98] sm:$0xff]
      %v443 = vld [vmem:[%s1 + $0xa0] sm:$0xff]
      %v444 = vld [vmem:[%s1 + $0xa8] sm:$0xff]
      %v445 = vld [vmem:[%s1 + $0xb0] sm:$0xff]
      %v446 = vld [vmem:[%s1 + $0xb8] sm:$0xff]
      %v447 = vld [vmem:[%s1 + $0xc0] sm:$0xff]
      %v448 = vld [vmem:[%s1 + $0xc8] sm:$0xff]
      %v449 = vld [vmem:[%s1 + $0xd0] sm:$0xff]
      %v450 = vld [vmem:[%s1 + $0xd8] sm:$0xff]
      %v451 = vld [vmem:[%s1 + $0xe0] sm:$0xff]
      %v452 = vld [vmem:[%s1 + $0xe8] sm:$0xff]
      %v453 = vld [vmem:[%s1 + $0xf0] sm:$0xff]
      %v454 = vld [vmem:[%s1 + $0xf8] sm:$0xff]
      %v455 = vld [vmem:[%s1 + $0x100] sm:$0xff]
      %v456 = vld [vmem:[%s1 + $0x108] sm:$0xff]
      %v457 = vld [vmem:[%s1 + $0x110] sm:$0xff]
      %v458 = vld [vmem:[%s1 + $0x118] sm:$0xff]
      %v459 = vld [vmem:[%s1 + $0x120] sm:$0xff]
      %v460 = vld [vmem:[%s1 + $0x128] sm:$0xff]
      %v461 = vld [vmem:[%s1 + $0x130] sm:$0xff]
      %v462 = vld [vmem:[%s1 + $0x138] sm:$0xff]
      %v463 = vld [vmem:[%s1 + $0x140] sm:$0xff]
      %v464 = vld [vmem:[%s1 + $0x148] sm:$0xff]
      %v465 = vld [vmem:[%s1 + $0x150] sm:$0xff]
      %v466 = vld [vmem:[%s1 + $0x158] sm:$0xff]
      %v467 = vld [vmem:[%s1 + $0x160] sm:$0xff]
      %v468 = vld [vmem:[%s1 + $0x168] sm:$0x3]
      %470 = vset.pattern.permute.xlu0 0
      %471 = vperm.xlu0 %470, %v423
      %v472 = vpop.permute.xlu0 %471
      %475 = vset.pattern.permute.xlu0 0
      %476 = vperm.xlu0 %475, %v424
      %v477 = vpop.permute.xlu0 %476
      %480 = vset.pattern.permute.xlu0 0
      %481 = vperm.xlu0 %480, %v425
      %v482 = vpop.permute.xlu0 %481
      %485 = vset.pattern.permute.xlu0 0
      %486 = vperm.xlu0 %485, %v426
      %v487 = vpop.permute.xlu0 %486
      %490 = vset.pattern.permute.xlu0 0
      %491 = vperm.xlu0 %490, %v427
      %v492 = vpop.permute.xlu0 %491
      %495 = vset.pattern.permute.xlu0 0
      %496 = vperm.xlu0 %495, %v428
      %v497 = vpop.permute.xlu0 %496
      %500 = vset.pattern.permute.xlu0 0
      %501 = vperm.xlu0 %500, %v429
      %v502 = vpop.permute.xlu0 %501
      %505 = vset.pattern.permute.xlu0 0
      %506 = vperm.xlu0 %505, %v430
      %v507 = vpop.permute.xlu0 %506
      %510 = vset.pattern.permute.xlu0 0
      %511 = vperm.xlu0 %510, %v431
      %v512 = vpop.permute.xlu0 %511
      %515 = vset.pattern.permute.xlu0 0
      %516 = vperm.xlu0 %515, %v432
      %v517 = vpop.permute.xlu0 %516
      %520 = vset.pattern.permute.xlu0 0
      %521 = vperm.xlu0 %520, %v433
      %v522 = vpop.permute.xlu0 %521
      %525 = vset.pattern.permute.xlu0 0
      %526 = vperm.xlu0 %525, %v434
      %v527 = vpop.permute.xlu0 %526
      %530 = vset.pattern.permute.xlu0 0
      %531 = vperm.xlu0 %530, %v435
      %v532 = vpop.permute.xlu0 %531
      %535 = vset.pattern.permute.xlu0 0
      %536 = vperm.xlu0 %535, %v436
      %v537 = vpop.permute.xlu0 %536
      %540 = vset.pattern.permute.xlu0 0
      %541 = vperm.xlu0 %540, %v437
      %v542 = vpop.permute.xlu0 %541
      %545 = vset.pattern.permute.xlu0 0
      %546 = vperm.xlu0 %545, %v438
      %v547 = vpop.permute.xlu0 %546
      %550 = vset.pattern.permute.xlu0 0
      %551 = vperm.xlu0 %550, %v439
      %v552 = vpop.permute.xlu0 %551
      %555 = vset.pattern.permute.xlu0 0
      %556 = vperm.xlu0 %555, %v440
      %v557 = vpop.permute.xlu0 %556
      %560 = vset.pattern.permute.xlu0 0
      %561 = vperm.xlu0 %560, %v441
      %v562 = vpop.permute.xlu0 %561
      %565 = vset.pattern.permute.xlu0 0
      %566 = vperm.xlu0 %565, %v442
      %v567 = vpop.permute.xlu0 %566
      %570 = vset.pattern.permute.xlu0 0
      %571 = vperm.xlu0 %570, %v443
      %v572 = vpop.permute.xlu0 %571
      %575 = vset.pattern.permute.xlu0 0
      %576 = vperm.xlu0 %575, %v444
      %v577 = vpop.permute.xlu0 %576
      %580 = vset.pattern.permute.xlu0 0
      %581 = vperm.xlu0 %580, %v445
      %v582 = vpop.permute.xlu0 %581
      %585 = vset.pattern.permute.xlu0 0
      %586 = vperm.xlu0 %585, %v446
      %v587 = vpop.permute.xlu0 %586
      %590 = vset.pattern.permute.xlu0 0
      %591 = vperm.xlu0 %590, %v447
      %v592 = vpop.permute.xlu0 %591
      %595 = vset.pattern.permute.xlu0 0
      %596 = vperm.xlu0 %595, %v448
      %v597 = vpop.permute.xlu0 %596
      %600 = vset.pattern.permute.xlu0 0
      %601 = vperm.xlu0 %600, %v449
      %v602 = vpop.permute.xlu0 %601
      %605 = vset.pattern.permute.xlu0 0
      %606 = vperm.xlu0 %605, %v450
      %v607 = vpop.permute.xlu0 %606
      %610 = vset.pattern.permute.xlu0 0
      %611 = vperm.xlu0 %610, %v451
      %v612 = vpop.permute.xlu0 %611
      %615 = vset.pattern.permute.xlu0 0
      %616 = vperm.xlu0 %615, %v452
      %v617 = vpop.permute.xlu0 %616
      %620 = vset.pattern.permute.xlu0 0
      %621 = vperm.xlu0 %620, %v453
      %v622 = vpop.permute.xlu0 %621
      %625 = vset.pattern.permute.xlu0 0
      %626 = vperm.xlu0 %625, %v454
      %v627 = vpop.permute.xlu0 %626
      %630 = vset.pattern.permute.xlu0 0
      %631 = vperm.xlu0 %630, %v455
      %v632 = vpop.permute.xlu0 %631
      %635 = vset.pattern.permute.xlu0 0
      %636 = vperm.xlu0 %635, %v456
      %v637 = vpop.permute.xlu0 %636
      %640 = vset.pattern.permute.xlu0 0
      %641 = vperm.xlu0 %640, %v457
      %v642 = vpop.permute.xlu0 %641
      %645 = vset.pattern.permute.xlu0 0
      %646 = vperm.xlu0 %645, %v458
      %v647 = vpop.permute.xlu0 %646
      %650 = vset.pattern.permute.xlu0 0
      %651 = vperm.xlu0 %650, %v459
      %v652 = vpop.permute.xlu0 %651
      %655 = vset.pattern.permute.xlu0 0
      %656 = vperm.xlu0 %655, %v460
      %v657 = vpop.permute.xlu0 %656
      %660 = vset.pattern.permute.xlu0 0
      %661 = vperm.xlu0 %660, %v461
      %v662 = vpop.permute.xlu0 %661
      %665 = vset.pattern.permute.xlu0 0
      %666 = vperm.xlu0 %665, %v462
      %v667 = vpop.permute.xlu0 %666
      %670 = vset.pattern.permute.xlu0 0
      %671 = vperm.xlu0 %670, %v463
      %v672 = vpop.permute.xlu0 %671
      %675 = vset.pattern.permute.xlu0 0
      %676 = vperm.xlu0 %675, %v464
      %v677 = vpop.permute.xlu0 %676
      %680 = vset.pattern.permute.xlu0 0
      %681 = vperm.xlu0 %680, %v465
      %v682 = vpop.permute.xlu0 %681
      %685 = vset.pattern.permute.xlu0 0
      %686 = vperm.xlu0 %685, %v466
      %v687 = vpop.permute.xlu0 %686
      %690 = vset.pattern.permute.xlu0 0
      %691 = vperm.xlu0 %690, %v467
      %v692 = vpop.permute.xlu0 %691
      %695 = vset.pattern.permute.xlu0 0
      %696 = vperm.xlu0 %695, %v468
      %v697 = vpop.permute.xlu0 %696
      %v699 = vmul.f32 %v377, %v472
      %v700 = vmul.f32 %v378, %v477
      %v701 = vmul.f32 %v379, %v482
      %v702 = vmul.f32 %v380, %v487
      %v703 = vmul.f32 %v381, %v492
      %v704 = vmul.f32 %v382, %v497
      %v705 = vmul.f32 %v383, %v502
      %v706 = vmul.f32 %v384, %v507
      %v707 = vmul.f32 %v385, %v512
      %v708 = vmul.f32 %v386, %v517
      %v709 = vmul.f32 %v387, %v522
      %v710 = vmul.f32 %v388, %v527
      %v711 = vmul.f32 %v389, %v532
      %v712 = vmul.f32 %v390, %v537
      %v713 = vmul.f32 %v391, %v542
      %v714 = vmul.f32 %v392, %v547
      %v715 = vmul.f32 %v393, %v552
      %v716 = vmul.f32 %v394, %v557
      %v717 = vmul.f32 %v395, %v562
      %v718 = vmul.f32 %v396, %v567
      %v719 = vmul.f32 %v397, %v572
      %v720 = vmul.f32 %v398, %v577
      %v721 = vmul.f32 %v399, %v582
      %v722 = vmul.f32 %v400, %v587
      %v723 = vmul.f32 %v401, %v592
      %v724 = vmul.f32 %v402, %v597
      %v725 = vmul.f32 %v403, %v602
      %v726 = vmul.f32 %v404, %v607
      %v727 = vmul.f32 %v405, %v612
      %v728 = vmul.f32 %v406, %v617
      %v729 = vmul.f32 %v407, %v622
      %v730 = vmul.f32 %v408, %v627
      %v731 = vmul.f32 %v409, %v632
      %v732 = vmul.f32 %v410, %v637
      %v733 = vmul.f32 %v411, %v642
      %v734 = vmul.f32 %v412, %v647
      %v735 = vmul.f32 %v413, %v652
      %v736 = vmul.f32 %v414, %v657
      %v737 = vmul.f32 %v415, %v662
      %v738 = vmul.f32 %v416, %v667
      %v739 = vmul.f32 %v417, %v672
      %v740 = vmul.f32 %v418, %v677
      %v741 = vmul.f32 %v419, %v682
      %v742 = vmul.f32 %v420, %v687
      %v743 = vmul.f32 %v421, %v692
      %v744 = vmul.f32 %v422, %v697
      %vm745 = vcmask 31744
      %746 = vst.msk [vmem:[#allocation2] sm:$0xff] %vm745, %v699
      %747 = vst.msk [vmem:[#allocation2 + $0x8] sm:$0xff] %vm745, %v700
      %748 = vst.msk [vmem:[#allocation2 + $0x10] sm:$0xff] %vm745, %v701
      %749 = vst.msk [vmem:[#allocation2 + $0x18] sm:$0xff] %vm745, %v702
      %750 = vst.msk [vmem:[#allocation2 + $0x20] sm:$0xff] %vm745, %v703
      %751 = vst.msk [vmem:[#allocation2 + $0x28] sm:$0xff] %vm745, %v704
      %752 = vst.msk [vmem:[#allocation2 + $0x30] sm:$0xff] %vm745, %v705
      %753 = vst.msk [vmem:[#allocation2 + $0x38] sm:$0xff] %vm745, %v706
      %754 = vst.msk [vmem:[#allocation2 + $0x40] sm:$0xff] %vm745, %v707
      %755 = vst.msk [vmem:[#allocation2 + $0x48] sm:$0xff] %vm745, %v708
      %756 = vst.msk [vmem:[#allocation2 + $0x50] sm:$0xff] %vm745, %v709
      %757 = vst.msk [vmem:[#allocation2 + $0x58] sm:$0xff] %vm745, %v710
      %758 = vst.msk [vmem:[#allocation2 + $0x60] sm:$0xff] %vm745, %v711
      %759 = vst.msk [vmem:[#allocation2 + $0x68] sm:$0xff] %vm745, %v712
      %760 = vst.msk [vmem:[#allocation2 + $0x70] sm:$0xff] %vm745, %v713
      %761 = vst.msk [vmem:[#allocation2 + $0x78] sm:$0xff] %vm745, %v714
      %762 = vst.msk [vmem:[#allocation2 + $0x80] sm:$0xff] %vm745, %v715
      %763 = vst.msk [vmem:[#allocation2 + $0x88] sm:$0xff] %vm745, %v716
      %764 = vst.msk [vmem:[#allocation2 + $0x90] sm:$0xff] %vm745, %v717
      %765 = vst.msk [vmem:[#allocation2 + $0x98] sm:$0xff] %vm745, %v718
      %766 = vst.msk [vmem:[#allocation2 + $0xa0] sm:$0xff] %vm745, %v719
      %767 = vst.msk [vmem:[#allocation2 + $0xa8] sm:$0xff] %vm745, %v720
      %768 = vst.msk [vmem:[#allocation2 + $0xb0] sm:$0xff] %vm745, %v721
      %769 = vst.msk [vmem:[#allocation2 + $0xb8] sm:$0xff] %vm745, %v722
      %770 = vst.msk [vmem:[#allocation2 + $0xc0] sm:$0xff] %vm745, %v723
      %771 = vst.msk [vmem:[#allocation2 + $0xc8] sm:$0xff] %vm745, %v724
      %772 = vst.msk [vmem:[#allocation2 + $0xd0] sm:$0xff] %vm745, %v725
      %773 = vst.msk [vmem:[#allocation2 + $0xd8] sm:$0xff] %vm745, %v726
      %774 = vst.msk [vmem:[#allocation2 + $0xe0] sm:$0xff] %vm745, %v727
      %775 = vst.msk [vmem:[#allocation2 + $0xe8] sm:$0xff] %vm745, %v728
      %776 = vst.msk [vmem:[#allocation2 + $0xf0] sm:$0xff] %vm745, %v729
      %777 = vst.msk [vmem:[#allocation2 + $0xf8] sm:$0xff] %vm745, %v730
      %778 = vst.msk [vmem:[#allocation2 + $0x100] sm:$0xff] %vm745, %v731
      %779 = vst.msk [vmem:[#allocation2 + $0x108] sm:$0xff] %vm745, %v732
      %780 = vst.msk [vmem:[#allocation2 + $0x110] sm:$0xff] %vm745, %v733
      %781 = vst.msk [vmem:[#allocation2 + $0x118] sm:$0xff] %vm745, %v734
      %782 = vst.msk [vmem:[#allocation2 + $0x120] sm:$0xff] %vm745, %v735
      %783 = vst.msk [vmem:[#allocation2 + $0x128] sm:$0xff] %vm745, %v736
      %784 = vst.msk [vmem:[#allocation2 + $0x130] sm:$0xff] %vm745, %v737
      %785 = vst.msk [vmem:[#allocation2 + $0x138] sm:$0xff] %vm745, %v738
      %786 = vst.msk [vmem:[#allocation2 + $0x140] sm:$0xff] %vm745, %v739
      %787 = vst.msk [vmem:[#allocation2 + $0x148] sm:$0xff] %vm745, %v740
      %788 = vst.msk [vmem:[#allocation2 + $0x150] sm:$0xff] %vm745, %v741
      %789 = vst.msk [vmem:[#allocation2 + $0x158] sm:$0xff] %vm745, %v742
      %790 = vst.msk [vmem:[#allocation2 + $0x160] sm:$0xff] %vm745, %v743
      %vm791 = vcmask 25600
      %792 = vst.msk [vmem:[#allocation2 + $0x168] sm:$0x3] %vm791, %v744
      %v793 = vld [vmem:[#allocation2] sm:$0xff]
      %v794 = vld [vmem:[#allocation2 + $0x8] sm:$0xff]
      %v795 = vld [vmem:[#allocation2 + $0x10] sm:$0xff]
      %v796 = vld [vmem:[#allocation2 + $0x18] sm:$0xff]
      %v797 = vld [vmem:[#allocation2 + $0x20] sm:$0xff]
      %v798 = vld [vmem:[#allocation2 + $0x28] sm:$0xff]
      %v799 = vld [vmem:[#allocation2 + $0x30] sm:$0xff]
      %v800 = vld [vmem:[#allocation2 + $0x38] sm:$0xff]
      %v801 = vld [vmem:[#allocation2 + $0x40] sm:$0xff]
      %v802 = vld [vmem:[#allocation2 + $0x48] sm:$0xff]
      %v803 = vld [vmem:[#allocation2 + $0x50] sm:$0xff]
      %v804 = vld [vmem:[#allocation2 + $0x58] sm:$0xff]
      %v805 = vld [vmem:[#allocation2 + $0x60] sm:$0xff]
      %v806 = vld [vmem:[#allocation2 + $0x68] sm:$0xff]
      %v807 = vld [vmem:[#allocation2 + $0x70] sm:$0xff]
      %v808 = vld [vmem:[#allocation2 + $0x78] sm:$0xff]
      %v809 = vld [vmem:[#allocation2 + $0x80] sm:$0xff]
      %v810 = vld [vmem:[#allocation2 + $0x88] sm:$0xff]
      %v811 = vld [vmem:[#allocation2 + $0x90] sm:$0xff]
      %v812 = vld [vmem:[#allocation2 + $0x98] sm:$0xff]
      %v813 = vld [vmem:[#allocation2 + $0xa0] sm:$0xff]
      %v814 = vld [vmem:[#allocation2 + $0xa8] sm:$0xff]
      %v815 = vld [vmem:[#allocation2 + $0xb0] sm:$0xff]
      %v816 = vld [vmem:[#allocation2 + $0xb8] sm:$0xff]
      %v817 = vld [vmem:[#allocation2 + $0xc0] sm:$0xff]
      %v818 = vld [vmem:[#allocation2 + $0xc8] sm:$0xff]
      %v819 = vld [vmem:[#allocation2 + $0xd0] sm:$0xff]
      %v820 = vld [vmem:[#allocation2 + $0xd8] sm:$0xff]
      %v821 = vld [vmem:[#allocation2 + $0xe0] sm:$0xff]
      %v822 = vld [vmem:[#allocation2 + $0xe8] sm:$0xff]
      %v823 = vld [vmem:[#allocation2 + $0xf0] sm:$0xff]
      %v824 = vld [vmem:[#allocation2 + $0xf8] sm:$0xff]
      %v825 = vld [vmem:[#allocation2 + $0x100] sm:$0xff]
      %v826 = vld [vmem:[#allocation2 + $0x108] sm:$0xff]
      %v827 = vld [vmem:[#allocation2 + $0x110] sm:$0xff]
      %v828 = vld [vmem:[#allocation2 + $0x118] sm:$0xff]
      %v829 = vld [vmem:[#allocation2 + $0x120] sm:$0xff]
      %v830 = vld [vmem:[#allocation2 + $0x128] sm:$0xff]
      %v831 = vld [vmem:[#allocation2 + $0x130] sm:$0xff]
      %v832 = vld [vmem:[#allocation2 + $0x138] sm:$0xff]
      %v833 = vld [vmem:[#allocation2 + $0x140] sm:$0xf]
      %v834 = vld [vmem:[%s4] sm:$0xf]
      %v835 = vld [vmem:[#allocation2 + $0x1] sm:$0xff]
      %v836 = vld [vmem:[#allocation2 + $0x9] sm:$0xff]
      %v837 = vld [vmem:[#allocation2 + $0x11] sm:$0xff]
      %v838 = vld [vmem:[#allocation2 + $0x19] sm:$0xff]
      %v839 = vld [vmem:[#allocation2 + $0x21] sm:$0xff]
      %v840 = vld [vmem:[#allocation2 + $0x29] sm:$0xff]
      %v841 = vld [vmem:[#allocation2 + $0x31] sm:$0xff]
      %v842 = vld [vmem:[#allocation2 + $0x39] sm:$0xff]
      %v843 = vld [vmem:[#allocation2 + $0x41] sm:$0xff]
      %v844 = vld [vmem:[#allocation2 + $0x49] sm:$0xff]
      %v845 = vld [vmem:[#allocation2 + $0x51] sm:$0xff]
      %v846 = vld [vmem:[#allocation2 + $0x59] sm:$0xff]
      %v847 = vld [vmem:[#allocation2 + $0x61] sm:$0xff]
      %v848 = vld [vmem:[#allocation2 + $0x69] sm:$0xff]
      %v849 = vld [vmem:[#allocation2 + $0x71] sm:$0xff]
      %v850 = vld [vmem:[#allocation2 + $0x79] sm:$0xff]
      %v851 = vld [vmem:[#allocation2 + $0x81] sm:$0xff]
      %v852 = vld [vmem:[#allocation2 + $0x89] sm:$0xff]
      %v853 = vld [vmem:[#allocation2 + $0x91] sm:$0xff]
      %v854 = vld [vmem:[#allocation2 + $0x99] sm:$0xff]
      %v855 = vld [vmem:[#allocation2 + $0xa1] sm:$0xff]
      %v856 = vld [vmem:[#allocation2 + $0xa9] sm:$0xff]
      %v857 = vld [vmem:[#allocation2 + $0xb1] sm:$0xff]
      %v858 = vld [vmem:[#allocation2 + $0xb9] sm:$0xff]
      %v859 = vld [vmem:[#allocation2 + $0xc1] sm:$0xff]
      %v860 = vld [vmem:[#allocation2 + $0xc9] sm:$0xff]
      %v861 = vld [vmem:[#allocation2 + $0xd1] sm:$0xff]
      %v862 = vld [vmem:[#allocation2 + $0xd9] sm:$0xff]
      %v863 = vld [vmem:[#allocation2 + $0xe1] sm:$0xff]
      %v864 = vld [vmem:[#allocation2 + $0xe9] sm:$0xff]
      %v865 = vld [vmem:[#allocation2 + $0xf1] sm:$0xff]
      %v866 = vld [vmem:[#allocation2 + $0xf9] sm:$0xff]
      %v867 = vld [vmem:[#allocation2 + $0x101] sm:$0xff]
      %v868 = vld [vmem:[#allocation2 + $0x109] sm:$0xff]
      %v869 = vld [vmem:[#allocation2 + $0x111] sm:$0xff]
      %v870 = vld [vmem:[#allocation2 + $0x119] sm:$0xff]
      %v871 = vld [vmem:[#allocation2 + $0x121] sm:$0xff]
      %v872 = vld [vmem:[#allocation2 + $0x129] sm:$0xff]
      %v873 = vld [vmem:[#allocation2 + $0x131] sm:$0xff]
      %v874 = vld [vmem:[#allocation2 + $0x139] sm:$0xff]
      %v875 = vld [vmem:[#allocation2 + $0x141] sm:$0xf]
      %s876 = scalar_lea.vmem %s4, 4
      %v877 = vld [vmem:[%s876] sm:$0xf]
      %v879 = vsel %vm745, %v835, 0
      %v882 = vsel %vm745, %v836, 0
      %v885 = vsel %vm745, %v837, 0
      %v888 = vsel %vm745, %v838, 0
      %v891 = vsel %vm745, %v839, 0
      %v894 = vsel %vm745, %v840, 0
      %v897 = vsel %vm745, %v841, 0
      %v900 = vsel %vm745, %v842, 0
      %v903 = vsel %vm745, %v843, 0
      %v906 = vsel %vm745, %v844, 0
      %v909 = vsel %vm745, %v845, 0
      %v912 = vsel %vm745, %v846, 0
      %v915 = vsel %vm745, %v847, 0
      %v918 = vsel %vm745, %v848, 0
      %v921 = vsel %vm745, %v849, 0
      %v924 = vsel %vm745, %v850, 0
      %v927 = vsel %vm745, %v851, 0
      %v930 = vsel %vm745, %v852, 0
      %v933 = vsel %vm745, %v853, 0
      %v936 = vsel %vm745, %v854, 0
      %v939 = vsel %vm745, %v855, 0
      %v942 = vsel %vm745, %v856, 0
      %v945 = vsel %vm745, %v857, 0
      %v948 = vsel %vm745, %v858, 0
      %v951 = vsel %vm745, %v859, 0
      %v954 = vsel %vm745, %v860, 0
      %v957 = vsel %vm745, %v861, 0
      %v960 = vsel %vm745, %v862, 0
      %v963 = vsel %vm745, %v863, 0
      %v966 = vsel %vm745, %v864, 0
      %v969 = vsel %vm745, %v865, 0
      %v972 = vsel %vm745, %v866, 0
      %v975 = vsel %vm745, %v867, 0
      %v978 = vsel %vm745, %v868, 0
      %v981 = vsel %vm745, %v869, 0
      %v984 = vsel %vm745, %v870, 0
      %v987 = vsel %vm745, %v871, 0
      %v990 = vsel %vm745, %v872, 0
      %v993 = vsel %vm745, %v873, 0
      %v996 = vsel %vm745, %v874, 0
      %v999 = vsel %vm745, %v875, 0
      %vm1001 = vcmask 1043456
      %v1003 = vsel %vm1001, %v877, 0
      %1005 = vmatprep.subr.mxu0 0.0
      %1006 = vmatpush1.msra.mxu0 %v1003
      %1007 = vmatprep.subr.mxu0 0.0
      %1008 = vmatpush1.msra.mxu0 0.0
      %1009 = vmatprep.subr.mxu0 0.0
      %1010 = vmatpush1.msra.mxu0 0.0
      %1011 = vmatprep.subr.mxu0 0.0
      %1012 = vmatpush1.msra.mxu0 0.0
      %1013 = vmatprep.subr.mxu0 0.0
      %1014 = vmatpush1.msra.mxu0 0.0
      %1015 = vmatprep.subr.mxu0 0.0
      %1016 = vmatpush1.msra.mxu0 0.0
      %1017 = vmatprep.subr.mxu0 0.0
      %1018 = vmatpush1.msra.mxu0 0.0
      %1019 = vmatprep.subr.mxu0 0.0
      %1020 = vmatpush1.msra.mxu0 0.0
      %1021 = vmatprep.subr.mxu0 0.0
      %1022 = vmatpush1.msra.mxu0 0.0
      %1023 = vmatprep.subr.mxu0 0.0
      %1024 = vmatpush1.msra.mxu0 0.0
      %1025 = vmatprep.subr.mxu0 0.0
      %1026 = vmatpush1.msra.mxu0 0.0
      %1027 = vmatprep.subr.mxu0 0.0
      %1028 = vmatpush1.msra.mxu0 0.0
      %1029 = vmatprep.subr.mxu0 0.0
      %1030 = vmatpush1.msra.mxu0 0.0
      %1031 = vmatprep.subr.mxu0 0.0
      %1032 = vmatpush1.msra.mxu0 0.0
      %1033 = vmatprep.subr.mxu0 0.0
      %1034 = vmatpush1.msra.mxu0 0.0
      %1035 = vmatprep.subr.mxu0 0.0
      %1036 = vmatpush1.msra.mxu0 0.0
      %1037 = vmatprep.subr.mxu0 0.0
      %1038 = vmatpush1.msra.mxu0 0.0
      %1039 = vmatprep.subr.mxu0 0.0
      %1040 = vmatpush1.msra.mxu0 0.0
      %1041 = vmatprep.subr.mxu0 0.0
      %1042 = vmatpush1.msra.mxu0 0.0
      %1043 = vmatprep.subr.mxu0 0.0
      %1044 = vmatpush1.msra.mxu0 0.0
      %1045 = vmatprep.subr.mxu0 0.0
      %1046 = vmatpush1.msra.mxu0 0.0
      %1047 = vmatprep.subr.mxu0 0.0
      %1048 = vmatpush1.msra.mxu0 0.0
      %1049 = vmatprep.subr.mxu0 0.0
      %1050 = vmatpush1.msra.mxu0 0.0
      %1051 = vmatprep.subr.mxu0 0.0
      %1052 = vmatpush1.msra.mxu0 0.0
      %1053 = vmatprep.subr.mxu0 0.0
      %1054 = vmatpush1.msra.mxu0 0.0
      %1055 = vmatprep.subr.mxu0 0.0
      %1056 = vmatpush1.msra.mxu0 0.0
      %1057 = vmatprep.subr.mxu0 0.0
      %1058 = vmatpush1.msra.mxu0 0.0
      %1059 = vmatprep.subr.mxu0 0.0
      %1060 = vmatpush1.msra.mxu0 0.0
      %1061 = vmatprep.subr.mxu0 0.0
      %1062 = vmatpush1.msra.mxu0 0.0
      %1063 = vmatprep.subr.mxu0 0.0
      %1064 = vmatpush1.msra.mxu0 0.0
      %1065 = vmatprep.subr.mxu0 0.0
      %1066 = vmatpush1.msra.mxu0 0.0
      %1067 = vmatprep.subr.mxu0 0.0
      %1068 = vmatpush1.msra.mxu0 0.0
      %1069 = vmatprep.mubr.f32.mxu0 0.0
      %1070 = vmatmul.mubr.f32.gmra.mrb[0].mxu0 %v879
      %v1071 = vpop.f32.mrb[0].mxu0
      %v1072 = vadd.f32 0.0, %v1071
      %v1073 = vpop.f32.mrb[0].mxu0
      %1074 = vmatprep.mubr.f32.mxu0 0.0
      %1075 = vmatmul.mubr.f32.gmra.mrb[0].mxu0 %v882
      %v1076 = vpop.f32.mrb[0].mxu0
      %v1077 = vadd.f32 0.0, %v1076
      %v1078 = vpop.f32.mrb[0].mxu0
      %1079 = vmatprep.mubr.f32.mxu0 0.0
      %1080 = vmatmul.mubr.f32.gmra.mrb[0].mxu0 %v885
      %v1081 = vpop.f32.mrb[0].mxu0
      %v1082 = vadd.f32 0.0, %v1081
      %v1083 = vpop.f32.mrb[0].mxu0
      %1084 = vmatprep.mubr.f32.mxu0 0.0
      %1085 = vmatmul.mubr.f32.gmra.mrb[0].mxu0 %v888
      %v1086 = vpop.f32.mrb[0].mxu0
      %v1087 = vadd.f32 0.0, %v1086
      %v1088 = vpop.f32.mrb[0].mxu0
      %1089 = vmatprep.mubr.f32.mxu0 0.0
      %1090 = vmatmul.mubr.f32.gmra.mrb[0].mxu0 %v891
      %v1091 = vpop.f32.mrb[0].mxu0
      %v1092 = vadd.f32 0.0, %v1091
      %v1093 = vpop.f32.mrb[0].mxu0
      %1094 = vmatprep.mubr.f32.mxu0 0.0
      %1095 = vmatmul.mubr.f32.gmra.mrb[0].mxu0 %v894
      %v1096 = vpop.f32.mrb[0].mxu0
      %v1097 = vadd.f32 0.0, %v1096
      %v1098 = vpop.f32.mrb[0].mxu0
      %1099 = vmatprep.mubr.f32.mxu0 0.0
      %1100 = vmatmul.mubr.f32.gmra.mrb[0].mxu0 %v897
      %v1101 = vpop.f32.mrb[0].mxu0
      %v1102 = vadd.f32 0.0, %v1101
      %v1103 = vpop.f32.mrb[0].mxu0
      %1104 = vmatprep.mubr.f32.mxu0 0.0
      %1105 = vmatmul.mubr.f32.gmra.mrb[0].mxu0 %v900
      %v1106 = vpop.f32.mrb[0].mxu0
      %v1107 = vadd.f32 0.0, %v1106
      %v1108 = vpop.f32.mrb[0].mxu0
      %1109 = vmatprep.mubr.f32.mxu0 0.0
      %1110 = vmatmul.mubr.f32.gmra.mrb[0].mxu0 %v903
      %v1111 = vpop.f32.mrb[0].mxu0
      %v1112 = vadd.f32 0.0, %v1111
      %v1113 = vpop.f32.mrb[0].mxu0
      %1114 = vmatprep.mubr.f32.mxu0 0.0
      %1115 = vmatmul.mubr.f32.gmra.mrb[0].mxu0 %v906
      %v1116 = vpop.f32.mrb[0].mxu0
      %v1117 = vadd.f32 0.0, %v1116
      %v1118 = vpop.f32.mrb[0].mxu0
      %1119 = vmatprep.mubr.f32.mxu0 0.0
      %1120 = vmatmul.mubr.f32.gmra.mrb[0].mxu0 %v909
      %v1121 = vpop.f32.mrb[0].mxu0
      %v1122 = vadd.f32 0.0, %v1121
      %v1123 = vpop.f32.mrb[0].mxu0
      %1124 = vmatprep.mubr.f32.mxu0 0.0
      %1125 = vmatmul.mubr.f32.gmra.mrb[0].mxu0 %v912
      %v1126 = vpop.f32.mrb[0].mxu0
      %v1127 = vadd.f32 0.0, %v1126
      %v1128 = vpop.f32.mrb[0].mxu0
      %1129 = vmatprep.mubr.f32.mxu0 0.0
      %1130 = vmatmul.mubr.f32.gmra.mrb[0].mxu0 %v915
      %v1131 = vpop.f32.mrb[0].mxu0
      %v1132 = vadd.f32 0.0, %v1131
      %v1133 = vpop.f32.mrb[0].mxu0
      %1134 = vmatprep.mubr.f32.mxu0 0.0
      %1135 = vmatmul.mubr.f32.gmra.mrb[0].mxu0 %v918
      %v1136 = vpop.f32.mrb[0].mxu0
      %v1137 = vadd.f32 0.0, %v1136
      %v1138 = vpop.f32.mrb[0].mxu0
      %1139 = vmatprep.mubr.f32.mxu0 0.0
      %1140 = vmatmul.mubr.f32.gmra.mrb[0].mxu0 %v921
      %v1141 = vpop.f32.mrb[0].mxu0
      %v1142 = vadd.f32 0.0, %v1141
      %v1143 = vpop.f32.mrb[0].mxu0
      %1144 = vmatprep.mubr.f32.mxu0 0.0
      %1145 = vmatmul.mubr.f32.gmra.mrb[0].mxu0 %v924
      %v1146 = vpop.f32.mrb[0].mxu0
      %v1147 = vadd.f32 0.0, %v1146
      %v1148 = vpop.f32.mrb[0].mxu0
      %1149 = vmatprep.mubr.f32.mxu0 0.0
      %1150 = vmatmul.mubr.f32.gmra.mrb[0].mxu0 %v927
      %v1151 = vpop.f32.mrb[0].mxu0
      %v1152 = vadd.f32 0.0, %v1151
      %v1153 = vpop.f32.mrb[0].mxu0
      %1154 = vmatprep.mubr.f32.mxu0 0.0
      %1155 = vmatmul.mubr.f32.gmra.mrb[0].mxu0 %v930
      %v1156 = vpop.f32.mrb[0].mxu0
      %v1157 = vadd.f32 0.0, %v1156
      %v1158 = vpop.f32.mrb[0].mxu0
      %1159 = vmatprep.mubr.f32.mxu0 0.0
      %1160 = vmatmul.mubr.f32.gmra.mrb[0].mxu0 %v933
      %v1161 = vpop.f32.mrb[0].mxu0
      %v1162 = vadd.f32 0.0, %v1161
      %v1163 = vpop.f32.mrb[0].mxu0
      %1164 = vmatprep.mubr.f32.mxu0 0.0
      %1165 = vmatmul.mubr.f32.gmra.mrb[0].mxu0 %v936
      %v1166 = vpop.f32.mrb[0].mxu0
      %v1167 = vadd.f32 0.0, %v1166
      %v1168 = vpop.f32.mrb[0].mxu0
      %1169 = vmatprep.mubr.f32.mxu0 0.0
      %1170 = vmatmul.mubr.f32.gmra.mrb[0].mxu0 %v939
      %v1171 = vpop.f32.mrb[0].mxu0
      %v1172 = vadd.f32 0.0, %v1171
      %v1173 = vpop.f32.mrb[0].mxu0
      %1174 = vmatprep.mubr.f32.mxu0 0.0
      %1175 = vmatmul.mubr.f32.gmra.mrb[0].mxu0 %v942
      %v1176 = vpop.f32.mrb[0].mxu0
      %v1177 = vadd.f32 0.0, %v1176
      %v1178 = vpop.f32.mrb[0].mxu0
      %1179 = vmatprep.mubr.f32.mxu0 0.0
      %1180 = vmatmul.mubr.f32.gmra.mrb[0].mxu0 %v945
      %v1181 = vpop.f32.mrb[0].mxu0
      %v1182 = vadd.f32 0.0, %v1181
      %v1183 = vpop.f32.mrb[0].mxu0
      %1184 = vmatprep.mubr.f32.mxu0 0.0
      %1185 = vmatmul.mubr.f32.gmra.mrb[0].mxu0 %v948
      %v1186 = vpop.f32.mrb[0].mxu0
      %v1187 = vadd.f32 0.0, %v1186
      %v1188 = vpop.f32.mrb[0].mxu0
      %1189 = vmatprep.mubr.f32.mxu0 0.0
      %1190 = vmatmul.mubr.f32.gmra.mrb[0].mxu0 %v951
      %v1191 = vpop.f32.mrb[0].mxu0
      %v1192 = vadd.f32 0.0, %v1191
      %v1193 = vpop.f32.mrb[0].mxu0
      %1194 = vmatprep.mubr.f32.mxu0 0.0
      %1195 = vmatmul.mubr.f32.gmra.mrb[0].mxu0 %v954
      %v1196 = vpop.f32.mrb[0].mxu0
      %v1197 = vadd.f32 0.0, %v1196
      %v1198 = vpop.f32.mrb[0].mxu0
      %1199 = vmatprep.mubr.f32.mxu0 0.0
      %1200 = vmatmul.mubr.f32.gmra.mrb[0].mxu0 %v957
      %v1201 = vpop.f32.mrb[0].mxu0
      %v1202 = vadd.f32 0.0, %v1201
      %v1203 = vpop.f32.mrb[0].mxu0
      %1204 = vmatprep.mubr.f32.mxu0 0.0
      %1205 = vmatmul.mubr.f32.gmra.mrb[0].mxu0 %v960
      %v1206 = vpop.f32.mrb[0].mxu0
      %v1207 = vadd.f32 0.0, %v1206
      %v1208 = vpop.f32.mrb[0].mxu0
      %1209 = vmatprep.mubr.f32.mxu0 0.0
      %1210 = vmatmul.mubr.f32.gmra.mrb[0].mxu0 %v963
      %v1211 = vpop.f32.mrb[0].mxu0
      %v1212 = vadd.f32 0.0, %v1211
      %v1213 = vpop.f32.mrb[0].mxu0
      %1214 = vmatprep.mubr.f32.mxu0 0.0
      %1215 = vmatmul.mubr.f32.gmra.mrb[0].mxu0 %v966
      %v1216 = vpop.f32.mrb[0].mxu0
      %v1217 = vadd.f32 0.0, %v1216
      %v1218 = vpop.f32.mrb[0].mxu0
      %1219 = vmatprep.mubr.f32.mxu0 0.0
      %1220 = vmatmul.mubr.f32.gmra.mrb[0].mxu0 %v969
      %v1221 = vpop.f32.mrb[0].mxu0
      %v1222 = vadd.f32 0.0, %v1221
      %v1223 = vpop.f32.mrb[0].mxu0
      %1224 = vmatprep.mubr.f32.mxu0 0.0
      %1225 = vmatmul.mubr.f32.gmra.mrb[0].mxu0 %v972
      %v1226 = vpop.f32.mrb[0].mxu0
      %v1227 = vadd.f32 0.0, %v1226
      %v1228 = vpop.f32.mrb[0].mxu0
      %1229 = vmatprep.mubr.f32.mxu0 0.0
      %1230 = vmatmul.mubr.f32.gmra.mrb[0].mxu0 %v975
      %v1231 = vpop.f32.mrb[0].mxu0
      %v1232 = vadd.f32 0.0, %v1231
      %v1233 = vpop.f32.mrb[0].mxu0
      %1234 = vmatprep.mubr.f32.mxu0 0.0
      %1235 = vmatmul.mubr.f32.gmra.mrb[0].mxu0 %v978
      %v1236 = vpop.f32.mrb[0].mxu0
      %v1237 = vadd.f32 0.0, %v1236
      %v1238 = vpop.f32.mrb[0].mxu0
      %1239 = vmatprep.mubr.f32.mxu0 0.0
      %1240 = vmatmul.mubr.f32.gmra.mrb[0].mxu0 %v981
      %v1241 = vpop.f32.mrb[0].mxu0
      %v1242 = vadd.f32 0.0, %v1241
      %v1243 = vpop.f32.mrb[0].mxu0
      %1244 = vmatprep.mubr.f32.mxu0 0.0
      %1245 = vmatmul.mubr.f32.gmra.mrb[0].mxu0 %v984
      %v1246 = vpop.f32.mrb[0].mxu0
      %v1247 = vadd.f32 0.0, %v1246
      %v1248 = vpop.f32.mrb[0].mxu0
      %1249 = vmatprep.mubr.f32.mxu0 0.0
      %1250 = vmatmul.mubr.f32.gmra.mrb[0].mxu0 %v987
      %v1251 = vpop.f32.mrb[0].mxu0
      %v1252 = vadd.f32 0.0, %v1251
      %v1253 = vpop.f32.mrb[0].mxu0
      %1254 = vmatprep.mubr.f32.mxu0 0.0
      %1255 = vmatmul.mubr.f32.gmra.mrb[0].mxu0 %v990
      %v1256 = vpop.f32.mrb[0].mxu0
      %v1257 = vadd.f32 0.0, %v1256
      %v1258 = vpop.f32.mrb[0].mxu0
      %1259 = vmatprep.mubr.f32.mxu0 0.0
      %1260 = vmatmul.mubr.f32.gmra.mrb[0].mxu0 %v993
      %v1261 = vpop.f32.mrb[0].mxu0
      %v1262 = vadd.f32 0.0, %v1261
      %v1263 = vpop.f32.mrb[0].mxu0
      %1264 = vmatprep.mubr.f32.mxu0 0.0
      %1265 = vmatmul.mubr.f32.gmra.mrb[0].mxu0 %v996
      %v1266 = vpop.f32.mrb[0].mxu0
      %v1267 = vadd.f32 0.0, %v1266
      %v1268 = vpop.f32.mrb[0].mxu0
      %1269 = vmatprep.mubr.f32.mxu0 0.0
      %1270 = vmatmul.mubr.f32.gmra.mrb[0].mxu0 %v999
      %v1271 = vpop.f32.mrb[0].mxu0
      %v1272 = vadd.f32 0.0, %v1271
      %v1273 = vpop.f32.mrb[0].mxu0
      %1274 = vdwg.mxu0
      %v1276 = vsel %vm745, %v793, 0
      %v1279 = vsel %vm745, %v794, 0
      %v1282 = vsel %vm745, %v795, 0
      %v1285 = vsel %vm745, %v796, 0
      %v1288 = vsel %vm745, %v797, 0
      %v1291 = vsel %vm745, %v798, 0
      %v1294 = vsel %vm745, %v799, 0
      %v1297 = vsel %vm745, %v800, 0
      %v1300 = vsel %vm745, %v801, 0
      %v1303 = vsel %vm745, %v802, 0
      %v1306 = vsel %vm745, %v803, 0
      %v1309 = vsel %vm745, %v804, 0
      %v1312 = vsel %vm745, %v805, 0
      %v1315 = vsel %vm745, %v806, 0
      %v1318 = vsel %vm745, %v807, 0
      %v1321 = vsel %vm745, %v808, 0
      %v1324 = vsel %vm745, %v809, 0
      %v1327 = vsel %vm745, %v810, 0
      %v1330 = vsel %vm745, %v811, 0
      %v1333 = vsel %vm745, %v812, 0
      %v1336 = vsel %vm745, %v813, 0
      %v1339 = vsel %vm745, %v814, 0
      %v1342 = vsel %vm745, %v815, 0
      %v1345 = vsel %vm745, %v816, 0
      %v1348 = vsel %vm745, %v817, 0
      %v1351 = vsel %vm745, %v818, 0
      %v1354 = vsel %vm745, %v819, 0
      %v1357 = vsel %vm745, %v820, 0
      %v1360 = vsel %vm745, %v821, 0
      %v1363 = vsel %vm745, %v822, 0
      %v1366 = vsel %vm745, %v823, 0
      %v1369 = vsel %vm745, %v824, 0
      %v1372 = vsel %vm745, %v825, 0
      %v1375 = vsel %vm745, %v826, 0
      %v1378 = vsel %vm745, %v827, 0
      %v1381 = vsel %vm745, %v828, 0
      %v1384 = vsel %vm745, %v829, 0
      %v1387 = vsel %vm745, %v830, 0
      %v1390 = vsel %vm745, %v831, 0
      %v1393 = vsel %vm745, %v832, 0
      %v1396 = vsel %vm745, %v833, 0
      %v1399 = vsel %vm1001, %v834, 0
      %1401 = vmatprep.subr.mxu0 0.0
      %1402 = vmatpush1.msra.mxu0 %v1399
      %1403 = vmatprep.subr.mxu0 0.0
      %1404 = vmatpush1.msra.mxu0 0.0
      %1405 = vmatprep.subr.mxu0 0.0
      %1406 = vmatpush1.msra.mxu0 0.0
      %1407 = vmatprep.subr.mxu0 0.0
      %1408 = vmatpush1.msra.mxu0 0.0
      %1409 = vmatprep.subr.mxu0 0.0
      %1410 = vmatpush1.msra.mxu0 0.0
      %1411 = vmatprep.subr.mxu0 0.0
      %1412 = vmatpush1.msra.mxu0 0.0
      %1413 = vmatprep.subr.mxu0 0.0
      %1414 = vmatpush1.msra.mxu0 0.0
      %1415 = vmatprep.subr.mxu0 0.0
      %1416 = vmatpush1.msra.mxu0 0.0
      %1417 = vmatprep.subr.mxu0 0.0
      %1418 = vmatpush1.msra.mxu0 0.0
      %1419 = vmatprep.subr.mxu0 0.0
      %1420 = vmatpush1.msra.mxu0 0.0
      %1421 = vmatprep.subr.mxu0 0.0
      %1422 = vmatpush1.msra.mxu0 0.0
      %1423 = vmatprep.subr.mxu0 0.0
      %1424 = vmatpush1.msra.mxu0 0.0
      %1425 = vmatprep.subr.mxu0 0.0
      %1426 = vmatpush1.msra.mxu0 0.0
      %1427 = vmatprep.subr.mxu0 0.0
      %1428 = vmatpush1.msra.mxu0 0.0
      %1429 = vmatprep.subr.mxu0 0.0
      %1430 = vmatpush1.msra.mxu0 0.0
      %1431 = vmatprep.subr.mxu0 0.0
      %1432 = vmatpush1.msra.mxu0 0.0
      %1433 = vmatprep.subr.mxu0 0.0
      %1434 = vmatpush1.msra.mxu0 0.0
      %1435 = vmatprep.subr.mxu0 0.0
      %1436 = vmatpush1.msra.mxu0 0.0
      %1437 = vmatprep.subr.mxu0 0.0
      %1438 = vmatpush1.msra.mxu0 0.0
      %1439 = vmatprep.subr.mxu0 0.0
      %1440 = vmatpush1.msra.mxu0 0.0
      %1441 = vmatprep.subr.mxu0 0.0
      %1442 = vmatpush1.msra.mxu0 0.0
      %1443 = vmatprep.subr.mxu0 0.0
      %1444 = vmatpush1.msra.mxu0 0.0
      %1445 = vmatprep.subr.mxu0 0.0
      %1446 = vmatpush1.msra.mxu0 0.0
      %1447 = vmatprep.subr.mxu0 0.0
      %1448 = vmatpush1.msra.mxu0 0.0
      %1449 = vmatprep.subr.mxu0 0.0
      %1450 = vmatpush1.msra.mxu0 0.0
      %1451 = vmatprep.subr.mxu0 0.0
      %1452 = vmatpush1.msra.mxu0 0.0
      %1453 = vmatprep.subr.mxu0 0.0
      %1454 = vmatpush1.msra.mxu0 0.0
      %1455 = vmatprep.subr.mxu0 0.0
      %1456 = vmatpush1.msra.mxu0 0.0
      %1457 = vmatprep.subr.mxu0 0.0
      %1458 = vmatpush1.msra.mxu0 0.0
      %1459 = vmatprep.subr.mxu0 0.0
      %1460 = vmatpush1.msra.mxu0 0.0
      %1461 = vmatprep.subr.mxu0 0.0
      %1462 = vmatpush1.msra.mxu0 0.0
      %1463 = vmatprep.subr.mxu0 0.0
      %1464 = vmatpush1.msra.mxu0 0.0
      %1465 = vmatprep.mubr.f32.mxu0 0.0
      %1466 = vmatmul.mubr.f32.gmra.mrb[0].mxu0 %v1276
      %v1467 = vpop.f32.mrb[0].mxu0
      %v1468 = vadd.f32 %v1072, %v1467
      %v1469 = vpop.f32.mrb[0].mxu0
      %1470 = vmatprep.mubr.f32.mxu0 0.0
      %1471 = vmatmul.mubr.f32.gmra.mrb[0].mxu0 %v1279
      %v1472 = vpop.f32.mrb[0].mxu0
      %v1473 = vadd.f32 %v1077, %v1472
      %v1474 = vpop.f32.mrb[0].mxu0
      %1475 = vmatprep.mubr.f32.mxu0 0.0
      %1476 = vmatmul.mubr.f32.gmra.mrb[0].mxu0 %v1282
      %v1477 = vpop.f32.mrb[0].mxu0
      %v1478 = vadd.f32 %v1082, %v1477
      %v1479 = vpop.f32.mrb[0].mxu0
      %1480 = vmatprep.mubr.f32.mxu0 0.0
      %1481 = vmatmul.mubr.f32.gmra.mrb[0].mxu0 %v1285
      %v1482 = vpop.f32.mrb[0].mxu0
      %v1483 = vadd.f32 %v1087, %v1482
      %v1484 = vpop.f32.mrb[0].mxu0
      %1485 = vmatprep.mubr.f32.mxu0 0.0
      %1486 = vmatmul.mubr.f32.gmra.mrb[0].mxu0 %v1288
      %v1487 = vpop.f32.mrb[0].mxu0
      %v1488 = vadd.f32 %v1092, %v1487
      %v1489 = vpop.f32.mrb[0].mxu0
      %1490 = vmatprep.mubr.f32.mxu0 0.0
      %1491 = vmatmul.mubr.f32.gmra.mrb[0].mxu0 %v1291
      %v1492 = vpop.f32.mrb[0].mxu0
      %v1493 = vadd.f32 %v1097, %v1492
      %v1494 = vpop.f32.mrb[0].mxu0
      %1495 = vmatprep.mubr.f32.mxu0 0.0
      %1496 = vmatmul.mubr.f32.gmra.mrb[0].mxu0 %v1294
      %v1497 = vpop.f32.mrb[0].mxu0
      %v1498 = vadd.f32 %v1102, %v1497
      %v1499 = vpop.f32.mrb[0].mxu0
      %1500 = vmatprep.mubr.f32.mxu0 0.0
      %1501 = vmatmul.mubr.f32.gmra.mrb[0].mxu0 %v1297
      %v1502 = vpop.f32.mrb[0].mxu0
      %v1503 = vadd.f32 %v1107, %v1502
      %v1504 = vpop.f32.mrb[0].mxu0
      %1505 = vmatprep.mubr.f32.mxu0 0.0
      %1506 = vmatmul.mubr.f32.gmra.mrb[0].mxu0 %v1300
      %v1507 = vpop.f32.mrb[0].mxu0
      %v1508 = vadd.f32 %v1112, %v1507
      %v1509 = vpop.f32.mrb[0].mxu0
      %1510 = vmatprep.mubr.f32.mxu0 0.0
      %1511 = vmatmul.mubr.f32.gmra.mrb[0].mxu0 %v1303
      %v1512 = vpop.f32.mrb[0].mxu0
      %v1513 = vadd.f32 %v1117, %v1512
      %v1514 = vpop.f32.mrb[0].mxu0
      %1515 = vmatprep.mubr.f32.mxu0 0.0
      %1516 = vmatmul.mubr.f32.gmra.mrb[0].mxu0 %v1306
      %v1517 = vpop.f32.mrb[0].mxu0
      %v1518 = vadd.f32 %v1122, %v1517
      %v1519 = vpop.f32.mrb[0].mxu0
      %1520 = vmatprep.mubr.f32.mxu0 0.0
      %1521 = vmatmul.mubr.f32.gmra.mrb[0].mxu0 %v1309
      %v1522 = vpop.f32.mrb[0].mxu0
      %v1523 = vadd.f32 %v1127, %v1522
      %v1524 = vpop.f32.mrb[0].mxu0
      %1525 = vmatprep.mubr.f32.mxu0 0.0
      %1526 = vmatmul.mubr.f32.gmra.mrb[0].mxu0 %v1312
      %v1527 = vpop.f32.mrb[0].mxu0
      %v1528 = vadd.f32 %v1132, %v1527
      %v1529 = vpop.f32.mrb[0].mxu0
      %1530 = vmatprep.mubr.f32.mxu0 0.0
      %1531 = vmatmul.mubr.f32.gmra.mrb[0].mxu0 %v1315
      %v1532 = vpop.f32.mrb[0].mxu0
      %v1533 = vadd.f32 %v1137, %v1532
      %v1534 = vpop.f32.mrb[0].mxu0
      %1535 = vmatprep.mubr.f32.mxu0 0.0
      %1536 = vmatmul.mubr.f32.gmra.mrb[0].mxu0 %v1318
      %v1537 = vpop.f32.mrb[0].mxu0
      %v1538 = vadd.f32 %v1142, %v1537
      %v1539 = vpop.f32.mrb[0].mxu0
      %1540 = vmatprep.mubr.f32.mxu0 0.0
      %1541 = vmatmul.mubr.f32.gmra.mrb[0].mxu0 %v1321
      %v1542 = vpop.f32.mrb[0].mxu0
      %v1543 = vadd.f32 %v1147, %v1542
      %v1544 = vpop.f32.mrb[0].mxu0
      %1545 = vmatprep.mubr.f32.mxu0 0.0
      %1546 = vmatmul.mubr.f32.gmra.mrb[0].mxu0 %v1324
      %v1547 = vpop.f32.mrb[0].mxu0
      %v1548 = vadd.f32 %v1152, %v1547
      %v1549 = vpop.f32.mrb[0].mxu0
      %1550 = vmatprep.mubr.f32.mxu0 0.0
      %1551 = vmatmul.mubr.f32.gmra.mrb[0].mxu0 %v1327
      %v1552 = vpop.f32.mrb[0].mxu0
      %v1553 = vadd.f32 %v1157, %v1552
      %v1554 = vpop.f32.mrb[0].mxu0
      %1555 = vmatprep.mubr.f32.mxu0 0.0
      %1556 = vmatmul.mubr.f32.gmra.mrb[0].mxu0 %v1330
      %v1557 = vpop.f32.mrb[0].mxu0
      %v1558 = vadd.f32 %v1162, %v1557
      %v1559 = vpop.f32.mrb[0].mxu0
      %1560 = vmatprep.mubr.f32.mxu0 0.0
      %1561 = vmatmul.mubr.f32.gmra.mrb[0].mxu0 %v1333
      %v1562 = vpop.f32.mrb[0].mxu0
      %v1563 = vadd.f32 %v1167, %v1562
      %v1564 = vpop.f32.mrb[0].mxu0
      %1565 = vmatprep.mubr.f32.mxu0 0.0
      %1566 = vmatmul.mubr.f32.gmra.mrb[0].mxu0 %v1336
      %v1567 = vpop.f32.mrb[0].mxu0
      %v1568 = vadd.f32 %v1172, %v1567
      %v1569 = vpop.f32.mrb[0].mxu0
      %1570 = vmatprep.mubr.f32.mxu0 0.0
      %1571 = vmatmul.mubr.f32.gmra.mrb[0].mxu0 %v1339
      %v1572 = vpop.f32.mrb[0].mxu0
      %v1573 = vadd.f32 %v1177, %v1572
      %v1574 = vpop.f32.mrb[0].mxu0
      %1575 = vmatprep.mubr.f32.mxu0 0.0
      %1576 = vmatmul.mubr.f32.gmra.mrb[0].mxu0 %v1342
      %v1577 = vpop.f32.mrb[0].mxu0
      %v1578 = vadd.f32 %v1182, %v1577
      %v1579 = vpop.f32.mrb[0].mxu0
      %1580 = vmatprep.mubr.f32.mxu0 0.0
      %1581 = vmatmul.mubr.f32.gmra.mrb[0].mxu0 %v1345
      %v1582 = vpop.f32.mrb[0].mxu0
      %v1583 = vadd.f32 %v1187, %v1582
      %v1584 = vpop.f32.mrb[0].mxu0
      %1585 = vmatprep.mubr.f32.mxu0 0.0
      %1586 = vmatmul.mubr.f32.gmra.mrb[0].mxu0 %v1348
      %v1587 = vpop.f32.mrb[0].mxu0
      %v1588 = vadd.f32 %v1192, %v1587
      %v1589 = vpop.f32.mrb[0].mxu0
      %1590 = vmatprep.mubr.f32.mxu0 0.0
      %1591 = vmatmul.mubr.f32.gmra.mrb[0].mxu0 %v1351
      %v1592 = vpop.f32.mrb[0].mxu0
      %v1593 = vadd.f32 %v1197, %v1592
      %v1594 = vpop.f32.mrb[0].mxu0
      %1595 = vmatprep.mubr.f32.mxu0 0.0
      %1596 = vmatmul.mubr.f32.gmra.mrb[0].mxu0 %v1354
      %v1597 = vpop.f32.mrb[0].mxu0
      %v1598 = vadd.f32 %v1202, %v1597
      %v1599 = vpop.f32.mrb[0].mxu0
      %1600 = vmatprep.mubr.f32.mxu0 0.0
      %1601 = vmatmul.mubr.f32.gmra.mrb[0].mxu0 %v1357
      %v1602 = vpop.f32.mrb[0].mxu0
      %v1603 = vadd.f32 %v1207, %v1602
      %v1604 = vpop.f32.mrb[0].mxu0
      %1605 = vmatprep.mubr.f32.mxu0 0.0
      %1606 = vmatmul.mubr.f32.gmra.mrb[0].mxu0 %v1360
      %v1607 = vpop.f32.mrb[0].mxu0
      %v1608 = vadd.f32 %v1212, %v1607
      %v1609 = vpop.f32.mrb[0].mxu0
      %1610 = vmatprep.mubr.f32.mxu0 0.0
      %1611 = vmatmul.mubr.f32.gmra.mrb[0].mxu0 %v1363
      %v1612 = vpop.f32.mrb[0].mxu0
      %v1613 = vadd.f32 %v1217, %v1612
      %v1614 = vpop.f32.mrb[0].mxu0
      %1615 = vmatprep.mubr.f32.mxu0 0.0
      %1616 = vmatmul.mubr.f32.gmra.mrb[0].mxu0 %v1366
      %v1617 = vpop.f32.mrb[0].mxu0
      %v1618 = vadd.f32 %v1222, %v1617
      %v1619 = vpop.f32.mrb[0].mxu0
      %1620 = vmatprep.mubr.f32.mxu0 0.0
      %1621 = vmatmul.mubr.f32.gmra.mrb[0].mxu0 %v1369
      %v1622 = vpop.f32.mrb[0].mxu0
      %v1623 = vadd.f32 %v1227, %v1622
      %v1624 = vpop.f32.mrb[0].mxu0
      %1625 = vmatprep.mubr.f32.mxu0 0.0
      %1626 = vmatmul.mubr.f32.gmra.mrb[0].mxu0 %v1372
      %v1627 = vpop.f32.mrb[0].mxu0
      %v1628 = vadd.f32 %v1232, %v1627
      %v1629 = vpop.f32.mrb[0].mxu0
      %1630 = vmatprep.mubr.f32.mxu0 0.0
      %1631 = vmatmul.mubr.f32.gmra.mrb[0].mxu0 %v1375
      %v1632 = vpop.f32.mrb[0].mxu0
      %v1633 = vadd.f32 %v1237, %v1632
      %v1634 = vpop.f32.mrb[0].mxu0
      %1635 = vmatprep.mubr.f32.mxu0 0.0
      %1636 = vmatmul.mubr.f32.gmra.mrb[0].mxu0 %v1378
      %v1637 = vpop.f32.mrb[0].mxu0
      %v1638 = vadd.f32 %v1242, %v1637
      %v1639 = vpop.f32.mrb[0].mxu0
      %1640 = vmatprep.mubr.f32.mxu0 0.0
      %1641 = vmatmul.mubr.f32.gmra.mrb[0].mxu0 %v1381
      %v1642 = vpop.f32.mrb[0].mxu0
      %v1643 = vadd.f32 %v1247, %v1642
      %v1644 = vpop.f32.mrb[0].mxu0
      %1645 = vmatprep.mubr.f32.mxu0 0.0
      %1646 = vmatmul.mubr.f32.gmra.mrb[0].mxu0 %v1384
      %v1647 = vpop.f32.mrb[0].mxu0
      %v1648 = vadd.f32 %v1252, %v1647
      %v1649 = vpop.f32.mrb[0].mxu0
      %1650 = vmatprep.mubr.f32.mxu0 0.0
      %1651 = vmatmul.mubr.f32.gmra.mrb[0].mxu0 %v1387
      %v1652 = vpop.f32.mrb[0].mxu0
      %v1653 = vadd.f32 %v1257, %v1652
      %v1654 = vpop.f32.mrb[0].mxu0
      %1655 = vmatprep.mubr.f32.mxu0 0.0
      %1656 = vmatmul.mubr.f32.gmra.mrb[0].mxu0 %v1390
      %v1657 = vpop.f32.mrb[0].mxu0
      %v1658 = vadd.f32 %v1262, %v1657
      %v1659 = vpop.f32.mrb[0].mxu0
      %1660 = vmatprep.mubr.f32.mxu0 0.0
      %1661 = vmatmul.mubr.f32.gmra.mrb[0].mxu0 %v1393
      %v1662 = vpop.f32.mrb[0].mxu0
      %v1663 = vadd.f32 %v1267, %v1662
      %v1664 = vpop.f32.mrb[0].mxu0
      %1665 = vmatprep.mubr.f32.mxu0 0.0
      %1666 = vmatmul.mubr.f32.gmra.mrb[0].mxu0 %v1396
      %v1667 = vpop.f32.mrb[0].mxu0
      %v1668 = vadd.f32 %v1272, %v1667
      %v1669 = vpop.f32.mrb[0].mxu0
      %1670 = vdwg.mxu0
      %v1671 = vld [vmem:[#allocation2 + $0x2] sm:$0xff]
      %v1672 = vld [vmem:[#allocation2 + $0xa] sm:$0xff]
      %v1673 = vld [vmem:[#allocation2 + $0x12] sm:$0xff]
      %v1674 = vld [vmem:[#allocation2 + $0x1a] sm:$0xff]
      %v1675 = vld [vmem:[#allocation2 + $0x22] sm:$0xff]
      %v1676 = vld [vmem:[#allocation2 + $0x2a] sm:$0xff]
      %v1677 = vld [vmem:[#allocation2 + $0x32] sm:$0xff]
      %v1678 = vld [vmem:[#allocation2 + $0x3a] sm:$0xff]
      %v1679 = vld [vmem:[#allocation2 + $0x42] sm:$0xff]
      %v1680 = vld [vmem:[#allocation2 + $0x4a] sm:$0xff]
      %v1681 = vld [vmem:[#allocation2 + $0x52] sm:$0xff]
      %v1682 = vld [vmem:[#allocation2 + $0x5a] sm:$0xff]
      %v1683 = vld [vmem:[#allocation2 + $0x62] sm:$0xff]
      %v1684 = vld [vmem:[#allocation2 + $0x6a] sm:$0xff]
      %v1685 = vld [vmem:[#allocation2 + $0x72] sm:$0xff]
      %v1686 = vld [vmem:[#allocation2 + $0x7a] sm:$0xff]
      %v1687 = vld [vmem:[#allocation2 + $0x82] sm:$0xff]
      %v1688 = vld [vmem:[#allocation2 + $0x8a] sm:$0xff]
      %v1689 = vld [vmem:[#allocation2 + $0x92] sm:$0xff]
      %v1690 = vld [vmem:[#allocation2 + $0x9a] sm:$0xff]
      %v1691 = vld [vmem:[#allocation2 + $0xa2] sm:$0xff]
      %v1692 = vld [vmem:[#allocation2 + $0xaa] sm:$0xff]
      %v1693 = vld [vmem:[#allocation2 + $0xb2] sm:$0xff]
      %v1694 = vld [vmem:[#allocation2 + $0xba] sm:$0xff]
      %v1695 = vld [vmem:[#allocation2 + $0xc2] sm:$0xff]
      %v1696 = vld [vmem:[#allocation2 + $0xca] sm:$0xff]
      %v1697 = vld [vmem:[#allocation2 + $0xd2] sm:$0xff]
      %v1698 = vld [vmem:[#allocation2 + $0xda] sm:$0xff]
      %v1699 = vld [vmem:[#allocation2 + $0xe2] sm:$0xff]
      %v1700 = vld [vmem:[#allocation2 + $0xea] sm:$0xff]
      %v1701 = vld [vmem:[#allocation2 + $0xf2] sm:$0xff]
      %v1702 = vld [vmem:[#allocation2 + $0xfa] sm:$0xff]
      %v1703 = vld [vmem:[#allocation2 + $0x102] sm:$0xff]
      %v1704 = vld [vmem:[#allocation2 + $0x10a] sm:$0xff]
      %v1705 = vld [vmem:[#allocation2 + $0x112] sm:$0xff]
      %v1706 = vld [vmem:[#allocation2 + $0x11a] sm:$0xff]
      %v1707 = vld [vmem:[#allocation2 + $0x122] sm:$0xff]
      %v1708 = vld [vmem:[#allocation2 + $0x12a] sm:$0xff]
      %v1709 = vld [vmem:[#allocation2 + $0x132] sm:$0xff]
      %v1710 = vld [vmem:[#allocation2 + $0x13a] sm:$0xff]
      %v1711 = vld [vmem:[#allocation2 + $0x142] sm:$0xf]
      %s1712 = scalar_lea.vmem %s4, 8
      %v1713 = vld [vmem:[%s1712] sm:$0xf]
      %v1715 = vsel %vm745, %v1671, 0
      %v1718 = vsel %vm745, %v1672, 0
      %v1721 = vsel %vm745, %v1673, 0
      %v1724 = vsel %vm745, %v1674, 0
      %v1727 = vsel %vm745, %v1675, 0
      %v1730 = vsel %vm745, %v1676, 0
      %v1733 = vsel %vm745, %v1677, 0
      %v1736 = vsel %vm745, %v1678, 0
      %v1739 = vsel %vm745, %v1679, 0
      %v1742 = vsel %vm745, %v1680, 0
      %v1745 = vsel %vm745, %v1681, 0
      %v1748 = vsel %vm745, %v1682, 0
      %v1751 = vsel %vm745, %v1683, 0
      %v1754 = vsel %vm745, %v1684, 0
      %v1757 = vsel %vm745, %v1685, 0
      %v1760 = vsel %vm745, %v1686, 0
      %v1763 = vsel %vm745, %v1687, 0
      %v1766 = vsel %vm745, %v1688, 0
      %v1769 = vsel %vm745, %v1689, 0
      %v1772 = vsel %vm745, %v1690, 0
      %v1775 = vsel %vm745, %v1691, 0
      %v1778 = vsel %vm745, %v1692, 0
      %v1781 = vsel %vm745, %v1693, 0
      %v1784 = vsel %vm745, %v1694, 0
      %v1787 = vsel %vm745, %v1695, 0
      %v1790 = vsel %vm745, %v1696, 0
      %v1793 = vsel %vm745, %v1697, 0
      %v1796 = vsel %vm745, %v1698, 0
      %v1799 = vsel %vm745, %v1699, 0
      %v1802 = vsel %vm745, %v1700, 0
      %v1805 = vsel %vm745, %v1701, 0
      %v1808 = vsel %vm745, %v1702, 0
      %v1811 = vsel %vm745, %v1703, 0
      %v1814 = vsel %vm745, %v1704, 0
      %v1817 = vsel %vm745, %v1705, 0
      %v1820 = vsel %vm745, %v1706, 0
      %v1823 = vsel %vm745, %v1707, 0
      %v1826 = vsel %vm745, %v1708, 0
      %v1829 = vsel %vm745, %v1709, 0
      %v1832 = vsel %vm745, %v1710, 0
      %v1835 = vsel %vm745, %v1711, 0
      %v1838 = vsel %vm1001, %v1713, 0
      %1840 = vmatprep.subr.mxu0 0.0
      %1841 = vmatpush1.msra.mxu0 %v1838
      %1842 = vmatprep.subr.mxu0 0.0
      %1843 = vmatpush1.msra.mxu0 0.0
      %1844 = vmatprep.subr.mxu0 0.0
      %1845 = vmatpush1.msra.mxu0 0.0
      %1846 = vmatprep.subr.mxu0 0.0
      %1847 = vmatpush1.msra.mxu0 0.0
      %1848 = vmatprep.subr.mxu0 0.0
      %1849 = vmatpush1.msra.mxu0 0.0
      %1850 = vmatprep.subr.mxu0 0.0
      %1851 = vmatpush1.msra.mxu0 0.0
      %1852 = vmatprep.subr.mxu0 0.0
      %1853 = vmatpush1.msra.mxu0 0.0
      %1854 = vmatprep.subr.mxu0 0.0
      %1855 = vmatpush1.msra.mxu0 0.0
      %1856 = vmatprep.subr.mxu0 0.0
      %1857 = vmatpush1.msra.mxu0 0.0
      %1858 = vmatprep.subr.mxu0 0.0
      %1859 = vmatpush1.msra.mxu0 0.0
      %1860 = vmatprep.subr.mxu0 0.0
      %1861 = vmatpush1.msra.mxu0 0.0
      %1862 = vmatprep.subr.mxu0 0.0
      %1863 = vmatpush1.msra.mxu0 0.0
      %1864 = vmatprep.subr.mxu0 0.0
      %1865 = vmatpush1.msra.mxu0 0.0
      %1866 = vmatprep.subr.mxu0 0.0
      %1867 = vmatpush1.msra.mxu0 0.0
      %1868 = vmatprep.subr.mxu0 0.0
      %1869 = vmatpush1.msra.mxu0 0.0
      %1870 = vmatprep.subr.mxu0 0.0
      %1871 = vmatpush1.msra.mxu0 0.0
      %1872 = vmatprep.subr.mxu0 0.0
      %1873 = vmatpush1.msra.mxu0 0.0
      %1874 = vmatprep.subr.mxu0 0.0
      %1875 = vmatpush1.msra.mxu0 0.0
      %1876 = vmatprep.subr.mxu0 0.0
      %1877 = vmatpush1.msra.mxu0 0.0
      %1878 = vmatprep.subr.mxu0 0.0
      %1879 = vmatpush1.msra.mxu0 0.0
      %1880 = vmatprep.subr.mxu0 0.0
      %1881 = vmatpush1.msra.mxu0 0.0
      %1882 = vmatprep.subr.mxu0 0.0
      %1883 = vmatpush1.msra.mxu0 0.0
      %1884 = vmatprep.subr.mxu0 0.0
      %1885 = vmatpush1.msra.mxu0 0.0
      %1886 = vmatprep.subr.mxu0 0.0
      %1887 = vmatpush1.msra.mxu0 0.0
      %1888 = vmatprep.subr.mxu0 0.0
      %1889 = vmatpush1.msra.mxu0 0.0
      %1890 = vmatprep.subr.mxu0 0.0
      %1891 = vmatpush1.msra.mxu0 0.0
      %1892 = vmatprep.subr.mxu0 0.0
      %1893 = vmatpush1.msra.mxu0 0.0
      %1894 = vmatprep.subr.mxu0 0.0
      %1895 = vmatpush1.msra.mxu0 0.0
      %1896 = vmatprep.subr.mxu0 0.0
      %1897 = vmatpush1.msra.mxu0 0.0
      %1898 = vmatprep.subr.mxu0 0.0
      %1899 = vmatpush1.msra.mxu0 0.0
      %1900 = vmatprep.subr.mxu0 0.0
      %1901 = vmatpush1.msra.mxu0 0.0
      %1902 = vmatprep.subr.mxu0 0.0
      %1903 = vmatpush1.msra.mxu0 0.0
      %1904 = vmatprep.mubr.f32.mxu0 0.0
      %1905 = vmatmul.mubr.f32.gmra.mrb[0].mxu0 %v1715
      %v1906 = vpop.f32.mrb[0].mxu0
      %v1907 = vadd.f32 0.0, %v1906
      %v1908 = vpop.f32.mrb[0].mxu0
      %1909 = vmatprep.mubr.f32.mxu0 0.0
      %1910 = vmatmul.mubr.f32.gmra.mrb[0].mxu0 %v1718
      %v1911 = vpop.f32.mrb[0].mxu0
      %v1912 = vadd.f32 0.0, %v1911
      %v1913 = vpop.f32.mrb[0].mxu0
      %1914 = vmatprep.mubr.f32.mxu0 0.0
      %1915 = vmatmul.mubr.f32.gmra.mrb[0].mxu0 %v1721
      %v1916 = vpop.f32.mrb[0].mxu0
      %v1917 = vadd.f32 0.0, %v1916
      %v1918 = vpop.f32.mrb[0].mxu0
      %1919 = vmatprep.mubr.f32.mxu0 0.0
      %1920 = vmatmul.mubr.f32.gmra.mrb[0].mxu0 %v1724
      %v1921 = vpop.f32.mrb[0].mxu0
      %v1922 = vadd.f32 0.0, %v1921
      %v1923 = vpop.f32.mrb[0].mxu0
      %1924 = vmatprep.mubr.f32.mxu0 0.0
      %1925 = vmatmul.mubr.f32.gmra.mrb[0].mxu0 %v1727
      %v1926 = vpop.f32.mrb[0].mxu0
      %v1927 = vadd.f32 0.0, %v1926
      %v1928 = vpop.f32.mrb[0].mxu0
      %1929 = vmatprep.mubr.f32.mxu0 0.0
      %1930 = vmatmul.mubr.f32.gmra.mrb[0].mxu0 %v1730
      %v1931 = vpop.f32.mrb[0].mxu0
      %v1932 = vadd.f32 0.0, %v1931
      %v1933 = vpop.f32.mrb[0].mxu0
      %1934 = vmatprep.mubr.f32.mxu0 0.0
      %1935 = vmatmul.mubr.f32.gmra.mrb[0].mxu0 %v1733
      %v1936 = vpop.f32.mrb[0].mxu0
      %v1937 = vadd.f32 0.0, %v1936
      %v1938 = vpop.f32.mrb[0].mxu0
      %1939 = vmatprep.mubr.f32.mxu0 0.0
      %1940 = vmatmul.mubr.f32.gmra.mrb[0].mxu0 %v1736
      %v1941 = vpop.f32.mrb[0].mxu0
      %v1942 = vadd.f32 0.0, %v1941
      %v1943 = vpop.f32.mrb[0].mxu0
      %1944 = vmatprep.mubr.f32.mxu0 0.0
      %1945 = vmatmul.mubr.f32.gmra.mrb[0].mxu0 %v1739
      %v1946 = vpop.f32.mrb[0].mxu0
      %v1947 = vadd.f32 0.0, %v1946
      %v1948 = vpop.f32.mrb[0].mxu0
      %1949 = vmatprep.mubr.f32.mxu0 0.0
      %1950 = vmatmul.mubr.f32.gmra.mrb[0].mxu0 %v1742
      %v1951 = vpop.f32.mrb[0].mxu0
      %v1952 = vadd.f32 0.0, %v1951
      %v1953 = vpop.f32.mrb[0].mxu0
      %1954 = vmatprep.mubr.f32.mxu0 0.0
      %1955 = vmatmul.mubr.f32.gmra.mrb[0].mxu0 %v1745
      %v1956 = vpop.f32.mrb[0].mxu0
      %v1957 = vadd.f32 0.0, %v1956
      %v1958 = vpop.f32.mrb[0].mxu0
      %1959 = vmatprep.mubr.f32.mxu0 0.0
      %1960 = vmatmul.mubr.f32.gmra.mrb[0].mxu0 %v1748
      %v1961 = vpop.f32.mrb[0].mxu0
      %v1962 = vadd.f32 0.0, %v1961
      %v1963 = vpop.f32.mrb[0].mxu0
      %1964 = vmatprep.mubr.f32.mxu0 0.0
      %1965 = vmatmul.mubr.f32.gmra.mrb[0].mxu0 %v1751
      %v1966 = vpop.f32.mrb[0].mxu0
      %v1967 = vadd.f32 0.0, %v1966
      %v1968 = vpop.f32.mrb[0].mxu0
      %1969 = vmatprep.mubr.f32.mxu0 0.0
      %1970 = vmatmul.mubr.f32.gmra.mrb[0].mxu0 %v1754
      %v1971 = vpop.f32.mrb[0].mxu0
      %v1972 = vadd.f32 0.0, %v1971
      %v1973 = vpop.f32.mrb[0].mxu0
      %1974 = vmatprep.mubr.f32.mxu0 0.0
      %1975 = vmatmul.mubr.f32.gmra.mrb[0].mxu0 %v1757
      %v1976 = vpop.f32.mrb[0].mxu0
      %v1977 = vadd.f32 0.0, %v1976
      %v1978 = vpop.f32.mrb[0].mxu0
      %1979 = vmatprep.mubr.f32.mxu0 0.0
      %1980 = vmatmul.mubr.f32.gmra.mrb[0].mxu0 %v1760
      %v1981 = vpop.f32.mrb[0].mxu0
      %v1982 = vadd.f32 0.0, %v1981
      %v1983 = vpop.f32.mrb[0].mxu0
      %1984 = vmatprep.mubr.f32.mxu0 0.0
      %1985 = vmatmul.mubr.f32.gmra.mrb[0].mxu0 %v1763
      %v1986 = vpop.f32.mrb[0].mxu0
      %v1987 = vadd.f32 0.0, %v1986
      %v1988 = vpop.f32.mrb[0].mxu0
      %1989 = vmatprep.mubr.f32.mxu0 0.0
      %1990 = vmatmul.mubr.f32.gmra.mrb[0].mxu0 %v1766
      %v1991 = vpop.f32.mrb[0].mxu0
      %v1992 = vadd.f32 0.0, %v1991
      %v1993 = vpop.f32.mrb[0].mxu0
      %1994 = vmatprep.mubr.f32.mxu0 0.0
      %1995 = vmatmul.mubr.f32.gmra.mrb[0].mxu0 %v1769
      %v1996 = vpop.f32.mrb[0].mxu0
      %v1997 = vadd.f32 0.0, %v1996
      %v1998 = vpop.f32.mrb[0].mxu0
      %1999 = vmatprep.mubr.f32.mxu0 0.0
      %2000 = vmatmul.mubr.f32.gmra.mrb[0].mxu0 %v1772
      %v2001 = vpop.f32.mrb[0].mxu0
      %v2002 = vadd.f32 0.0, %v2001
      %v2003 = vpop.f32.mrb[0].mxu0
      %2004 = vmatprep.mubr.f32.mxu0 0.0
      %2005 = vmatmul.mubr.f32.gmra.mrb[0].mxu0 %v1775
      %v2006 = vpop.f32.mrb[0].mxu0
      %v2007 = vadd.f32 0.0, %v2006
      %v2008 = vpop.f32.mrb[0].mxu0
      %2009 = vmatprep.mubr.f32.mxu0 0.0
      %2010 = vmatmul.mubr.f32.gmra.mrb[0].mxu0 %v1778
      %v2011 = vpop.f32.mrb[0].mxu0
      %v2012 = vadd.f32 0.0, %v2011
      %v2013 = vpop.f32.mrb[0].mxu0
      %2014 = vmatprep.mubr.f32.mxu0 0.0
      %2015 = vmatmul.mubr.f32.gmra.mrb[0].mxu0 %v1781
      %v2016 = vpop.f32.mrb[0].mxu0
      %v2017 = vadd.f32 0.0, %v2016
      %v2018 = vpop.f32.mrb[0].mxu0
      %2019 = vmatprep.mubr.f32.mxu0 0.0
      %2020 = vmatmul.mubr.f32.gmra.mrb[0].mxu0 %v1784
      %v2021 = vpop.f32.mrb[0].mxu0
      %v2022 = vadd.f32 0.0, %v2021
      %v2023 = vpop.f32.mrb[0].mxu0
      %2024 = vmatprep.mubr.f32.mxu0 0.0
      %2025 = vmatmul.mubr.f32.gmra.mrb[0].mxu0 %v1787
      %v2026 = vpop.f32.mrb[0].mxu0
      %v2027 = vadd.f32 0.0, %v2026
      %v2028 = vpop.f32.mrb[0].mxu0
      %2029 = vmatprep.mubr.f32.mxu0 0.0
      %2030 = vmatmul.mubr.f32.gmra.mrb[0].mxu0 %v1790
      %v2031 = vpop.f32.mrb[0].mxu0
      %v2032 = vadd.f32 0.0, %v2031
      %v2033 = vpop.f32.mrb[0].mxu0
      %2034 = vmatprep.mubr.f32.mxu0 0.0
      %2035 = vmatmul.mubr.f32.gmra.mrb[0].mxu0 %v1793
      %v2036 = vpop.f32.mrb[0].mxu0
      %v2037 = vadd.f32 0.0, %v2036
      %v2038 = vpop.f32.mrb[0].mxu0
      %2039 = vmatprep.mubr.f32.mxu0 0.0
      %2040 = vmatmul.mubr.f32.gmra.mrb[0].mxu0 %v1796
      %v2041 = vpop.f32.mrb[0].mxu0
      %v2042 = vadd.f32 0.0, %v2041
      %v2043 = vpop.f32.mrb[0].mxu0
      %2044 = vmatprep.mubr.f32.mxu0 0.0
      %2045 = vmatmul.mubr.f32.gmra.mrb[0].mxu0 %v1799
      %v2046 = vpop.f32.mrb[0].mxu0
      %v2047 = vadd.f32 0.0, %v2046
      %v2048 = vpop.f32.mrb[0].mxu0
      %2049 = vmatprep.mubr.f32.mxu0 0.0
      %2050 = vmatmul.mubr.f32.gmra.mrb[0].mxu0 %v1802
      %v2051 = vpop.f32.mrb[0].mxu0
      %v2052 = vadd.f32 0.0, %v2051
      %v2053 = vpop.f32.mrb[0].mxu0
      %2054 = vmatprep.mubr.f32.mxu0 0.0
      %2055 = vmatmul.mubr.f32.gmra.mrb[0].mxu0 %v1805
      %v2056 = vpop.f32.mrb[0].mxu0
      %v2057 = vadd.f32 0.0, %v2056
      %v2058 = vpop.f32.mrb[0].mxu0
      %2059 = vmatprep.mubr.f32.mxu0 0.0
      %2060 = vmatmul.mubr.f32.gmra.mrb[0].mxu0 %v1808
      %v2061 = vpop.f32.mrb[0].mxu0
      %v2062 = vadd.f32 0.0, %v2061
      %v2063 = vpop.f32.mrb[0].mxu0
      %2064 = vmatprep.mubr.f32.mxu0 0.0
      %2065 = vmatmul.mubr.f32.gmra.mrb[0].mxu0 %v1811
      %v2066 = vpop.f32.mrb[0].mxu0
      %v2067 = vadd.f32 0.0, %v2066
      %v2068 = vpop.f32.mrb[0].mxu0
      %2069 = vmatprep.mubr.f32.mxu0 0.0
      %2070 = vmatmul.mubr.f32.gmra.mrb[0].mxu0 %v1814
      %v2071 = vpop.f32.mrb[0].mxu0
      %v2072 = vadd.f32 0.0, %v2071
      %v2073 = vpop.f32.mrb[0].mxu0
      %2074 = vmatprep.mubr.f32.mxu0 0.0
      %2075 = vmatmul.mubr.f32.gmra.mrb[0].mxu0 %v1817
      %v2076 = vpop.f32.mrb[0].mxu0
      %v2077 = vadd.f32 0.0, %v2076
      %v2078 = vpop.f32.mrb[0].mxu0
      %2079 = vmatprep.mubr.f32.mxu0 0.0
      %2080 = vmatmul.mubr.f32.gmra.mrb[0].mxu0 %v1820
      %v2081 = vpop.f32.mrb[0].mxu0
      %v2082 = vadd.f32 0.0, %v2081
      %v2083 = vpop.f32.mrb[0].mxu0
      %2084 = vmatprep.mubr.f32.mxu0 0.0
      %2085 = vmatmul.mubr.f32.gmra.mrb[0].mxu0 %v1823
      %v2086 = vpop.f32.mrb[0].mxu0
      %v2087 = vadd.f32 0.0, %v2086
      %v2088 = vpop.f32.mrb[0].mxu0
      %2089 = vmatprep.mubr.f32.mxu0 0.0
      %2090 = vmatmul.mubr.f32.gmra.mrb[0].mxu0 %v1826
      %v2091 = vpop.f32.mrb[0].mxu0
      %v2092 = vadd.f32 0.0, %v2091
      %v2093 = vpop.f32.mrb[0].mxu0
      %2094 = vmatprep.mubr.f32.mxu0 0.0
      %2095 = vmatmul.mubr.f32.gmra.mrb[0].mxu0 %v1829
      %v2096 = vpop.f32.mrb[0].mxu0
      %v2097 = vadd.f32 0.0, %v2096
      %v2098 = vpop.f32.mrb[0].mxu0
      %2099 = vmatprep.mubr.f32.mxu0 0.0
      %2100 = vmatmul.mubr.f32.gmra.mrb[0].mxu0 %v1832
      %v2101 = vpop.f32.mrb[0].mxu0
      %v2102 = vadd.f32 0.0, %v2101
      %v2103 = vpop.f32.mrb[0].mxu0
      %2104 = vmatprep.mubr.f32.mxu0 0.0
      %2105 = vmatmul.mubr.f32.gmra.mrb[0].mxu0 %v1835
      %v2106 = vpop.f32.mrb[0].mxu0
      %v2107 = vadd.f32 0.0, %v2106
      %v2108 = vpop.f32.mrb[0].mxu0
      %2109 = vdwg.mxu0
      %v2110 = vadd.f32 %v1468, %v1907
      %v2111 = vadd.f32 %v1473, %v1912
      %v2112 = vadd.f32 %v1478, %v1917
      %v2113 = vadd.f32 %v1483, %v1922
      %v2114 = vadd.f32 %v1488, %v1927
      %v2115 = vadd.f32 %v1493, %v1932
      %v2116 = vadd.f32 %v1498, %v1937
      %v2117 = vadd.f32 %v1503, %v1942
      %v2118 = vadd.f32 %v1508, %v1947
      %v2119 = vadd.f32 %v1513, %v1952
      %v2120 = vadd.f32 %v1518, %v1957
      %v2121 = vadd.f32 %v1523, %v1962
      %v2122 = vadd.f32 %v1528, %v1967
      %v2123 = vadd.f32 %v1533, %v1972
      %v2124 = vadd.f32 %v1538, %v1977
      %v2125 = vadd.f32 %v1543, %v1982
      %v2126 = vadd.f32 %v1548, %v1987
      %v2127 = vadd.f32 %v1553, %v1992
      %v2128 = vadd.f32 %v1558, %v1997
      %v2129 = vadd.f32 %v1563, %v2002
      %v2130 = vadd.f32 %v1568, %v2007
      %v2131 = vadd.f32 %v1573, %v2012
      %v2132 = vadd.f32 %v1578, %v2017
      %v2133 = vadd.f32 %v1583, %v2022
      %v2134 = vadd.f32 %v1588, %v2027
      %v2135 = vadd.f32 %v1593, %v2032
      %v2136 = vadd.f32 %v1598, %v2037
      %v2137 = vadd.f32 %v1603, %v2042
      %v2138 = vadd.f32 %v1608, %v2047
      %v2139 = vadd.f32 %v1613, %v2052
      %v2140 = vadd.f32 %v1618, %v2057
      %v2141 = vadd.f32 %v1623, %v2062
      %v2142 = vadd.f32 %v1628, %v2067
      %v2143 = vadd.f32 %v1633, %v2072
      %v2144 = vadd.f32 %v1638, %v2077
      %v2145 = vadd.f32 %v1643, %v2082
      %v2146 = vadd.f32 %v1648, %v2087
      %v2147 = vadd.f32 %v1653, %v2092
      %v2148 = vadd.f32 %v1658, %v2097
      %v2149 = vadd.f32 %v1663, %v2102
      %v2150 = vadd.f32 %v1668, %v2107
      %v2151 = vld [vmem:[#allocation2 + $0x12] sm:$0xff]
      %v2152 = vld [vmem:[#allocation2 + $0x1a] sm:$0xff]
      %v2153 = vld [vmem:[#allocation2 + $0x22] sm:$0xff]
      %v2154 = vld [vmem:[#allocation2 + $0x2a] sm:$0xff]
      %v2155 = vld [vmem:[#allocation2 + $0x32] sm:$0xff]
      %v2156 = vld [vmem:[#allocation2 + $0x3a] sm:$0xff]
      %v2157 = vld [vmem:[#allocation2 + $0x42] sm:$0xff]
      %v2158 = vld [vmem:[#allocation2 + $0x4a] sm:$0xff]
      %v2159 = vld [vmem:[#allocation2 + $0x52] sm:$0xff]
      %v2160 = vld [vmem:[#allocation2 + $0x5a] sm:$0xff]
      %v2161 = vld [vmem:[#allocation2 + $0x62] sm:$0xff]
      %v2162 = vld [vmem:[#allocation2 + $0x6a] sm:$0xff]
      %v2163 = vld [vmem:[#allocation2 + $0x72] sm:$0xff]
      %v2164 = vld [vmem:[#allocation2 + $0x7a] sm:$0xff]
      %v2165 = vld [vmem:[#allocation2 + $0x82] sm:$0xff]
      %v2166 = vld [vmem:[#allocation2 + $0x8a] sm:$0xff]
      %v2167 = vld [vmem:[#allocation2 + $0x92] sm:$0xff]
      %v2168 = vld [vmem:[#allocation2 + $0x9a] sm:$0xff]
      %v2169 = vld [vmem:[#allocation2 + $0xa2] sm:$0xff]
      %v2170 = vld [vmem:[#allocation2 + $0xaa] sm:$0xff]
      %v2171 = vld [vmem:[#allocation2 + $0xb2] sm:$0xff]
      %v2172 = vld [vmem:[#allocation2 + $0xba] sm:$0xff]
      %v2173 = vld [vmem:[#allocation2 + $0xc2] sm:$0xff]
      %v2174 = vld [vmem:[#allocation2 + $0xca] sm:$0xff]
      %v2175 = vld [vmem:[#allocation2 + $0xd2] sm:$0xff]
      %v2176 = vld [vmem:[#allocation2 + $0xda] sm:$0xff]
      %v2177 = vld [vmem:[#allocation2 + $0xe2] sm:$0xff]
      %v2178 = vld [vmem:[#allocation2 + $0xea] sm:$0xff]
      %v2179 = vld [vmem:[#allocation2 + $0xf2] sm:$0xff]
      %v2180 = vld [vmem:[#allocation2 + $0xfa] sm:$0xff]
      %v2181 = vld [vmem:[#allocation2 + $0x102] sm:$0xff]
      %v2182 = vld [vmem:[#allocation2 + $0x10a] sm:$0xff]
      %v2183 = vld [vmem:[#allocation2 + $0x112] sm:$0xff]
      %v2184 = vld [vmem:[#allocation2 + $0x11a] sm:$0xff]
      %v2185 = vld [vmem:[#allocation2 + $0x122] sm:$0xff]
      %v2186 = vld [vmem:[#allocation2 + $0x12a] sm:$0xff]
      %v2187 = vld [vmem:[#allocation2 + $0x132] sm:$0xff]
      %v2188 = vld [vmem:[#allocation2 + $0x13a] sm:$0xff]
      %v2189 = vld [vmem:[#allocation2 + $0x142] sm:$0xff]
      %v2190 = vld [vmem:[#allocation2 + $0x14a] sm:$0xff]
      %v2191 = vld [vmem:[#allocation2 + $0x152] sm:$0xf]
      %s2192 = scalar_lea.vmem %s4, 12
      %v2193 = vld [vmem:[%s2192] sm:$0xf]
      %v2195 = vsel %vm745, %v2151, 0
      %v2198 = vsel %vm745, %v2152, 0
      %v2201 = vsel %vm745, %v2153, 0
      %v2204 = vsel %vm745, %v2154, 0
      %v2207 = vsel %vm745, %v2155, 0
      %v2210 = vsel %vm745, %v2156, 0
      %v2213 = vsel %vm745, %v2157, 0
      %v2216 = vsel %vm745, %v2158, 0
      %v2219 = vsel %vm745, %v2159, 0
      %v2222 = vsel %vm745, %v2160, 0
      %v2225 = vsel %vm745, %v2161, 0
      %v2228 = vsel %vm745, %v2162, 0
      %v2231 = vsel %vm745, %v2163, 0
      %v2234 = vsel %vm745, %v2164, 0
      %v2237 = vsel %vm745, %v2165, 0
      %v2240 = vsel %vm745, %v2166, 0
      %v2243 = vsel %vm745, %v2167, 0
      %v2246 = vsel %vm745, %v2168, 0
      %v2249 = vsel %vm745, %v2169, 0
      %v2252 = vsel %vm745, %v2170, 0
      %v2255 = vsel %vm745, %v2171, 0
      %v2258 = vsel %vm745, %v2172, 0
      %v2261 = vsel %vm745, %v2173, 0
      %v2264 = vsel %vm745, %v2174, 0
      %v2267 = vsel %vm745, %v2175, 0
      %v2270 = vsel %vm745, %v2176, 0
      %v2273 = vsel %vm745, %v2177, 0
      %v2276 = vsel %vm745, %v2178, 0
      %v2279 = vsel %vm745, %v2179, 0
      %v2282 = vsel %vm745, %v2180, 0
      %v2285 = vsel %vm745, %v2181, 0
      %v2288 = vsel %vm745, %v2182, 0
      %v2291 = vsel %vm745, %v2183, 0
      %v2294 = vsel %vm745, %v2184, 0
      %v2297 = vsel %vm745, %v2185, 0
      %v2300 = vsel %vm745, %v2186, 0
      %v2303 = vsel %vm745, %v2187, 0
      %v2306 = vsel %vm745, %v2188, 0
      %v2309 = vsel %vm745, %v2189, 0
      %v2312 = vsel %vm745, %v2190, 0
      %v2315 = vsel %vm745, %v2191, 0
      %v2318 = vsel %vm1001, %v2193, 0
      %2320 = vmatprep.subr.mxu0 0.0
      %2321 = vmatpush1.msra.mxu0 %v2318
      %2322 = vmatprep.subr.mxu0 0.0
      %2323 = vmatpush1.msra.mxu0 0.0
      %2324 = vmatprep.subr.mxu0 0.0
      %2325 = vmatpush1.msra.mxu0 0.0
      %2326 = vmatprep.subr.mxu0 0.0
      %2327 = vmatpush1.msra.mxu0 0.0
      %2328 = vmatprep.subr.mxu0 0.0
      %2329 = vmatpush1.msra.mxu0 0.0
      %2330 = vmatprep.subr.mxu0 0.0
      %2331 = vmatpush1.msra.mxu0 0.0
      %2332 = vmatprep.subr.mxu0 0.0
      %2333 = vmatpush1.msra.mxu0 0.0
      %2334 = vmatprep.subr.mxu0 0.0
      %2335 = vmatpush1.msra.mxu0 0.0
      %2336 = vmatprep.subr.mxu0 0.0
      %2337 = vmatpush1.msra.mxu0 0.0
      %2338 = vmatprep.subr.mxu0 0.0
      %2339 = vmatpush1.msra.mxu0 0.0
      %2340 = vmatprep.subr.mxu0 0.0
      %2341 = vmatpush1.msra.mxu0 0.0
      %2342 = vmatprep.subr.mxu0 0.0
      %2343 = vmatpush1.msra.mxu0 0.0
      %2344 = vmatprep.subr.mxu0 0.0
      %2345 = vmatpush1.msra.mxu0 0.0
      %2346 = vmatprep.subr.mxu0 0.0
      %2347 = vmatpush1.msra.mxu0 0.0
      %2348 = vmatprep.subr.mxu0 0.0
      %2349 = vmatpush1.msra.mxu0 0.0
      %2350 = vmatprep.subr.mxu0 0.0
      %2351 = vmatpush1.msra.mxu0 0.0
      %2352 = vmatprep.subr.mxu0 0.0
      %2353 = vmatpush1.msra.mxu0 0.0
      %2354 = vmatprep.subr.mxu0 0.0
      %2355 = vmatpush1.msra.mxu0 0.0
      %2356 = vmatprep.subr.mxu0 0.0
      %2357 = vmatpush1.msra.mxu0 0.0
      %2358 = vmatprep.subr.mxu0 0.0
      %2359 = vmatpush1.msra.mxu0 0.0
      %2360 = vmatprep.subr.mxu0 0.0
      %2361 = vmatpush1.msra.mxu0 0.0
      %2362 = vmatprep.subr.mxu0 0.0
      %2363 = vmatpush1.msra.mxu0 0.0
      %2364 = vmatprep.subr.mxu0 0.0
      %2365 = vmatpush1.msra.mxu0 0.0
      %2366 = vmatprep.subr.mxu0 0.0
      %2367 = vmatpush1.msra.mxu0 0.0
      %2368 = vmatprep.subr.mxu0 0.0
      %2369 = vmatpush1.msra.mxu0 0.0
      %2370 = vmatprep.subr.mxu0 0.0
      %2371 = vmatpush1.msra.mxu0 0.0
      %2372 = vmatprep.subr.mxu0 0.0
      %2373 = vmatpush1.msra.mxu0 0.0
      %2374 = vmatprep.subr.mxu0 0.0
      %2375 = vmatpush1.msra.mxu0 0.0
      %2376 = vmatprep.subr.mxu0 0.0
      %2377 = vmatpush1.msra.mxu0 0.0
      %2378 = vmatprep.subr.mxu0 0.0
      %2379 = vmatpush1.msra.mxu0 0.0
      %2380 = vmatprep.subr.mxu0 0.0
      %2381 = vmatpush1.msra.mxu0 0.0
      %2382 = vmatprep.subr.mxu0 0.0
      %2383 = vmatpush1.msra.mxu0 0.0
      %2384 = vmatprep.mubr.f32.mxu0 0.0
      %2385 = vmatmul.mubr.f32.gmra.mrb[0].mxu0 %v2195
      %v2386 = vpop.f32.mrb[0].mxu0
      %v2387 = vadd.f32 0.0, %v2386
      %v2388 = vpop.f32.mrb[0].mxu0
      %2389 = vmatprep.mubr.f32.mxu0 0.0
      %2390 = vmatmul.mubr.f32.gmra.mrb[0].mxu0 %v2198
      %v2391 = vpop.f32.mrb[0].mxu0
      %v2392 = vadd.f32 0.0, %v2391
      %v2393 = vpop.f32.mrb[0].mxu0
      %2394 = vmatprep.mubr.f32.mxu0 0.0
      %2395 = vmatmul.mubr.f32.gmra.mrb[0].mxu0 %v2201
      %v2396 = vpop.f32.mrb[0].mxu0
      %v2397 = vadd.f32 0.0, %v2396
      %v2398 = vpop.f32.mrb[0].mxu0
      %2399 = vmatprep.mubr.f32.mxu0 0.0
      %2400 = vmatmul.mubr.f32.gmra.mrb[0].mxu0 %v2204
      %v2401 = vpop.f32.mrb[0].mxu0
      %v2402 = vadd.f32 0.0, %v2401
      %v2403 = vpop.f32.mrb[0].mxu0
      %2404 = vmatprep.mubr.f32.mxu0 0.0
      %2405 = vmatmul.mubr.f32.gmra.mrb[0].mxu0 %v2207
      %v2406 = vpop.f32.mrb[0].mxu0
      %v2407 = vadd.f32 0.0, %v2406
      %v2408 = vpop.f32.mrb[0].mxu0
      %2409 = vmatprep.mubr.f32.mxu0 0.0
      %2410 = vmatmul.mubr.f32.gmra.mrb[0].mxu0 %v2210
      %v2411 = vpop.f32.mrb[0].mxu0
      %v2412 = vadd.f32 0.0, %v2411
      %v2413 = vpop.f32.mrb[0].mxu0
      %2414 = vmatprep.mubr.f32.mxu0 0.0
      %2415 = vmatmul.mubr.f32.gmra.mrb[0].mxu0 %v2213
      %v2416 = vpop.f32.mrb[0].mxu0
      %v2417 = vadd.f32 0.0, %v2416
      %v2418 = vpop.f32.mrb[0].mxu0
      %2419 = vmatprep.mubr.f32.mxu0 0.0
      %2420 = vmatmul.mubr.f32.gmra.mrb[0].mxu0 %v2216
      %v2421 = vpop.f32.mrb[0].mxu0
      %v2422 = vadd.f32 0.0, %v2421
      %v2423 = vpop.f32.mrb[0].mxu0
      %2424 = vmatprep.mubr.f32.mxu0 0.0
      %2425 = vmatmul.mubr.f32.gmra.mrb[0].mxu0 %v2219
      %v2426 = vpop.f32.mrb[0].mxu0
      %v2427 = vadd.f32 0.0, %v2426
      %v2428 = vpop.f32.mrb[0].mxu0
      %2429 = vmatprep.mubr.f32.mxu0 0.0
      %2430 = vmatmul.mubr.f32.gmra.mrb[0].mxu0 %v2222
      %v2431 = vpop.f32.mrb[0].mxu0
      %v2432 = vadd.f32 0.0, %v2431
      %v2433 = vpop.f32.mrb[0].mxu0
      %2434 = vmatprep.mubr.f32.mxu0 0.0
      %2435 = vmatmul.mubr.f32.gmra.mrb[0].mxu0 %v2225
      %v2436 = vpop.f32.mrb[0].mxu0
      %v2437 = vadd.f32 0.0, %v2436
      %v2438 = vpop.f32.mrb[0].mxu0
      %2439 = vmatprep.mubr.f32.mxu0 0.0
      %2440 = vmatmul.mubr.f32.gmra.mrb[0].mxu0 %v2228
      %v2441 = vpop.f32.mrb[0].mxu0
      %v2442 = vadd.f32 0.0, %v2441
      %v2443 = vpop.f32.mrb[0].mxu0
      %2444 = vmatprep.mubr.f32.mxu0 0.0
      %2445 = vmatmul.mubr.f32.gmra.mrb[0].mxu0 %v2231
      %v2446 = vpop.f32.mrb[0].mxu0
      %v2447 = vadd.f32 0.0, %v2446
      %v2448 = vpop.f32.mrb[0].mxu0
      %2449 = vmatprep.mubr.f32.mxu0 0.0
      %2450 = vmatmul.mubr.f32.gmra.mrb[0].mxu0 %v2234
      %v2451 = vpop.f32.mrb[0].mxu0
      %v2452 = vadd.f32 0.0, %v2451
      %v2453 = vpop.f32.mrb[0].mxu0
      %2454 = vmatprep.mubr.f32.mxu0 0.0
      %2455 = vmatmul.mubr.f32.gmra.mrb[0].mxu0 %v2237
      %v2456 = vpop.f32.mrb[0].mxu0
      %v2457 = vadd.f32 0.0, %v2456
      %v2458 = vpop.f32.mrb[0].mxu0
      %2459 = vmatprep.mubr.f32.mxu0 0.0
      %2460 = vmatmul.mubr.f32.gmra.mrb[0].mxu0 %v2240
      %v2461 = vpop.f32.mrb[0].mxu0
      %v2462 = vadd.f32 0.0, %v2461
      %v2463 = vpop.f32.mrb[0].mxu0
      %2464 = vmatprep.mubr.f32.mxu0 0.0
      %2465 = vmatmul.mubr.f32.gmra.mrb[0].mxu0 %v2243
      %v2466 = vpop.f32.mrb[0].mxu0
      %v2467 = vadd.f32 0.0, %v2466
      %v2468 = vpop.f32.mrb[0].mxu0
      %2469 = vmatprep.mubr.f32.mxu0 0.0
      %2470 = vmatmul.mubr.f32.gmra.mrb[0].mxu0 %v2246
      %v2471 = vpop.f32.mrb[0].mxu0
      %v2472 = vadd.f32 0.0, %v2471
      %v2473 = vpop.f32.mrb[0].mxu0
      %2474 = vmatprep.mubr.f32.mxu0 0.0
      %2475 = vmatmul.mubr.f32.gmra.mrb[0].mxu0 %v2249
      %v2476 = vpop.f32.mrb[0].mxu0
      %v2477 = vadd.f32 0.0, %v2476
      %v2478 = vpop.f32.mrb[0].mxu0
      %2479 = vmatprep.mubr.f32.mxu0 0.0
      %2480 = vmatmul.mubr.f32.gmra.mrb[0].mxu0 %v2252
      %v2481 = vpop.f32.mrb[0].mxu0
      %v2482 = vadd.f32 0.0, %v2481
      %v2483 = vpop.f32.mrb[0].mxu0
      %2484 = vmatprep.mubr.f32.mxu0 0.0
      %2485 = vmatmul.mubr.f32.gmra.mrb[0].mxu0 %v2255
      %v2486 = vpop.f32.mrb[0].mxu0
      %v2487 = vadd.f32 0.0, %v2486
      %v2488 = vpop.f32.mrb[0].mxu0
      %2489 = vmatprep.mubr.f32.mxu0 0.0
      %2490 = vmatmul.mubr.f32.gmra.mrb[0].mxu0 %v2258
      %v2491 = vpop.f32.mrb[0].mxu0
      %v2492 = vadd.f32 0.0, %v2491
      %v2493 = vpop.f32.mrb[0].mxu0
      %2494 = vmatprep.mubr.f32.mxu0 0.0
      %2495 = vmatmul.mubr.f32.gmra.mrb[0].mxu0 %v2261
      %v2496 = vpop.f32.mrb[0].mxu0
      %v2497 = vadd.f32 0.0, %v2496
      %v2498 = vpop.f32.mrb[0].mxu0
      %2499 = vmatprep.mubr.f32.mxu0 0.0
      %2500 = vmatmul.mubr.f32.gmra.mrb[0].mxu0 %v2264
      %v2501 = vpop.f32.mrb[0].mxu0
      %v2502 = vadd.f32 0.0, %v2501
      %v2503 = vpop.f32.mrb[0].mxu0
      %2504 = vmatprep.mubr.f32.mxu0 0.0
      %2505 = vmatmul.mubr.f32.gmra.mrb[0].mxu0 %v2267
      %v2506 = vpop.f32.mrb[0].mxu0
      %v2507 = vadd.f32 0.0, %v2506
      %v2508 = vpop.f32.mrb[0].mxu0
      %2509 = vmatprep.mubr.f32.mxu0 0.0
      %2510 = vmatmul.mubr.f32.gmra.mrb[0].mxu0 %v2270
      %v2511 = vpop.f32.mrb[0].mxu0
      %v2512 = vadd.f32 0.0, %v2511
      %v2513 = vpop.f32.mrb[0].mxu0
      %2514 = vmatprep.mubr.f32.mxu0 0.0
      %2515 = vmatmul.mubr.f32.gmra.mrb[0].mxu0 %v2273
      %v2516 = vpop.f32.mrb[0].mxu0
      %v2517 = vadd.f32 0.0, %v2516
      %v2518 = vpop.f32.mrb[0].mxu0
      %2519 = vmatprep.mubr.f32.mxu0 0.0
      %2520 = vmatmul.mubr.f32.gmra.mrb[0].mxu0 %v2276
      %v2521 = vpop.f32.mrb[0].mxu0
      %v2522 = vadd.f32 0.0, %v2521
      %v2523 = vpop.f32.mrb[0].mxu0
      %2524 = vmatprep.mubr.f32.mxu0 0.0
      %2525 = vmatmul.mubr.f32.gmra.mrb[0].mxu0 %v2279
      %v2526 = vpop.f32.mrb[0].mxu0
      %v2527 = vadd.f32 0.0, %v2526
      %v2528 = vpop.f32.mrb[0].mxu0
      %2529 = vmatprep.mubr.f32.mxu0 0.0
      %2530 = vmatmul.mubr.f32.gmra.mrb[0].mxu0 %v2282
      %v2531 = vpop.f32.mrb[0].mxu0
      %v2532 = vadd.f32 0.0, %v2531
      %v2533 = vpop.f32.mrb[0].mxu0
      %2534 = vmatprep.mubr.f32.mxu0 0.0
      %2535 = vmatmul.mubr.f32.gmra.mrb[0].mxu0 %v2285
      %v2536 = vpop.f32.mrb[0].mxu0
      %v2537 = vadd.f32 0.0, %v2536
      %v2538 = vpop.f32.mrb[0].mxu0
      %2539 = vmatprep.mubr.f32.mxu0 0.0
      %2540 = vmatmul.mubr.f32.gmra.mrb[0].mxu0 %v2288
      %v2541 = vpop.f32.mrb[0].mxu0
      %v2542 = vadd.f32 0.0, %v2541
      %v2543 = vpop.f32.mrb[0].mxu0
      %2544 = vmatprep.mubr.f32.mxu0 0.0
      %2545 = vmatmul.mubr.f32.gmra.mrb[0].mxu0 %v2291
      %v2546 = vpop.f32.mrb[0].mxu0
      %v2547 = vadd.f32 0.0, %v2546
      %v2548 = vpop.f32.mrb[0].mxu0
      %2549 = vmatprep.mubr.f32.mxu0 0.0
      %2550 = vmatmul.mubr.f32.gmra.mrb[0].mxu0 %v2294
      %v2551 = vpop.f32.mrb[0].mxu0
      %v2552 = vadd.f32 0.0, %v2551
      %v2553 = vpop.f32.mrb[0].mxu0
      %2554 = vmatprep.mubr.f32.mxu0 0.0
      %2555 = vmatmul.mubr.f32.gmra.mrb[0].mxu0 %v2297
      %v2556 = vpop.f32.mrb[0].mxu0
      %v2557 = vadd.f32 0.0, %v2556
      %v2558 = vpop.f32.mrb[0].mxu0
      %2559 = vmatprep.mubr.f32.mxu0 0.0
      %2560 = vmatmul.mubr.f32.gmra.mrb[0].mxu0 %v2300
      %v2561 = vpop.f32.mrb[0].mxu0
      %v2562 = vadd.f32 0.0, %v2561
      %v2563 = vpop.f32.mrb[0].mxu0
      %2564 = vmatprep.mubr.f32.mxu0 0.0
      %2565 = vmatmul.mubr.f32.gmra.mrb[0].mxu0 %v2303
      %v2566 = vpop.f32.mrb[0].mxu0
      %v2567 = vadd.f32 0.0, %v2566
      %v2568 = vpop.f32.mrb[0].mxu0
      %2569 = vmatprep.mubr.f32.mxu0 0.0
      %2570 = vmatmul.mubr.f32.gmra.mrb[0].mxu0 %v2306
      %v2571 = vpop.f32.mrb[0].mxu0
      %v2572 = vadd.f32 0.0, %v2571
      %v2573 = vpop.f32.mrb[0].mxu0
      %2574 = vmatprep.mubr.f32.mxu0 0.0
      %2575 = vmatmul.mubr.f32.gmra.mrb[0].mxu0 %v2309
      %v2576 = vpop.f32.mrb[0].mxu0
      %v2577 = vadd.f32 0.0, %v2576
      %v2578 = vpop.f32.mrb[0].mxu0
      %2579 = vmatprep.mubr.f32.mxu0 0.0
      %2580 = vmatmul.mubr.f32.gmra.mrb[0].mxu0 %v2312
      %v2581 = vpop.f32.mrb[0].mxu0
      %v2582 = vadd.f32 0.0, %v2581
      %v2583 = vpop.f32.mrb[0].mxu0
      %2584 = vmatprep.mubr.f32.mxu0 0.0
      %2585 = vmatmul.mubr.f32.gmra.mrb[0].mxu0 %v2315
      %v2586 = vpop.f32.mrb[0].mxu0
      %v2587 = vadd.f32 0.0, %v2586
      %v2588 = vpop.f32.mrb[0].mxu0
      %2589 = vdwg.mxu0
      %v2590 = vadd.f32 %v2110, %v2387
      %v2591 = vadd.f32 %v2111, %v2392
      %v2592 = vadd.f32 %v2112, %v2397
      %v2593 = vadd.f32 %v2113, %v2402
      %v2594 = vadd.f32 %v2114, %v2407
      %v2595 = vadd.f32 %v2115, %v2412
      %v2596 = vadd.f32 %v2116, %v2417
      %v2597 = vadd.f32 %v2117, %v2422
      %v2598 = vadd.f32 %v2118, %v2427
      %v2599 = vadd.f32 %v2119, %v2432
      %v2600 = vadd.f32 %v2120, %v2437
      %v2601 = vadd.f32 %v2121, %v2442
      %v2602 = vadd.f32 %v2122, %v2447
      %v2603 = vadd.f32 %v2123, %v2452
      %v2604 = vadd.f32 %v2124, %v2457
      %v2605 = vadd.f32 %v2125, %v2462
      %v2606 = vadd.f32 %v2126, %v2467
      %v2607 = vadd.f32 %v2127, %v2472
      %v2608 = vadd.f32 %v2128, %v2477
      %v2609 = vadd.f32 %v2129, %v2482
      %v2610 = vadd.f32 %v2130, %v2487
      %v2611 = vadd.f32 %v2131, %v2492
      %v2612 = vadd.f32 %v2132, %v2497
      %v2613 = vadd.f32 %v2133, %v2502
      %v2614 = vadd.f32 %v2134, %v2507
      %v2615 = vadd.f32 %v2135, %v2512
      %v2616 = vadd.f32 %v2136, %v2517
      %v2617 = vadd.f32 %v2137, %v2522
      %v2618 = vadd.f32 %v2138, %v2527
      %v2619 = vadd.f32 %v2139, %v2532
      %v2620 = vadd.f32 %v2140, %v2537
      %v2621 = vadd.f32 %v2141, %v2542
      %v2622 = vadd.f32 %v2142, %v2547
      %v2623 = vadd.f32 %v2143, %v2552
      %v2624 = vadd.f32 %v2144, %v2557
      %v2625 = vadd.f32 %v2145, %v2562
      %v2626 = vadd.f32 %v2146, %v2567
      %v2627 = vadd.f32 %v2147, %v2572
      %v2628 = vadd.f32 %v2148, %v2577
      %v2629 = vadd.f32 %v2149, %v2582
      %v2630 = vadd.f32 %v2150, %v2587
      %v2631 = vld [vmem:[#allocation2 + $0x13] sm:$0xff]
      %v2632 = vld [vmem:[#allocation2 + $0x1b] sm:$0xff]
      %v2633 = vld [vmem:[#allocation2 + $0x23] sm:$0xff]
      %v2634 = vld [vmem:[#allocation2 + $0x2b] sm:$0xff]
      %v2635 = vld [vmem:[#allocation2 + $0x33] sm:$0xff]
      %v2636 = vld [vmem:[#allocation2 + $0x3b] sm:$0xff]
      %v2637 = vld [vmem:[#allocation2 + $0x43] sm:$0xff]
      %v2638 = vld [vmem:[#allocation2 + $0x4b] sm:$0xff]
      %v2639 = vld [vmem:[#allocation2 + $0x53] sm:$0xff]
      %v2640 = vld [vmem:[#allocation2 + $0x5b] sm:$0xff]
      %v2641 = vld [vmem:[#allocation2 + $0x63] sm:$0xff]
      %v2642 = vld [vmem:[#allocation2 + $0x6b] sm:$0xff]
      %v2643 = vld [vmem:[#allocation2 + $0x73] sm:$0xff]
      %v2644 = vld [vmem:[#allocation2 + $0x7b] sm:$0xff]
      %v2645 = vld [vmem:[#allocation2 + $0x83] sm:$0xff]
      %v2646 = vld [vmem:[#allocation2 + $0x8b] sm:$0xff]
      %v2647 = vld [vmem:[#allocation2 + $0x93] sm:$0xff]
      %v2648 = vld [vmem:[#allocation2 + $0x9b] sm:$0xff]
      %v2649 = vld [vmem:[#allocation2 + $0xa3] sm:$0xff]
      %v2650 = vld [vmem:[#allocation2 + $0xab] sm:$0xff]
      %v2651 = vld [vmem:[#allocation2 + $0xb3] sm:$0xff]
      %v2652 = vld [vmem:[#allocation2 + $0xbb] sm:$0xff]
      %v2653 = vld [vmem:[#allocation2 + $0xc3] sm:$0xff]
      %v2654 = vld [vmem:[#allocation2 + $0xcb] sm:$0xff]
      %v2655 = vld [vmem:[#allocation2 + $0xd3] sm:$0xff]
      %v2656 = vld [vmem:[#allocation2 + $0xdb] sm:$0xff]
      %v2657 = vld [vmem:[#allocation2 + $0xe3] sm:$0xff]
      %v2658 = vld [vmem:[#allocation2 + $0xeb] sm:$0xff]
      %v2659 = vld [vmem:[#allocation2 + $0xf3] sm:$0xff]
      %v2660 = vld [vmem:[#allocation2 + $0xfb] sm:$0xff]
      %v2661 = vld [vmem:[#allocation2 + $0x103] sm:$0xff]
      %v2662 = vld [vmem:[#allocation2 + $0x10b] sm:$0xff]
      %v2663 = vld [vmem:[#allocation2 + $0x113] sm:$0xff]
      %v2664 = vld [vmem:[#allocation2 + $0x11b] sm:$0xff]
      %v2665 = vld [vmem:[#allocation2 + $0x123] sm:$0xff]
      %v2666 = vld [vmem:[#allocation2 + $0x12b] sm:$0xff]
      %v2667 = vld [vmem:[#allocation2 + $0x133] sm:$0xff]
      %v2668 = vld [vmem:[#allocation2 + $0x13b] sm:$0xff]
      %v2669 = vld [vmem:[#allocation2 + $0x143] sm:$0xff]
      %v2670 = vld [vmem:[#allocation2 + $0x14b] sm:$0xff]
      %v2671 = vld [vmem:[#allocation2 + $0x153] sm:$0xf]
      %s2672 = scalar_lea.vmem %s4, 16
      %v2673 = vld [vmem:[%s2672] sm:$0xf]
      %v2675 = vsel %vm745, %v2631, 0
      %v2678 = vsel %vm745, %v2632, 0
      %v2681 = vsel %vm745, %v2633, 0
      %v2684 = vsel %vm745, %v2634, 0
      %v2687 = vsel %vm745, %v2635, 0
      %v2690 = vsel %vm745, %v2636, 0
      %v2693 = vsel %vm745, %v2637, 0
      %v2696 = vsel %vm745, %v2638, 0
      %v2699 = vsel %vm745, %v2639, 0
      %v2702 = vsel %vm745, %v2640, 0
      %v2705 = vsel %vm745, %v2641, 0
      %v2708 = vsel %vm745, %v2642, 0
      %v2711 = vsel %vm745, %v2643, 0
      %v2714 = vsel %vm745, %v2644, 0
      %v2717 = vsel %vm745, %v2645, 0
      %v2720 = vsel %vm745, %v2646, 0
      %v2723 = vsel %vm745, %v2647, 0
      %v2726 = vsel %vm745, %v2648, 0
      %v2729 = vsel %vm745, %v2649, 0
      %v2732 = vsel %vm745, %v2650, 0
      %v2735 = vsel %vm745, %v2651, 0
      %v2738 = vsel %vm745, %v2652, 0
      %v2741 = vsel %vm745, %v2653, 0
      %v2744 = vsel %vm745, %v2654, 0
      %v2747 = vsel %vm745, %v2655, 0
      %v2750 = vsel %vm745, %v2656, 0
      %v2753 = vsel %vm745, %v2657, 0
      %v2756 = vsel %vm745, %v2658, 0
      %v2759 = vsel %vm745, %v2659, 0
      %v2762 = vsel %vm745, %v2660, 0
      %v2765 = vsel %vm745, %v2661, 0
      %v2768 = vsel %vm745, %v2662, 0
      %v2771 = vsel %vm745, %v2663, 0
      %v2774 = vsel %vm745, %v2664, 0
      %v2777 = vsel %vm745, %v2665, 0
      %v2780 = vsel %vm745, %v2666, 0
      %v2783 = vsel %vm745, %v2667, 0
      %v2786 = vsel %vm745, %v2668, 0
      %v2789 = vsel %vm745, %v2669, 0
      %v2792 = vsel %vm745, %v2670, 0
      %v2795 = vsel %vm745, %v2671, 0
      %v2798 = vsel %vm1001, %v2673, 0
      %2800 = vmatprep.subr.mxu0 0.0
      %2801 = vmatpush1.msra.mxu0 %v2798
      %2802 = vmatprep.subr.mxu0 0.0
      %2803 = vmatpush1.msra.mxu0 0.0
      %2804 = vmatprep.subr.mxu0 0.0
      %2805 = vmatpush1.msra.mxu0 0.0
      %2806 = vmatprep.subr.mxu0 0.0
      %2807 = vmatpush1.msra.mxu0 0.0
      %2808 = vmatprep.subr.mxu0 0.0
      %2809 = vmatpush1.msra.mxu0 0.0
      %2810 = vmatprep.subr.mxu0 0.0
      %2811 = vmatpush1.msra.mxu0 0.0
      %2812 = vmatprep.subr.mxu0 0.0
      %2813 = vmatpush1.msra.mxu0 0.0
      %2814 = vmatprep.subr.mxu0 0.0
      %2815 = vmatpush1.msra.mxu0 0.0
      %2816 = vmatprep.subr.mxu0 0.0
      %2817 = vmatpush1.msra.mxu0 0.0
      %2818 = vmatprep.subr.mxu0 0.0
      %2819 = vmatpush1.msra.mxu0 0.0
      %2820 = vmatprep.subr.mxu0 0.0
      %2821 = vmatpush1.msra.mxu0 0.0
      %2822 = vmatprep.subr.mxu0 0.0
      %2823 = vmatpush1.msra.mxu0 0.0
      %2824 = vmatprep.subr.mxu0 0.0
      %2825 = vmatpush1.msra.mxu0 0.0
      %2826 = vmatprep.subr.mxu0 0.0
      %2827 = vmatpush1.msra.mxu0 0.0
      %2828 = vmatprep.subr.mxu0 0.0
      %2829 = vmatpush1.msra.mxu0 0.0
      %2830 = vmatprep.subr.mxu0 0.0
      %2831 = vmatpush1.msra.mxu0 0.0
      %2832 = vmatprep.subr.mxu0 0.0
      %2833 = vmatpush1.msra.mxu0 0.0
      %2834 = vmatprep.subr.mxu0 0.0
      %2835 = vmatpush1.msra.mxu0 0.0
      %2836 = vmatprep.subr.mxu0 0.0
      %2837 = vmatpush1.msra.mxu0 0.0
      %2838 = vmatprep.subr.mxu0 0.0
      %2839 = vmatpush1.msra.mxu0 0.0
      %2840 = vmatprep.subr.mxu0 0.0
      %2841 = vmatpush1.msra.mxu0 0.0
      %2842 = vmatprep.subr.mxu0 0.0
      %2843 = vmatpush1.msra.mxu0 0.0
      %2844 = vmatprep.subr.mxu0 0.0
      %2845 = vmatpush1.msra.mxu0 0.0
      %2846 = vmatprep.subr.mxu0 0.0
      %2847 = vmatpush1.msra.mxu0 0.0
      %2848 = vmatprep.subr.mxu0 0.0
      %2849 = vmatpush1.msra.mxu0 0.0
      %2850 = vmatprep.subr.mxu0 0.0
      %2851 = vmatpush1.msra.mxu0 0.0
      %2852 = vmatprep.subr.mxu0 0.0
      %2853 = vmatpush1.msra.mxu0 0.0
      %2854 = vmatprep.subr.mxu0 0.0
      %2855 = vmatpush1.msra.mxu0 0.0
      %2856 = vmatprep.subr.mxu0 0.0
      %2857 = vmatpush1.msra.mxu0 0.0
      %2858 = vmatprep.subr.mxu0 0.0
      %2859 = vmatpush1.msra.mxu0 0.0
      %2860 = vmatprep.subr.mxu0 0.0
      %2861 = vmatpush1.msra.mxu0 0.0
      %2862 = vmatprep.subr.mxu0 0.0
      %2863 = vmatpush1.msra.mxu0 0.0
      %2864 = vmatprep.mubr.f32.mxu0 0.0
      %2865 = vmatmul.mubr.f32.gmra.mrb[0].mxu0 %v2675
      %v2866 = vpop.f32.mrb[0].mxu0
      %v2867 = vadd.f32 0.0, %v2866
      %v2868 = vpop.f32.mrb[0].mxu0
      %2869 = vmatprep.mubr.f32.mxu0 0.0
      %2870 = vmatmul.mubr.f32.gmra.mrb[0].mxu0 %v2678
      %v2871 = vpop.f32.mrb[0].mxu0
      %v2872 = vadd.f32 0.0, %v2871
      %v2873 = vpop.f32.mrb[0].mxu0
      %2874 = vmatprep.mubr.f32.mxu0 0.0
      %2875 = vmatmul.mubr.f32.gmra.mrb[0].mxu0 %v2681
      %v2876 = vpop.f32.mrb[0].mxu0
      %v2877 = vadd.f32 0.0, %v2876
      %v2878 = vpop.f32.mrb[0].mxu0
      %2879 = vmatprep.mubr.f32.mxu0 0.0
      %2880 = vmatmul.mubr.f32.gmra.mrb[0].mxu0 %v2684
      %v2881 = vpop.f32.mrb[0].mxu0
      %v2882 = vadd.f32 0.0, %v2881
      %v2883 = vpop.f32.mrb[0].mxu0
      %2884 = vmatprep.mubr.f32.mxu0 0.0
      %2885 = vmatmul.mubr.f32.gmra.mrb[0].mxu0 %v2687
      %v2886 = vpop.f32.mrb[0].mxu0
      %v2887 = vadd.f32 0.0, %v2886
      %v2888 = vpop.f32.mrb[0].mxu0
      %2889 = vmatprep.mubr.f32.mxu0 0.0
      %2890 = vmatmul.mubr.f32.gmra.mrb[0].mxu0 %v2690
      %v2891 = vpop.f32.mrb[0].mxu0
      %v2892 = vadd.f32 0.0, %v2891
      %v2893 = vpop.f32.mrb[0].mxu0
      %2894 = vmatprep.mubr.f32.mxu0 0.0
      %2895 = vmatmul.mubr.f32.gmra.mrb[0].mxu0 %v2693
      %v2896 = vpop.f32.mrb[0].mxu0
      %v2897 = vadd.f32 0.0, %v2896
      %v2898 = vpop.f32.mrb[0].mxu0
      %2899 = vmatprep.mubr.f32.mxu0 0.0
      %2900 = vmatmul.mubr.f32.gmra.mrb[0].mxu0 %v2696
      %v2901 = vpop.f32.mrb[0].mxu0
      %v2902 = vadd.f32 0.0, %v2901
      %v2903 = vpop.f32.mrb[0].mxu0
      %2904 = vmatprep.mubr.f32.mxu0 0.0
      %2905 = vmatmul.mubr.f32.gmra.mrb[0].mxu0 %v2699
      %v2906 = vpop.f32.mrb[0].mxu0
      %v2907 = vadd.f32 0.0, %v2906
      %v2908 = vpop.f32.mrb[0].mxu0
      %2909 = vmatprep.mubr.f32.mxu0 0.0
      %2910 = vmatmul.mubr.f32.gmra.mrb[0].mxu0 %v2702
      %v2911 = vpop.f32.mrb[0].mxu0
      %v2912 = vadd.f32 0.0, %v2911
      %v2913 = vpop.f32.mrb[0].mxu0
      %2914 = vmatprep.mubr.f32.mxu0 0.0
      %2915 = vmatmul.mubr.f32.gmra.mrb[0].mxu0 %v2705
      %v2916 = vpop.f32.mrb[0].mxu0
      %v2917 = vadd.f32 0.0, %v2916
      %v2918 = vpop.f32.mrb[0].mxu0
      %2919 = vmatprep.mubr.f32.mxu0 0.0
      %2920 = vmatmul.mubr.f32.gmra.mrb[0].mxu0 %v2708
      %v2921 = vpop.f32.mrb[0].mxu0
      %v2922 = vadd.f32 0.0, %v2921
      %v2923 = vpop.f32.mrb[0].mxu0
      %2924 = vmatprep.mubr.f32.mxu0 0.0
      %2925 = vmatmul.mubr.f32.gmra.mrb[0].mxu0 %v2711
      %v2926 = vpop.f32.mrb[0].mxu0
      %v2927 = vadd.f32 0.0, %v2926
      %v2928 = vpop.f32.mrb[0].mxu0
      %2929 = vmatprep.mubr.f32.mxu0 0.0
      %2930 = vmatmul.mubr.f32.gmra.mrb[0].mxu0 %v2714
      %v2931 = vpop.f32.mrb[0].mxu0
      %v2932 = vadd.f32 0.0, %v2931
      %v2933 = vpop.f32.mrb[0].mxu0
      %2934 = vmatprep.mubr.f32.mxu0 0.0
      %2935 = vmatmul.mubr.f32.gmra.mrb[0].mxu0 %v2717
      %v2936 = vpop.f32.mrb[0].mxu0
      %v2937 = vadd.f32 0.0, %v2936
      %v2938 = vpop.f32.mrb[0].mxu0
      %2939 = vmatprep.mubr.f32.mxu0 0.0
      %2940 = vmatmul.mubr.f32.gmra.mrb[0].mxu0 %v2720
      %v2941 = vpop.f32.mrb[0].mxu0
      %v2942 = vadd.f32 0.0, %v2941
      %v2943 = vpop.f32.mrb[0].mxu0
      %2944 = vmatprep.mubr.f32.mxu0 0.0
      %2945 = vmatmul.mubr.f32.gmra.mrb[0].mxu0 %v2723
      %v2946 = vpop.f32.mrb[0].mxu0
      %v2947 = vadd.f32 0.0, %v2946
      %v2948 = vpop.f32.mrb[0].mxu0
      %2949 = vmatprep.mubr.f32.mxu0 0.0
      %2950 = vmatmul.mubr.f32.gmra.mrb[0].mxu0 %v2726
      %v2951 = vpop.f32.mrb[0].mxu0
      %v2952 = vadd.f32 0.0, %v2951
      %v2953 = vpop.f32.mrb[0].mxu0
      %2954 = vmatprep.mubr.f32.mxu0 0.0
      %2955 = vmatmul.mubr.f32.gmra.mrb[0].mxu0 %v2729
      %v2956 = vpop.f32.mrb[0].mxu0
      %v2957 = vadd.f32 0.0, %v2956
      %v2958 = vpop.f32.mrb[0].mxu0
      %2959 = vmatprep.mubr.f32.mxu0 0.0
      %2960 = vmatmul.mubr.f32.gmra.mrb[0].mxu0 %v2732
      %v2961 = vpop.f32.mrb[0].mxu0
      %v2962 = vadd.f32 0.0, %v2961
      %v2963 = vpop.f32.mrb[0].mxu0
      %2964 = vmatprep.mubr.f32.mxu0 0.0
      %2965 = vmatmul.mubr.f32.gmra.mrb[0].mxu0 %v2735
      %v2966 = vpop.f32.mrb[0].mxu0
      %v2967 = vadd.f32 0.0, %v2966
      %v2968 = vpop.f32.mrb[0].mxu0
      %2969 = vmatprep.mubr.f32.mxu0 0.0
      %2970 = vmatmul.mubr.f32.gmra.mrb[0].mxu0 %v2738
      %v2971 = vpop.f32.mrb[0].mxu0
      %v2972 = vadd.f32 0.0, %v2971
      %v2973 = vpop.f32.mrb[0].mxu0
      %2974 = vmatprep.mubr.f32.mxu0 0.0
      %2975 = vmatmul.mubr.f32.gmra.mrb[0].mxu0 %v2741
      %v2976 = vpop.f32.mrb[0].mxu0
      %v2977 = vadd.f32 0.0, %v2976
      %v2978 = vpop.f32.mrb[0].mxu0
      %2979 = vmatprep.mubr.f32.mxu0 0.0
      %2980 = vmatmul.mubr.f32.gmra.mrb[0].mxu0 %v2744
      %v2981 = vpop.f32.mrb[0].mxu0
      %v2982 = vadd.f32 0.0, %v2981
      %v2983 = vpop.f32.mrb[0].mxu0
      %2984 = vmatprep.mubr.f32.mxu0 0.0
      %2985 = vmatmul.mubr.f32.gmra.mrb[0].mxu0 %v2747
      %v2986 = vpop.f32.mrb[0].mxu0
      %v2987 = vadd.f32 0.0, %v2986
      %v2988 = vpop.f32.mrb[0].mxu0
      %2989 = vmatprep.mubr.f32.mxu0 0.0
      %2990 = vmatmul.mubr.f32.gmra.mrb[0].mxu0 %v2750
      %v2991 = vpop.f32.mrb[0].mxu0
      %v2992 = vadd.f32 0.0, %v2991
      %v2993 = vpop.f32.mrb[0].mxu0
      %2994 = vmatprep.mubr.f32.mxu0 0.0
      %2995 = vmatmul.mubr.f32.gmra.mrb[0].mxu0 %v2753
      %v2996 = vpop.f32.mrb[0].mxu0
      %v2997 = vadd.f32 0.0, %v2996
      %v2998 = vpop.f32.mrb[0].mxu0
      %2999 = vmatprep.mubr.f32.mxu0 0.0
      %3000 = vmatmul.mubr.f32.gmra.mrb[0].mxu0 %v2756
      %v3001 = vpop.f32.mrb[0].mxu0
      %v3002 = vadd.f32 0.0, %v3001
      %v3003 = vpop.f32.mrb[0].mxu0
      %3004 = vmatprep.mubr.f32.mxu0 0.0
      %3005 = vmatmul.mubr.f32.gmra.mrb[0].mxu0 %v2759
      %v3006 = vpop.f32.mrb[0].mxu0
      %v3007 = vadd.f32 0.0, %v3006
      %v3008 = vpop.f32.mrb[0].mxu0
      %3009 = vmatprep.mubr.f32.mxu0 0.0
      %3010 = vmatmul.mubr.f32.gmra.mrb[0].mxu0 %v2762
      %v3011 = vpop.f32.mrb[0].mxu0
      %v3012 = vadd.f32 0.0, %v3011
      %v3013 = vpop.f32.mrb[0].mxu0
      %3014 = vmatprep.mubr.f32.mxu0 0.0
      %3015 = vmatmul.mubr.f32.gmra.mrb[0].mxu0 %v2765
      %v3016 = vpop.f32.mrb[0].mxu0
      %v3017 = vadd.f32 0.0, %v3016
      %v3018 = vpop.f32.mrb[0].mxu0
      %3019 = vmatprep.mubr.f32.mxu0 0.0
      %3020 = vmatmul.mubr.f32.gmra.mrb[0].mxu0 %v2768
      %v3021 = vpop.f32.mrb[0].mxu0
      %v3022 = vadd.f32 0.0, %v3021
      %v3023 = vpop.f32.mrb[0].mxu0
      %3024 = vmatprep.mubr.f32.mxu0 0.0
      %3025 = vmatmul.mubr.f32.gmra.mrb[0].mxu0 %v2771
      %v3026 = vpop.f32.mrb[0].mxu0
      %v3027 = vadd.f32 0.0, %v3026
      %v3028 = vpop.f32.mrb[0].mxu0
      %3029 = vmatprep.mubr.f32.mxu0 0.0
      %3030 = vmatmul.mubr.f32.gmra.mrb[0].mxu0 %v2774
      %v3031 = vpop.f32.mrb[0].mxu0
      %v3032 = vadd.f32 0.0, %v3031
      %v3033 = vpop.f32.mrb[0].mxu0
      %3034 = vmatprep.mubr.f32.mxu0 0.0
      %3035 = vmatmul.mubr.f32.gmra.mrb[0].mxu0 %v2777
      %v3036 = vpop.f32.mrb[0].mxu0
      %v3037 = vadd.f32 0.0, %v3036
      %v3038 = vpop.f32.mrb[0].mxu0
      %3039 = vmatprep.mubr.f32.mxu0 0.0
      %3040 = vmatmul.mubr.f32.gmra.mrb[0].mxu0 %v2780
      %v3041 = vpop.f32.mrb[0].mxu0
      %v3042 = vadd.f32 0.0, %v3041
      %v3043 = vpop.f32.mrb[0].mxu0
      %3044 = vmatprep.mubr.f32.mxu0 0.0
      %3045 = vmatmul.mubr.f32.gmra.mrb[0].mxu0 %v2783
      %v3046 = vpop.f32.mrb[0].mxu0
      %v3047 = vadd.f32 0.0, %v3046
      %v3048 = vpop.f32.mrb[0].mxu0
      %3049 = vmatprep.mubr.f32.mxu0 0.0
      %3050 = vmatmul.mubr.f32.gmra.mrb[0].mxu0 %v2786
      %v3051 = vpop.f32.mrb[0].mxu0
      %v3052 = vadd.f32 0.0, %v3051
      %v3053 = vpop.f32.mrb[0].mxu0
      %3054 = vmatprep.mubr.f32.mxu0 0.0
      %3055 = vmatmul.mubr.f32.gmra.mrb[0].mxu0 %v2789
      %v3056 = vpop.f32.mrb[0].mxu0
      %v3057 = vadd.f32 0.0, %v3056
      %v3058 = vpop.f32.mrb[0].mxu0
      %3059 = vmatprep.mubr.f32.mxu0 0.0
      %3060 = vmatmul.mubr.f32.gmra.mrb[0].mxu0 %v2792
      %v3061 = vpop.f32.mrb[0].mxu0
      %v3062 = vadd.f32 0.0, %v3061
      %v3063 = vpop.f32.mrb[0].mxu0
      %3064 = vmatprep.mubr.f32.mxu0 0.0
      %3065 = vmatmul.mubr.f32.gmra.mrb[0].mxu0 %v2795
      %v3066 = vpop.f32.mrb[0].mxu0
      %v3067 = vadd.f32 0.0, %v3066
      %v3068 = vpop.f32.mrb[0].mxu0
      %3069 = vdwg.mxu0
      %v3070 = vadd.f32 %v2590, %v2867
      %v3071 = vadd.f32 %v2591, %v2872
      %v3072 = vadd.f32 %v2592, %v2877
      %v3073 = vadd.f32 %v2593, %v2882
      %v3074 = vadd.f32 %v2594, %v2887
      %v3075 = vadd.f32 %v2595, %v2892
      %v3076 = vadd.f32 %v2596, %v2897
      %v3077 = vadd.f32 %v2597, %v2902
      %v3078 = vadd.f32 %v2598, %v2907
      %v3079 = vadd.f32 %v2599, %v2912
      %v3080 = vadd.f32 %v2600, %v2917
      %v3081 = vadd.f32 %v2601, %v2922
      %v3082 = vadd.f32 %v2602, %v2927
      %v3083 = vadd.f32 %v2603, %v2932
      %v3084 = vadd.f32 %v2604, %v2937
      %v3085 = vadd.f32 %v2605, %v2942
      %v3086 = vadd.f32 %v2606, %v2947
      %v3087 = vadd.f32 %v2607, %v2952
      %v3088 = vadd.f32 %v2608, %v2957
      %v3089 = vadd.f32 %v2609, %v2962
      %v3090 = vadd.f32 %v2610, %v2967
      %v3091 = vadd.f32 %v2611, %v2972
      %v3092 = vadd.f32 %v2612, %v2977
      %v3093 = vadd.f32 %v2613, %v2982
      %v3094 = vadd.f32 %v2614, %v2987
      %v3095 = vadd.f32 %v2615, %v2992
      %v3096 = vadd.f32 %v2616, %v2997
      %v3097 = vadd.f32 %v2617, %v3002
      %v3098 = vadd.f32 %v2618, %v3007
      %v3099 = vadd.f32 %v2619, %v3012
      %v3100 = vadd.f32 %v2620, %v3017
      %v3101 = vadd.f32 %v2621, %v3022
      %v3102 = vadd.f32 %v2622, %v3027
      %v3103 = vadd.f32 %v2623, %v3032
      %v3104 = vadd.f32 %v2624, %v3037
      %v3105 = vadd.f32 %v2625, %v3042
      %v3106 = vadd.f32 %v2626, %v3047
      %v3107 = vadd.f32 %v2627, %v3052
      %v3108 = vadd.f32 %v2628, %v3057
      %v3109 = vadd.f32 %v2629, %v3062
      %v3110 = vadd.f32 %v2630, %v3067
      %v3111 = vld [vmem:[#allocation2 + $0x14] sm:$0xff]
      %v3112 = vld [vmem:[#allocation2 + $0x1c] sm:$0xff]
      %v3113 = vld [vmem:[#allocation2 + $0x24] sm:$0xff]
      %v3114 = vld [vmem:[#allocation2 + $0x2c] sm:$0xff]
      %v3115 = vld [vmem:[#allocation2 + $0x34] sm:$0xff]
      %v3116 = vld [vmem:[#allocation2 + $0x3c] sm:$0xff]
      %v3117 = vld [vmem:[#allocation2 + $0x44] sm:$0xff]
      %v3118 = vld [vmem:[#allocation2 + $0x4c] sm:$0xff]
      %v3119 = vld [vmem:[#allocation2 + $0x54] sm:$0xff]
      %v3120 = vld [vmem:[#allocation2 + $0x5c] sm:$0xff]
      %v3121 = vld [vmem:[#allocation2 + $0x64] sm:$0xff]
      %v3122 = vld [vmem:[#allocation2 + $0x6c] sm:$0xff]
      %v3123 = vld [vmem:[#allocation2 + $0x74] sm:$0xff]
      %v3124 = vld [vmem:[#allocation2 + $0x7c] sm:$0xff]
      %v3125 = vld [vmem:[#allocation2 + $0x84] sm:$0xff]
      %v3126 = vld [vmem:[#allocation2 + $0x8c] sm:$0xff]
      %v3127 = vld [vmem:[#allocation2 + $0x94] sm:$0xff]
      %v3128 = vld [vmem:[#allocation2 + $0x9c] sm:$0xff]
      %v3129 = vld [vmem:[#allocation2 + $0xa4] sm:$0xff]
      %v3130 = vld [vmem:[#allocation2 + $0xac] sm:$0xff]
      %v3131 = vld [vmem:[#allocation2 + $0xb4] sm:$0xff]
      %v3132 = vld [vmem:[#allocation2 + $0xbc] sm:$0xff]
      %v3133 = vld [vmem:[#allocation2 + $0xc4] sm:$0xff]
      %v3134 = vld [vmem:[#allocation2 + $0xcc] sm:$0xff]
      %v3135 = vld [vmem:[#allocation2 + $0xd4] sm:$0xff]
      %v3136 = vld [vmem:[#allocation2 + $0xdc] sm:$0xff]
      %v3137 = vld [vmem:[#allocation2 + $0xe4] sm:$0xff]
      %v3138 = vld [vmem:[#allocation2 + $0xec] sm:$0xff]
      %v3139 = vld [vmem:[#allocation2 + $0xf4] sm:$0xff]
      %v3140 = vld [vmem:[#allocation2 + $0xfc] sm:$0xff]
      %v3141 = vld [vmem:[#allocation2 + $0x104] sm:$0xff]
      %v3142 = vld [vmem:[#allocation2 + $0x10c] sm:$0xff]
      %v3143 = vld [vmem:[#allocation2 + $0x114] sm:$0xff]
      %v3144 = vld [vmem:[#allocation2 + $0x11c] sm:$0xff]
      %v3145 = vld [vmem:[#allocation2 + $0x124] sm:$0xff]
      %v3146 = vld [vmem:[#allocation2 + $0x12c] sm:$0xff]
      %v3147 = vld [vmem:[#allocation2 + $0x134] sm:$0xff]
      %v3148 = vld [vmem:[#allocation2 + $0x13c] sm:$0xff]
      %v3149 = vld [vmem:[#allocation2 + $0x144] sm:$0xff]
      %v3150 = vld [vmem:[#allocation2 + $0x14c] sm:$0xff]
      %v3151 = vld [vmem:[#allocation2 + $0x154] sm:$0xf]
      %s3152 = scalar_lea.vmem %s4, 20
      %v3153 = vld [vmem:[%s3152] sm:$0xf]
      %v3155 = vsel %vm745, %v3111, 0
      %v3158 = vsel %vm745, %v3112, 0
      %v3161 = vsel %vm745, %v3113, 0
      %v3164 = vsel %vm745, %v3114, 0
      %v3167 = vsel %vm745, %v3115, 0
      %v3170 = vsel %vm745, %v3116, 0
      %v3173 = vsel %vm745, %v3117, 0
      %v3176 = vsel %vm745, %v3118, 0
      %v3179 = vsel %vm745, %v3119, 0
      %v3182 = vsel %vm745, %v3120, 0
      %v3185 = vsel %vm745, %v3121, 0
      %v3188 = vsel %vm745, %v3122, 0
      %v3191 = vsel %vm745, %v3123, 0
      %v3194 = vsel %vm745, %v3124, 0
      %v3197 = vsel %vm745, %v3125, 0
      %v3200 = vsel %vm745, %v3126, 0
      %v3203 = vsel %vm745, %v3127, 0
      %v3206 = vsel %vm745, %v3128, 0
      %v3209 = vsel %vm745, %v3129, 0
      %v3212 = vsel %vm745, %v3130, 0
      %v3215 = vsel %vm745, %v3131, 0
      %v3218 = vsel %vm745, %v3132, 0
      %v3221 = vsel %vm745, %v3133, 0
      %v3224 = vsel %vm745, %v3134, 0
      %v3227 = vsel %vm745, %v3135, 0
      %v3230 = vsel %vm745, %v3136, 0
      %v3233 = vsel %vm745, %v3137, 0
      %v3236 = vsel %vm745, %v3138, 0
      %v3239 = vsel %vm745, %v3139, 0
      %v3242 = vsel %vm745, %v3140, 0
      %v3245 = vsel %vm745, %v3141, 0
      %v3248 = vsel %vm745, %v3142, 0
      %v3251 = vsel %vm745, %v3143, 0
      %v3254 = vsel %vm745, %v3144, 0
      %v3257 = vsel %vm745, %v3145, 0
      %v3260 = vsel %vm745, %v3146, 0
      %v3263 = vsel %vm745, %v3147, 0
      %v3266 = vsel %vm745, %v3148, 0
      %v3269 = vsel %vm745, %v3149, 0
      %v3272 = vsel %vm745, %v3150, 0
      %v3275 = vsel %vm745, %v3151, 0
      %v3278 = vsel %vm1001, %v3153, 0
      %3280 = vmatprep.subr.mxu0 0.0
      %3281 = vmatpush1.msra.mxu0 %v3278
      %3282 = vmatprep.subr.mxu0 0.0
      %3283 = vmatpush1.msra.mxu0 0.0
      %3284 = vmatprep.subr.mxu0 0.0
      %3285 = vmatpush1.msra.mxu0 0.0
      %3286 = vmatprep.subr.mxu0 0.0
      %3287 = vmatpush1.msra.mxu0 0.0
      %3288 = vmatprep.subr.mxu0 0.0
      %3289 = vmatpush1.msra.mxu0 0.0
      %3290 = vmatprep.subr.mxu0 0.0
      %3291 = vmatpush1.msra.mxu0 0.0
      %3292 = vmatprep.subr.mxu0 0.0
      %3293 = vmatpush1.msra.mxu0 0.0
      %3294 = vmatprep.subr.mxu0 0.0
      %3295 = vmatpush1.msra.mxu0 0.0
      %3296 = vmatprep.subr.mxu0 0.0
      %3297 = vmatpush1.msra.mxu0 0.0
      %3298 = vmatprep.subr.mxu0 0.0
      %3299 = vmatpush1.msra.mxu0 0.0
      %3300 = vmatprep.subr.mxu0 0.0
      %3301 = vmatpush1.msra.mxu0 0.0
      %3302 = vmatprep.subr.mxu0 0.0
      %3303 = vmatpush1.msra.mxu0 0.0
      %3304 = vmatprep.subr.mxu0 0.0
      %3305 = vmatpush1.msra.mxu0 0.0
      %3306 = vmatprep.subr.mxu0 0.0
      %3307 = vmatpush1.msra.mxu0 0.0
      %3308 = vmatprep.subr.mxu0 0.0
      %3309 = vmatpush1.msra.mxu0 0.0
      %3310 = vmatprep.subr.mxu0 0.0
      %3311 = vmatpush1.msra.mxu0 0.0
      %3312 = vmatprep.subr.mxu0 0.0
      %3313 = vmatpush1.msra.mxu0 0.0
      %3314 = vmatprep.subr.mxu0 0.0
      %3315 = vmatpush1.msra.mxu0 0.0
      %3316 = vmatprep.subr.mxu0 0.0
      %3317 = vmatpush1.msra.mxu0 0.0
      %3318 = vmatprep.subr.mxu0 0.0
      %3319 = vmatpush1.msra.mxu0 0.0
      %3320 = vmatprep.subr.mxu0 0.0
      %3321 = vmatpush1.msra.mxu0 0.0
      %3322 = vmatprep.subr.mxu0 0.0
      %3323 = vmatpush1.msra.mxu0 0.0
      %3324 = vmatprep.subr.mxu0 0.0
      %3325 = vmatpush1.msra.mxu0 0.0
      %3326 = vmatprep.subr.mxu0 0.0
      %3327 = vmatpush1.msra.mxu0 0.0
      %3328 = vmatprep.subr.mxu0 0.0
      %3329 = vmatpush1.msra.mxu0 0.0
      %3330 = vmatprep.subr.mxu0 0.0
      %3331 = vmatpush1.msra.mxu0 0.0
      %3332 = vmatprep.subr.mxu0 0.0
      %3333 = vmatpush1.msra.mxu0 0.0
      %3334 = vmatprep.subr.mxu0 0.0
      %3335 = vmatpush1.msra.mxu0 0.0
      %3336 = vmatprep.subr.mxu0 0.0
      %3337 = vmatpush1.msra.mxu0 0.0
      %3338 = vmatprep.subr.mxu0 0.0
      %3339 = vmatpush1.msra.mxu0 0.0
      %3340 = vmatprep.subr.mxu0 0.0
      %3341 = vmatpush1.msra.mxu0 0.0
      %3342 = vmatprep.subr.mxu0 0.0
      %3343 = vmatpush1.msra.mxu0 0.0
      %3344 = vmatprep.mubr.f32.mxu0 0.0
      %3345 = vmatmul.mubr.f32.gmra.mrb[0].mxu0 %v3155
      %v3346 = vpop.f32.mrb[0].mxu0
      %v3347 = vadd.f32 0.0, %v3346
      %v3348 = vpop.f32.mrb[0].mxu0
      %3349 = vmatprep.mubr.f32.mxu0 0.0
      %3350 = vmatmul.mubr.f32.gmra.mrb[0].mxu0 %v3158
      %v3351 = vpop.f32.mrb[0].mxu0
      %v3352 = vadd.f32 0.0, %v3351
      %v3353 = vpop.f32.mrb[0].mxu0
      %3354 = vmatprep.mubr.f32.mxu0 0.0
      %3355 = vmatmul.mubr.f32.gmra.mrb[0].mxu0 %v3161
      %v3356 = vpop.f32.mrb[0].mxu0
      %v3357 = vadd.f32 0.0, %v3356
      %v3358 = vpop.f32.mrb[0].mxu0
      %3359 = vmatprep.mubr.f32.mxu0 0.0
      %3360 = vmatmul.mubr.f32.gmra.mrb[0].mxu0 %v3164
      %v3361 = vpop.f32.mrb[0].mxu0
      %v3362 = vadd.f32 0.0, %v3361
      %v3363 = vpop.f32.mrb[0].mxu0
      %3364 = vmatprep.mubr.f32.mxu0 0.0
      %3365 = vmatmul.mubr.f32.gmra.mrb[0].mxu0 %v3167
      %v3366 = vpop.f32.mrb[0].mxu0
      %v3367 = vadd.f32 0.0, %v3366
      %v3368 = vpop.f32.mrb[0].mxu0
      %3369 = vmatprep.mubr.f32.mxu0 0.0
      %3370 = vmatmul.mubr.f32.gmra.mrb[0].mxu0 %v3170
      %v3371 = vpop.f32.mrb[0].mxu0
      %v3372 = vadd.f32 0.0, %v3371
      %v3373 = vpop.f32.mrb[0].mxu0
      %3374 = vmatprep.mubr.f32.mxu0 0.0
      %3375 = vmatmul.mubr.f32.gmra.mrb[0].mxu0 %v3173
      %v3376 = vpop.f32.mrb[0].mxu0
      %v3377 = vadd.f32 0.0, %v3376
      %v3378 = vpop.f32.mrb[0].mxu0
      %3379 = vmatprep.mubr.f32.mxu0 0.0
      %3380 = vmatmul.mubr.f32.gmra.mrb[0].mxu0 %v3176
      %v3381 = vpop.f32.mrb[0].mxu0
      %v3382 = vadd.f32 0.0, %v3381
      %v3383 = vpop.f32.mrb[0].mxu0
      %3384 = vmatprep.mubr.f32.mxu0 0.0
      %3385 = vmatmul.mubr.f32.gmra.mrb[0].mxu0 %v3179
      %v3386 = vpop.f32.mrb[0].mxu0
      %v3387 = vadd.f32 0.0, %v3386
      %v3388 = vpop.f32.mrb[0].mxu0
      %3389 = vmatprep.mubr.f32.mxu0 0.0
      %3390 = vmatmul.mubr.f32.gmra.mrb[0].mxu0 %v3182
      %v3391 = vpop.f32.mrb[0].mxu0
      %v3392 = vadd.f32 0.0, %v3391
      %v3393 = vpop.f32.mrb[0].mxu0
      %3394 = vmatprep.mubr.f32.mxu0 0.0
      %3395 = vmatmul.mubr.f32.gmra.mrb[0].mxu0 %v3185
      %v3396 = vpop.f32.mrb[0].mxu0
      %v3397 = vadd.f32 0.0, %v3396
      %v3398 = vpop.f32.mrb[0].mxu0
      %3399 = vmatprep.mubr.f32.mxu0 0.0
      %3400 = vmatmul.mubr.f32.gmra.mrb[0].mxu0 %v3188
      %v3401 = vpop.f32.mrb[0].mxu0
      %v3402 = vadd.f32 0.0, %v3401
      %v3403 = vpop.f32.mrb[0].mxu0
      %3404 = vmatprep.mubr.f32.mxu0 0.0
      %3405 = vmatmul.mubr.f32.gmra.mrb[0].mxu0 %v3191
      %v3406 = vpop.f32.mrb[0].mxu0
      %v3407 = vadd.f32 0.0, %v3406
      %v3408 = vpop.f32.mrb[0].mxu0
      %3409 = vmatprep.mubr.f32.mxu0 0.0
      %3410 = vmatmul.mubr.f32.gmra.mrb[0].mxu0 %v3194
      %v3411 = vpop.f32.mrb[0].mxu0
      %v3412 = vadd.f32 0.0, %v3411
      %v3413 = vpop.f32.mrb[0].mxu0
      %3414 = vmatprep.mubr.f32.mxu0 0.0
      %3415 = vmatmul.mubr.f32.gmra.mrb[0].mxu0 %v3197
      %v3416 = vpop.f32.mrb[0].mxu0
      %v3417 = vadd.f32 0.0, %v3416
      %v3418 = vpop.f32.mrb[0].mxu0
      %3419 = vmatprep.mubr.f32.mxu0 0.0
      %3420 = vmatmul.mubr.f32.gmra.mrb[0].mxu0 %v3200
      %v3421 = vpop.f32.mrb[0].mxu0
      %v3422 = vadd.f32 0.0, %v3421
      %v3423 = vpop.f32.mrb[0].mxu0
      %3424 = vmatprep.mubr.f32.mxu0 0.0
      %3425 = vmatmul.mubr.f32.gmra.mrb[0].mxu0 %v3203
      %v3426 = vpop.f32.mrb[0].mxu0
      %v3427 = vadd.f32 0.0, %v3426
      %v3428 = vpop.f32.mrb[0].mxu0
      %3429 = vmatprep.mubr.f32.mxu0 0.0
      %3430 = vmatmul.mubr.f32.gmra.mrb[0].mxu0 %v3206
      %v3431 = vpop.f32.mrb[0].mxu0
      %v3432 = vadd.f32 0.0, %v3431
      %v3433 = vpop.f32.mrb[0].mxu0
      %3434 = vmatprep.mubr.f32.mxu0 0.0
      %3435 = vmatmul.mubr.f32.gmra.mrb[0].mxu0 %v3209
      %v3436 = vpop.f32.mrb[0].mxu0
      %v3437 = vadd.f32 0.0, %v3436
      %v3438 = vpop.f32.mrb[0].mxu0
      %3439 = vmatprep.mubr.f32.mxu0 0.0
      %3440 = vmatmul.mubr.f32.gmra.mrb[0].mxu0 %v3212
      %v3441 = vpop.f32.mrb[0].mxu0
      %v3442 = vadd.f32 0.0, %v3441
      %v3443 = vpop.f32.mrb[0].mxu0
      %3444 = vmatprep.mubr.f32.mxu0 0.0
      %3445 = vmatmul.mubr.f32.gmra.mrb[0].mxu0 %v3215
      %v3446 = vpop.f32.mrb[0].mxu0
      %v3447 = vadd.f32 0.0, %v3446
      %v3448 = vpop.f32.mrb[0].mxu0
      %3449 = vmatprep.mubr.f32.mxu0 0.0
      %3450 = vmatmul.mubr.f32.gmra.mrb[0].mxu0 %v3218
      %v3451 = vpop.f32.mrb[0].mxu0
      %v3452 = vadd.f32 0.0, %v3451
      %v3453 = vpop.f32.mrb[0].mxu0
      %3454 = vmatprep.mubr.f32.mxu0 0.0
      %3455 = vmatmul.mubr.f32.gmra.mrb[0].mxu0 %v3221
      %v3456 = vpop.f32.mrb[0].mxu0
      %v3457 = vadd.f32 0.0, %v3456
      %v3458 = vpop.f32.mrb[0].mxu0
      %3459 = vmatprep.mubr.f32.mxu0 0.0
      %3460 = vmatmul.mubr.f32.gmra.mrb[0].mxu0 %v3224
      %v3461 = vpop.f32.mrb[0].mxu0
      %v3462 = vadd.f32 0.0, %v3461
      %v3463 = vpop.f32.mrb[0].mxu0
      %3464 = vmatprep.mubr.f32.mxu0 0.0
      %3465 = vmatmul.mubr.f32.gmra.mrb[0].mxu0 %v3227
      %v3466 = vpop.f32.mrb[0].mxu0
      %v3467 = vadd.f32 0.0, %v3466
      %v3468 = vpop.f32.mrb[0].mxu0
      %3469 = vmatprep.mubr.f32.mxu0 0.0
      %3470 = vmatmul.mubr.f32.gmra.mrb[0].mxu0 %v3230
      %v3471 = vpop.f32.mrb[0].mxu0
      %v3472 = vadd.f32 0.0, %v3471
      %v3473 = vpop.f32.mrb[0].mxu0
      %3474 = vmatprep.mubr.f32.mxu0 0.0
      %3475 = vmatmul.mubr.f32.gmra.mrb[0].mxu0 %v3233
      %v3476 = vpop.f32.mrb[0].mxu0
      %v3477 = vadd.f32 0.0, %v3476
      %v3478 = vpop.f32.mrb[0].mxu0
      %3479 = vmatprep.mubr.f32.mxu0 0.0
      %3480 = vmatmul.mubr.f32.gmra.mrb[0].mxu0 %v3236
      %v3481 = vpop.f32.mrb[0].mxu0
      %v3482 = vadd.f32 0.0, %v3481
      %v3483 = vpop.f32.mrb[0].mxu0
      %3484 = vmatprep.mubr.f32.mxu0 0.0
      %3485 = vmatmul.mubr.f32.gmra.mrb[0].mxu0 %v3239
      %v3486 = vpop.f32.mrb[0].mxu0
      %v3487 = vadd.f32 0.0, %v3486
      %v3488 = vpop.f32.mrb[0].mxu0
      %3489 = vmatprep.mubr.f32.mxu0 0.0
      %3490 = vmatmul.mubr.f32.gmra.mrb[0].mxu0 %v3242
      %v3491 = vpop.f32.mrb[0].mxu0
      %v3492 = vadd.f32 0.0, %v3491
      %v3493 = vpop.f32.mrb[0].mxu0
      %3494 = vmatprep.mubr.f32.mxu0 0.0
      %3495 = vmatmul.mubr.f32.gmra.mrb[0].mxu0 %v3245
      %v3496 = vpop.f32.mrb[0].mxu0
      %v3497 = vadd.f32 0.0, %v3496
      %v3498 = vpop.f32.mrb[0].mxu0
      %3499 = vmatprep.mubr.f32.mxu0 0.0
      %3500 = vmatmul.mubr.f32.gmra.mrb[0].mxu0 %v3248
      %v3501 = vpop.f32.mrb[0].mxu0
      %v3502 = vadd.f32 0.0, %v3501
      %v3503 = vpop.f32.mrb[0].mxu0
      %3504 = vmatprep.mubr.f32.mxu0 0.0
      %3505 = vmatmul.mubr.f32.gmra.mrb[0].mxu0 %v3251
      %v3506 = vpop.f32.mrb[0].mxu0
      %v3507 = vadd.f32 0.0, %v3506
      %v3508 = vpop.f32.mrb[0].mxu0
      %3509 = vmatprep.mubr.f32.mxu0 0.0
      %3510 = vmatmul.mubr.f32.gmra.mrb[0].mxu0 %v3254
      %v3511 = vpop.f32.mrb[0].mxu0
      %v3512 = vadd.f32 0.0, %v3511
      %v3513 = vpop.f32.mrb[0].mxu0
      %3514 = vmatprep.mubr.f32.mxu0 0.0
      %3515 = vmatmul.mubr.f32.gmra.mrb[0].mxu0 %v3257
      %v3516 = vpop.f32.mrb[0].mxu0
      %v3517 = vadd.f32 0.0, %v3516
      %v3518 = vpop.f32.mrb[0].mxu0
      %3519 = vmatprep.mubr.f32.mxu0 0.0
      %3520 = vmatmul.mubr.f32.gmra.mrb[0].mxu0 %v3260
      %v3521 = vpop.f32.mrb[0].mxu0
      %v3522 = vadd.f32 0.0, %v3521
      %v3523 = vpop.f32.mrb[0].mxu0
      %3524 = vmatprep.mubr.f32.mxu0 0.0
      %3525 = vmatmul.mubr.f32.gmra.mrb[0].mxu0 %v3263
      %v3526 = vpop.f32.mrb[0].mxu0
      %v3527 = vadd.f32 0.0, %v3526
      %v3528 = vpop.f32.mrb[0].mxu0
      %3529 = vmatprep.mubr.f32.mxu0 0.0
      %3530 = vmatmul.mubr.f32.gmra.mrb[0].mxu0 %v3266
      %v3531 = vpop.f32.mrb[0].mxu0
      %v3532 = vadd.f32 0.0, %v3531
      %v3533 = vpop.f32.mrb[0].mxu0
      %3534 = vmatprep.mubr.f32.mxu0 0.0
      %3535 = vmatmul.mubr.f32.gmra.mrb[0].mxu0 %v3269
      %v3536 = vpop.f32.mrb[0].mxu0
      %v3537 = vadd.f32 0.0, %v3536
      %v3538 = vpop.f32.mrb[0].mxu0
      %3539 = vmatprep.mubr.f32.mxu0 0.0
      %3540 = vmatmul.mubr.f32.gmra.mrb[0].mxu0 %v3272
      %v3541 = vpop.f32.mrb[0].mxu0
      %v3542 = vadd.f32 0.0, %v3541
      %v3543 = vpop.f32.mrb[0].mxu0
      %3544 = vmatprep.mubr.f32.mxu0 0.0
      %3545 = vmatmul.mubr.f32.gmra.mrb[0].mxu0 %v3275
      %v3546 = vpop.f32.mrb[0].mxu0
      %v3547 = vadd.f32 0.0, %v3546
      %v3548 = vpop.f32.mrb[0].mxu0
      %3549 = vdwg.mxu0
      %v3550 = vadd.f32 %v3070, %v3347
      %v3551 = vadd.f32 %v3071, %v3352
      %v3552 = vadd.f32 %v3072, %v3357
      %v3553 = vadd.f32 %v3073, %v3362
      %v3554 = vadd.f32 %v3074, %v3367
      %v3555 = vadd.f32 %v3075, %v3372
      %v3556 = vadd.f32 %v3076, %v3377
      %v3557 = vadd.f32 %v3077, %v3382
      %v3558 = vadd.f32 %v3078, %v3387
      %v3559 = vadd.f32 %v3079, %v3392
      %v3560 = vadd.f32 %v3080, %v3397
      %v3561 = vadd.f32 %v3081, %v3402
      %v3562 = vadd.f32 %v3082, %v3407
      %v3563 = vadd.f32 %v3083, %v3412
      %v3564 = vadd.f32 %v3084, %v3417
      %v3565 = vadd.f32 %v3085, %v3422
      %v3566 = vadd.f32 %v3086, %v3427
      %v3567 = vadd.f32 %v3087, %v3432
      %v3568 = vadd.f32 %v3088, %v3437
      %v3569 = vadd.f32 %v3089, %v3442
      %v3570 = vadd.f32 %v3090, %v3447
      %v3571 = vadd.f32 %v3091, %v3452
      %v3572 = vadd.f32 %v3092, %v3457
      %v3573 = vadd.f32 %v3093, %v3462
      %v3574 = vadd.f32 %v3094, %v3467
      %v3575 = vadd.f32 %v3095, %v3472
      %v3576 = vadd.f32 %v3096, %v3477
      %v3577 = vadd.f32 %v3097, %v3482
      %v3578 = vadd.f32 %v3098, %v3487
      %v3579 = vadd.f32 %v3099, %v3492
      %v3580 = vadd.f32 %v3100, %v3497
      %v3581 = vadd.f32 %v3101, %v3502
      %v3582 = vadd.f32 %v3102, %v3507
      %v3583 = vadd.f32 %v3103, %v3512
      %v3584 = vadd.f32 %v3104, %v3517
      %v3585 = vadd.f32 %v3105, %v3522
      %v3586 = vadd.f32 %v3106, %v3527
      %v3587 = vadd.f32 %v3107, %v3532
      %v3588 = vadd.f32 %v3108, %v3537
      %v3589 = vadd.f32 %v3109, %v3542
      %v3590 = vadd.f32 %v3110, %v3547
      %v3591 = vld [vmem:[#allocation2 + $0x24] sm:$0xff]
      %v3592 = vld [vmem:[#allocation2 + $0x2c] sm:$0xff]
      %v3593 = vld [vmem:[#allocation2 + $0x34] sm:$0xff]
      %v3594 = vld [vmem:[#allocation2 + $0x3c] sm:$0xff]
      %v3595 = vld [vmem:[#allocation2 + $0x44] sm:$0xff]
      %v3596 = vld [vmem:[#allocation2 + $0x4c] sm:$0xff]
      %v3597 = vld [vmem:[#allocation2 + $0x54] sm:$0xff]
      %v3598 = vld [vmem:[#allocation2 + $0x5c] sm:$0xff]
      %v3599 = vld [vmem:[#allocation2 + $0x64] sm:$0xff]
      %v3600 = vld [vmem:[#allocation2 + $0x6c] sm:$0xff]
      %v3601 = vld [vmem:[#allocation2 + $0x74] sm:$0xff]
      %v3602 = vld [vmem:[#allocation2 + $0x7c] sm:$0xff]
      %v3603 = vld [vmem:[#allocation2 + $0x84] sm:$0xff]
      %v3604 = vld [vmem:[#allocation2 + $0x8c] sm:$0xff]
      %v3605 = vld [vmem:[#allocation2 + $0x94] sm:$0xff]
      %v3606 = vld [vmem:[#allocation2 + $0x9c] sm:$0xff]
      %v3607 = vld [vmem:[#allocation2 + $0xa4] sm:$0xff]
      %v3608 = vld [vmem:[#allocation2 + $0xac] sm:$0xff]
      %v3609 = vld [vmem:[#allocation2 + $0xb4] sm:$0xff]
      %v3610 = vld [vmem:[#allocation2 + $0xbc] sm:$0xff]
      %v3611 = vld [vmem:[#allocation2 + $0xc4] sm:$0xff]
      %v3612 = vld [vmem:[#allocation2 + $0xcc] sm:$0xff]
      %v3613 = vld [vmem:[#allocation2 + $0xd4] sm:$0xff]
      %v3614 = vld [vmem:[#allocation2 + $0xdc] sm:$0xff]
      %v3615 = vld [vmem:[#allocation2 + $0xe4] sm:$0xff]
      %v3616 = vld [vmem:[#allocation2 + $0xec] sm:$0xff]
      %v3617 = vld [vmem:[#allocation2 + $0xf4] sm:$0xff]
      %v3618 = vld [vmem:[#allocation2 + $0xfc] sm:$0xff]
      %v3619 = vld [vmem:[#allocation2 + $0x104] sm:$0xff]
      %v3620 = vld [vmem:[#allocation2 + $0x10c] sm:$0xff]
      %v3621 = vld [vmem:[#allocation2 + $0x114] sm:$0xff]
      %v3622 = vld [vmem:[#allocation2 + $0x11c] sm:$0xff]
      %v3623 = vld [vmem:[#allocation2 + $0x124] sm:$0xff]
      %v3624 = vld [vmem:[#allocation2 + $0x12c] sm:$0xff]
      %v3625 = vld [vmem:[#allocation2 + $0x134] sm:$0xff]
      %v3626 = vld [vmem:[#allocation2 + $0x13c] sm:$0xff]
      %v3627 = vld [vmem:[#allocation2 + $0x144] sm:$0xff]
      %v3628 = vld [vmem:[#allocation2 + $0x14c] sm:$0xff]
      %v3629 = vld [vmem:[#allocation2 + $0x154] sm:$0xff]
      %v3630 = vld [vmem:[#allocation2 + $0x15c] sm:$0xff]
      %v3631 = vld [vmem:[#allocation2 + $0x164] sm:$0xf]
      %s3632 = scalar_lea.vmem %s4, 24
      %v3633 = vld [vmem:[%s3632] sm:$0xf]
      %v3635 = vsel %vm745, %v3591, 0
      %v3638 = vsel %vm745, %v3592, 0
      %v3641 = vsel %vm745, %v3593, 0
      %v3644 = vsel %vm745, %v3594, 0
      %v3647 = vsel %vm745, %v3595, 0
      %v3650 = vsel %vm745, %v3596, 0
      %v3653 = vsel %vm745, %v3597, 0
      %v3656 = vsel %vm745, %v3598, 0
      %v3659 = vsel %vm745, %v3599, 0
      %v3662 = vsel %vm745, %v3600, 0
      %v3665 = vsel %vm745, %v3601, 0
      %v3668 = vsel %vm745, %v3602, 0
      %v3671 = vsel %vm745, %v3603, 0
      %v3674 = vsel %vm745, %v3604, 0
      %v3677 = vsel %vm745, %v3605, 0
      %v3680 = vsel %vm745, %v3606, 0
      %v3683 = vsel %vm745, %v3607, 0
      %v3686 = vsel %vm745, %v3608, 0
      %v3689 = vsel %vm745, %v3609, 0
      %v3692 = vsel %vm745, %v3610, 0
      %v3695 = vsel %vm745, %v3611, 0
      %v3698 = vsel %vm745, %v3612, 0
      %v3701 = vsel %vm745, %v3613, 0
      %v3704 = vsel %vm745, %v3614, 0
      %v3707 = vsel %vm745, %v3615, 0
      %v3710 = vsel %vm745, %v3616, 0
      %v3713 = vsel %vm745, %v3617, 0
      %v3716 = vsel %vm745, %v3618, 0
      %v3719 = vsel %vm745, %v3619, 0
      %v3722 = vsel %vm745, %v3620, 0
      %v3725 = vsel %vm745, %v3621, 0
      %v3728 = vsel %vm745, %v3622, 0
      %v3731 = vsel %vm745, %v3623, 0
      %v3734 = vsel %vm745, %v3624, 0
      %v3737 = vsel %vm745, %v3625, 0
      %v3740 = vsel %vm745, %v3626, 0
      %v3743 = vsel %vm745, %v3627, 0
      %v3746 = vsel %vm745, %v3628, 0
      %v3749 = vsel %vm745, %v3629, 0
      %v3752 = vsel %vm745, %v3630, 0
      %v3755 = vsel %vm745, %v3631, 0
      %v3758 = vsel %vm1001, %v3633, 0
      %3760 = vmatprep.subr.mxu0 0.0
      %3761 = vmatpush1.msra.mxu0 %v3758
      %3762 = vmatprep.subr.mxu0 0.0
      %3763 = vmatpush1.msra.mxu0 0.0
      %3764 = vmatprep.subr.mxu0 0.0
      %3765 = vmatpush1.msra.mxu0 0.0
      %3766 = vmatprep.subr.mxu0 0.0
      %3767 = vmatpush1.msra.mxu0 0.0
      %3768 = vmatprep.subr.mxu0 0.0
      %3769 = vmatpush1.msra.mxu0 0.0
      %3770 = vmatprep.subr.mxu0 0.0
      %3771 = vmatpush1.msra.mxu0 0.0
      %3772 = vmatprep.subr.mxu0 0.0
      %3773 = vmatpush1.msra.mxu0 0.0
      %3774 = vmatprep.subr.mxu0 0.0
      %3775 = vmatpush1.msra.mxu0 0.0
      %3776 = vmatprep.subr.mxu0 0.0
      %3777 = vmatpush1.msra.mxu0 0.0
      %3778 = vmatprep.subr.mxu0 0.0
      %3779 = vmatpush1.msra.mxu0 0.0
      %3780 = vmatprep.subr.mxu0 0.0
      %3781 = vmatpush1.msra.mxu0 0.0
      %3782 = vmatprep.subr.mxu0 0.0
      %3783 = vmatpush1.msra.mxu0 0.0
      %3784 = vmatprep.subr.mxu0 0.0
      %3785 = vmatpush1.msra.mxu0 0.0
      %3786 = vmatprep.subr.mxu0 0.0
      %3787 = vmatpush1.msra.mxu0 0.0
      %3788 = vmatprep.subr.mxu0 0.0
      %3789 = vmatpush1.msra.mxu0 0.0
      %3790 = vmatprep.subr.mxu0 0.0
      %3791 = vmatpush1.msra.mxu0 0.0
      %3792 = vmatprep.subr.mxu0 0.0
      %3793 = vmatpush1.msra.mxu0 0.0
      %3794 = vmatprep.subr.mxu0 0.0
      %3795 = vmatpush1.msra.mxu0 0.0
      %3796 = vmatprep.subr.mxu0 0.0
      %3797 = vmatpush1.msra.mxu0 0.0
      %3798 = vmatprep.subr.mxu0 0.0
      %3799 = vmatpush1.msra.mxu0 0.0
      %3800 = vmatprep.subr.mxu0 0.0
      %3801 = vmatpush1.msra.mxu0 0.0
      %3802 = vmatprep.subr.mxu0 0.0
      %3803 = vmatpush1.msra.mxu0 0.0
      %3804 = vmatprep.subr.mxu0 0.0
      %3805 = vmatpush1.msra.mxu0 0.0
      %3806 = vmatprep.subr.mxu0 0.0
      %3807 = vmatpush1.msra.mxu0 0.0
      %3808 = vmatprep.subr.mxu0 0.0
      %3809 = vmatpush1.msra.mxu0 0.0
      %3810 = vmatprep.subr.mxu0 0.0
      %3811 = vmatpush1.msra.mxu0 0.0
      %3812 = vmatprep.subr.mxu0 0.0
      %3813 = vmatpush1.msra.mxu0 0.0
      %3814 = vmatprep.subr.mxu0 0.0
      %3815 = vmatpush1.msra.mxu0 0.0
      %3816 = vmatprep.subr.mxu0 0.0
      %3817 = vmatpush1.msra.mxu0 0.0
      %3818 = vmatprep.subr.mxu0 0.0
      %3819 = vmatpush1.msra.mxu0 0.0
      %3820 = vmatprep.subr.mxu0 0.0
      %3821 = vmatpush1.msra.mxu0 0.0
      %3822 = vmatprep.subr.mxu0 0.0
      %3823 = vmatpush1.msra.mxu0 0.0
      %3824 = vmatprep.mubr.f32.mxu0 0.0
      %3825 = vmatmul.mubr.f32.gmra.mrb[0].mxu0 %v3635
      %v3826 = vpop.f32.mrb[0].mxu0
      %v3827 = vadd.f32 0.0, %v3826
      %v3828 = vpop.f32.mrb[0].mxu0
      %3829 = vmatprep.mubr.f32.mxu0 0.0
      %3830 = vmatmul.mubr.f32.gmra.mrb[0].mxu0 %v3638
      %v3831 = vpop.f32.mrb[0].mxu0
      %v3832 = vadd.f32 0.0, %v3831
      %v3833 = vpop.f32.mrb[0].mxu0
      %3834 = vmatprep.mubr.f32.mxu0 0.0
      %3835 = vmatmul.mubr.f32.gmra.mrb[0].mxu0 %v3641
      %v3836 = vpop.f32.mrb[0].mxu0
      %v3837 = vadd.f32 0.0, %v3836
      %v3838 = vpop.f32.mrb[0].mxu0
      %3839 = vmatprep.mubr.f32.mxu0 0.0
      %3840 = vmatmul.mubr.f32.gmra.mrb[0].mxu0 %v3644
      %v3841 = vpop.f32.mrb[0].mxu0
      %v3842 = vadd.f32 0.0, %v3841
      %v3843 = vpop.f32.mrb[0].mxu0
      %3844 = vmatprep.mubr.f32.mxu0 0.0
      %3845 = vmatmul.mubr.f32.gmra.mrb[0].mxu0 %v3647
      %v3846 = vpop.f32.mrb[0].mxu0
      %v3847 = vadd.f32 0.0, %v3846
      %v3848 = vpop.f32.mrb[0].mxu0
      %3849 = vmatprep.mubr.f32.mxu0 0.0
      %3850 = vmatmul.mubr.f32.gmra.mrb[0].mxu0 %v3650
      %v3851 = vpop.f32.mrb[0].mxu0
      %v3852 = vadd.f32 0.0, %v3851
      %v3853 = vpop.f32.mrb[0].mxu0
      %3854 = vmatprep.mubr.f32.mxu0 0.0
      %3855 = vmatmul.mubr.f32.gmra.mrb[0].mxu0 %v3653
      %v3856 = vpop.f32.mrb[0].mxu0
      %v3857 = vadd.f32 0.0, %v3856
      %v3858 = vpop.f32.mrb[0].mxu0
      %3859 = vmatprep.mubr.f32.mxu0 0.0
      %3860 = vmatmul.mubr.f32.gmra.mrb[0].mxu0 %v3656
      %v3861 = vpop.f32.mrb[0].mxu0
      %v3862 = vadd.f32 0.0, %v3861
      %v3863 = vpop.f32.mrb[0].mxu0
      %3864 = vmatprep.mubr.f32.mxu0 0.0
      %3865 = vmatmul.mubr.f32.gmra.mrb[0].mxu0 %v3659
      %v3866 = vpop.f32.mrb[0].mxu0
      %v3867 = vadd.f32 0.0, %v3866
      %v3868 = vpop.f32.mrb[0].mxu0
      %3869 = vmatprep.mubr.f32.mxu0 0.0
      %3870 = vmatmul.mubr.f32.gmra.mrb[0].mxu0 %v3662
      %v3871 = vpop.f32.mrb[0].mxu0
      %v3872 = vadd.f32 0.0, %v3871
      %v3873 = vpop.f32.mrb[0].mxu0
      %3874 = vmatprep.mubr.f32.mxu0 0.0
      %3875 = vmatmul.mubr.f32.gmra.mrb[0].mxu0 %v3665
      %v3876 = vpop.f32.mrb[0].mxu0
      %v3877 = vadd.f32 0.0, %v3876
      %v3878 = vpop.f32.mrb[0].mxu0
      %3879 = vmatprep.mubr.f32.mxu0 0.0
      %3880 = vmatmul.mubr.f32.gmra.mrb[0].mxu0 %v3668
      %v3881 = vpop.f32.mrb[0].mxu0
      %v3882 = vadd.f32 0.0, %v3881
      %v3883 = vpop.f32.mrb[0].mxu0
      %3884 = vmatprep.mubr.f32.mxu0 0.0
      %3885 = vmatmul.mubr.f32.gmra.mrb[0].mxu0 %v3671
      %v3886 = vpop.f32.mrb[0].mxu0
      %v3887 = vadd.f32 0.0, %v3886
      %v3888 = vpop.f32.mrb[0].mxu0
      %3889 = vmatprep.mubr.f32.mxu0 0.0
      %3890 = vmatmul.mubr.f32.gmra.mrb[0].mxu0 %v3674
      %v3891 = vpop.f32.mrb[0].mxu0
      %v3892 = vadd.f32 0.0, %v3891
      %v3893 = vpop.f32.mrb[0].mxu0
      %3894 = vmatprep.mubr.f32.mxu0 0.0
      %3895 = vmatmul.mubr.f32.gmra.mrb[0].mxu0 %v3677
      %v3896 = vpop.f32.mrb[0].mxu0
      %v3897 = vadd.f32 0.0, %v3896
      %v3898 = vpop.f32.mrb[0].mxu0
      %3899 = vmatprep.mubr.f32.mxu0 0.0
      %3900 = vmatmul.mubr.f32.gmra.mrb[0].mxu0 %v3680
      %v3901 = vpop.f32.mrb[0].mxu0
      %v3902 = vadd.f32 0.0, %v3901
      %v3903 = vpop.f32.mrb[0].mxu0
      %3904 = vmatprep.mubr.f32.mxu0 0.0
      %3905 = vmatmul.mubr.f32.gmra.mrb[0].mxu0 %v3683
      %v3906 = vpop.f32.mrb[0].mxu0
      %v3907 = vadd.f32 0.0, %v3906
      %v3908 = vpop.f32.mrb[0].mxu0
      %3909 = vmatprep.mubr.f32.mxu0 0.0
      %3910 = vmatmul.mubr.f32.gmra.mrb[0].mxu0 %v3686
      %v3911 = vpop.f32.mrb[0].mxu0
      %v3912 = vadd.f32 0.0, %v3911
      %v3913 = vpop.f32.mrb[0].mxu0
      %3914 = vmatprep.mubr.f32.mxu0 0.0
      %3915 = vmatmul.mubr.f32.gmra.mrb[0].mxu0 %v3689
      %v3916 = vpop.f32.mrb[0].mxu0
      %v3917 = vadd.f32 0.0, %v3916
      %v3918 = vpop.f32.mrb[0].mxu0
      %3919 = vmatprep.mubr.f32.mxu0 0.0
      %3920 = vmatmul.mubr.f32.gmra.mrb[0].mxu0 %v3692
      %v3921 = vpop.f32.mrb[0].mxu0
      %v3922 = vadd.f32 0.0, %v3921
      %v3923 = vpop.f32.mrb[0].mxu0
      %3924 = vmatprep.mubr.f32.mxu0 0.0
      %3925 = vmatmul.mubr.f32.gmra.mrb[0].mxu0 %v3695
      %v3926 = vpop.f32.mrb[0].mxu0
      %v3927 = vadd.f32 0.0, %v3926
      %v3928 = vpop.f32.mrb[0].mxu0
      %3929 = vmatprep.mubr.f32.mxu0 0.0
      %3930 = vmatmul.mubr.f32.gmra.mrb[0].mxu0 %v3698
      %v3931 = vpop.f32.mrb[0].mxu0
      %v3932 = vadd.f32 0.0, %v3931
      %v3933 = vpop.f32.mrb[0].mxu0
      %3934 = vmatprep.mubr.f32.mxu0 0.0
      %3935 = vmatmul.mubr.f32.gmra.mrb[0].mxu0 %v3701
      %v3936 = vpop.f32.mrb[0].mxu0
      %v3937 = vadd.f32 0.0, %v3936
      %v3938 = vpop.f32.mrb[0].mxu0
      %3939 = vmatprep.mubr.f32.mxu0 0.0
      %3940 = vmatmul.mubr.f32.gmra.mrb[0].mxu0 %v3704
      %v3941 = vpop.f32.mrb[0].mxu0
      %v3942 = vadd.f32 0.0, %v3941
      %v3943 = vpop.f32.mrb[0].mxu0
      %3944 = vmatprep.mubr.f32.mxu0 0.0
      %3945 = vmatmul.mubr.f32.gmra.mrb[0].mxu0 %v3707
      %v3946 = vpop.f32.mrb[0].mxu0
      %v3947 = vadd.f32 0.0, %v3946
      %v3948 = vpop.f32.mrb[0].mxu0
      %3949 = vmatprep.mubr.f32.mxu0 0.0
      %3950 = vmatmul.mubr.f32.gmra.mrb[0].mxu0 %v3710
      %v3951 = vpop.f32.mrb[0].mxu0
      %v3952 = vadd.f32 0.0, %v3951
      %v3953 = vpop.f32.mrb[0].mxu0
      %3954 = vmatprep.mubr.f32.mxu0 0.0
      %3955 = vmatmul.mubr.f32.gmra.mrb[0].mxu0 %v3713
      %v3956 = vpop.f32.mrb[0].mxu0
      %v3957 = vadd.f32 0.0, %v3956
      %v3958 = vpop.f32.mrb[0].mxu0
      %3959 = vmatprep.mubr.f32.mxu0 0.0
      %3960 = vmatmul.mubr.f32.gmra.mrb[0].mxu0 %v3716
      %v3961 = vpop.f32.mrb[0].mxu0
      %v3962 = vadd.f32 0.0, %v3961
      %v3963 = vpop.f32.mrb[0].mxu0
      %3964 = vmatprep.mubr.f32.mxu0 0.0
      %3965 = vmatmul.mubr.f32.gmra.mrb[0].mxu0 %v3719
      %v3966 = vpop.f32.mrb[0].mxu0
      %v3967 = vadd.f32 0.0, %v3966
      %v3968 = vpop.f32.mrb[0].mxu0
      %3969 = vmatprep.mubr.f32.mxu0 0.0
      %3970 = vmatmul.mubr.f32.gmra.mrb[0].mxu0 %v3722
      %v3971 = vpop.f32.mrb[0].mxu0
      %v3972 = vadd.f32 0.0, %v3971
      %v3973 = vpop.f32.mrb[0].mxu0
      %3974 = vmatprep.mubr.f32.mxu0 0.0
      %3975 = vmatmul.mubr.f32.gmra.mrb[0].mxu0 %v3725
      %v3976 = vpop.f32.mrb[0].mxu0
      %v3977 = vadd.f32 0.0, %v3976
      %v3978 = vpop.f32.mrb[0].mxu0
      %3979 = vmatprep.mubr.f32.mxu0 0.0
      %3980 = vmatmul.mubr.f32.gmra.mrb[0].mxu0 %v3728
      %v3981 = vpop.f32.mrb[0].mxu0
      %v3982 = vadd.f32 0.0, %v3981
      %v3983 = vpop.f32.mrb[0].mxu0
      %3984 = vmatprep.mubr.f32.mxu0 0.0
      %3985 = vmatmul.mubr.f32.gmra.mrb[0].mxu0 %v3731
      %v3986 = vpop.f32.mrb[0].mxu0
      %v3987 = vadd.f32 0.0, %v3986
      %v3988 = vpop.f32.mrb[0].mxu0
      %3989 = vmatprep.mubr.f32.mxu0 0.0
      %3990 = vmatmul.mubr.f32.gmra.mrb[0].mxu0 %v3734
      %v3991 = vpop.f32.mrb[0].mxu0
      %v3992 = vadd.f32 0.0, %v3991
      %v3993 = vpop.f32.mrb[0].mxu0
      %3994 = vmatprep.mubr.f32.mxu0 0.0
      %3995 = vmatmul.mubr.f32.gmra.mrb[0].mxu0 %v3737
      %v3996 = vpop.f32.mrb[0].mxu0
      %v3997 = vadd.f32 0.0, %v3996
      %v3998 = vpop.f32.mrb[0].mxu0
      %3999 = vmatprep.mubr.f32.mxu0 0.0
      %4000 = vmatmul.mubr.f32.gmra.mrb[0].mxu0 %v3740
      %v4001 = vpop.f32.mrb[0].mxu0
      %v4002 = vadd.f32 0.0, %v4001
      %v4003 = vpop.f32.mrb[0].mxu0
      %4004 = vmatprep.mubr.f32.mxu0 0.0
      %4005 = vmatmul.mubr.f32.gmra.mrb[0].mxu0 %v3743
      %v4006 = vpop.f32.mrb[0].mxu0
      %v4007 = vadd.f32 0.0, %v4006
      %v4008 = vpop.f32.mrb[0].mxu0
      %4009 = vmatprep.mubr.f32.mxu0 0.0
      %4010 = vmatmul.mubr.f32.gmra.mrb[0].mxu0 %v3746
      %v4011 = vpop.f32.mrb[0].mxu0
      %v4012 = vadd.f32 0.0, %v4011
      %v4013 = vpop.f32.mrb[0].mxu0
      %4014 = vmatprep.mubr.f32.mxu0 0.0
      %4015 = vmatmul.mubr.f32.gmra.mrb[0].mxu0 %v3749
      %v4016 = vpop.f32.mrb[0].mxu0
      %v4017 = vadd.f32 0.0, %v4016
      %v4018 = vpop.f32.mrb[0].mxu0
      %4019 = vmatprep.mubr.f32.mxu0 0.0
      %4020 = vmatmul.mubr.f32.gmra.mrb[0].mxu0 %v3752
      %v4021 = vpop.f32.mrb[0].mxu0
      %v4022 = vadd.f32 0.0, %v4021
      %v4023 = vpop.f32.mrb[0].mxu0
      %4024 = vmatprep.mubr.f32.mxu0 0.0
      %4025 = vmatmul.mubr.f32.gmra.mrb[0].mxu0 %v3755
      %v4026 = vpop.f32.mrb[0].mxu0
      %v4027 = vadd.f32 0.0, %v4026
      %v4028 = vpop.f32.mrb[0].mxu0
      %4029 = vdwg.mxu0
      %v4030 = vadd.f32 %v3550, %v3827
      %v4031 = vadd.f32 %v3551, %v3832
      %v4032 = vadd.f32 %v3552, %v3837
      %v4033 = vadd.f32 %v3553, %v3842
      %v4034 = vadd.f32 %v3554, %v3847
      %v4035 = vadd.f32 %v3555, %v3852
      %v4036 = vadd.f32 %v3556, %v3857
      %v4037 = vadd.f32 %v3557, %v3862
      %v4038 = vadd.f32 %v3558, %v3867
      %v4039 = vadd.f32 %v3559, %v3872
      %v4040 = vadd.f32 %v3560, %v3877
      %v4041 = vadd.f32 %v3561, %v3882
      %v4042 = vadd.f32 %v3562, %v3887
      %v4043 = vadd.f32 %v3563, %v3892
      %v4044 = vadd.f32 %v3564, %v3897
      %v4045 = vadd.f32 %v3565, %v3902
      %v4046 = vadd.f32 %v3566, %v3907
      %v4047 = vadd.f32 %v3567, %v3912
      %v4048 = vadd.f32 %v3568, %v3917
      %v4049 = vadd.f32 %v3569, %v3922
      %v4050 = vadd.f32 %v3570, %v3927
      %v4051 = vadd.f32 %v3571, %v3932
      %v4052 = vadd.f32 %v3572, %v3937
      %v4053 = vadd.f32 %v3573, %v3942
      %v4054 = vadd.f32 %v3574, %v3947
      %v4055 = vadd.f32 %v3575, %v3952
      %v4056 = vadd.f32 %v3576, %v3957
      %v4057 = vadd.f32 %v3577, %v3962
      %v4058 = vadd.f32 %v3578, %v3967
      %v4059 = vadd.f32 %v3579, %v3972
      %v4060 = vadd.f32 %v3580, %v3977
      %v4061 = vadd.f32 %v3581, %v3982
      %v4062 = vadd.f32 %v3582, %v3987
      %v4063 = vadd.f32 %v3583, %v3992
      %v4064 = vadd.f32 %v3584, %v3997
      %v4065 = vadd.f32 %v3585, %v4002
      %v4066 = vadd.f32 %v3586, %v4007
      %v4067 = vadd.f32 %v3587, %v4012
      %v4068 = vadd.f32 %v3588, %v4017
      %v4069 = vadd.f32 %v3589, %v4022
      %v4070 = vadd.f32 %v3590, %v4027
      %v4071 = vld [vmem:[#allocation2 + $0x25] sm:$0xff]
      %v4072 = vld [vmem:[#allocation2 + $0x2d] sm:$0xff]
      %v4073 = vld [vmem:[#allocation2 + $0x35] sm:$0xff]
      %v4074 = vld [vmem:[#allocation2 + $0x3d] sm:$0xff]
      %v4075 = vld [vmem:[#allocation2 + $0x45] sm:$0xff]
      %v4076 = vld [vmem:[#allocation2 + $0x4d] sm:$0xff]
      %v4077 = vld [vmem:[#allocation2 + $0x55] sm:$0xff]
      %v4078 = vld [vmem:[#allocation2 + $0x5d] sm:$0xff]
      %v4079 = vld [vmem:[#allocation2 + $0x65] sm:$0xff]
      %v4080 = vld [vmem:[#allocation2 + $0x6d] sm:$0xff]
      %v4081 = vld [vmem:[#allocation2 + $0x75] sm:$0xff]
      %v4082 = vld [vmem:[#allocation2 + $0x7d] sm:$0xff]
      %v4083 = vld [vmem:[#allocation2 + $0x85] sm:$0xff]
      %v4084 = vld [vmem:[#allocation2 + $0x8d] sm:$0xff]
      %v4085 = vld [vmem:[#allocation2 + $0x95] sm:$0xff]
      %v4086 = vld [vmem:[#allocation2 + $0x9d] sm:$0xff]
      %v4087 = vld [vmem:[#allocation2 + $0xa5] sm:$0xff]
      %v4088 = vld [vmem:[#allocation2 + $0xad] sm:$0xff]
      %v4089 = vld [vmem:[#allocation2 + $0xb5] sm:$0xff]
      %v4090 = vld [vmem:[#allocation2 + $0xbd] sm:$0xff]
      %v4091 = vld [vmem:[#allocation2 + $0xc5] sm:$0xff]
      %v4092 = vld [vmem:[#allocation2 + $0xcd] sm:$0xff]
      %v4093 = vld [vmem:[#allocation2 + $0xd5] sm:$0xff]
      %v4094 = vld [vmem:[#allocation2 + $0xdd] sm:$0xff]
      %v4095 = vld [vmem:[#allocation2 + $0xe5] sm:$0xff]
      %v4096 = vld [vmem:[#allocation2 + $0xed] sm:$0xff]
      %v4097 = vld [vmem:[#allocation2 + $0xf5] sm:$0xff]
      %v4098 = vld [vmem:[#allocation2 + $0xfd] sm:$0xff]
      %v4099 = vld [vmem:[#allocation2 + $0x105] sm:$0xff]
      %v4100 = vld [vmem:[#allocation2 + $0x10d] sm:$0xff]
      %v4101 = vld [vmem:[#allocation2 + $0x115] sm:$0xff]
      %v4102 = vld [vmem:[#allocation2 + $0x11d] sm:$0xff]
      %v4103 = vld [vmem:[#allocation2 + $0x125] sm:$0xff]
      %v4104 = vld [vmem:[#allocation2 + $0x12d] sm:$0xff]
      %v4105 = vld [vmem:[#allocation2 + $0x135] sm:$0xff]
      %v4106 = vld [vmem:[#allocation2 + $0x13d] sm:$0xff]
      %v4107 = vld [vmem:[#allocation2 + $0x145] sm:$0xff]
      %v4108 = vld [vmem:[#allocation2 + $0x14d] sm:$0xff]
      %v4109 = vld [vmem:[#allocation2 + $0x155] sm:$0xff]
      %v4110 = vld [vmem:[#allocation2 + $0x15d] sm:$0xff]
      %v4111 = vld [vmem:[#allocation2 + $0x165] sm:$0xf]
      %s4112 = scalar_lea.vmem %s4, 28
      %v4113 = vld [vmem:[%s4112] sm:$0xf]
      %v4115 = vsel %vm745, %v4071, 0
      %v4118 = vsel %vm745, %v4072, 0
      %v4121 = vsel %vm745, %v4073, 0
      %v4124 = vsel %vm745, %v4074, 0
      %v4127 = vsel %vm745, %v4075, 0
      %v4130 = vsel %vm745, %v4076, 0
      %v4133 = vsel %vm745, %v4077, 0
      %v4136 = vsel %vm745, %v4078, 0
      %v4139 = vsel %vm745, %v4079, 0
      %v4142 = vsel %vm745, %v4080, 0
      %v4145 = vsel %vm745, %v4081, 0
      %v4148 = vsel %vm745, %v4082, 0
      %v4151 = vsel %vm745, %v4083, 0
      %v4154 = vsel %vm745, %v4084, 0
      %v4157 = vsel %vm745, %v4085, 0
      %v4160 = vsel %vm745, %v4086, 0
      %v4163 = vsel %vm745, %v4087, 0
      %v4166 = vsel %vm745, %v4088, 0
      %v4169 = vsel %vm745, %v4089, 0
      %v4172 = vsel %vm745, %v4090, 0
      %v4175 = vsel %vm745, %v4091, 0
      %v4178 = vsel %vm745, %v4092, 0
      %v4181 = vsel %vm745, %v4093, 0
      %v4184 = vsel %vm745, %v4094, 0
      %v4187 = vsel %vm745, %v4095, 0
      %v4190 = vsel %vm745, %v4096, 0
      %v4193 = vsel %vm745, %v4097, 0
      %v4196 = vsel %vm745, %v4098, 0
      %v4199 = vsel %vm745, %v4099, 0
      %v4202 = vsel %vm745, %v4100, 0
      %v4205 = vsel %vm745, %v4101, 0
      %v4208 = vsel %vm745, %v4102, 0
      %v4211 = vsel %vm745, %v4103, 0
      %v4214 = vsel %vm745, %v4104, 0
      %v4217 = vsel %vm745, %v4105, 0
      %v4220 = vsel %vm745, %v4106, 0
      %v4223 = vsel %vm745, %v4107, 0
      %v4226 = vsel %vm745, %v4108, 0
      %v4229 = vsel %vm745, %v4109, 0
      %v4232 = vsel %vm745, %v4110, 0
      %v4235 = vsel %vm745, %v4111, 0
      %v4238 = vsel %vm1001, %v4113, 0
      %4240 = vmatprep.subr.mxu0 0.0
      %4241 = vmatpush1.msra.mxu0 %v4238
      %4242 = vmatprep.subr.mxu0 0.0
      %4243 = vmatpush1.msra.mxu0 0.0
      %4244 = vmatprep.subr.mxu0 0.0
      %4245 = vmatpush1.msra.mxu0 0.0
      %4246 = vmatprep.subr.mxu0 0.0
      %4247 = vmatpush1.msra.mxu0 0.0
      %4248 = vmatprep.subr.mxu0 0.0
      %4249 = vmatpush1.msra.mxu0 0.0
      %4250 = vmatprep.subr.mxu0 0.0
      %4251 = vmatpush1.msra.mxu0 0.0
      %4252 = vmatprep.subr.mxu0 0.0
      %4253 = vmatpush1.msra.mxu0 0.0
      %4254 = vmatprep.subr.mxu0 0.0
      %4255 = vmatpush1.msra.mxu0 0.0
      %4256 = vmatprep.subr.mxu0 0.0
      %4257 = vmatpush1.msra.mxu0 0.0
      %4258 = vmatprep.subr.mxu0 0.0
      %4259 = vmatpush1.msra.mxu0 0.0
      %4260 = vmatprep.subr.mxu0 0.0
      %4261 = vmatpush1.msra.mxu0 0.0
      %4262 = vmatprep.subr.mxu0 0.0
      %4263 = vmatpush1.msra.mxu0 0.0
      %4264 = vmatprep.subr.mxu0 0.0
      %4265 = vmatpush1.msra.mxu0 0.0
      %4266 = vmatprep.subr.mxu0 0.0
      %4267 = vmatpush1.msra.mxu0 0.0
      %4268 = vmatprep.subr.mxu0 0.0
      %4269 = vmatpush1.msra.mxu0 0.0
      %4270 = vmatprep.subr.mxu0 0.0
      %4271 = vmatpush1.msra.mxu0 0.0
      %4272 = vmatprep.subr.mxu0 0.0
      %4273 = vmatpush1.msra.mxu0 0.0
      %4274 = vmatprep.subr.mxu0 0.0
      %4275 = vmatpush1.msra.mxu0 0.0
      %4276 = vmatprep.subr.mxu0 0.0
      %4277 = vmatpush1.msra.mxu0 0.0
      %4278 = vmatprep.subr.mxu0 0.0
      %4279 = vmatpush1.msra.mxu0 0.0
      %4280 = vmatprep.subr.mxu0 0.0
      %4281 = vmatpush1.msra.mxu0 0.0
      %4282 = vmatprep.subr.mxu0 0.0
      %4283 = vmatpush1.msra.mxu0 0.0
      %4284 = vmatprep.subr.mxu0 0.0
      %4285 = vmatpush1.msra.mxu0 0.0
      %4286 = vmatprep.subr.mxu0 0.0
      %4287 = vmatpush1.msra.mxu0 0.0
      %4288 = vmatprep.subr.mxu0 0.0
      %4289 = vmatpush1.msra.mxu0 0.0
      %4290 = vmatprep.subr.mxu0 0.0
      %4291 = vmatpush1.msra.mxu0 0.0
      %4292 = vmatprep.subr.mxu0 0.0
      %4293 = vmatpush1.msra.mxu0 0.0
      %4294 = vmatprep.subr.mxu0 0.0
      %4295 = vmatpush1.msra.mxu0 0.0
      %4296 = vmatprep.subr.mxu0 0.0
      %4297 = vmatpush1.msra.mxu0 0.0
      %4298 = vmatprep.subr.mxu0 0.0
      %4299 = vmatpush1.msra.mxu0 0.0
      %4300 = vmatprep.subr.mxu0 0.0
      %4301 = vmatpush1.msra.mxu0 0.0
      %4302 = vmatprep.subr.mxu0 0.0
      %4303 = vmatpush1.msra.mxu0 0.0
      %4304 = vmatprep.mubr.f32.mxu0 0.0
      %4305 = vmatmul.mubr.f32.gmra.mrb[0].mxu0 %v4115
      %v4306 = vpop.f32.mrb[0].mxu0
      %v4307 = vadd.f32 0.0, %v4306
      %v4308 = vpop.f32.mrb[0].mxu0
      %4309 = vmatprep.mubr.f32.mxu0 0.0
      %4310 = vmatmul.mubr.f32.gmra.mrb[0].mxu0 %v4118
      %v4311 = vpop.f32.mrb[0].mxu0
      %v4312 = vadd.f32 0.0, %v4311
      %v4313 = vpop.f32.mrb[0].mxu0
      %4314 = vmatprep.mubr.f32.mxu0 0.0
      %4315 = vmatmul.mubr.f32.gmra.mrb[0].mxu0 %v4121
      %v4316 = vpop.f32.mrb[0].mxu0
      %v4317 = vadd.f32 0.0, %v4316
      %v4318 = vpop.f32.mrb[0].mxu0
      %4319 = vmatprep.mubr.f32.mxu0 0.0
      %4320 = vmatmul.mubr.f32.gmra.mrb[0].mxu0 %v4124
      %v4321 = vpop.f32.mrb[0].mxu0
      %v4322 = vadd.f32 0.0, %v4321
      %v4323 = vpop.f32.mrb[0].mxu0
      %4324 = vmatprep.mubr.f32.mxu0 0.0
      %4325 = vmatmul.mubr.f32.gmra.mrb[0].mxu0 %v4127
      %v4326 = vpop.f32.mrb[0].mxu0
      %v4327 = vadd.f32 0.0, %v4326
      %v4328 = vpop.f32.mrb[0].mxu0
      %4329 = vmatprep.mubr.f32.mxu0 0.0
      %4330 = vmatmul.mubr.f32.gmra.mrb[0].mxu0 %v4130
      %v4331 = vpop.f32.mrb[0].mxu0
      %v4332 = vadd.f32 0.0, %v4331
      %v4333 = vpop.f32.mrb[0].mxu0
      %4334 = vmatprep.mubr.f32.mxu0 0.0
      %4335 = vmatmul.mubr.f32.gmra.mrb[0].mxu0 %v4133
      %v4336 = vpop.f32.mrb[0].mxu0
      %v4337 = vadd.f32 0.0, %v4336
      %v4338 = vpop.f32.mrb[0].mxu0
      %4339 = vmatprep.mubr.f32.mxu0 0.0
      %4340 = vmatmul.mubr.f32.gmra.mrb[0].mxu0 %v4136
      %v4341 = vpop.f32.mrb[0].mxu0
      %v4342 = vadd.f32 0.0, %v4341
      %v4343 = vpop.f32.mrb[0].mxu0
      %4344 = vmatprep.mubr.f32.mxu0 0.0
      %4345 = vmatmul.mubr.f32.gmra.mrb[0].mxu0 %v4139
      %v4346 = vpop.f32.mrb[0].mxu0
      %v4347 = vadd.f32 0.0, %v4346
      %v4348 = vpop.f32.mrb[0].mxu0
      %4349 = vmatprep.mubr.f32.mxu0 0.0
      %4350 = vmatmul.mubr.f32.gmra.mrb[0].mxu0 %v4142
      %v4351 = vpop.f32.mrb[0].mxu0
      %v4352 = vadd.f32 0.0, %v4351
      %v4353 = vpop.f32.mrb[0].mxu0
      %4354 = vmatprep.mubr.f32.mxu0 0.0
      %4355 = vmatmul.mubr.f32.gmra.mrb[0].mxu0 %v4145
      %v4356 = vpop.f32.mrb[0].mxu0
      %v4357 = vadd.f32 0.0, %v4356
      %v4358 = vpop.f32.mrb[0].mxu0
      %4359 = vmatprep.mubr.f32.mxu0 0.0
      %4360 = vmatmul.mubr.f32.gmra.mrb[0].mxu0 %v4148
      %v4361 = vpop.f32.mrb[0].mxu0
      %v4362 = vadd.f32 0.0, %v4361
      %v4363 = vpop.f32.mrb[0].mxu0
      %4364 = vmatprep.mubr.f32.mxu0 0.0
      %4365 = vmatmul.mubr.f32.gmra.mrb[0].mxu0 %v4151
      %v4366 = vpop.f32.mrb[0].mxu0
      %v4367 = vadd.f32 0.0, %v4366
      %v4368 = vpop.f32.mrb[0].mxu0
      %4369 = vmatprep.mubr.f32.mxu0 0.0
      %4370 = vmatmul.mubr.f32.gmra.mrb[0].mxu0 %v4154
      %v4371 = vpop.f32.mrb[0].mxu0
      %v4372 = vadd.f32 0.0, %v4371
      %v4373 = vpop.f32.mrb[0].mxu0
      %4374 = vmatprep.mubr.f32.mxu0 0.0
      %4375 = vmatmul.mubr.f32.gmra.mrb[0].mxu0 %v4157
      %v4376 = vpop.f32.mrb[0].mxu0
      %v4377 = vadd.f32 0.0, %v4376
      %v4378 = vpop.f32.mrb[0].mxu0
      %4379 = vmatprep.mubr.f32.mxu0 0.0
      %4380 = vmatmul.mubr.f32.gmra.mrb[0].mxu0 %v4160
      %v4381 = vpop.f32.mrb[0].mxu0
      %v4382 = vadd.f32 0.0, %v4381
      %v4383 = vpop.f32.mrb[0].mxu0
      %4384 = vmatprep.mubr.f32.mxu0 0.0
      %4385 = vmatmul.mubr.f32.gmra.mrb[0].mxu0 %v4163
      %v4386 = vpop.f32.mrb[0].mxu0
      %v4387 = vadd.f32 0.0, %v4386
      %v4388 = vpop.f32.mrb[0].mxu0
      %4389 = vmatprep.mubr.f32.mxu0 0.0
      %4390 = vmatmul.mubr.f32.gmra.mrb[0].mxu0 %v4166
      %v4391 = vpop.f32.mrb[0].mxu0
      %v4392 = vadd.f32 0.0, %v4391
      %v4393 = vpop.f32.mrb[0].mxu0
      %4394 = vmatprep.mubr.f32.mxu0 0.0
      %4395 = vmatmul.mubr.f32.gmra.mrb[0].mxu0 %v4169
      %v4396 = vpop.f32.mrb[0].mxu0
      %v4397 = vadd.f32 0.0, %v4396
      %v4398 = vpop.f32.mrb[0].mxu0
      %4399 = vmatprep.mubr.f32.mxu0 0.0
      %4400 = vmatmul.mubr.f32.gmra.mrb[0].mxu0 %v4172
      %v4401 = vpop.f32.mrb[0].mxu0
      %v4402 = vadd.f32 0.0, %v4401
      %v4403 = vpop.f32.mrb[0].mxu0
      %4404 = vmatprep.mubr.f32.mxu0 0.0
      %4405 = vmatmul.mubr.f32.gmra.mrb[0].mxu0 %v4175
      %v4406 = vpop.f32.mrb[0].mxu0
      %v4407 = vadd.f32 0.0, %v4406
      %v4408 = vpop.f32.mrb[0].mxu0
      %4409 = vmatprep.mubr.f32.mxu0 0.0
      %4410 = vmatmul.mubr.f32.gmra.mrb[0].mxu0 %v4178
      %v4411 = vpop.f32.mrb[0].mxu0
      %v4412 = vadd.f32 0.0, %v4411
      %v4413 = vpop.f32.mrb[0].mxu0
      %4414 = vmatprep.mubr.f32.mxu0 0.0
      %4415 = vmatmul.mubr.f32.gmra.mrb[0].mxu0 %v4181
      %v4416 = vpop.f32.mrb[0].mxu0
      %v4417 = vadd.f32 0.0, %v4416
      %v4418 = vpop.f32.mrb[0].mxu0
      %4419 = vmatprep.mubr.f32.mxu0 0.0
      %4420 = vmatmul.mubr.f32.gmra.mrb[0].mxu0 %v4184
      %v4421 = vpop.f32.mrb[0].mxu0
      %v4422 = vadd.f32 0.0, %v4421
      %v4423 = vpop.f32.mrb[0].mxu0
      %4424 = vmatprep.mubr.f32.mxu0 0.0
      %4425 = vmatmul.mubr.f32.gmra.mrb[0].mxu0 %v4187
      %v4426 = vpop.f32.mrb[0].mxu0
      %v4427 = vadd.f32 0.0, %v4426
      %v4428 = vpop.f32.mrb[0].mxu0
      %4429 = vmatprep.mubr.f32.mxu0 0.0
      %4430 = vmatmul.mubr.f32.gmra.mrb[0].mxu0 %v4190
      %v4431 = vpop.f32.mrb[0].mxu0
      %v4432 = vadd.f32 0.0, %v4431
      %v4433 = vpop.f32.mrb[0].mxu0
      %4434 = vmatprep.mubr.f32.mxu0 0.0
      %4435 = vmatmul.mubr.f32.gmra.mrb[0].mxu0 %v4193
      %v4436 = vpop.f32.mrb[0].mxu0
      %v4437 = vadd.f32 0.0, %v4436
      %v4438 = vpop.f32.mrb[0].mxu0
      %4439 = vmatprep.mubr.f32.mxu0 0.0
      %4440 = vmatmul.mubr.f32.gmra.mrb[0].mxu0 %v4196
      %v4441 = vpop.f32.mrb[0].mxu0
      %v4442 = vadd.f32 0.0, %v4441
      %v4443 = vpop.f32.mrb[0].mxu0
      %4444 = vmatprep.mubr.f32.mxu0 0.0
      %4445 = vmatmul.mubr.f32.gmra.mrb[0].mxu0 %v4199
      %v4446 = vpop.f32.mrb[0].mxu0
      %v4447 = vadd.f32 0.0, %v4446
      %v4448 = vpop.f32.mrb[0].mxu0
      %4449 = vmatprep.mubr.f32.mxu0 0.0
      %4450 = vmatmul.mubr.f32.gmra.mrb[0].mxu0 %v4202
      %v4451 = vpop.f32.mrb[0].mxu0
      %v4452 = vadd.f32 0.0, %v4451
      %v4453 = vpop.f32.mrb[0].mxu0
      %4454 = vmatprep.mubr.f32.mxu0 0.0
      %4455 = vmatmul.mubr.f32.gmra.mrb[0].mxu0 %v4205
      %v4456 = vpop.f32.mrb[0].mxu0
      %v4457 = vadd.f32 0.0, %v4456
      %v4458 = vpop.f32.mrb[0].mxu0
      %4459 = vmatprep.mubr.f32.mxu0 0.0
      %4460 = vmatmul.mubr.f32.gmra.mrb[0].mxu0 %v4208
      %v4461 = vpop.f32.mrb[0].mxu0
      %v4462 = vadd.f32 0.0, %v4461
      %v4463 = vpop.f32.mrb[0].mxu0
      %4464 = vmatprep.mubr.f32.mxu0 0.0
      %4465 = vmatmul.mubr.f32.gmra.mrb[0].mxu0 %v4211
      %v4466 = vpop.f32.mrb[0].mxu0
      %v4467 = vadd.f32 0.0, %v4466
      %v4468 = vpop.f32.mrb[0].mxu0
      %4469 = vmatprep.mubr.f32.mxu0 0.0
      %4470 = vmatmul.mubr.f32.gmra.mrb[0].mxu0 %v4214
      %v4471 = vpop.f32.mrb[0].mxu0
      %v4472 = vadd.f32 0.0, %v4471
      %v4473 = vpop.f32.mrb[0].mxu0
      %4474 = vmatprep.mubr.f32.mxu0 0.0
      %4475 = vmatmul.mubr.f32.gmra.mrb[0].mxu0 %v4217
      %v4476 = vpop.f32.mrb[0].mxu0
      %v4477 = vadd.f32 0.0, %v4476
      %v4478 = vpop.f32.mrb[0].mxu0
      %4479 = vmatprep.mubr.f32.mxu0 0.0
      %4480 = vmatmul.mubr.f32.gmra.mrb[0].mxu0 %v4220
      %v4481 = vpop.f32.mrb[0].mxu0
      %v4482 = vadd.f32 0.0, %v4481
      %v4483 = vpop.f32.mrb[0].mxu0
      %4484 = vmatprep.mubr.f32.mxu0 0.0
      %4485 = vmatmul.mubr.f32.gmra.mrb[0].mxu0 %v4223
      %v4486 = vpop.f32.mrb[0].mxu0
      %v4487 = vadd.f32 0.0, %v4486
      %v4488 = vpop.f32.mrb[0].mxu0
      %4489 = vmatprep.mubr.f32.mxu0 0.0
      %4490 = vmatmul.mubr.f32.gmra.mrb[0].mxu0 %v4226
      %v4491 = vpop.f32.mrb[0].mxu0
      %v4492 = vadd.f32 0.0, %v4491
      %v4493 = vpop.f32.mrb[0].mxu0
      %4494 = vmatprep.mubr.f32.mxu0 0.0
      %4495 = vmatmul.mubr.f32.gmra.mrb[0].mxu0 %v4229
      %v4496 = vpop.f32.mrb[0].mxu0
      %v4497 = vadd.f32 0.0, %v4496
      %v4498 = vpop.f32.mrb[0].mxu0
      %4499 = vmatprep.mubr.f32.mxu0 0.0
      %4500 = vmatmul.mubr.f32.gmra.mrb[0].mxu0 %v4232
      %v4501 = vpop.f32.mrb[0].mxu0
      %v4502 = vadd.f32 0.0, %v4501
      %v4503 = vpop.f32.mrb[0].mxu0
      %4504 = vmatprep.mubr.f32.mxu0 0.0
      %4505 = vmatmul.mubr.f32.gmra.mrb[0].mxu0 %v4235
      %v4506 = vpop.f32.mrb[0].mxu0
      %v4507 = vadd.f32 0.0, %v4506
      %v4508 = vpop.f32.mrb[0].mxu0
      %4509 = vdwg.mxu0
      %v4510 = vadd.f32 %v4030, %v4307
      %v4511 = vadd.f32 %v4031, %v4312
      %v4512 = vadd.f32 %v4032, %v4317
      %v4513 = vadd.f32 %v4033, %v4322
      %v4514 = vadd.f32 %v4034, %v4327
      %v4515 = vadd.f32 %v4035, %v4332
      %v4516 = vadd.f32 %v4036, %v4337
      %v4517 = vadd.f32 %v4037, %v4342
      %v4518 = vadd.f32 %v4038, %v4347
      %v4519 = vadd.f32 %v4039, %v4352
      %v4520 = vadd.f32 %v4040, %v4357
      %v4521 = vadd.f32 %v4041, %v4362
      %v4522 = vadd.f32 %v4042, %v4367
      %v4523 = vadd.f32 %v4043, %v4372
      %v4524 = vadd.f32 %v4044, %v4377
      %v4525 = vadd.f32 %v4045, %v4382
      %v4526 = vadd.f32 %v4046, %v4387
      %v4527 = vadd.f32 %v4047, %v4392
      %v4528 = vadd.f32 %v4048, %v4397
      %v4529 = vadd.f32 %v4049, %v4402
      %v4530 = vadd.f32 %v4050, %v4407
      %v4531 = vadd.f32 %v4051, %v4412
      %v4532 = vadd.f32 %v4052, %v4417
      %v4533 = vadd.f32 %v4053, %v4422
      %v4534 = vadd.f32 %v4054, %v4427
      %v4535 = vadd.f32 %v4055, %v4432
      %v4536 = vadd.f32 %v4056, %v4437
      %v4537 = vadd.f32 %v4057, %v4442
      %v4538 = vadd.f32 %v4058, %v4447
      %v4539 = vadd.f32 %v4059, %v4452
      %v4540 = vadd.f32 %v4060, %v4457
      %v4541 = vadd.f32 %v4061, %v4462
      %v4542 = vadd.f32 %v4062, %v4467
      %v4543 = vadd.f32 %v4063, %v4472
      %v4544 = vadd.f32 %v4064, %v4477
      %v4545 = vadd.f32 %v4065, %v4482
      %v4546 = vadd.f32 %v4066, %v4487
      %v4547 = vadd.f32 %v4067, %v4492
      %v4548 = vadd.f32 %v4068, %v4497
      %v4549 = vadd.f32 %v4069, %v4502
      %v4550 = vadd.f32 %v4070, %v4507
      %v4551 = vld [vmem:[#allocation2 + $0x26] sm:$0xff]
      %v4552 = vld [vmem:[#allocation2 + $0x2e] sm:$0xff]
      %v4553 = vld [vmem:[#allocation2 + $0x36] sm:$0xff]
      %v4554 = vld [vmem:[#allocation2 + $0x3e] sm:$0xff]
      %v4555 = vld [vmem:[#allocation2 + $0x46] sm:$0xff]
      %v4556 = vld [vmem:[#allocation2 + $0x4e] sm:$0xff]
      %v4557 = vld [vmem:[#allocation2 + $0x56] sm:$0xff]
      %v4558 = vld [vmem:[#allocation2 + $0x5e] sm:$0xff]
      %v4559 = vld [vmem:[#allocation2 + $0x66] sm:$0xff]
      %v4560 = vld [vmem:[#allocation2 + $0x6e] sm:$0xff]
      %v4561 = vld [vmem:[#allocation2 + $0x76] sm:$0xff]
      %v4562 = vld [vmem:[#allocation2 + $0x7e] sm:$0xff]
      %v4563 = vld [vmem:[#allocation2 + $0x86] sm:$0xff]
      %v4564 = vld [vmem:[#allocation2 + $0x8e] sm:$0xff]
      %v4565 = vld [vmem:[#allocation2 + $0x96] sm:$0xff]
      %v4566 = vld [vmem:[#allocation2 + $0x9e] sm:$0xff]
      %v4567 = vld [vmem:[#allocation2 + $0xa6] sm:$0xff]
      %v4568 = vld [vmem:[#allocation2 + $0xae] sm:$0xff]
      %v4569 = vld [vmem:[#allocation2 + $0xb6] sm:$0xff]
      %v4570 = vld [vmem:[#allocation2 + $0xbe] sm:$0xff]
      %v4571 = vld [vmem:[#allocation2 + $0xc6] sm:$0xff]
      %v4572 = vld [vmem:[#allocation2 + $0xce] sm:$0xff]
      %v4573 = vld [vmem:[#allocation2 + $0xd6] sm:$0xff]
      %v4574 = vld [vmem:[#allocation2 + $0xde] sm:$0xff]
      %v4575 = vld [vmem:[#allocation2 + $0xe6] sm:$0xff]
      %v4576 = vld [vmem:[#allocation2 + $0xee] sm:$0xff]
      %v4577 = vld [vmem:[#allocation2 + $0xf6] sm:$0xff]
      %v4578 = vld [vmem:[#allocation2 + $0xfe] sm:$0xff]
      %v4579 = vld [vmem:[#allocation2 + $0x106] sm:$0xff]
      %v4580 = vld [vmem:[#allocation2 + $0x10e] sm:$0xff]
      %v4581 = vld [vmem:[#allocation2 + $0x116] sm:$0xff]
      %v4582 = vld [vmem:[#allocation2 + $0x11e] sm:$0xff]
      %v4583 = vld [vmem:[#allocation2 + $0x126] sm:$0xff]
      %v4584 = vld [vmem:[#allocation2 + $0x12e] sm:$0xff]
      %v4585 = vld [vmem:[#allocation2 + $0x136] sm:$0xff]
      %v4586 = vld [vmem:[#allocation2 + $0x13e] sm:$0xff]
      %v4587 = vld [vmem:[#allocation2 + $0x146] sm:$0xff]
      %v4588 = vld [vmem:[#allocation2 + $0x14e] sm:$0xff]
      %v4589 = vld [vmem:[#allocation2 + $0x156] sm:$0xff]
      %v4590 = vld [vmem:[#allocation2 + $0x15e] sm:$0xff]
      %v4591 = vld [vmem:[#allocation2 + $0x166] sm:$0xf]
      %s4592 = scalar_lea.vmem %s4, 32
      %v4593 = vld [vmem:[%s4592] sm:$0xf]
      %v4595 = vsel %vm745, %v4551, 0
      %v4598 = vsel %vm745, %v4552, 0
      %v4601 = vsel %vm745, %v4553, 0
      %v4604 = vsel %vm745, %v4554, 0
      %v4607 = vsel %vm745, %v4555, 0
      %v4610 = vsel %vm745, %v4556, 0
      %v4613 = vsel %vm745, %v4557, 0
      %v4616 = vsel %vm745, %v4558, 0
      %v4619 = vsel %vm745, %v4559, 0
      %v4622 = vsel %vm745, %v4560, 0
      %v4625 = vsel %vm745, %v4561, 0
      %v4628 = vsel %vm745, %v4562, 0
      %v4631 = vsel %vm745, %v4563, 0
      %v4634 = vsel %vm745, %v4564, 0
      %v4637 = vsel %vm745, %v4565, 0
      %v4640 = vsel %vm745, %v4566, 0
      %v4643 = vsel %vm745, %v4567, 0
      %v4646 = vsel %vm745, %v4568, 0
      %v4649 = vsel %vm745, %v4569, 0
      %v4652 = vsel %vm745, %v4570, 0
      %v4655 = vsel %vm745, %v4571, 0
      %v4658 = vsel %vm745, %v4572, 0
      %v4661 = vsel %vm745, %v4573, 0
      %v4664 = vsel %vm745, %v4574, 0
      %v4667 = vsel %vm745, %v4575, 0
      %v4670 = vsel %vm745, %v4576, 0
      %v4673 = vsel %vm745, %v4577, 0
      %v4676 = vsel %vm745, %v4578, 0
      %v4679 = vsel %vm745, %v4579, 0
      %v4682 = vsel %vm745, %v4580, 0
      %v4685 = vsel %vm745, %v4581, 0
      %v4688 = vsel %vm745, %v4582, 0
      %v4691 = vsel %vm745, %v4583, 0
      %v4694 = vsel %vm745, %v4584, 0
      %v4697 = vsel %vm745, %v4585, 0
      %v4700 = vsel %vm745, %v4586, 0
      %v4703 = vsel %vm745, %v4587, 0
      %v4706 = vsel %vm745, %v4588, 0
      %v4709 = vsel %vm745, %v4589, 0
      %v4712 = vsel %vm745, %v4590, 0
      %v4715 = vsel %vm745, %v4591, 0
      %v4718 = vsel %vm1001, %v4593, 0
      %4720 = vmatprep.subr.mxu0 0.0
      %4721 = vmatpush1.msra.mxu0 %v4718
      %4722 = vmatprep.subr.mxu0 0.0
      %4723 = vmatpush1.msra.mxu0 0.0
      %4724 = vmatprep.subr.mxu0 0.0
      %4725 = vmatpush1.msra.mxu0 0.0
      %4726 = vmatprep.subr.mxu0 0.0
      %4727 = vmatpush1.msra.mxu0 0.0
      %4728 = vmatprep.subr.mxu0 0.0
      %4729 = vmatpush1.msra.mxu0 0.0
      %4730 = vmatprep.subr.mxu0 0.0
      %4731 = vmatpush1.msra.mxu0 0.0
      %4732 = vmatprep.subr.mxu0 0.0
      %4733 = vmatpush1.msra.mxu0 0.0
      %4734 = vmatprep.subr.mxu0 0.0
      %4735 = vmatpush1.msra.mxu0 0.0
      %4736 = vmatprep.subr.mxu0 0.0
      %4737 = vmatpush1.msra.mxu0 0.0
      %4738 = vmatprep.subr.mxu0 0.0
      %4739 = vmatpush1.msra.mxu0 0.0
      %4740 = vmatprep.subr.mxu0 0.0
      %4741 = vmatpush1.msra.mxu0 0.0
      %4742 = vmatprep.subr.mxu0 0.0
      %4743 = vmatpush1.msra.mxu0 0.0
      %4744 = vmatprep.subr.mxu0 0.0
      %4745 = vmatpush1.msra.mxu0 0.0
      %4746 = vmatprep.subr.mxu0 0.0
      %4747 = vmatpush1.msra.mxu0 0.0
      %4748 = vmatprep.subr.mxu0 0.0
      %4749 = vmatpush1.msra.mxu0 0.0
      %4750 = vmatprep.subr.mxu0 0.0
      %4751 = vmatpush1.msra.mxu0 0.0
      %4752 = vmatprep.subr.mxu0 0.0
      %4753 = vmatpush1.msra.mxu0 0.0
      %4754 = vmatprep.subr.mxu0 0.0
      %4755 = vmatpush1.msra.mxu0 0.0
      %4756 = vmatprep.subr.mxu0 0.0
      %4757 = vmatpush1.msra.mxu0 0.0
      %4758 = vmatprep.subr.mxu0 0.0
      %4759 = vmatpush1.msra.mxu0 0.0
      %4760 = vmatprep.subr.mxu0 0.0
      %4761 = vmatpush1.msra.mxu0 0.0
      %4762 = vmatprep.subr.mxu0 0.0
      %4763 = vmatpush1.msra.mxu0 0.0
      %4764 = vmatprep.subr.mxu0 0.0
      %4765 = vmatpush1.msra.mxu0 0.0
      %4766 = vmatprep.subr.mxu0 0.0
      %4767 = vmatpush1.msra.mxu0 0.0
      %4768 = vmatprep.subr.mxu0 0.0
      %4769 = vmatpush1.msra.mxu0 0.0
      %4770 = vmatprep.subr.mxu0 0.0
      %4771 = vmatpush1.msra.mxu0 0.0
      %4772 = vmatprep.subr.mxu0 0.0
      %4773 = vmatpush1.msra.mxu0 0.0
      %4774 = vmatprep.subr.mxu0 0.0
      %4775 = vmatpush1.msra.mxu0 0.0
      %4776 = vmatprep.subr.mxu0 0.0
      %4777 = vmatpush1.msra.mxu0 0.0
      %4778 = vmatprep.subr.mxu0 0.0
      %4779 = vmatpush1.msra.mxu0 0.0
      %4780 = vmatprep.subr.mxu0 0.0
      %4781 = vmatpush1.msra.mxu0 0.0
      %4782 = vmatprep.subr.mxu0 0.0
      %4783 = vmatpush1.msra.mxu0 0.0
      %4784 = vmatprep.mubr.f32.mxu0 0.0
      %4785 = vmatmul.mubr.f32.gmra.mrb[0].mxu0 %v4595
      %v4786 = vpop.f32.mrb[0].mxu0
      %v4787 = vadd.f32 0.0, %v4786
      %v4788 = vpop.f32.mrb[0].mxu0
      %4789 = vmatprep.mubr.f32.mxu0 0.0
      %4790 = vmatmul.mubr.f32.gmra.mrb[0].mxu0 %v4598
      %v4791 = vpop.f32.mrb[0].mxu0
      %v4792 = vadd.f32 0.0, %v4791
      %v4793 = vpop.f32.mrb[0].mxu0
      %4794 = vmatprep.mubr.f32.mxu0 0.0
      %4795 = vmatmul.mubr.f32.gmra.mrb[0].mxu0 %v4601
      %v4796 = vpop.f32.mrb[0].mxu0
      %v4797 = vadd.f32 0.0, %v4796
      %v4798 = vpop.f32.mrb[0].mxu0
      %4799 = vmatprep.mubr.f32.mxu0 0.0
      %4800 = vmatmul.mubr.f32.gmra.mrb[0].mxu0 %v4604
      %v4801 = vpop.f32.mrb[0].mxu0
      %v4802 = vadd.f32 0.0, %v4801
      %v4803 = vpop.f32.mrb[0].mxu0
      %4804 = vmatprep.mubr.f32.mxu0 0.0
      %4805 = vmatmul.mubr.f32.gmra.mrb[0].mxu0 %v4607
      %v4806 = vpop.f32.mrb[0].mxu0
      %v4807 = vadd.f32 0.0, %v4806
      %v4808 = vpop.f32.mrb[0].mxu0
      %4809 = vmatprep.mubr.f32.mxu0 0.0
      %4810 = vmatmul.mubr.f32.gmra.mrb[0].mxu0 %v4610
      %v4811 = vpop.f32.mrb[0].mxu0
      %v4812 = vadd.f32 0.0, %v4811
      %v4813 = vpop.f32.mrb[0].mxu0
      %4814 = vmatprep.mubr.f32.mxu0 0.0
      %4815 = vmatmul.mubr.f32.gmra.mrb[0].mxu0 %v4613
      %v4816 = vpop.f32.mrb[0].mxu0
      %v4817 = vadd.f32 0.0, %v4816
      %v4818 = vpop.f32.mrb[0].mxu0
      %4819 = vmatprep.mubr.f32.mxu0 0.0
      %4820 = vmatmul.mubr.f32.gmra.mrb[0].mxu0 %v4616
      %v4821 = vpop.f32.mrb[0].mxu0
      %v4822 = vadd.f32 0.0, %v4821
      %v4823 = vpop.f32.mrb[0].mxu0
      %4824 = vmatprep.mubr.f32.mxu0 0.0
      %4825 = vmatmul.mubr.f32.gmra.mrb[0].mxu0 %v4619
      %v4826 = vpop.f32.mrb[0].mxu0
      %v4827 = vadd.f32 0.0, %v4826
      %v4828 = vpop.f32.mrb[0].mxu0
      %4829 = vmatprep.mubr.f32.mxu0 0.0
      %4830 = vmatmul.mubr.f32.gmra.mrb[0].mxu0 %v4622
      %v4831 = vpop.f32.mrb[0].mxu0
      %v4832 = vadd.f32 0.0, %v4831
      %v4833 = vpop.f32.mrb[0].mxu0
      %4834 = vmatprep.mubr.f32.mxu0 0.0
      %4835 = vmatmul.mubr.f32.gmra.mrb[0].mxu0 %v4625
      %v4836 = vpop.f32.mrb[0].mxu0
      %v4837 = vadd.f32 0.0, %v4836
      %v4838 = vpop.f32.mrb[0].mxu0
      %4839 = vmatprep.mubr.f32.mxu0 0.0
      %4840 = vmatmul.mubr.f32.gmra.mrb[0].mxu0 %v4628
      %v4841 = vpop.f32.mrb[0].mxu0
      %v4842 = vadd.f32 0.0, %v4841
      %v4843 = vpop.f32.mrb[0].mxu0
      %4844 = vmatprep.mubr.f32.mxu0 0.0
      %4845 = vmatmul.mubr.f32.gmra.mrb[0].mxu0 %v4631
      %v4846 = vpop.f32.mrb[0].mxu0
      %v4847 = vadd.f32 0.0, %v4846
      %v4848 = vpop.f32.mrb[0].mxu0
      %4849 = vmatprep.mubr.f32.mxu0 0.0
      %4850 = vmatmul.mubr.f32.gmra.mrb[0].mxu0 %v4634
      %v4851 = vpop.f32.mrb[0].mxu0
      %v4852 = vadd.f32 0.0, %v4851
      %v4853 = vpop.f32.mrb[0].mxu0
      %4854 = vmatprep.mubr.f32.mxu0 0.0
      %4855 = vmatmul.mubr.f32.gmra.mrb[0].mxu0 %v4637
      %v4856 = vpop.f32.mrb[0].mxu0
      %v4857 = vadd.f32 0.0, %v4856
      %v4858 = vpop.f32.mrb[0].mxu0
      %4859 = vmatprep.mubr.f32.mxu0 0.0
      %4860 = vmatmul.mubr.f32.gmra.mrb[0].mxu0 %v4640
      %v4861 = vpop.f32.mrb[0].mxu0
      %v4862 = vadd.f32 0.0, %v4861
      %v4863 = vpop.f32.mrb[0].mxu0
      %4864 = vmatprep.mubr.f32.mxu0 0.0
      %4865 = vmatmul.mubr.f32.gmra.mrb[0].mxu0 %v4643
      %v4866 = vpop.f32.mrb[0].mxu0
      %v4867 = vadd.f32 0.0, %v4866
      %v4868 = vpop.f32.mrb[0].mxu0
      %4869 = vmatprep.mubr.f32.mxu0 0.0
      %4870 = vmatmul.mubr.f32.gmra.mrb[0].mxu0 %v4646
      %v4871 = vpop.f32.mrb[0].mxu0
      %v4872 = vadd.f32 0.0, %v4871
      %v4873 = vpop.f32.mrb[0].mxu0
      %4874 = vmatprep.mubr.f32.mxu0 0.0
      %4875 = vmatmul.mubr.f32.gmra.mrb[0].mxu0 %v4649
      %v4876 = vpop.f32.mrb[0].mxu0
      %v4877 = vadd.f32 0.0, %v4876
      %v4878 = vpop.f32.mrb[0].mxu0
      %4879 = vmatprep.mubr.f32.mxu0 0.0
      %4880 = vmatmul.mubr.f32.gmra.mrb[0].mxu0 %v4652
      %v4881 = vpop.f32.mrb[0].mxu0
      %v4882 = vadd.f32 0.0, %v4881
      %v4883 = vpop.f32.mrb[0].mxu0
      %4884 = vmatprep.mubr.f32.mxu0 0.0
      %4885 = vmatmul.mubr.f32.gmra.mrb[0].mxu0 %v4655
      %v4886 = vpop.f32.mrb[0].mxu0
      %v4887 = vadd.f32 0.0, %v4886
      %v4888 = vpop.f32.mrb[0].mxu0
      %4889 = vmatprep.mubr.f32.mxu0 0.0
      %4890 = vmatmul.mubr.f32.gmra.mrb[0].mxu0 %v4658
      %v4891 = vpop.f32.mrb[0].mxu0
      %v4892 = vadd.f32 0.0, %v4891
      %v4893 = vpop.f32.mrb[0].mxu0
      %4894 = vmatprep.mubr.f32.mxu0 0.0
      %4895 = vmatmul.mubr.f32.gmra.mrb[0].mxu0 %v4661
      %v4896 = vpop.f32.mrb[0].mxu0
      %v4897 = vadd.f32 0.0, %v4896
      %v4898 = vpop.f32.mrb[0].mxu0
      %4899 = vmatprep.mubr.f32.mxu0 0.0
      %4900 = vmatmul.mubr.f32.gmra.mrb[0].mxu0 %v4664
      %v4901 = vpop.f32.mrb[0].mxu0
      %v4902 = vadd.f32 0.0, %v4901
      %v4903 = vpop.f32.mrb[0].mxu0
      %4904 = vmatprep.mubr.f32.mxu0 0.0
      %4905 = vmatmul.mubr.f32.gmra.mrb[0].mxu0 %v4667
      %v4906 = vpop.f32.mrb[0].mxu0
      %v4907 = vadd.f32 0.0, %v4906
      %v4908 = vpop.f32.mrb[0].mxu0
      %4909 = vmatprep.mubr.f32.mxu0 0.0
      %4910 = vmatmul.mubr.f32.gmra.mrb[0].mxu0 %v4670
      %v4911 = vpop.f32.mrb[0].mxu0
      %v4912 = vadd.f32 0.0, %v4911
      %v4913 = vpop.f32.mrb[0].mxu0
      %4914 = vmatprep.mubr.f32.mxu0 0.0
      %4915 = vmatmul.mubr.f32.gmra.mrb[0].mxu0 %v4673
      %v4916 = vpop.f32.mrb[0].mxu0
      %v4917 = vadd.f32 0.0, %v4916
      %v4918 = vpop.f32.mrb[0].mxu0
      %4919 = vmatprep.mubr.f32.mxu0 0.0
      %4920 = vmatmul.mubr.f32.gmra.mrb[0].mxu0 %v4676
      %v4921 = vpop.f32.mrb[0].mxu0
      %v4922 = vadd.f32 0.0, %v4921
      %v4923 = vpop.f32.mrb[0].mxu0
      %4924 = vmatprep.mubr.f32.mxu0 0.0
      %4925 = vmatmul.mubr.f32.gmra.mrb[0].mxu0 %v4679
      %v4926 = vpop.f32.mrb[0].mxu0
      %v4927 = vadd.f32 0.0, %v4926
      %v4928 = vpop.f32.mrb[0].mxu0
      %4929 = vmatprep.mubr.f32.mxu0 0.0
      %4930 = vmatmul.mubr.f32.gmra.mrb[0].mxu0 %v4682
      %v4931 = vpop.f32.mrb[0].mxu0
      %v4932 = vadd.f32 0.0, %v4931
      %v4933 = vpop.f32.mrb[0].mxu0
      %4934 = vmatprep.mubr.f32.mxu0 0.0
      %4935 = vmatmul.mubr.f32.gmra.mrb[0].mxu0 %v4685
      %v4936 = vpop.f32.mrb[0].mxu0
      %v4937 = vadd.f32 0.0, %v4936
      %v4938 = vpop.f32.mrb[0].mxu0
      %4939 = vmatprep.mubr.f32.mxu0 0.0
      %4940 = vmatmul.mubr.f32.gmra.mrb[0].mxu0 %v4688
      %v4941 = vpop.f32.mrb[0].mxu0
      %v4942 = vadd.f32 0.0, %v4941
      %v4943 = vpop.f32.mrb[0].mxu0
      %4944 = vmatprep.mubr.f32.mxu0 0.0
      %4945 = vmatmul.mubr.f32.gmra.mrb[0].mxu0 %v4691
      %v4946 = vpop.f32.mrb[0].mxu0
      %v4947 = vadd.f32 0.0, %v4946
      %v4948 = vpop.f32.mrb[0].mxu0
      %4949 = vmatprep.mubr.f32.mxu0 0.0
      %4950 = vmatmul.mubr.f32.gmra.mrb[0].mxu0 %v4694
      %v4951 = vpop.f32.mrb[0].mxu0
      %v4952 = vadd.f32 0.0, %v4951
      %v4953 = vpop.f32.mrb[0].mxu0
      %4954 = vmatprep.mubr.f32.mxu0 0.0
      %4955 = vmatmul.mubr.f32.gmra.mrb[0].mxu0 %v4697
      %v4956 = vpop.f32.mrb[0].mxu0
      %v4957 = vadd.f32 0.0, %v4956
      %v4958 = vpop.f32.mrb[0].mxu0
      %4959 = vmatprep.mubr.f32.mxu0 0.0
      %4960 = vmatmul.mubr.f32.gmra.mrb[0].mxu0 %v4700
      %v4961 = vpop.f32.mrb[0].mxu0
      %v4962 = vadd.f32 0.0, %v4961
      %v4963 = vpop.f32.mrb[0].mxu0
      %4964 = vmatprep.mubr.f32.mxu0 0.0
      %4965 = vmatmul.mubr.f32.gmra.mrb[0].mxu0 %v4703
      %v4966 = vpop.f32.mrb[0].mxu0
      %v4967 = vadd.f32 0.0, %v4966
      %v4968 = vpop.f32.mrb[0].mxu0
      %4969 = vmatprep.mubr.f32.mxu0 0.0
      %4970 = vmatmul.mubr.f32.gmra.mrb[0].mxu0 %v4706
      %v4971 = vpop.f32.mrb[0].mxu0
      %v4972 = vadd.f32 0.0, %v4971
      %v4973 = vpop.f32.mrb[0].mxu0
      %4974 = vmatprep.mubr.f32.mxu0 0.0
      %4975 = vmatmul.mubr.f32.gmra.mrb[0].mxu0 %v4709
      %v4976 = vpop.f32.mrb[0].mxu0
      %v4977 = vadd.f32 0.0, %v4976
      %v4978 = vpop.f32.mrb[0].mxu0
      %4979 = vmatprep.mubr.f32.mxu0 0.0
      %4980 = vmatmul.mubr.f32.gmra.mrb[0].mxu0 %v4712
      %v4981 = vpop.f32.mrb[0].mxu0
      %v4982 = vadd.f32 0.0, %v4981
      %v4983 = vpop.f32.mrb[0].mxu0
      %4984 = vmatprep.mubr.f32.mxu0 0.0
      %4985 = vmatmul.mubr.f32.gmra.mrb[0].mxu0 %v4715
      %v4986 = vpop.f32.mrb[0].mxu0
      %v4987 = vadd.f32 0.0, %v4986
      %v4988 = vpop.f32.mrb[0].mxu0
      %4989 = vdwg.mxu0
      %v4990 = vadd.f32 %v4510, %v4787
      %v4991 = vadd.f32 %v4511, %v4792
      %v4992 = vadd.f32 %v4512, %v4797
      %v4993 = vadd.f32 %v4513, %v4802
      %v4994 = vadd.f32 %v4514, %v4807
      %v4995 = vadd.f32 %v4515, %v4812
      %v4996 = vadd.f32 %v4516, %v4817
      %v4997 = vadd.f32 %v4517, %v4822
      %v4998 = vadd.f32 %v4518, %v4827
      %v4999 = vadd.f32 %v4519, %v4832
      %v5000 = vadd.f32 %v4520, %v4837
      %v5001 = vadd.f32 %v4521, %v4842
      %v5002 = vadd.f32 %v4522, %v4847
      %v5003 = vadd.f32 %v4523, %v4852
      %v5004 = vadd.f32 %v4524, %v4857
      %v5005 = vadd.f32 %v4525, %v4862
      %v5006 = vadd.f32 %v4526, %v4867
      %v5007 = vadd.f32 %v4527, %v4872
      %v5008 = vadd.f32 %v4528, %v4877
      %v5009 = vadd.f32 %v4529, %v4882
      %v5010 = vadd.f32 %v4530, %v4887
      %v5011 = vadd.f32 %v4531, %v4892
      %v5012 = vadd.f32 %v4532, %v4897
      %v5013 = vadd.f32 %v4533, %v4902
      %v5014 = vadd.f32 %v4534, %v4907
      %v5015 = vadd.f32 %v4535, %v4912
      %v5016 = vadd.f32 %v4536, %v4917
      %v5017 = vadd.f32 %v4537, %v4922
      %v5018 = vadd.f32 %v4538, %v4927
      %v5019 = vadd.f32 %v4539, %v4932
      %v5020 = vadd.f32 %v4540, %v4937
      %v5021 = vadd.f32 %v4541, %v4942
      %v5022 = vadd.f32 %v4542, %v4947
      %v5023 = vadd.f32 %v4543, %v4952
      %v5024 = vadd.f32 %v4544, %v4957
      %v5025 = vadd.f32 %v4545, %v4962
      %v5026 = vadd.f32 %v4546, %v4967
      %v5027 = vadd.f32 %v4547, %v4972
      %v5028 = vadd.f32 %v4548, %v4977
      %v5029 = vadd.f32 %v4549, %v4982
      %v5030 = vadd.f32 %v4550, %v4987
      %5031 = vst [vmem:[%s224] sm:$0xff] %v4990
      %5032 = vst [vmem:[%s224 + $0x8] sm:$0xff] %v4991
      %5033 = vst [vmem:[%s224 + $0x10] sm:$0xff] %v4992
      %5034 = vst [vmem:[%s224 + $0x18] sm:$0xff] %v4993
      %5035 = vst [vmem:[%s224 + $0x20] sm:$0xff] %v4994
      %5036 = vst [vmem:[%s224 + $0x28] sm:$0xff] %v4995
      %5037 = vst [vmem:[%s224 + $0x30] sm:$0xff] %v4996
      %5038 = vst [vmem:[%s224 + $0x38] sm:$0xff] %v4997
      %5039 = vst [vmem:[%s224 + $0x40] sm:$0xff] %v4998
      %5040 = vst [vmem:[%s224 + $0x48] sm:$0xff] %v4999
      %5041 = vst [vmem:[%s224 + $0x50] sm:$0xff] %v5000
      %5042 = vst [vmem:[%s224 + $0x58] sm:$0xff] %v5001
      %5043 = vst [vmem:[%s224 + $0x60] sm:$0xff] %v5002
      %5044 = vst [vmem:[%s224 + $0x68] sm:$0xff] %v5003
      %5045 = vst [vmem:[%s224 + $0x70] sm:$0xff] %v5004
      %5046 = vst [vmem:[%s224 + $0x78] sm:$0xff] %v5005
      %5047 = vst [vmem:[%s224 + $0x80] sm:$0xff] %v5006
      %5048 = vst [vmem:[%s224 + $0x88] sm:$0xff] %v5007
      %5049 = vst [vmem:[%s224 + $0x90] sm:$0xff] %v5008
      %5050 = vst [vmem:[%s224 + $0x98] sm:$0xff] %v5009
      %5051 = vst [vmem:[%s224 + $0xa0] sm:$0xff] %v5010
      %5052 = vst [vmem:[%s224 + $0xa8] sm:$0xff] %v5011
      %5053 = vst [vmem:[%s224 + $0xb0] sm:$0xff] %v5012
      %5054 = vst [vmem:[%s224 + $0xb8] sm:$0xff] %v5013
      %5055 = vst [vmem:[%s224 + $0xc0] sm:$0xff] %v5014
      %5056 = vst [vmem:[%s224 + $0xc8] sm:$0xff] %v5015
      %5057 = vst [vmem:[%s224 + $0xd0] sm:$0xff] %v5016
      %5058 = vst [vmem:[%s224 + $0xd8] sm:$0xff] %v5017
      %5059 = vst [vmem:[%s224 + $0xe0] sm:$0xff] %v5018
      %5060 = vst [vmem:[%s224 + $0xe8] sm:$0xff] %v5019
      %5061 = vst [vmem:[%s224 + $0xf0] sm:$0xff] %v5020
      %5062 = vst [vmem:[%s224 + $0xf8] sm:$0xff] %v5021
      %5063 = vst [vmem:[%s224 + $0x100] sm:$0xff] %v5022
      %5064 = vst [vmem:[%s224 + $0x108] sm:$0xff] %v5023
      %5065 = vst [vmem:[%s224 + $0x110] sm:$0xff] %v5024
      %5066 = vst [vmem:[%s224 + $0x118] sm:$0xff] %v5025
      %5067 = vst [vmem:[%s224 + $0x120] sm:$0xff] %v5026
      %5068 = vst [vmem:[%s224 + $0x128] sm:$0xff] %v5027
      %5069 = vst [vmem:[%s224 + $0x130] sm:$0xff] %v5028
      %5070 = vst [vmem:[%s224 + $0x138] sm:$0xff] %v5029
      %5071 = vst [vmem:[%s224 + $0x140] sm:$0xf] %v5030
      %p5072 = scmp.lt.s32.totalorder %s16, 1
      %s5073 = scalar_select %p5072, %s16, 1
      %s5074 = smul.addr %s5073, 41
      %s5075 = smul.addr %s5074, 8
      %s5076 = scalar_lea.vmem %s5, %s5075
      // Predicated region
      $region41: #{basic_block_forward.2} parent=39 // pred_check
        %p5077 = pneg %p144
      $region42: #{basic_block_forward.2} parent=39 // pred_check_branch
        %5079 = sbr.rel (%p5077) target = $region44
      $region43: #{basic_block_forward.2} parent=39 // pred_region
        _
      $region44: #{basic_block_forward.2} parent=39 // pred_fallthru
        _
    $region40: #{basic_block_forward.2} parent=5 // pred_fallthru
      _
    %p5080 = scmp.le.s32.totalorder 2, %s11
    // Predicated region
    $region45: #{basic_block_forward.2} parent=5 // pred_check
      %p5081 = pneg %p5080
    $region46: #{basic_block_forward.2} parent=5 // pred_check_branch
      %5083 = sbr.rel (%p5081) target = $region48
    $region47: #{basic_block_forward.2} parent=5 // pred_region
      %s5084 = ssub.s32 %s11, 2
      // Predicated region
      $region49: #{basic_block_forward.2} parent=47 // pred_check
        %p5085 = pneg %p150
      $region50: #{basic_block_forward.2} parent=47 // pred_check_branch
        %5087 = sbr.rel (%p5085) target = $region52
      $region51: #{basic_block_forward.2} parent=47 // pred_region
        %p5088 = scmp.lt.s32.totalorder %s17, 1
        %s5089 = scalar_select %p5088, %s17, 1
        %s5090 = smul.addr %s5089, 41
        %s5091 = smul.addr %s5090, 8
        %s5092 = scalar_lea.vmem %s5, %s5091
      $region52: #{basic_block_forward.2} parent=47 // pred_fallthru
        _
    $region48: #{basic_block_forward.2} parent=5 // pred_fallthru
      _
  $region6: #{basic_block_forward.2} parent=0 // loop_footer
    %s15 = sadd.s32 1, %s11
  $region7: #{basic_block_forward.2} parent=0 // loop_footer_branch
    %10 = sbr.rel target = $region3
  $region8: #{basic_block_forward.2} parent=0 // loop_exit
    _

</llo_original>
